<compile_context>
chip_gen: v7x
topology: tpu7x:2x2x1
jax: 0.10.0
libtpu: 0.0.40
codegen_flags: <defaults>
</compile_context>

<pallas_src>
import numpy as np
import jax
import jax.numpy as jnp
from jax.experimental import pallas as pl
from jax.experimental.pallas import tpu as pltpu


BBLK = 32  # images per grid step; kernel rows are (spatial_row * BBLK + batch)


# ------------------------------ Pallas kernel -------------------------------

def cnn_fused_kernel(x_ref, w1_ref, b1_ref, w2_ref, b2_ref, wf_ref, bf_ref,
                     out_ref, a1_ref, p1_ref, a2_ref):
    BB = BBLK

    # --- conv1: kh folded into K -> ONE matmul (26*BB, 84) x (84, 512), single
    #     accumulator write.  Output row = oh*BB+b (oh in [0,26));
    #     output col = dw*256 + w_p*16 + c encodes w = 2*w_p + dw.
    a1_ref[...] = jnp.dot(x_ref[0], w1_ref[...],
                          preferred_element_type=jnp.float32)

    # Zero the conv2 K-pad lanes of p1 once per step (W2 pad rows are zero, but
    # uninitialized VMEM could hold NaN and NaN*0 would poison the matmul).
    p1_ref[:, 208:256] = jnp.zeros((13 * BB, 48), jnp.bfloat16)

    # --- 2x2 maxpool #1 (+bias, +ReLU): columns via the even/odd lane halves,
    #     rows via aligned BB-row chunks.  Stored once, as bf16.
    b1b = jnp.broadcast_to(b1_ref[...], (BB, 208))          # hoisted broadcast
    for i in range(13):
        r0, r1 = (2 * i) * BB, (2 * i + 1) * BB
        top = jnp.maximum(a1_ref[r0:r0 + BB, 0:208], a1_ref[r0:r0 + BB, 256:464])
        bot = jnp.maximum(a1_ref[r1:r1 + BB, 0:208], a1_ref[r1:r1 + BB, 256:464])
        p1_ref[i * BB:(i + 1) * BB, 0:208] = jnp.maximum(
            jnp.maximum(top, bot) + b1b, 0.0).astype(jnp.bfloat16)

    # --- conv2: 3 dots (10*BB, 256) x (256, 416) summed in ONE expression ->
    #     single scratch write.  Only output rows 0..9 are computed (row 10 of
    #     the 11-row conv2 output is dropped by the floor-mode 2x2 pool anyway).
    #     Output col = dw*256 + w_q*32 + co encodes w = 2*w_q + dw.
    a2_ref[...] = (
        jnp.dot(p1_ref[0:10 * BB, :], w2_ref[0],
                preferred_element_type=jnp.float32)
        + jnp.dot(p1_ref[BB:11 * BB, :], w2_ref[1],
                  preferred_element_type=jnp.float32)
        + jnp.dot(p1_ref[2 * BB:12 * BB, :], w2_ref[2],
                  preferred_element_type=jnp.float32))

    # --- 2x2 maxpool #2 (+bias, +ReLU) + FC: accumulate 5 dots in registers,
    #     no concatenate, single lane-dense write of the logits block.
    b2b = jnp.broadcast_to(b2_ref[...], (BB, 160))          # hoisted broadcast
    acc = jnp.zeros((BB, 128), jnp.float32)
    for j in range(5):
        r0, r1 = (2 * j) * BB, (2 * j + 1) * BB
        top = jnp.maximum(a2_ref[r0:r0 + BB, 0:160], a2_ref[r0:r0 + BB, 256:416])
        bot = jnp.maximum(a2_ref[r1:r1 + BB, 0:160], a2_ref[r1:r1 + BB, 256:416])
        piece = jnp.maximum(jnp.maximum(top, bot) + b2b, 0.0).astype(jnp.bfloat16)
        acc = acc + jnp.dot(piece, wf_ref[j], preferred_element_type=jnp.float32)
    out_ref[...] = acc + bf_ref[...]


# ------------------------- weight / layout preparation ----------------------

def _build_kernel_weights(params):
    """Convert torch-layout params into the structured matmul weights."""
    w1_oihw, b1, w2_oihw, b2, wfc, bfc = params

    # conv1 (kh folded into K): W1[kh*28 + w_in, dw*256 + w_p*16 + c] =
    #   w1[c, 0, kh, kw] with w_in = 2*w_p + dw + kw.
    w1_r = jnp.transpose(w1_oihw[:, 0], (1, 2, 0))                 # (kh, kw, c)
    sel1 = np.zeros((3, 28, 2, 13), np.float32)
    for kw in range(3):
        for dw in range(2):
            for wp in range(13):
                sel1[kw, 2 * wp + dw + kw, dw, wp] = 1.0
    w1b = jnp.einsum('hkc,kwdp->hwdpc', w1_r, jnp.asarray(sel1))   # (3,28,2,13,16)
    w1b = w1b.reshape(3, 28, 2, 208)
    W1 = jnp.zeros((3, 28, 512), jnp.float32)
    W1 = W1.at[:, :, 0:208].set(w1b[:, :, 0, :])
    W1 = W1.at[:, :, 256:464].set(w1b[:, :, 1, :])
    W1 = W1.reshape(84, 512)                                       # fold kh into K
    B1 = jnp.tile(b1, 13).reshape(1, 208)

    # conv2: W2[kh, w_p*16+ci, dw*256 + w_q*32 + co] = w2[co, ci, kh, kw],
    #        with w_p = 2*w_q + dw + kw.  K padded 208 -> 256 with zero rows.
    w2_r = jnp.transpose(w2_oihw, (2, 3, 1, 0))                    # (kh, kw, ci, co)
    sel2 = np.zeros((3, 13, 2, 5), np.float32)
    for kw in range(3):
        for dw in range(2):
            for wq in range(5):
                sel2[kw, 2 * wq + dw + kw, dw, wq] = 1.0
    w2b = jnp.einsum('hkio,kpdq->hpidqo', w2_r, jnp.asarray(sel2))  # (3,13,16,2,5,32)
    w2b = w2b.reshape(3, 208, 2, 160)
    W2 = jnp.zeros((3, 256, 416), jnp.float32)                     # rows 208:256 stay 0
    W2 = W2.at[:, 0:208, 0:160].set(w2b[:, :, 0, :])
    W2 = W2.at[:, 0:208, 256:416].set(w2b[:, :, 1, :])
    B2 = jnp.tile(b2, 5).reshape(1, 160)

    # FC split by pooled row j: lane order of each piece is w_q*32 + co; torch
    # flat index is co*25 + j*5 + w_q.  Pad output lanes to 128.
    WF = jnp.transpose(wfc.reshape(10, 32, 5, 5), (2, 3, 1, 0))    # (j, w_q, co, out)
    WF = WF.reshape(5, 160, 10)
    WFp = jnp.zeros((5, 160, 128), jnp.float32).at[:, :, :10].set(WF)
    BF = jnp.zeros((1, 128), jnp.float32).at[0, :10].set(bfc)

    return (W1.astype(jnp.bfloat16), B1, W2.astype(jnp.bfloat16), B2,
            WFp.astype(jnp.bfloat16), BF)


def cnn_forward(x_nchw, params):
    B = x_nchw.shape[0]
    assert B % BBLK == 0, "batch must be a multiple of BBLK for this test"
    nb = B // BBLK
    W1, B1, W2, B2, WF, BF = _build_kernel_weights(params)

    # h-major / batch-minor rows: Xk[g, h*BBLK + b, w] = x[g*BBLK+b, 0, h, w],
    # then fold the 3 kh taps into K (lanes kh*28 + w) and pre-cast to bf16.
    x = x_nchw[:, 0].astype(jnp.float32)                            # (B, 28, 28)
    Xk = x.reshape(nb, BBLK, 28, 28).transpose(0, 2, 1, 3).reshape(nb, 28 * BBLK, 28)
    Xf = jnp.concatenate(
        [Xk[:, kh * BBLK:(kh + 26) * BBLK, :] for kh in range(3)], axis=-1
    ).astype(jnp.bfloat16)                                          # (nb, 26*BBLK, 84)

    flops = 2 * B * (26 * 84 * 512 + 3 * 10 * 256 * 416 + 5 * 160 * 128)
    bytes_accessed = (Xf.size * 2 + B * 128 * 4
                      + (W1.size + W2.size + WF.size) * 2
                      + (B1.size + B2.size + BF.size) * 4)

    out = pl.pallas_call(
        cnn_fused_kernel,
        out_shape=jax.ShapeDtypeStruct((B, 128), jnp.float32),
        grid=(nb,),
        in_specs=[
            pl.BlockSpec((1, 26 * BBLK, 84), lambda g: (g, 0, 0)),   # folded input
            pl.BlockSpec((84, 512), lambda g: (0, 0)),               # conv1 weight
            pl.BlockSpec((1, 208), lambda g: (0, 0)),                # conv1 bias
            pl.BlockSpec((3, 256, 416), lambda g: (0, 0, 0)),        # conv2 weight
            pl.BlockSpec((1, 160), lambda g: (0, 0)),                # conv2 bias
            pl.BlockSpec((5, 160, 128), lambda g: (0, 0, 0)),        # FC weight (per j)
            pl.BlockSpec((1, 128), lambda g: (0, 0)),                # FC bias
        ],
        out_specs=pl.BlockSpec((BBLK, 128), lambda g: (g, 0)),       # lane-dense logits
        scratch_shapes=[
            pltpu.VMEM((26 * BBLK, 512), jnp.float32),               # conv1 acc
            pltpu.VMEM((13 * BBLK, 256), jnp.bfloat16),              # pooled1 (bf16, K-padded)
            pltpu.VMEM((10 * BBLK, 416), jnp.float32),               # conv2 acc
        ],
        compiler_params=pltpu.CompilerParams(dimension_semantics=("parallel",)),
        cost_estimate=pl.CostEstimate(flops=flops, transcendentals=0,
                                      bytes_accessed=bytes_accessed),
    )(Xf, W1, B1, W2, B2, WF, BF)

    return out[:, :10]


# -------------------------- params / reference / test -----------------------

def init_params(key):
    k1, k2, k3, k4, k5, k6 = jax.random.split(key, 6)
    # PyTorch-layout synthetic parameters.
    w1 = jax.random.normal(k1, (16, 1, 3, 3), jnp.float32) * 0.30   # OIHW
    b1 = jax.random.normal(k2, (16,), jnp.float32) * 0.10
    w2 = jax.random.normal(k3, (32, 16, 3, 3), jnp.float32) * 0.10  # OIHW
    b2 = jax.random.normal(k4, (32,), jnp.float32) * 0.10
    wfc = jax.random.normal(k5, (10, 32 * 5 * 5), jnp.float32) * 0.05
    bfc = jax.random.normal(k6, (10,), jnp.float32) * 0.05
    return (w1, b1, w2, b2, wfc, bfc)


def reference_forward(x_nchw, params):
    w1_oihw, b1, w2_oihw, b2, wfc, bfc = params
    x = jnp.transpose(x_nchw, (0, 2, 3, 1)).astype(jnp.float32)      # NHWC
    w1 = jnp.transpose(w1_oihw, (2, 3, 1, 0))                        # HWIO
    w2 = jnp.transpose(w2_oihw, (2, 3, 1, 0))
    dn1 = jax.lax.conv_dimension_numbers(x.shape, w1.shape, ("NHWC", "HWIO", "NHWC"))
    a = jax.lax.conv_general_dilated(x, w1, (1, 1), "VALID", dimension_numbers=dn1)
    a = jnp.maximum(a + b1.reshape(1, 1, 1, -1), 0.0)
    a = jax.lax.reduce_window(a, -jnp.inf, jax.lax.max,
                              (1, 2, 2, 1), (1, 2, 2, 1), "VALID")
    dn2 = jax.lax.conv_dimension_numbers(a.shape, w2.shape, ("NHWC", "HWIO", "NHWC"))
    a = jax.lax.conv_general_dilated(a, w2, (1, 1), "VALID", dimension_numbers=dn2)
    a = jnp.maximum(a + b2.reshape(1, 1, 1, -1), 0.0)
    a = jax.lax.reduce_window(a, -jnp.inf, jax.lax.max,
                              (1, 2, 2, 1), (1, 2, 2, 1), "VALID")
    a = jnp.transpose(a, (0, 3, 1, 2)).reshape(a.shape[0], -1)       # torch C-major flatten
    return a @ wfc.T + bfc


if __name__ == "__main__":
    key = jax.random.PRNGKey(0)
    kx, kp = jax.random.split(key)
    B = 2 * BBLK                              # 64: two grid steps (both v7x TCs busy)
    x = jax.random.normal(kx, (B, 1, 28, 28), jnp.float32)           # NCHW, 28x28 fixed by FC
    params = init_params(kp)

    out = jax.block_until_ready(cnn_forward(x, params))
    ref = jax.block_until_ready(reference_forward(x, params))

    assert out.shape == (B, 10), out.shape
    max_err = jnp.max(jnp.abs(out - ref))
    # bf16 matmul operands bound accuracy to roughly 1e-2 relative.
    assert jnp.allclose(out, ref, atol=3e-2, rtol=3e-2), ("max_err", max_err)
    print("KERNEL_OK")
</pallas_src>

<mosaic_0001>
module attributes {stable_mosaic.version = 11 : i64} {
  func.func @cnn_fused_kernel(%arg0: i32, %arg1: memref<1x832x84xbf16, #tpu.memory_space<vmem>>, %arg2: memref<84x512xbf16, #tpu.memory_space<vmem>>, %arg3: memref<1x208xf32, #tpu.memory_space<vmem>>, %arg4: memref<3x256x416xbf16, #tpu.memory_space<vmem>>, %arg5: memref<1x160xf32, #tpu.memory_space<vmem>>, %arg6: memref<5x160x128xbf16, #tpu.memory_space<vmem>>, %arg7: memref<1x128xf32, #tpu.memory_space<vmem>>, %arg8: memref<32x128xf32, #tpu.memory_space<vmem>>, %arg9: memref<832x512xf32, #tpu.memory_space<vmem>>, %arg10: memref<416x256xbf16, #tpu.memory_space<vmem>>, %arg11: memref<320x416xf32, #tpu.memory_space<vmem>>) attributes {dimension_semantics = [#tpu.dimension_semantics<parallel>], iteration_bounds = array<i64: 2>, scalar_prefetch = 0 : i64, scratch_operands = 3 : i64, tpu.core_type = #tpu.core_type<tc>, window_params = [{transform_indices = @transform_0, window_bounds = array<i64: 1, 832, 84>}, {pipeline_mode = #tpu.pipeline_mode<synchronous>, transform_indices = @transform_1, window_bounds = array<i64: 84, 512>}, {pipeline_mode = #tpu.pipeline_mode<synchronous>, transform_indices = @transform_2, window_bounds = array<i64: 1, 208>}, {pipeline_mode = #tpu.pipeline_mode<synchronous>, transform_indices = @transform_3, window_bounds = array<i64: 3, 256, 416>}, {pipeline_mode = #tpu.pipeline_mode<synchronous>, transform_indices = @transform_4, window_bounds = array<i64: 1, 160>}, {pipeline_mode = #tpu.pipeline_mode<synchronous>, transform_indices = @transform_5, window_bounds = array<i64: 5, 160, 128>}, {pipeline_mode = #tpu.pipeline_mode<synchronous>, transform_indices = @transform_6, window_bounds = array<i64: 1, 128>}, {transform_indices = @transform_7, window_bounds = array<i64: 32, 128>}]} {
    %c0 = arith.constant 0 : index
    %c0_0 = arith.constant 0 : index
    %c0_1 = arith.constant 0 : index
    %0 = vector.load %arg1[%c0, %c0_0, %c0_1] : memref<1x832x84xbf16, #tpu.memory_space<vmem>>, vector<1x832x84xbf16>
    %1 = vector.shape_cast %0 : vector<1x832x84xbf16> to vector<832x84xbf16>
    %c0_2 = arith.constant 0 : index
    %c0_3 = arith.constant 0 : index
    %2 = vector.load %arg2[%c0_2, %c0_3] : memref<84x512xbf16, #tpu.memory_space<vmem>>, vector<84x512xbf16>
    %cst = arith.constant dense<0.000000e+00> : vector<832x512xf32>
    %3 = tpu.matmul %1, %2, %cst {dimension_numbers = #tpu.dot_dimension_numbers<[1], [0], [0], [1], [0, 0, 1, 1], [], []>} : vector<832x84xbf16>, vector<84x512xbf16>, vector<832x512xf32> -> vector<832x512xf32>
    %c0_4 = arith.constant 0 : index
    %c0_5 = arith.constant 0 : index
    %4 = vector.load %arg9[%c0_4, %c0_5] : memref<832x512xf32, #tpu.memory_space<vmem>>, vector<832x512xf32>
    tpu.vector_store %arg9[%c0_4, %c0_5], %3 {strides = array<i32>} : memref<832x512xf32, #tpu.memory_space<vmem>>, vector<832x512xf32>,
    %cst_6 = arith.constant 0.000000e+00 : bf16
    %5 = vector.broadcast %cst_6 : bf16 to vector<416x48xbf16>
    %c0_7 = arith.constant 0 : index
    %c208 = arith.constant 208 : index
    %6 = vector.load %arg10[%c0_7, %c208] : memref<416x256xbf16, #tpu.memory_space<vmem>>, vector<416x48xbf16>
    tpu.vector_store %arg10[%c0_7, %c208], %5 {strides = array<i32>} : memref<416x256xbf16, #tpu.memory_space<vmem>>, vector<416x48xbf16>,
    %c0_8 = arith.constant 0 : index
    %c0_9 = arith.constant 0 : index
    %7 = vector.load %arg3[%c0_8, %c0_9] : memref<1x208xf32, #tpu.memory_space<vmem>>, vector<1x208xf32>
    %8 = vector.shape_cast %7 : vector<1x208xf32> to vector<1x208xf32>
    %9 = vector.broadcast %8 : vector<1x208xf32> to vector<32x208xf32>
    %c0_10 = arith.constant 0 : index
    %c0_11 = arith.constant 0 : index
    %10 = vector.load %arg9[%c0_10, %c0_11] : memref<832x512xf32, #tpu.memory_space<vmem>>, vector<32x208xf32>
    %c0_12 = arith.constant 0 : index
    %c256 = arith.constant 256 : index
    %11 = vector.load %arg9[%c0_12, %c256] : memref<832x512xf32, #tpu.memory_space<vmem>>, vector<32x208xf32>
    %12 = arith.maximumf %10, %11 : vector<32x208xf32>
    %c32 = arith.constant 32 : index
    %c0_13 = arith.constant 0 : index
    %13 = vector.load %arg9[%c32, %c0_13] : memref<832x512xf32, #tpu.memory_space<vmem>>, vector<32x208xf32>
    %c32_14 = arith.constant 32 : index
    %c256_15 = arith.constant 256 : index
    %14 = vector.load %arg9[%c32_14, %c256_15] : memref<832x512xf32, #tpu.memory_space<vmem>>, vector<32x208xf32>
    %15 = arith.maximumf %13, %14 : vector<32x208xf32>
    %16 = arith.maximumf %12, %15 : vector<32x208xf32>
    %17 = arith.addf %16, %9 : vector<32x208xf32>
    %cst_16 = arith.constant 0.000000e+00 : f32
    %18 = vector.broadcast %cst_16 : f32 to vector<32x208xf32>
    %19 = arith.maximumf %17, %18 : vector<32x208xf32>
    %20 = arith.truncf %19 : vector<32x208xf32> to vector<32x208xbf16>
    %c0_17 = arith.constant 0 : index
    %c0_18 = arith.constant 0 : index
    %21 = vector.load %arg10[%c0_17, %c0_18] : memref<416x256xbf16, #tpu.memory_space<vmem>>, vector<32x208xbf16>
    tpu.vector_store %arg10[%c0_17, %c0_18], %20 {strides = array<i32>} : memref<416x256xbf16, #tpu.memory_space<vmem>>, vector<32x208xbf16>,
    %c64 = arith.constant 64 : index
    %c0_19 = arith.constant 0 : index
    %22 = vector.load %arg9[%c64, %c0_19] : memref<832x512xf32, #tpu.memory_space<vmem>>, vector<32x208xf32>
    %c64_20 = arith.constant 64 : index
    %c256_21 = arith.constant 256 : index
    %23 = vector.load %arg9[%c64_20, %c256_21] : memref<832x512xf32, #tpu.memory_space<vmem>>, vector<32x208xf32>
    %24 = arith.maximumf %22, %23 : vector<32x208xf32>
    %c96 = arith.constant 96 : index
    %c0_22 = arith.constant 0 : index
    %25 = vector.load %arg9[%c96, %c0_22] : memref<832x512xf32, #tpu.memory_space<vmem>>, vector<32x208xf32>
    %c96_23 = arith.constant 96 : index
    %c256_24 = arith.constant 256 : index
    %26 = vector.load %arg9[%c96_23, %c256_24] : memref<832x512xf32, #tpu.memory_space<vmem>>, vector<32x208xf32>
    %27 = arith.maximumf %25, %26 : vector<32x208xf32>
    %28 = arith.maximumf %24, %27 : vector<32x208xf32>
    %29 = arith.addf %28, %9 : vector<32x208xf32>
    %cst_25 = arith.constant 0.000000e+00 : f32
    %30 = vector.broadcast %cst_25 : f32 to vector<32x208xf32>
    %31 = arith.maximumf %29, %30 : vector<32x208xf32>
    %32 = arith.truncf %31 : vector<32x208xf32> to vector<32x208xbf16>
    %c32_26 = arith.constant 32 : index
    %c0_27 = arith.constant 0 : index
    %33 = vector.load %arg10[%c32_26, %c0_27] : memref<416x256xbf16, #tpu.memory_space<vmem>>, vector<32x208xbf16>
    tpu.vector_store %arg10[%c32_26, %c0_27], %32 {strides = array<i32>} : memref<416x256xbf16, #tpu.memory_space<vmem>>, vector<32x208xbf16>,
    %c128 = arith.constant 128 : index
    %c0_28 = arith.constant 0 : index
    %34 = vector.load %arg9[%c128, %c0_28] : memref<832x512xf32, #tpu.memory_space<vmem>>, vector<32x208xf32>
    %c128_29 = arith.constant 128 : index
    %c256_30 = arith.constant 256 : index
    %35 = vector.load %arg9[%c128_29, %c256_30] : memref<832x512xf32, #tpu.memory_space<vmem>>, vector<32x208xf32>
    %36 = arith.maximumf %34, %35 : vector<32x208xf32>
    %c160 = arith.constant 160 : index
    %c0_31 = arith.constant 0 : index
    %37 = vector.load %arg9[%c160, %c0_31] : memref<832x512xf32, #tpu.memory_space<vmem>>, vector<32x208xf32>
    %c160_32 = arith.constant 160 : index
    %c256_33 = arith.constant 256 : index
    %38 = vector.load %arg9[%c160_32, %c256_33] : memref<832x512xf32, #tpu.memory_space<vmem>>, vector<32x208xf32>
    %39 = arith.maximumf %37, %38 : vector<32x208xf32>
    %40 = arith.maximumf %36, %39 : vector<32x208xf32>
    %41 = arith.addf %40, %9 : vector<32x208xf32>
    %cst_34 = arith.constant 0.000000e+00 : f32
    %42 = vector.broadcast %cst_34 : f32 to vector<32x208xf32>
    %43 = arith.maximumf %41, %42 : vector<32x208xf32>
    %44 = arith.truncf %43 : vector<32x208xf32> to vector<32x208xbf16>
    %c64_35 = arith.constant 64 : index
    %c0_36 = arith.constant 0 : index
    %45 = vector.load %arg10[%c64_35, %c0_36] : memref<416x256xbf16, #tpu.memory_space<vmem>>, vector<32x208xbf16>
    tpu.vector_store %arg10[%c64_35, %c0_36], %44 {strides = array<i32>} : memref<416x256xbf16, #tpu.memory_space<vmem>>, vector<32x208xbf16>,
    %c192 = arith.constant 192 : index
    %c0_37 = arith.constant 0 : index
    %46 = vector.load %arg9[%c192, %c0_37] : memref<832x512xf32, #tpu.memory_space<vmem>>, vector<32x208xf32>
    %c192_38 = arith.constant 192 : index
    %c256_39 = arith.constant 256 : index
    %47 = vector.load %arg9[%c192_38, %c256_39] : memref<832x512xf32, #tpu.memory_space<vmem>>, vector<32x208xf32>
    %48 = arith.maximumf %46, %47 : vector<32x208xf32>
    %c224 = arith.constant 224 : index
    %c0_40 = arith.constant 0 : index
    %49 = vector.load %arg9[%c224, %c0_40] : memref<832x512xf32, #tpu.memory_space<vmem>>, vector<32x208xf32>
    %c224_41 = arith.constant 224 : index
    %c256_42 = arith.constant 256 : index
    %50 = vector.load %arg9[%c224_41, %c256_42] : memref<832x512xf32, #tpu.memory_space<vmem>>, vector<32x208xf32>
    %51 = arith.maximumf %49, %50 : vector<32x208xf32>
    %52 = arith.maximumf %48, %51 : vector<32x208xf32>
    %53 = arith.addf %52, %9 : vector<32x208xf32>
    %cst_43 = arith.constant 0.000000e+00 : f32
    %54 = vector.broadcast %cst_43 : f32 to vector<32x208xf32>
    %55 = arith.maximumf %53, %54 : vector<32x208xf32>
    %56 = arith.truncf %55 : vector<32x208xf32> to vector<32x208xbf16>
    %c96_44 = arith.constant 96 : index
    %c0_45 = arith.constant 0 : index
    %57 = vector.load %arg10[%c96_44, %c0_45] : memref<416x256xbf16, #tpu.memory_space<vmem>>, vector<32x208xbf16>
    tpu.vector_store %arg10[%c96_44, %c0_45], %56 {strides = array<i32>} : memref<416x256xbf16, #tpu.memory_space<vmem>>, vector<32x208xbf16>,
    %c256_46 = arith.constant 256 : index
    %c0_47 = arith.constant 0 : index
    %58 = vector.load %arg9[%c256_46, %c0_47] : memref<832x512xf32, #tpu.memory_space<vmem>>, vector<32x208xf32>
    %c256_48 = arith.constant 256 : index
    %c256_49 = arith.constant 256 : index
    %59 = vector.load %arg9[%c256_48, %c256_49] : memref<832x512xf32, #tpu.memory_space<vmem>>, vector<32x208xf32>
    %60 = arith.maximumf %58, %59 : vector<32x208xf32>
    %c288 = arith.constant 288 : index
    %c0_50 = arith.constant 0 : index
    %61 = vector.load %arg9[%c288, %c0_50] : memref<832x512xf32, #tpu.memory_space<vmem>>, vector<32x208xf32>
    %c288_51 = arith.constant 288 : index
    %c256_52 = arith.constant 256 : index
    %62 = vector.load %arg9[%c288_51, %c256_52] : memref<832x512xf32, #tpu.memory_space<vmem>>, vector<32x208xf32>
    %63 = arith.maximumf %61, %62 : vector<32x208xf32>
    %64 = arith.maximumf %60, %63 : vector<32x208xf32>
    %65 = arith.addf %64, %9 : vector<32x208xf32>
    %cst_53 = arith.constant 0.000000e+00 : f32
    %66 = vector.broadcast %cst_53 : f32 to vector<32x208xf32>
    %67 = arith.maximumf %65, %66 : vector<32x208xf32>
    %68 = arith.truncf %67 : vector<32x208xf32> to vector<32x208xbf16>
    %c128_54 = arith.constant 128 : index
    %c0_55 = arith.constant 0 : index
    %69 = vector.load %arg10[%c128_54, %c0_55] : memref<416x256xbf16, #tpu.memory_space<vmem>>, vector<32x208xbf16>
    tpu.vector_store %arg10[%c128_54, %c0_55], %68 {strides = array<i32>} : memref<416x256xbf16, #tpu.memory_space<vmem>>, vector<32x208xbf16>,
    %c320 = arith.constant 320 : index
    %c0_56 = arith.constant 0 : index
    %70 = vector.load %arg9[%c320, %c0_56] : memref<832x512xf32, #tpu.memory_space<vmem>>, vector<32x208xf32>
    %c320_57 = arith.constant 320 : index
    %c256_58 = arith.constant 256 : index
    %71 = vector.load %arg9[%c320_57, %c256_58] : memref<832x512xf32, #tpu.memory_space<vmem>>, vector<32x208xf32>
    %72 = arith.maximumf %70, %71 : vector<32x208xf32>
    %c352 = arith.constant 352 : index
    %c0_59 = arith.constant 0 : index
    %73 = vector.load %arg9[%c352, %c0_59] : memref<832x512xf32, #tpu.memory_space<vmem>>, vector<32x208xf32>
    %c352_60 = arith.constant 352 : index
    %c256_61 = arith.constant 256 : index
    %74 = vector.load %arg9[%c352_60, %c256_61] : memref<832x512xf32, #tpu.memory_space<vmem>>, vector<32x208xf32>
    %75 = arith.maximumf %73, %74 : vector<32x208xf32>
    %76 = arith.maximumf %72, %75 : vector<32x208xf32>
    %77 = arith.addf %76, %9 : vector<32x208xf32>
    %cst_62 = arith.constant 0.000000e+00 : f32
    %78 = vector.broadcast %cst_62 : f32 to vector<32x208xf32>
    %79 = arith.maximumf %77, %78 : vector<32x208xf32>
    %80 = arith.truncf %79 : vector<32x208xf32> to vector<32x208xbf16>
    %c160_63 = arith.constant 160 : index
    %c0_64 = arith.constant 0 : index
    %81 = vector.load %arg10[%c160_63, %c0_64] : memref<416x256xbf16, #tpu.memory_space<vmem>>, vector<32x208xbf16>
    tpu.vector_store %arg10[%c160_63, %c0_64], %80 {strides = array<i32>} : memref<416x256xbf16, #tpu.memory_space<vmem>>, vector<32x208xbf16>,
    %c384 = arith.constant 384 : index
    %c0_65 = arith.constant 0 : index
    %82 = vector.load %arg9[%c384, %c0_65] : memref<832x512xf32, #tpu.memory_space<vmem>>, vector<32x208xf32>
    %c384_66 = arith.constant 384 : index
    %c256_67 = arith.constant 256 : index
    %83 = vector.load %arg9[%c384_66, %c256_67] : memref<832x512xf32, #tpu.memory_space<vmem>>, vector<32x208xf32>
    %84 = arith.maximumf %82, %83 : vector<32x208xf32>
    %c416 = arith.constant 416 : index
    %c0_68 = arith.constant 0 : index
    %85 = vector.load %arg9[%c416, %c0_68] : memref<832x512xf32, #tpu.memory_space<vmem>>, vector<32x208xf32>
    %c416_69 = arith.constant 416 : index
    %c256_70 = arith.constant 256 : index
    %86 = vector.load %arg9[%c416_69, %c256_70] : memref<832x512xf32, #tpu.memory_space<vmem>>, vector<32x208xf32>
    %87 = arith.maximumf %85, %86 : vector<32x208xf32>
    %88 = arith.maximumf %84, %87 : vector<32x208xf32>
    %89 = arith.addf %88, %9 : vector<32x208xf32>
    %cst_71 = arith.constant 0.000000e+00 : f32
    %90 = vector.broadcast %cst_71 : f32 to vector<32x208xf32>
    %91 = arith.maximumf %89, %90 : vector<32x208xf32>
    %92 = arith.truncf %91 : vector<32x208xf32> to vector<32x208xbf16>
    %c192_72 = arith.constant 192 : index
    %c0_73 = arith.constant 0 : index
    %93 = vector.load %arg10[%c192_72, %c0_73] : memref<416x256xbf16, #tpu.memory_space<vmem>>, vector<32x208xbf16>
    tpu.vector_store %arg10[%c192_72, %c0_73], %92 {strides = array<i32>} : memref<416x256xbf16, #tpu.memory_space<vmem>>, vector<32x208xbf16>,
    %c448 = arith.constant 448 : index
    %c0_74 = arith.constant 0 : index
    %94 = vector.load %arg9[%c448, %c0_74] : memref<832x512xf32, #tpu.memory_space<vmem>>, vector<32x208xf32>
    %c448_75 = arith.constant 448 : index
    %c256_76 = arith.constant 256 : index
    %95 = vector.load %arg9[%c448_75, %c256_76] : memref<832x512xf32, #tpu.memory_space<vmem>>, vector<32x208xf32>
    %96 = arith.maximumf %94, %95 : vector<32x208xf32>
    %c480 = arith.constant 480 : index
    %c0_77 = arith.constant 0 : index
    %97 = vector.load %arg9[%c480, %c0_77] : memref<832x512xf32, #tpu.memory_space<vmem>>, vector<32x208xf32>
    %c480_78 = arith.constant 480 : index
    %c256_79 = arith.constant 256 : index
    %98 = vector.load %arg9[%c480_78, %c256_79] : memref<832x512xf32, #tpu.memory_space<vmem>>, vector<32x208xf32>
    %99 = arith.maximumf %97, %98 : vector<32x208xf32>
    %100 = arith.maximumf %96, %99 : vector<32x208xf32>
    %101 = arith.addf %100, %9 : vector<32x208xf32>
    %cst_80 = arith.constant 0.000000e+00 : f32
    %102 = vector.broadcast %cst_80 : f32 to vector<32x208xf32>
    %103 = arith.maximumf %101, %102 : vector<32x208xf32>
    %104 = arith.truncf %103 : vector<32x208xf32> to vector<32x208xbf16>
    %c224_81 = arith.constant 224 : index
    %c0_82 = arith.constant 0 : index
    %105 = vector.load %arg10[%c224_81, %c0_82] : memref<416x256xbf16, #tpu.memory_space<vmem>>, vector<32x208xbf16>
    tpu.vector_store %arg10[%c224_81, %c0_82], %104 {strides = array<i32>} : memref<416x256xbf16, #tpu.memory_space<vmem>>, vector<32x208xbf16>,
    %c512 = arith.constant 512 : index
    %c0_83 = arith.constant 0 : index
    %106 = vector.load %arg9[%c512, %c0_83] : memref<832x512xf32, #tpu.memory_space<vmem>>, vector<32x208xf32>
    %c512_84 = arith.constant 512 : index
    %c256_85 = arith.constant 256 : index
    %107 = vector.load %arg9[%c512_84, %c256_85] : memref<832x512xf32, #tpu.memory_space<vmem>>, vector<32x208xf32>
    %108 = arith.maximumf %106, %107 : vector<32x208xf32>
    %c544 = arith.constant 544 : index
    %c0_86 = arith.constant 0 : index
    %109 = vector.load %arg9[%c544, %c0_86] : memref<832x512xf32, #tpu.memory_space<vmem>>, vector<32x208xf32>
    %c544_87 = arith.constant 544 : index
    %c256_88 = arith.constant 256 : index
    %110 = vector.load %arg9[%c544_87, %c256_88] : memref<832x512xf32, #tpu.memory_space<vmem>>, vector<32x208xf32>
    %111 = arith.maximumf %109, %110 : vector<32x208xf32>
    %112 = arith.maximumf %108, %111 : vector<32x208xf32>
    %113 = arith.addf %112, %9 : vector<32x208xf32>
    %cst_89 = arith.constant 0.000000e+00 : f32
    %114 = vector.broadcast %cst_89 : f32 to vector<32x208xf32>
    %115 = arith.maximumf %113, %114 : vector<32x208xf32>
    %116 = arith.truncf %115 : vector<32x208xf32> to vector<32x208xbf16>
    %c256_90 = arith.constant 256 : index
    %c0_91 = arith.constant 0 : index
    %117 = vector.load %arg10[%c256_90, %c0_91] : memref<416x256xbf16, #tpu.memory_space<vmem>>, vector<32x208xbf16>
    tpu.vector_store %arg10[%c256_90, %c0_91], %116 {strides = array<i32>} : memref<416x256xbf16, #tpu.memory_space<vmem>>, vector<32x208xbf16>,
    %c576 = arith.constant 576 : index
    %c0_92 = arith.constant 0 : index
    %118 = vector.load %arg9[%c576, %c0_92] : memref<832x512xf32, #tpu.memory_space<vmem>>, vector<32x208xf32>
    %c576_93 = arith.constant 576 : index
    %c256_94 = arith.constant 256 : index
    %119 = vector.load %arg9[%c576_93, %c256_94] : memref<832x512xf32, #tpu.memory_space<vmem>>, vector<32x208xf32>
    %120 = arith.maximumf %118, %119 : vector<32x208xf32>
    %c608 = arith.constant 608 : index
    %c0_95 = arith.constant 0 : index
    %121 = vector.load %arg9[%c608, %c0_95] : memref<832x512xf32, #tpu.memory_space<vmem>>, vector<32x208xf32>
    %c608_96 = arith.constant 608 : index
    %c256_97 = arith.constant 256 : index
    %122 = vector.load %arg9[%c608_96, %c256_97] : memref<832x512xf32, #tpu.memory_space<vmem>>, vector<32x208xf32>
    %123 = arith.maximumf %121, %122 : vector<32x208xf32>
    %124 = arith.maximumf %120, %123 : vector<32x208xf32>
    %125 = arith.addf %124, %9 : vector<32x208xf32>
    %cst_98 = arith.constant 0.000000e+00 : f32
    %126 = vector.broadcast %cst_98 : f32 to vector<32x208xf32>
    %127 = arith.maximumf %125, %126 : vector<32x208xf32>
    %128 = arith.truncf %127 : vector<32x208xf32> to vector<32x208xbf16>
    %c288_99 = arith.constant 288 : index
    %c0_100 = arith.constant 0 : index
    %129 = vector.load %arg10[%c288_99, %c0_100] : memref<416x256xbf16, #tpu.memory_space<vmem>>, vector<32x208xbf16>
    tpu.vector_store %arg10[%c288_99, %c0_100], %128 {strides = array<i32>} : memref<416x256xbf16, #tpu.memory_space<vmem>>, vector<32x208xbf16>,
    %c640 = arith.constant 640 : index
    %c0_101 = arith.constant 0 : index
    %130 = vector.load %arg9[%c640, %c0_101] : memref<832x512xf32, #tpu.memory_space<vmem>>, vector<32x208xf32>
    %c640_102 = arith.constant 640 : index
    %c256_103 = arith.constant 256 : index
    %131 = vector.load %arg9[%c640_102, %c256_103] : memref<832x512xf32, #tpu.memory_space<vmem>>, vector<32x208xf32>
    %132 = arith.maximumf %130, %131 : vector<32x208xf32>
    %c672 = arith.constant 672 : index
    %c0_104 = arith.constant 0 : index
    %133 = vector.load %arg9[%c672, %c0_104] : memref<832x512xf32, #tpu.memory_space<vmem>>, vector<32x208xf32>
    %c672_105 = arith.constant 672 : index
    %c256_106 = arith.constant 256 : index
    %134 = vector.load %arg9[%c672_105, %c256_106] : memref<832x512xf32, #tpu.memory_space<vmem>>, vector<32x208xf32>
    %135 = arith.maximumf %133, %134 : vector<32x208xf32>
    %136 = arith.maximumf %132, %135 : vector<32x208xf32>
    %137 = arith.addf %136, %9 : vector<32x208xf32>
    %cst_107 = arith.constant 0.000000e+00 : f32
    %138 = vector.broadcast %cst_107 : f32 to vector<32x208xf32>
    %139 = arith.maximumf %137, %138 : vector<32x208xf32>
    %140 = arith.truncf %139 : vector<32x208xf32> to vector<32x208xbf16>
    %c320_108 = arith.constant 320 : index
    %c0_109 = arith.constant 0 : index
    %141 = vector.load %arg10[%c320_108, %c0_109] : memref<416x256xbf16, #tpu.memory_space<vmem>>, vector<32x208xbf16>
    tpu.vector_store %arg10[%c320_108, %c0_109], %140 {strides = array<i32>} : memref<416x256xbf16, #tpu.memory_space<vmem>>, vector<32x208xbf16>,
    %c704 = arith.constant 704 : index
    %c0_110 = arith.constant 0 : index
    %142 = vector.load %arg9[%c704, %c0_110] : memref<832x512xf32, #tpu.memory_space<vmem>>, vector<32x208xf32>
    %c704_111 = arith.constant 704 : index
    %c256_112 = arith.constant 256 : index
    %143 = vector.load %arg9[%c704_111, %c256_112] : memref<832x512xf32, #tpu.memory_space<vmem>>, vector<32x208xf32>
    %144 = arith.maximumf %142, %143 : vector<32x208xf32>
    %c736 = arith.constant 736 : index
    %c0_113 = arith.constant 0 : index
    %145 = vector.load %arg9[%c736, %c0_113] : memref<832x512xf32, #tpu.memory_space<vmem>>, vector<32x208xf32>
    %c736_114 = arith.constant 736 : index
    %c256_115 = arith.constant 256 : index
    %146 = vector.load %arg9[%c736_114, %c256_115] : memref<832x512xf32, #tpu.memory_space<vmem>>, vector<32x208xf32>
    %147 = arith.maximumf %145, %146 : vector<32x208xf32>
    %148 = arith.maximumf %144, %147 : vector<32x208xf32>
    %149 = arith.addf %148, %9 : vector<32x208xf32>
    %cst_116 = arith.constant 0.000000e+00 : f32
    %150 = vector.broadcast %cst_116 : f32 to vector<32x208xf32>
    %151 = arith.maximumf %149, %150 : vector<32x208xf32>
    %152 = arith.truncf %151 : vector<32x208xf32> to vector<32x208xbf16>
    %c352_117 = arith.constant 352 : index
    %c0_118 = arith.constant 0 : index
    %153 = vector.load %arg10[%c352_117, %c0_118] : memref<416x256xbf16, #tpu.memory_space<vmem>>, vector<32x208xbf16>
    tpu.vector_store %arg10[%c352_117, %c0_118], %152 {strides = array<i32>} : memref<416x256xbf16, #tpu.memory_space<vmem>>, vector<32x208xbf16>,
    %c768 = arith.constant 768 : index
    %c0_119 = arith.constant 0 : index
    %154 = vector.load %arg9[%c768, %c0_119] : memref<832x512xf32, #tpu.memory_space<vmem>>, vector<32x208xf32>
    %c768_120 = arith.constant 768 : index
    %c256_121 = arith.constant 256 : index
    %155 = vector.load %arg9[%c768_120, %c256_121] : memref<832x512xf32, #tpu.memory_space<vmem>>, vector<32x208xf32>
    %156 = arith.maximumf %154, %155 : vector<32x208xf32>
    %c800 = arith.constant 800 : index
    %c0_122 = arith.constant 0 : index
    %157 = vector.load %arg9[%c800, %c0_122] : memref<832x512xf32, #tpu.memory_space<vmem>>, vector<32x208xf32>
    %c800_123 = arith.constant 800 : index
    %c256_124 = arith.constant 256 : index
    %158 = vector.load %arg9[%c800_123, %c256_124] : memref<832x512xf32, #tpu.memory_space<vmem>>, vector<32x208xf32>
    %159 = arith.maximumf %157, %158 : vector<32x208xf32>
    %160 = arith.maximumf %156, %159 : vector<32x208xf32>
    %161 = arith.addf %160, %9 : vector<32x208xf32>
    %cst_125 = arith.constant 0.000000e+00 : f32
    %162 = vector.broadcast %cst_125 : f32 to vector<32x208xf32>
    %163 = arith.maximumf %161, %162 : vector<32x208xf32>
    %164 = arith.truncf %163 : vector<32x208xf32> to vector<32x208xbf16>
    %c384_126 = arith.constant 384 : index
    %c0_127 = arith.constant 0 : index
    %165 = vector.load %arg10[%c384_126, %c0_127] : memref<416x256xbf16, #tpu.memory_space<vmem>>, vector<32x208xbf16>
    tpu.vector_store %arg10[%c384_126, %c0_127], %164 {strides = array<i32>} : memref<416x256xbf16, #tpu.memory_space<vmem>>, vector<32x208xbf16>,
    %c0_128 = arith.constant 0 : index
    %c0_129 = arith.constant 0 : index
    %166 = vector.load %arg10[%c0_128, %c0_129] : memref<416x256xbf16, #tpu.memory_space<vmem>>, vector<320x256xbf16>
    %c0_130 = arith.constant 0 : index
    %c0_131 = arith.constant 0 : index
    %c0_132 = arith.constant 0 : index
    %167 = vector.load %arg4[%c0_130, %c0_131, %c0_132] : memref<3x256x416xbf16, #tpu.memory_space<vmem>>, vector<1x256x416xbf16>
    %168 = vector.shape_cast %167 : vector<1x256x416xbf16> to vector<256x416xbf16>
    %cst_133 = arith.constant dense<0.000000e+00> : vector<320x416xf32>
    %169 = tpu.matmul %166, %168, %cst_133 {dimension_numbers = #tpu.dot_dimension_numbers<[1], [0], [0], [1], [0, 0, 1, 1], [], []>} : vector<320x256xbf16>, vector<256x416xbf16>, vector<320x416xf32> -> vector<320x416xf32>
    %c32_134 = arith.constant 32 : index
    %c0_135 = arith.constant 0 : index
    %170 = vector.load %arg10[%c32_134, %c0_135] : memref<416x256xbf16, #tpu.memory_space<vmem>>, vector<320x256xbf16>
    %c1 = arith.constant 1 : index
    %c0_136 = arith.constant 0 : index
    %c0_137 = arith.constant 0 : index
    %171 = vector.load %arg4[%c1, %c0_136, %c0_137] : memref<3x256x416xbf16, #tpu.memory_space<vmem>>, vector<1x256x416xbf16>
    %172 = vector.shape_cast %171 : vector<1x256x416xbf16> to vector<256x416xbf16>
    %cst_138 = arith.constant dense<0.000000e+00> : vector<320x416xf32>
    %173 = tpu.matmul %170, %172, %cst_138 {dimension_numbers = #tpu.dot_dimension_numbers<[1], [0], [0], [1], [0, 0, 1, 1], [], []>} : vector<320x256xbf16>, vector<256x416xbf16>, vector<320x416xf32> -> vector<320x416xf32>
    %174 = arith.addf %169, %173 : vector<320x416xf32>
    %c64_139 = arith.constant 64 : index
    %c0_140 = arith.constant 0 : index
    %175 = vector.load %arg10[%c64_139, %c0_140] : memref<416x256xbf16, #tpu.memory_space<vmem>>, vector<320x256xbf16>
    %c2 = arith.constant 2 : index
    %c0_141 = arith.constant 0 : index
    %c0_142 = arith.constant 0 : index
    %176 = vector.load %arg4[%c2, %c0_141, %c0_142] : memref<3x256x416xbf16, #tpu.memory_space<vmem>>, vector<1x256x416xbf16>
    %177 = vector.shape_cast %176 : vector<1x256x416xbf16> to vector<256x416xbf16>
    %cst_143 = arith.constant dense<0.000000e+00> : vector<320x416xf32>
    %178 = tpu.matmul %175, %177, %cst_143 {dimension_numbers = #tpu.dot_dimension_numbers<[1], [0], [0], [1], [0, 0, 1, 1], [], []>} : vector<320x256xbf16>, vector<256x416xbf16>, vector<320x416xf32> -> vector<320x416xf32>
    %179 = arith.addf %174, %178 : vector<320x416xf32>
    %c0_144 = arith.constant 0 : index
    %c0_145 = arith.constant 0 : index
    %180 = vector.load %arg11[%c0_144, %c0_145] : memref<320x416xf32, #tpu.memory_space<vmem>>, vector<320x416xf32>
    tpu.vector_store %arg11[%c0_144, %c0_145], %179 {strides = array<i32>} : memref<320x416xf32, #tpu.memory_space<vmem>>, vector<320x416xf32>,
    %c0_146 = arith.constant 0 : index
    %c0_147 = arith.constant 0 : index
    %181 = vector.load %arg5[%c0_146, %c0_147] : memref<1x160xf32, #tpu.memory_space<vmem>>, vector<1x160xf32>
    %182 = vector.shape_cast %181 : vector<1x160xf32> to vector<1x160xf32>
    %183 = vector.broadcast %182 : vector<1x160xf32> to vector<32x160xf32>
    %cst_148 = arith.constant 0.000000e+00 : f32
    %184 = vector.broadcast %cst_148 : f32 to vector<32x128xf32>
    %c0_149 = arith.constant 0 : index
    %c0_150 = arith.constant 0 : index
    %185 = vector.load %arg11[%c0_149, %c0_150] : memref<320x416xf32, #tpu.memory_space<vmem>>, vector<32x160xf32>
    %c0_151 = arith.constant 0 : index
    %c256_152 = arith.constant 256 : index
    %186 = vector.load %arg11[%c0_151, %c256_152] : memref<320x416xf32, #tpu.memory_space<vmem>>, vector<32x160xf32>
    %187 = arith.maximumf %185, %186 : vector<32x160xf32>
    %c32_153 = arith.constant 32 : index
    %c0_154 = arith.constant 0 : index
    %188 = vector.load %arg11[%c32_153, %c0_154] : memref<320x416xf32, #tpu.memory_space<vmem>>, vector<32x160xf32>
    %c32_155 = arith.constant 32 : index
    %c256_156 = arith.constant 256 : index
    %189 = vector.load %arg11[%c32_155, %c256_156] : memref<320x416xf32, #tpu.memory_space<vmem>>, vector<32x160xf32>
    %190 = arith.maximumf %188, %189 : vector<32x160xf32>
    %191 = arith.maximumf %187, %190 : vector<32x160xf32>
    %192 = arith.addf %191, %183 : vector<32x160xf32>
    %cst_157 = arith.constant 0.000000e+00 : f32
    %193 = vector.broadcast %cst_157 : f32 to vector<32x160xf32>
    %194 = arith.maximumf %192, %193 : vector<32x160xf32>
    %195 = arith.truncf %194 : vector<32x160xf32> to vector<32x160xbf16>
    %c0_158 = arith.constant 0 : index
    %c0_159 = arith.constant 0 : index
    %c0_160 = arith.constant 0 : index
    %196 = vector.load %arg6[%c0_158, %c0_159, %c0_160] : memref<5x160x128xbf16, #tpu.memory_space<vmem>>, vector<1x160x128xbf16>
    %197 = vector.shape_cast %196 : vector<1x160x128xbf16> to vector<160x128xbf16>
    %cst_161 = arith.constant dense<0.000000e+00> : vector<32x128xf32>
    %198 = tpu.matmul %195, %197, %cst_161 {dimension_numbers = #tpu.dot_dimension_numbers<[1], [0], [0], [1], [0, 0, 1, 1], [], []>} : vector<32x160xbf16>, vector<160x128xbf16>, vector<32x128xf32> -> vector<32x128xf32>
    %199 = arith.addf %184, %198 : vector<32x128xf32>
    %c64_162 = arith.constant 64 : index
    %c0_163 = arith.constant 0 : index
    %200 = vector.load %arg11[%c64_162, %c0_163] : memref<320x416xf32, #tpu.memory_space<vmem>>, vector<32x160xf32>
    %c64_164 = arith.constant 64 : index
    %c256_165 = arith.constant 256 : index
    %201 = vector.load %arg11[%c64_164, %c256_165] : memref<320x416xf32, #tpu.memory_space<vmem>>, vector<32x160xf32>
    %202 = arith.maximumf %200, %201 : vector<32x160xf32>
    %c96_166 = arith.constant 96 : index
    %c0_167 = arith.constant 0 : index
    %203 = vector.load %arg11[%c96_166, %c0_167] : memref<320x416xf32, #tpu.memory_space<vmem>>, vector<32x160xf32>
    %c96_168 = arith.constant 96 : index
    %c256_169 = arith.constant 256 : index
    %204 = vector.load %arg11[%c96_168, %c256_169] : memref<320x416xf32, #tpu.memory_space<vmem>>, vector<32x160xf32>
    %205 = arith.maximumf %203, %204 : vector<32x160xf32>
    %206 = arith.maximumf %202, %205 : vector<32x160xf32>
    %207 = arith.addf %206, %183 : vector<32x160xf32>
    %cst_170 = arith.constant 0.000000e+00 : f32
    %208 = vector.broadcast %cst_170 : f32 to vector<32x160xf32>
    %209 = arith.maximumf %207, %208 : vector<32x160xf32>
    %210 = arith.truncf %209 : vector<32x160xf32> to vector<32x160xbf16>
    %c1_171 = arith.constant 1 : index
    %c0_172 = arith.constant 0 : index
    %c0_173 = arith.constant 0 : index
    %211 = vector.load %arg6[%c1_171, %c0_172, %c0_173] : memref<5x160x128xbf16, #tpu.memory_space<vmem>>, vector<1x160x128xbf16>
    %212 = vector.shape_cast %211 : vector<1x160x128xbf16> to vector<160x128xbf16>
    %cst_174 = arith.constant dense<0.000000e+00> : vector<32x128xf32>
    %213 = tpu.matmul %210, %212, %cst_174 {dimension_numbers = #tpu.dot_dimension_numbers<[1], [0], [0], [1], [0, 0, 1, 1], [], []>} : vector<32x160xbf16>, vector<160x128xbf16>, vector<32x128xf32> -> vector<32x128xf32>
    %214 = arith.addf %199, %213 : vector<32x128xf32>
    %c128_175 = arith.constant 128 : index
    %c0_176 = arith.constant 0 : index
    %215 = vector.load %arg11[%c128_175, %c0_176] : memref<320x416xf32, #tpu.memory_space<vmem>>, vector<32x160xf32>
    %c128_177 = arith.constant 128 : index
    %c256_178 = arith.constant 256 : index
    %216 = vector.load %arg11[%c128_177, %c256_178] : memref<320x416xf32, #tpu.memory_space<vmem>>, vector<32x160xf32>
    %217 = arith.maximumf %215, %216 : vector<32x160xf32>
    %c160_179 = arith.constant 160 : index
    %c0_180 = arith.constant 0 : index
    %218 = vector.load %arg11[%c160_179, %c0_180] : memref<320x416xf32, #tpu.memory_space<vmem>>, vector<32x160xf32>
    %c160_181 = arith.constant 160 : index
    %c256_182 = arith.constant 256 : index
    %219 = vector.load %arg11[%c160_181, %c256_182] : memref<320x416xf32, #tpu.memory_space<vmem>>, vector<32x160xf32>
    %220 = arith.maximumf %218, %219 : vector<32x160xf32>
    %221 = arith.maximumf %217, %220 : vector<32x160xf32>
    %222 = arith.addf %221, %183 : vector<32x160xf32>
    %cst_183 = arith.constant 0.000000e+00 : f32
    %223 = vector.broadcast %cst_183 : f32 to vector<32x160xf32>
    %224 = arith.maximumf %222, %223 : vector<32x160xf32>
    %225 = arith.truncf %224 : vector<32x160xf32> to vector<32x160xbf16>
    %c2_184 = arith.constant 2 : index
    %c0_185 = arith.constant 0 : index
    %c0_186 = arith.constant 0 : index
    %226 = vector.load %arg6[%c2_184, %c0_185, %c0_186] : memref<5x160x128xbf16, #tpu.memory_space<vmem>>, vector<1x160x128xbf16>
    %227 = vector.shape_cast %226 : vector<1x160x128xbf16> to vector<160x128xbf16>
    %cst_187 = arith.constant dense<0.000000e+00> : vector<32x128xf32>
    %228 = tpu.matmul %225, %227, %cst_187 {dimension_numbers = #tpu.dot_dimension_numbers<[1], [0], [0], [1], [0, 0, 1, 1], [], []>} : vector<32x160xbf16>, vector<160x128xbf16>, vector<32x128xf32> -> vector<32x128xf32>
    %229 = arith.addf %214, %228 : vector<32x128xf32>
    %c192_188 = arith.constant 192 : index
    %c0_189 = arith.constant 0 : index
    %230 = vector.load %arg11[%c192_188, %c0_189] : memref<320x416xf32, #tpu.memory_space<vmem>>, vector<32x160xf32>
    %c192_190 = arith.constant 192 : index
    %c256_191 = arith.constant 256 : index
    %231 = vector.load %arg11[%c192_190, %c256_191] : memref<320x416xf32, #tpu.memory_space<vmem>>, vector<32x160xf32>
    %232 = arith.maximumf %230, %231 : vector<32x160xf32>
    %c224_192 = arith.constant 224 : index
    %c0_193 = arith.constant 0 : index
    %233 = vector.load %arg11[%c224_192, %c0_193] : memref<320x416xf32, #tpu.memory_space<vmem>>, vector<32x160xf32>
    %c224_194 = arith.constant 224 : index
    %c256_195 = arith.constant 256 : index
    %234 = vector.load %arg11[%c224_194, %c256_195] : memref<320x416xf32, #tpu.memory_space<vmem>>, vector<32x160xf32>
    %235 = arith.maximumf %233, %234 : vector<32x160xf32>
    %236 = arith.maximumf %232, %235 : vector<32x160xf32>
    %237 = arith.addf %236, %183 : vector<32x160xf32>
    %cst_196 = arith.constant 0.000000e+00 : f32
    %238 = vector.broadcast %cst_196 : f32 to vector<32x160xf32>
    %239 = arith.maximumf %237, %238 : vector<32x160xf32>
    %240 = arith.truncf %239 : vector<32x160xf32> to vector<32x160xbf16>
    %c3 = arith.constant 3 : index
    %c0_197 = arith.constant 0 : index
    %c0_198 = arith.constant 0 : index
    %241 = vector.load %arg6[%c3, %c0_197, %c0_198] : memref<5x160x128xbf16, #tpu.memory_space<vmem>>, vector<1x160x128xbf16>
    %242 = vector.shape_cast %241 : vector<1x160x128xbf16> to vector<160x128xbf16>
    %cst_199 = arith.constant dense<0.000000e+00> : vector<32x128xf32>
    %243 = tpu.matmul %240, %242, %cst_199 {dimension_numbers = #tpu.dot_dimension_numbers<[1], [0], [0], [1], [0, 0, 1, 1], [], []>} : vector<32x160xbf16>, vector<160x128xbf16>, vector<32x128xf32> -> vector<32x128xf32>
    %244 = arith.addf %229, %243 : vector<32x128xf32>
    %c256_200 = arith.constant 256 : index
    %c0_201 = arith.constant 0 : index
    %245 = vector.load %arg11[%c256_200, %c0_201] : memref<320x416xf32, #tpu.memory_space<vmem>>, vector<32x160xf32>
    %c256_202 = arith.constant 256 : index
    %c256_203 = arith.constant 256 : index
    %246 = vector.load %arg11[%c256_202, %c256_203] : memref<320x416xf32, #tpu.memory_space<vmem>>, vector<32x160xf32>
    %247 = arith.maximumf %245, %246 : vector<32x160xf32>
    %c288_204 = arith.constant 288 : index
    %c0_205 = arith.constant 0 : index
    %248 = vector.load %arg11[%c288_204, %c0_205] : memref<320x416xf32, #tpu.memory_space<vmem>>, vector<32x160xf32>
    %c288_206 = arith.constant 288 : index
    %c256_207 = arith.constant 256 : index
    %249 = vector.load %arg11[%c288_206, %c256_207] : memref<320x416xf32, #tpu.memory_space<vmem>>, vector<32x160xf32>
    %250 = arith.maximumf %248, %249 : vector<32x160xf32>
    %251 = arith.maximumf %247, %250 : vector<32x160xf32>
    %252 = arith.addf %251, %183 : vector<32x160xf32>
    %cst_208 = arith.constant 0.000000e+00 : f32
    %253 = vector.broadcast %cst_208 : f32 to vector<32x160xf32>
    %254 = arith.maximumf %252, %253 : vector<32x160xf32>
    %255 = arith.truncf %254 : vector<32x160xf32> to vector<32x160xbf16>
    %c4 = arith.constant 4 : index
    %c0_209 = arith.constant 0 : index
    %c0_210 = arith.constant 0 : index
    %256 = vector.load %arg6[%c4, %c0_209, %c0_210] : memref<5x160x128xbf16, #tpu.memory_space<vmem>>, vector<1x160x128xbf16>
    %257 = vector.shape_cast %256 : vector<1x160x128xbf16> to vector<160x128xbf16>
    %cst_211 = arith.constant dense<0.000000e+00> : vector<32x128xf32>
    %258 = tpu.matmul %255, %257, %cst_211 {dimension_numbers = #tpu.dot_dimension_numbers<[1], [0], [0], [1], [0, 0, 1, 1], [], []>} : vector<32x160xbf16>, vector<160x128xbf16>, vector<32x128xf32> -> vector<32x128xf32>
    %259 = arith.addf %244, %258 : vector<32x128xf32>
    %c0_212 = arith.constant 0 : index
    %c0_213 = arith.constant 0 : index
    %260 = vector.load %arg7[%c0_212, %c0_213] : memref<1x128xf32, #tpu.memory_space<vmem>>, vector<1x128xf32>
    %261 = vector.broadcast %260 : vector<1x128xf32> to vector<32x128xf32>
    %262 = arith.addf %259, %261 : vector<32x128xf32>
    %c0_214 = arith.constant 0 : index
    %c0_215 = arith.constant 0 : index
    %263 = vector.load %arg8[%c0_214, %c0_215] : memref<32x128xf32, #tpu.memory_space<vmem>>, vector<32x128xf32>
    tpu.vector_store %arg8[%c0_214, %c0_215], %262 {strides = array<i32>} : memref<32x128xf32, #tpu.memory_space<vmem>>, vector<32x128xf32>,
    return
  }
  func.func @transform_0(%arg0: i32) -> (i32, i32, i32) {
    %c0_i32 = arith.constant 0 : i32
    %c0_i32_0 = arith.constant 0 : i32
    %c0_i32_1 = arith.constant 0 : i32
    return %arg0, %c0_i32, %c0_i32_0 : i32, i32, i32
  }
  func.func @transform_1(%arg0: i32) -> (i32, i32) {
    %c0_i32 = arith.constant 0 : i32
    %c0_i32_0 = arith.constant 0 : i32
    %c0_i32_1 = arith.constant 0 : i32
    return %c0_i32, %c0_i32_0 : i32, i32
  }
  func.func @transform_2(%arg0: i32) -> (i32, i32) {
    %c0_i32 = arith.constant 0 : i32
    %c0_i32_0 = arith.constant 0 : i32
    %c0_i32_1 = arith.constant 0 : i32
    return %c0_i32, %c0_i32_0 : i32, i32
  }
  func.func @transform_3(%arg0: i32) -> (i32, i32, i32) {
    %c0_i32 = arith.constant 0 : i32
    %c0_i32_0 = arith.constant 0 : i32
    %c0_i32_1 = arith.constant 0 : i32
    %c0_i32_2 = arith.constant 0 : i32
    return %c0_i32, %c0_i32_0, %c0_i32_1 : i32, i32, i32
  }
  func.func @transform_4(%arg0: i32) -> (i32, i32) {
    %c0_i32 = arith.constant 0 : i32
    %c0_i32_0 = arith.constant 0 : i32
    %c0_i32_1 = arith.constant 0 : i32
    return %c0_i32, %c0_i32_0 : i32, i32
  }
  func.func @transform_5(%arg0: i32) -> (i32, i32, i32) {
    %c0_i32 = arith.constant 0 : i32
    %c0_i32_0 = arith.constant 0 : i32
    %c0_i32_1 = arith.constant 0 : i32
    %c0_i32_2 = arith.constant 0 : i32
    return %c0_i32, %c0_i32_0, %c0_i32_1 : i32, i32, i32
  }
  func.func @transform_6(%arg0: i32) -> (i32, i32) {
    %c0_i32 = arith.constant 0 : i32
    %c0_i32_0 = arith.constant 0 : i32
    %c0_i32_1 = arith.constant 0 : i32
    return %c0_i32, %c0_i32_0 : i32, i32
  }
  func.func @transform_7(%arg0: i32) -> (i32, i32) {
    %c0_i32 = arith.constant 0 : i32
    %c0_i32_0 = arith.constant 0 : i32
    return %arg0, %c0_i32 : i32, i32
  }
}

</mosaic_0001>

<llo_original>
// kernel: tpu_custom_call.1
$region0: #{tpu_custom_call.1}
  #allocation0 [shape = 'u32[]', space=smem, size = 0x4, offset = 0x4, fixed_abs, tag = 'smem constant byte address 0x4 - core index']
  #allocation1 [shape = 'u32[144,128]{1,0:T(1,128)}', space=vmem, size = 0x12000, scoped, tag = 'internal scratch']
  #allocation2 [shape = 'f32[832,512]{1,0:T(8,128)}', space=vmem, size = 0x1a0000, scoped, tag = 'scratch operand']
  #allocation3 [shape = 'bf16[416,256]{1,0:T(16,128)(2,1)}', space=vmem, size = 0x34000, scoped, tag = 'scratch operand']
  #allocation4 [shape = 'f32[320,416]{1,0:T(8,128)}', space=vmem, size = 0xa0000, scoped, tag = 'scratch operand']
  %s0 = inlined_call_operand.vmem [shape: bf16[2,832,84], index: 0, kind: input, shape index: {}]
  %s1 = inlined_call_operand.vmem [shape: bf16[84,512], index: 1, kind: input, shape index: {}]
  %s2 = inlined_call_operand.vmem [shape: f32[1,208], index: 2, kind: input, shape index: {}]
  %s3 = inlined_call_operand.vmem [shape: bf16[3,256,416], index: 3, kind: input, shape index: {}]
  %s4 = inlined_call_operand.vmem [shape: f32[1,160], index: 4, kind: input, shape index: {}]
  %s5 = inlined_call_operand.vmem [shape: bf16[5,160,128], index: 5, kind: input, shape index: {}]
  %s6 = inlined_call_operand.vmem [shape: f32[1,128], index: 6, kind: input, shape index: {}]
  %s7 = inlined_call_operand.hbm [shape: f32[64,128], index: 7, kind: output, shape index: {}]
  %s8 = sld [smem:[#allocation0]]
  $region61: #{tpu_custom_call.1} parent=0
    _
  %s10 = ssub.s32 1, %s8
  %s11 = scalar_select 0, %s10, %s8
  $region1: #{tpu_custom_call.1} parent=0
    #allocation5 [shape = 'u8[32768]{0}', space=vmem, size = 0x8000, scoped, tag = 'output window, operand 0']
    #allocation6 [shape = 's32[2]{0}', space=sflag, size = 0x8, scoped, tag = 'scoped memory for tpu_custom_call.1']
    %12 = vsyncpa [#allocation6], 0
    %s13 = scalar_lea.sflag [#allocation6], 1
    %14 = vsyncpa %s13, 0
    loop: start=0, step=1, limit=4
    $region2: #{tpu_custom_call.1} parent=1 // loop_pre_header
      _
    $region3: #{tpu_custom_call.1} parent=1 // loop_header
      %s16 = sphi 0, %s20
      %p17 = scmp.ge.s32.totalorder %s16, 4
      %s26 = sphi 0, %s28
      %s29 = sphi 0, %s26
      %s30 = sphi 0, %s29
      %s46 = sphi 0, %s30
      %s50 = sphi 0, %s50
      %s52 = sphi 0, %s50
      %s53 = sphi 0, %s52
      %s67 = sphi 0, %s53
      %s71 = sphi 0, %s71
      %s73 = sphi 0, %s71
      %s74 = sphi 0, %s73
      %s88 = sphi 0, %s74
      %s92 = sphi 0, %s92
      %s94 = sphi 0, %s92
      %s95 = sphi 0, %s94
      %s109 = sphi 0, %s95
      %s113 = sphi 0, %s113
      %s115 = sphi 0, %s113
      %s116 = sphi 0, %s115
      %s130 = sphi 0, %s116
      %s134 = sphi 0, %s134
      %s136 = sphi 0, %s134
      %s137 = sphi 0, %s136
      %s151 = sphi 0, %s137
      %s155 = sphi 0, %s155
      %s157 = sphi 0, %s155
      %s158 = sphi 0, %s157
      %s172 = sphi 0, %s158
      %s178 = sphi 0, %s180
      %s181 = sphi 0, %s178
      %s182 = sphi 0, %s181
      %s198 = sphi 0, %s182
    $region4: #{tpu_custom_call.1} parent=1 // loop_header_branch
      %19 = sbr.rel (%p17) target = $region8
    $region5: #{tpu_custom_call.1} parent=1 // loop_body
      %s21 = ssub.s32 %s16, 1
      %s22 = ssub.s32 %s16, 2
      %s23 = sadd.s32 %s16, 1
      %s24 = ssub.s32 %s16, %s23
      %p25 = scmp.eq.s32.totalorder %s24, 0
      %s27 = sadd.s32 %s26, 1
      %s28 = scalar_select %p25, %s26, %s27
      %p31 = pneg %p25
      %p32 = scmp.eq.s32.totalorder %s16, 1
      %p33 = por %p31, %p32
      %p34 = scmp.ne.s32.totalorder %s26, %s29
      %p35 = scmp.eq.s32.totalorder %s16, 0
      %p36 = por %p34, %p35
      %p37 = scmp.ne.s32.totalorder %s26, %s29
      %p38 = scmp.eq.s32.totalorder %s21, 1
      %p39 = por %p37, %p38
      %p40 = scmp.ne.s32.totalorder %s29, %s30
      %p41 = scmp.eq.s32.totalorder %s21, 0
      %p42 = por %p40, %p41
      %p43 = scmp.ne.s32.totalorder %s29, %s30
      %p44 = scmp.eq.s32.totalorder %s22, 1
      %p45 = por %p43, %p44
      %p47 = scmp.ne.s32.totalorder %s30, %s46
      %p48 = scmp.eq.s32.totalorder %s22, 0
      %p49 = por %p47, %p48
      %s51 = sadd.s32 %s50, 1
      %p54 = scmp.eq.s32.totalorder %s16, 1
      %p55 = scmp.ne.s32.totalorder %s50, %s52
      %p56 = scmp.eq.s32.totalorder %s16, 0
      %p57 = por %p55, %p56
      %p58 = scmp.ne.s32.totalorder %s50, %s52
      %p59 = scmp.eq.s32.totalorder %s21, 1
      %p60 = por %p58, %p59
      %p61 = scmp.ne.s32.totalorder %s52, %s53
      %p62 = scmp.eq.s32.totalorder %s21, 0
      %p63 = por %p61, %p62
      %p64 = scmp.ne.s32.totalorder %s52, %s53
      %p65 = scmp.eq.s32.totalorder %s22, 1
      %p66 = por %p64, %p65
      %p68 = scmp.ne.s32.totalorder %s53, %s67
      %p69 = scmp.eq.s32.totalorder %s22, 0
      %p70 = por %p68, %p69
      %s72 = sadd.s32 %s71, 1
      %p75 = scmp.eq.s32.totalorder %s16, 1
      %p76 = scmp.ne.s32.totalorder %s71, %s73
      %p77 = scmp.eq.s32.totalorder %s16, 0
      %p78 = por %p76, %p77
      %p79 = scmp.ne.s32.totalorder %s71, %s73
      %p80 = scmp.eq.s32.totalorder %s21, 1
      %p81 = por %p79, %p80
      %p82 = scmp.ne.s32.totalorder %s73, %s74
      %p83 = scmp.eq.s32.totalorder %s21, 0
      %p84 = por %p82, %p83
      %p85 = scmp.ne.s32.totalorder %s73, %s74
      %p86 = scmp.eq.s32.totalorder %s22, 1
      %p87 = por %p85, %p86
      %p89 = scmp.ne.s32.totalorder %s74, %s88
      %p90 = scmp.eq.s32.totalorder %s22, 0
      %p91 = por %p89, %p90
      %s93 = sadd.s32 %s92, 1
      %p96 = scmp.eq.s32.totalorder %s16, 1
      %p97 = scmp.ne.s32.totalorder %s92, %s94
      %p98 = scmp.eq.s32.totalorder %s16, 0
      %p99 = por %p97, %p98
      %p100 = scmp.ne.s32.totalorder %s92, %s94
      %p101 = scmp.eq.s32.totalorder %s21, 1
      %p102 = por %p100, %p101
      %p103 = scmp.ne.s32.totalorder %s94, %s95
      %p104 = scmp.eq.s32.totalorder %s21, 0
      %p105 = por %p103, %p104
      %p106 = scmp.ne.s32.totalorder %s94, %s95
      %p107 = scmp.eq.s32.totalorder %s22, 1
      %p108 = por %p106, %p107
      %p110 = scmp.ne.s32.totalorder %s95, %s109
      %p111 = scmp.eq.s32.totalorder %s22, 0
      %p112 = por %p110, %p111
      %s114 = sadd.s32 %s113, 1
      %p117 = scmp.eq.s32.totalorder %s16, 1
      %p118 = scmp.ne.s32.totalorder %s113, %s115
      %p119 = scmp.eq.s32.totalorder %s16, 0
      %p120 = por %p118, %p119
      %p121 = scmp.ne.s32.totalorder %s113, %s115
      %p122 = scmp.eq.s32.totalorder %s21, 1
      %p123 = por %p121, %p122
      %p124 = scmp.ne.s32.totalorder %s115, %s116
      %p125 = scmp.eq.s32.totalorder %s21, 0
      %p126 = por %p124, %p125
      %p127 = scmp.ne.s32.totalorder %s115, %s116
      %p128 = scmp.eq.s32.totalorder %s22, 1
      %p129 = por %p127, %p128
      %p131 = scmp.ne.s32.totalorder %s116, %s130
      %p132 = scmp.eq.s32.totalorder %s22, 0
      %p133 = por %p131, %p132
      %s135 = sadd.s32 %s134, 1
      %p138 = scmp.eq.s32.totalorder %s16, 1
      %p139 = scmp.ne.s32.totalorder %s134, %s136
      %p140 = scmp.eq.s32.totalorder %s16, 0
      %p141 = por %p139, %p140
      %p142 = scmp.ne.s32.totalorder %s134, %s136
      %p143 = scmp.eq.s32.totalorder %s21, 1
      %p144 = por %p142, %p143
      %p145 = scmp.ne.s32.totalorder %s136, %s137
      %p146 = scmp.eq.s32.totalorder %s21, 0
      %p147 = por %p145, %p146
      %p148 = scmp.ne.s32.totalorder %s136, %s137
      %p149 = scmp.eq.s32.totalorder %s22, 1
      %p150 = por %p148, %p149
      %p152 = scmp.ne.s32.totalorder %s137, %s151
      %p153 = scmp.eq.s32.totalorder %s22, 0
      %p154 = por %p152, %p153
      %s156 = sadd.s32 %s155, 1
      %p159 = scmp.eq.s32.totalorder %s16, 1
      %p160 = scmp.ne.s32.totalorder %s155, %s157
      %p161 = scmp.eq.s32.totalorder %s16, 0
      %p162 = por %p160, %p161
      %p163 = scmp.ne.s32.totalorder %s155, %s157
      %p164 = scmp.eq.s32.totalorder %s21, 1
      %p165 = por %p163, %p164
      %p166 = scmp.ne.s32.totalorder %s157, %s158
      %p167 = scmp.eq.s32.totalorder %s21, 0
      %p168 = por %p166, %p167
      %p169 = scmp.ne.s32.totalorder %s157, %s158
      %p170 = scmp.eq.s32.totalorder %s22, 1
      %p171 = por %p169, %p170
      %p173 = scmp.ne.s32.totalorder %s158, %s172
      %p174 = scmp.eq.s32.totalorder %s22, 0
      %p175 = por %p173, %p174
      %s176 = ssub.s32 %s16, %s23
      %p177 = scmp.eq.s32.totalorder %s176, 0
      %s179 = sadd.s32 %s178, 1
      %s180 = scalar_select %p177, %s178, %s179
      %p183 = pneg %p177
      %p184 = scmp.eq.s32.totalorder %s16, 1
      %p185 = por %p183, %p184
      %p186 = scmp.ne.s32.totalorder %s178, %s181
      %p187 = scmp.eq.s32.totalorder %s16, 0
      %p188 = por %p186, %p187
      %p189 = scmp.ne.s32.totalorder %s178, %s181
      %p190 = scmp.eq.s32.totalorder %s21, 1
      %p191 = por %p189, %p190
      %p192 = scmp.ne.s32.totalorder %s181, %s182
      %p193 = scmp.eq.s32.totalorder %s21, 0
      %p194 = por %p192, %p193
      %p195 = scmp.ne.s32.totalorder %s181, %s182
      %p196 = scmp.eq.s32.totalorder %s22, 1
      %p197 = por %p195, %p196
      %p199 = scmp.ne.s32.totalorder %s182, %s198
      %p200 = scmp.eq.s32.totalorder %s22, 0
      %p201 = por %p199, %p200
      %p202 = scmp.le.s32.totalorder 1, %s16
      %p203 = scmp.lt.s32.totalorder %s16, 3
      %p204 = pnand %p202, %p203
      %p205 = pneg %p204
      // Predicated region
      $region9: #{tpu_custom_call.1} parent=5 // pred_check
        _
      $region10: #{tpu_custom_call.1} parent=5 // pred_check_branch
        %207 = sbr.rel (%p204) target = $region12
      $region11: #{tpu_custom_call.1} parent=5 // pred_region
        %s208 = ssub.s32 %s16, 1
        // Predicated region
        $region13: #{tpu_custom_call.1} parent=11 // pred_check
          %p209 = pneg %p63
        $region14: #{tpu_custom_call.1} parent=11 // pred_check_branch
          %211 = sbr.rel (%p209) target = $region16
        $region15: #{tpu_custom_call.1} parent=11 // pred_region
          _
        $region16: #{tpu_custom_call.1} parent=11 // pred_fallthru
          _
        // Predicated region
        $region17: #{tpu_custom_call.1} parent=11 // pred_check
          %p212 = pneg %p84
        $region18: #{tpu_custom_call.1} parent=11 // pred_check_branch
          %214 = sbr.rel (%p212) target = $region20
        $region19: #{tpu_custom_call.1} parent=11 // pred_region
          _
        $region20: #{tpu_custom_call.1} parent=11 // pred_fallthru
          _
        // Predicated region
        $region21: #{tpu_custom_call.1} parent=11 // pred_check
          %p215 = pneg %p105
        $region22: #{tpu_custom_call.1} parent=11 // pred_check_branch
          %217 = sbr.rel (%p215) target = $region24
        $region23: #{tpu_custom_call.1} parent=11 // pred_region
          _
        $region24: #{tpu_custom_call.1} parent=11 // pred_fallthru
          _
        // Predicated region
        $region25: #{tpu_custom_call.1} parent=11 // pred_check
          %p218 = pneg %p126
        $region26: #{tpu_custom_call.1} parent=11 // pred_check_branch
          %220 = sbr.rel (%p218) target = $region28
        $region27: #{tpu_custom_call.1} parent=11 // pred_region
          _
        $region28: #{tpu_custom_call.1} parent=11 // pred_fallthru
          _
        // Predicated region
        $region29: #{tpu_custom_call.1} parent=11 // pred_check
          %p221 = pneg %p147
        $region30: #{tpu_custom_call.1} parent=11 // pred_check_branch
          %223 = sbr.rel (%p221) target = $region32
        $region31: #{tpu_custom_call.1} parent=11 // pred_region
          _
        $region32: #{tpu_custom_call.1} parent=11 // pred_fallthru
          _
        // Predicated region
        $region33: #{tpu_custom_call.1} parent=11 // pred_check
          %p224 = pneg %p168
        $region34: #{tpu_custom_call.1} parent=11 // pred_check_branch
          %226 = sbr.rel (%p224) target = $region36
        $region35: #{tpu_custom_call.1} parent=11 // pred_region
          _
        $region36: #{tpu_custom_call.1} parent=11 // pred_fallthru
          _
      $region12: #{tpu_custom_call.1} parent=5 // pred_fallthru
        _
      %p227 = scmp.lt.s32.totalorder %s16, 2
      // Predicated region
      $region37: #{tpu_custom_call.1} parent=5 // pred_check
        %p228 = pneg %p227
      $region38: #{tpu_custom_call.1} parent=5 // pred_check_branch
        %230 = sbr.rel (%p228) target = $region40
      $region39: #{tpu_custom_call.1} parent=5 // pred_region
        // Predicated region
        $region41: #{tpu_custom_call.1} parent=39 // pred_check
          %p231 = pneg %p36
        $region42: #{tpu_custom_call.1} parent=39 // pred_check_branch
          %233 = sbr.rel (%p231) target = $region44
        $region43: #{tpu_custom_call.1} parent=39 // pred_region
          %p234 = scmp.lt.s32.totalorder %s16, 1
          %s235 = scalar_select %p234, %s16, 1
          %s236 = smul.addr %s235, 104
          %s237 = smul.addr %s236, 4
          %s238 = scalar_lea.vmem %s0, %s237
        $region44: #{tpu_custom_call.1} parent=39 // pred_fallthru
          _
      $region40: #{tpu_custom_call.1} parent=5 // pred_fallthru
        _
      %p239 = scmp.le.s32.totalorder 1, %s16
      %p240 = scmp.lt.s32.totalorder %s16, 3
      %p241 = pnand %p239, %p240
      %p242 = pneg %p241
      // Predicated region
      $region45: #{tpu_custom_call.1} parent=5 // pred_check
        _
      $region46: #{tpu_custom_call.1} parent=5 // pred_check_branch
        %244 = sbr.rel (%p241) target = $region48
      $region47: #{tpu_custom_call.1} parent=5 // pred_region
        %s245 = ssub.s32 %s16, 1
        %p246 = scmp.lt.s32.totalorder %s21, 1
        %s247 = scalar_select %p246, %s21, 1
        %s248 = smul.addr %s247, 104
        %s249 = smul.addr %s248, 4
        %s250 = scalar_lea.vmem %s0, %s249
        %p251 = pneg %p42
        %p252 = pneg %p39
        %p253 = pneg %p63
        %p254 = pneg %p60
        %p255 = pneg %p84
        %p256 = pneg %p81
        %p257 = pneg %p105
        %p258 = pneg %p102
        %p259 = pneg %p126
        %p260 = pneg %p123
        %p261 = pneg %p147
        %p262 = pneg %p144
        %p263 = pneg %p168
        %p264 = pneg %p165
        %p265 = pneg %p194
        %p266 = pneg %p191
        %s267 = sand.u32 %s181, 1
        %s268 = scalar_lea.sflag [#allocation6], %s267
        %s269 = sand.u32 %s181, 1
        %s270 = smul.addr %s269, 32
        %s271 = scalar_lea.vmem [#allocation5], %s270
        %p272 = scmp.lt.s32.totalorder %s21, 1
        %s273 = scalar_select %p272, %s21, 1
        %s274 = smul.addr %s273, 104
        %s275 = smul.addr %s274, 4
        %s276 = scalar_lea.vmem %s0, %s275
        %s277 = smul.u32 4, %s21
        %v279 = vld [vmem:[%s276] sm:$0xf]
        %v280 = vld [vmem:[%s276 + $0x4] sm:$0xf]
        %v281 = vld [vmem:[%s276 + $0x8] sm:$0xf]
        %v282 = vld [vmem:[%s276 + $0xc] sm:$0xf]
        %v283 = vld [vmem:[%s276 + $0x10] sm:$0xf]
        %v284 = vld [vmem:[%s276 + $0x14] sm:$0xf]
        %v285 = vld [vmem:[%s276 + $0x18] sm:$0xf]
        %v286 = vld [vmem:[%s276 + $0x1c] sm:$0xf]
        %v287 = vld [vmem:[%s276 + $0x20] sm:$0xf]
        %v288 = vld [vmem:[%s276 + $0x24] sm:$0xf]
        %v289 = vld [vmem:[%s276 + $0x28] sm:$0xf]
        %v290 = vld [vmem:[%s276 + $0x2c] sm:$0xf]
        %v291 = vld [vmem:[%s276 + $0x30] sm:$0xf]
        %v292 = vld [vmem:[%s276 + $0x34] sm:$0xf]
        %v293 = vld [vmem:[%s276 + $0x38] sm:$0xf]
        %v294 = vld [vmem:[%s276 + $0x3c] sm:$0xf]
        %v295 = vld [vmem:[%s276 + $0x40] sm:$0xf]
        %v296 = vld [vmem:[%s276 + $0x44] sm:$0xf]
        %v297 = vld [vmem:[%s276 + $0x48] sm:$0xf]
        %v298 = vld [vmem:[%s276 + $0x4c] sm:$0xf]
        %v299 = vld [vmem:[%s276 + $0x50] sm:$0xf]
        %v300 = vld [vmem:[%s276 + $0x54] sm:$0xf]
        %v301 = vld [vmem:[%s276 + $0x58] sm:$0xf]
        %v302 = vld [vmem:[%s276 + $0x5c] sm:$0xf]
        %v303 = vld [vmem:[%s276 + $0x60] sm:$0xf]
        %v304 = vld [vmem:[%s276 + $0x64] sm:$0xf]
        %v305 = vld [vmem:[%s276 + $0x68] sm:$0xf]
        %v306 = vld [vmem:[%s276 + $0x6c] sm:$0xf]
        %v307 = vld [vmem:[%s276 + $0x70] sm:$0xf]
        %v308 = vld [vmem:[%s276 + $0x74] sm:$0xf]
        %v309 = vld [vmem:[%s276 + $0x78] sm:$0xf]
        %v310 = vld [vmem:[%s276 + $0x7c] sm:$0xf]
        %v311 = vld [vmem:[%s276 + $0x80] sm:$0xf]
        %v312 = vld [vmem:[%s276 + $0x84] sm:$0xf]
        %v313 = vld [vmem:[%s276 + $0x88] sm:$0xf]
        %v314 = vld [vmem:[%s276 + $0x8c] sm:$0xf]
        %v315 = vld [vmem:[%s276 + $0x90] sm:$0xf]
        %v316 = vld [vmem:[%s276 + $0x94] sm:$0xf]
        %v317 = vld [vmem:[%s276 + $0x98] sm:$0xf]
        %v318 = vld [vmem:[%s276 + $0x9c] sm:$0xf]
        %v319 = vld [vmem:[%s276 + $0xa0] sm:$0xf]
        %v320 = vld [vmem:[%s276 + $0xa4] sm:$0xf]
        %v321 = vld [vmem:[%s276 + $0xa8] sm:$0xf]
        %v322 = vld [vmem:[%s276 + $0xac] sm:$0xf]
        %v323 = vld [vmem:[%s276 + $0xb0] sm:$0xf]
        %v324 = vld [vmem:[%s276 + $0xb4] sm:$0xf]
        %v325 = vld [vmem:[%s276 + $0xb8] sm:$0xf]
        %v326 = vld [vmem:[%s276 + $0xbc] sm:$0xf]
        %v327 = vld [vmem:[%s276 + $0xc0] sm:$0xf]
        %v328 = vld [vmem:[%s276 + $0xc4] sm:$0xf]
        %v329 = vld [vmem:[%s276 + $0xc8] sm:$0xf]
        %v330 = vld [vmem:[%s276 + $0xcc] sm:$0xf]
        %v331 = vld [vmem:[%s276 + $0xd0] sm:$0xf]
        %v332 = vld [vmem:[%s276 + $0xd4] sm:$0xf]
        %v333 = vld [vmem:[%s276 + $0xd8] sm:$0xf]
        %v334 = vld [vmem:[%s276 + $0xdc] sm:$0xf]
        %v335 = vld [vmem:[%s276 + $0xe0] sm:$0xf]
        %v336 = vld [vmem:[%s276 + $0xe4] sm:$0xf]
        %v337 = vld [vmem:[%s276 + $0xe8] sm:$0xf]
        %v338 = vld [vmem:[%s276 + $0xec] sm:$0xf]
        %v339 = vld [vmem:[%s276 + $0xf0] sm:$0xf]
        %v340 = vld [vmem:[%s276 + $0xf4] sm:$0xf]
        %v341 = vld [vmem:[%s276 + $0xf8] sm:$0xf]
        %v342 = vld [vmem:[%s276 + $0xfc] sm:$0xf]
        %v343 = vld [vmem:[%s276 + $0x100] sm:$0xf]
        %v344 = vld [vmem:[%s276 + $0x104] sm:$0xf]
        %v345 = vld [vmem:[%s276 + $0x108] sm:$0xf]
        %v346 = vld [vmem:[%s276 + $0x10c] sm:$0xf]
        %v347 = vld [vmem:[%s276 + $0x110] sm:$0xf]
        %v348 = vld [vmem:[%s276 + $0x114] sm:$0xf]
        %v349 = vld [vmem:[%s276 + $0x118] sm:$0xf]
        %v350 = vld [vmem:[%s276 + $0x11c] sm:$0xf]
        %v351 = vld [vmem:[%s276 + $0x120] sm:$0xf]
        %v352 = vld [vmem:[%s276 + $0x124] sm:$0xf]
        %v353 = vld [vmem:[%s276 + $0x128] sm:$0xf]
        %v354 = vld [vmem:[%s276 + $0x12c] sm:$0xf]
        %v355 = vld [vmem:[%s276 + $0x130] sm:$0xf]
        %v356 = vld [vmem:[%s276 + $0x134] sm:$0xf]
        %v357 = vld [vmem:[%s276 + $0x138] sm:$0xf]
        %v358 = vld [vmem:[%s276 + $0x13c] sm:$0xf]
        %v359 = vld [vmem:[%s276 + $0x140] sm:$0xf]
        %v360 = vld [vmem:[%s276 + $0x144] sm:$0xf]
        %v361 = vld [vmem:[%s276 + $0x148] sm:$0xf]
        %v362 = vld [vmem:[%s276 + $0x14c] sm:$0xf]
        %v363 = vld [vmem:[%s276 + $0x150] sm:$0xf]
        %v364 = vld [vmem:[%s276 + $0x154] sm:$0xf]
        %v365 = vld [vmem:[%s276 + $0x158] sm:$0xf]
        %v366 = vld [vmem:[%s276 + $0x15c] sm:$0xf]
        %v367 = vld [vmem:[%s276 + $0x160] sm:$0xf]
        %v368 = vld [vmem:[%s276 + $0x164] sm:$0xf]
        %v369 = vld [vmem:[%s276 + $0x168] sm:$0xf]
        %v370 = vld [vmem:[%s276 + $0x16c] sm:$0xf]
        %v371 = vld [vmem:[%s276 + $0x170] sm:$0xf]
        %v372 = vld [vmem:[%s276 + $0x174] sm:$0xf]
        %v373 = vld [vmem:[%s276 + $0x178] sm:$0xf]
        %v374 = vld [vmem:[%s276 + $0x17c] sm:$0xf]
        %v375 = vld [vmem:[%s276 + $0x180] sm:$0xf]
        %v376 = vld [vmem:[%s276 + $0x184] sm:$0xf]
        %v377 = vld [vmem:[%s276 + $0x188] sm:$0xf]
        %v378 = vld [vmem:[%s276 + $0x18c] sm:$0xf]
        %v379 = vld [vmem:[%s276 + $0x190] sm:$0xf]
        %v380 = vld [vmem:[%s276 + $0x194] sm:$0xf]
        %v381 = vld [vmem:[%s276 + $0x198] sm:$0xf]
        %v382 = vld [vmem:[%s276 + $0x19c] sm:$0xf]
        %v383 = vld [vmem:[%s1] sm:$0xff]
        %v384 = vld [vmem:[%s1 + $0x8] sm:$0xff]
        %v385 = vld [vmem:[%s1 + $0x10] sm:$0xff]
        %v386 = vld [vmem:[%s1 + $0x18] sm:$0xff]
        %v387 = vld [vmem:[%s1 + $0x20] sm:$0xff]
        %v388 = vld [vmem:[%s1 + $0x28] sm:$0xff]
        %v389 = vld [vmem:[%s1 + $0x30] sm:$0xff]
        %v390 = vld [vmem:[%s1 + $0x38] sm:$0xff]
        %v391 = vld [vmem:[%s1 + $0x40] sm:$0xff]
        %v392 = vld [vmem:[%s1 + $0x48] sm:$0xff]
        %v393 = vld [vmem:[%s1 + $0x50] sm:$0xff]
        %v394 = vld [vmem:[%s1 + $0x58] sm:$0xff]
        %v395 = vld [vmem:[%s1 + $0x60] sm:$0xff]
        %v396 = vld [vmem:[%s1 + $0x68] sm:$0xff]
        %v397 = vld [vmem:[%s1 + $0x70] sm:$0xff]
        %v398 = vld [vmem:[%s1 + $0x78] sm:$0xff]
        %v399 = vld [vmem:[%s1 + $0x80] sm:$0xff]
        %v400 = vld [vmem:[%s1 + $0x88] sm:$0xff]
        %v401 = vld [vmem:[%s1 + $0x90] sm:$0xff]
        %v402 = vld [vmem:[%s1 + $0x98] sm:$0xff]
        %v403 = vld [vmem:[%s1 + $0xa0] sm:$0x33]
        %v404 = vld [vmem:[%s1 + $0xa8] sm:$0x33]
        %v509 = vunpack.c.l.b16 %v279
        %v510 = vunpack.c.l.b16 %v280
        %v511 = vunpack.c.l.b16 %v281
        %v512 = vunpack.c.l.b16 %v282
        %v513 = vunpack.c.l.b16 %v283
        %v514 = vunpack.c.l.b16 %v284
        %v515 = vunpack.c.l.b16 %v285
        %v516 = vunpack.c.l.b16 %v286
        %v517 = vunpack.c.l.b16 %v287
        %v518 = vunpack.c.l.b16 %v288
        %v519 = vunpack.c.l.b16 %v289
        %v520 = vunpack.c.l.b16 %v290
        %v521 = vunpack.c.l.b16 %v291
        %v522 = vunpack.c.l.b16 %v292
        %v523 = vunpack.c.l.b16 %v293
        %v524 = vunpack.c.l.b16 %v294
        %v525 = vunpack.c.l.b16 %v295
        %v526 = vunpack.c.l.b16 %v296
        %v527 = vunpack.c.l.b16 %v297
        %v528 = vunpack.c.l.b16 %v298
        %v529 = vunpack.c.l.b16 %v299
        %v530 = vunpack.c.l.b16 %v300
        %v531 = vunpack.c.l.b16 %v301
        %v532 = vunpack.c.l.b16 %v302
        %v533 = vunpack.c.l.b16 %v303
        %v534 = vunpack.c.l.b16 %v304
        %v535 = vunpack.c.l.b16 %v305
        %v536 = vunpack.c.l.b16 %v306
        %v537 = vunpack.c.l.b16 %v307
        %v538 = vunpack.c.l.b16 %v308
        %v539 = vunpack.c.l.b16 %v309
        %v540 = vunpack.c.l.b16 %v310
        %v541 = vunpack.c.l.b16 %v311
        %v542 = vunpack.c.l.b16 %v312
        %v543 = vunpack.c.l.b16 %v313
        %v544 = vunpack.c.l.b16 %v314
        %v545 = vunpack.c.l.b16 %v315
        %v546 = vunpack.c.l.b16 %v316
        %v547 = vunpack.c.l.b16 %v317
        %v548 = vunpack.c.l.b16 %v318
        %v549 = vunpack.c.l.b16 %v319
        %v550 = vunpack.c.l.b16 %v320
        %v551 = vunpack.c.l.b16 %v321
        %v552 = vunpack.c.l.b16 %v322
        %v553 = vunpack.c.l.b16 %v323
        %v554 = vunpack.c.l.b16 %v324
        %v555 = vunpack.c.l.b16 %v325
        %v556 = vunpack.c.l.b16 %v326
        %v557 = vunpack.c.l.b16 %v327
        %v558 = vunpack.c.l.b16 %v328
        %v559 = vunpack.c.l.b16 %v329
        %v560 = vunpack.c.l.b16 %v330
        %v561 = vunpack.c.l.b16 %v331
        %v562 = vunpack.c.l.b16 %v332
        %v563 = vunpack.c.l.b16 %v333
        %v564 = vunpack.c.l.b16 %v334
        %v565 = vunpack.c.l.b16 %v335
        %v566 = vunpack.c.l.b16 %v336
        %v567 = vunpack.c.l.b16 %v337
        %v568 = vunpack.c.l.b16 %v338
        %v569 = vunpack.c.l.b16 %v339
        %v570 = vunpack.c.l.b16 %v340
        %v571 = vunpack.c.l.b16 %v341
        %v572 = vunpack.c.l.b16 %v342
        %v573 = vunpack.c.l.b16 %v343
        %v574 = vunpack.c.l.b16 %v344
        %v575 = vunpack.c.l.b16 %v345
        %v576 = vunpack.c.l.b16 %v346
        %v577 = vunpack.c.l.b16 %v347
        %v578 = vunpack.c.l.b16 %v348
        %v579 = vunpack.c.l.b16 %v349
        %v580 = vunpack.c.l.b16 %v350
        %v581 = vunpack.c.l.b16 %v351
        %v582 = vunpack.c.l.b16 %v352
        %v583 = vunpack.c.l.b16 %v353
        %v584 = vunpack.c.l.b16 %v354
        %v585 = vunpack.c.l.b16 %v355
        %v586 = vunpack.c.l.b16 %v356
        %v587 = vunpack.c.l.b16 %v357
        %v588 = vunpack.c.l.b16 %v358
        %v589 = vunpack.c.l.b16 %v359
        %v590 = vunpack.c.l.b16 %v360
        %v591 = vunpack.c.l.b16 %v361
        %v592 = vunpack.c.l.b16 %v362
        %v593 = vunpack.c.l.b16 %v363
        %v594 = vunpack.c.l.b16 %v364
        %v595 = vunpack.c.l.b16 %v365
        %v596 = vunpack.c.l.b16 %v366
        %v597 = vunpack.c.l.b16 %v367
        %v598 = vunpack.c.l.b16 %v368
        %v599 = vunpack.c.l.b16 %v369
        %v600 = vunpack.c.l.b16 %v370
        %v601 = vunpack.c.l.b16 %v371
        %v602 = vunpack.c.l.b16 %v372
        %v603 = vunpack.c.l.b16 %v373
        %v604 = vunpack.c.l.b16 %v374
        %v605 = vunpack.c.l.b16 %v375
        %v606 = vunpack.c.l.b16 %v376
        %v607 = vunpack.c.l.b16 %v377
        %v608 = vunpack.c.l.b16 %v378
        %v609 = vunpack.c.l.b16 %v379
        %v610 = vunpack.c.l.b16 %v380
        %v611 = vunpack.c.l.b16 %v381
        %v612 = vunpack.c.l.b16 %v382
        %v613 = vpack.c.b16 %v510, %v509
        %v614 = vpack.c.b16 %v512, %v511
        %v615 = vpack.c.b16 %v514, %v513
        %v616 = vpack.c.b16 %v516, %v515
        %v617 = vpack.c.b16 %v518, %v517
        %v618 = vpack.c.b16 %v520, %v519
        %v619 = vpack.c.b16 %v522, %v521
        %v620 = vpack.c.b16 %v524, %v523
        %v621 = vpack.c.b16 %v526, %v525
        %v622 = vpack.c.b16 %v528, %v527
        %v623 = vpack.c.b16 %v530, %v529
        %v624 = vpack.c.b16 %v532, %v531
        %v625 = vpack.c.b16 %v534, %v533
        %v626 = vpack.c.b16 %v536, %v535
        %v627 = vpack.c.b16 %v538, %v537
        %v628 = vpack.c.b16 %v540, %v539
        %v629 = vpack.c.b16 %v542, %v541
        %v630 = vpack.c.b16 %v544, %v543
        %v631 = vpack.c.b16 %v546, %v545
        %v632 = vpack.c.b16 %v548, %v547
        %v633 = vpack.c.b16 %v550, %v549
        %v634 = vpack.c.b16 %v552, %v551
        %v635 = vpack.c.b16 %v554, %v553
        %v636 = vpack.c.b16 %v556, %v555
        %v637 = vpack.c.b16 %v558, %v557
        %v638 = vpack.c.b16 %v560, %v559
        %v639 = vpack.c.b16 %v562, %v561
        %v640 = vpack.c.b16 %v564, %v563
        %v641 = vpack.c.b16 %v566, %v565
        %v642 = vpack.c.b16 %v568, %v567
        %v643 = vpack.c.b16 %v570, %v569
        %v644 = vpack.c.b16 %v572, %v571
        %v645 = vpack.c.b16 %v574, %v573
        %v646 = vpack.c.b16 %v576, %v575
        %v647 = vpack.c.b16 %v578, %v577
        %v648 = vpack.c.b16 %v580, %v579
        %v649 = vpack.c.b16 %v582, %v581
        %v650 = vpack.c.b16 %v584, %v583
        %v651 = vpack.c.b16 %v586, %v585
        %v652 = vpack.c.b16 %v588, %v587
        %v653 = vpack.c.b16 %v590, %v589
        %v654 = vpack.c.b16 %v592, %v591
        %v655 = vpack.c.b16 %v594, %v593
        %v656 = vpack.c.b16 %v596, %v595
        %v657 = vpack.c.b16 %v598, %v597
        %v658 = vpack.c.b16 %v600, %v599
        %v659 = vpack.c.b16 %v602, %v601
        %v660 = vpack.c.b16 %v604, %v603
        %v661 = vpack.c.b16 %v606, %v605
        %v662 = vpack.c.b16 %v608, %v607
        %v663 = vpack.c.b16 %v610, %v609
        %v664 = vpack.c.b16 %v612, %v611
        %v687 = vunpack.c.l.b16 %v383
        %v688 = vunpack.c.h.b16 %v383
        %v689 = vunpack.c.l.b16 %v384
        %v690 = vunpack.c.h.b16 %v384
        %v691 = vunpack.c.l.b16 %v385
        %v692 = vunpack.c.h.b16 %v385
        %v693 = vunpack.c.l.b16 %v386
        %v694 = vunpack.c.h.b16 %v386
        %v695 = vunpack.c.l.b16 %v387
        %v696 = vunpack.c.h.b16 %v387
        %v697 = vunpack.c.l.b16 %v388
        %v698 = vunpack.c.h.b16 %v388
        %v699 = vunpack.c.l.b16 %v389
        %v700 = vunpack.c.h.b16 %v389
        %v701 = vunpack.c.l.b16 %v390
        %v702 = vunpack.c.h.b16 %v390
        %v703 = vunpack.c.l.b16 %v391
        %v704 = vunpack.c.h.b16 %v391
        %v705 = vunpack.c.l.b16 %v392
        %v706 = vunpack.c.h.b16 %v392
        %v707 = vunpack.c.l.b16 %v393
        %v708 = vunpack.c.h.b16 %v393
        %v709 = vunpack.c.l.b16 %v394
        %v710 = vunpack.c.h.b16 %v394
        %v711 = vunpack.c.l.b16 %v395
        %v712 = vunpack.c.h.b16 %v395
        %v713 = vunpack.c.l.b16 %v396
        %v714 = vunpack.c.h.b16 %v396
        %v715 = vunpack.c.l.b16 %v397
        %v716 = vunpack.c.h.b16 %v397
        %v717 = vunpack.c.l.b16 %v398
        %v718 = vunpack.c.h.b16 %v398
        %v719 = vunpack.c.l.b16 %v399
        %v720 = vunpack.c.h.b16 %v399
        %v721 = vunpack.c.l.b16 %v400
        %v722 = vunpack.c.h.b16 %v400
        %v723 = vunpack.c.l.b16 %v401
        %v724 = vunpack.c.h.b16 %v401
        %v725 = vunpack.c.l.b16 %v402
        %v726 = vunpack.c.h.b16 %v402
        %v727 = vunpack.c.l.b16 %v403
        %v728 = vunpack.c.h.b16 %v403
        %v729 = vunpack.c.l.b16 %v404
        %v730 = vunpack.c.h.b16 %v404
        %v731 = vpack.c.b16 %v691, %v687
        %v732 = vpack.c.b16 %v692, %v688
        %v733 = vpack.c.b16 %v693, %v689
        %v734 = vpack.c.b16 %v694, %v690
        %v735 = vpack.c.b16 %v699, %v695
        %v736 = vpack.c.b16 %v700, %v696
        %v737 = vpack.c.b16 %v701, %v697
        %v738 = vpack.c.b16 %v702, %v698
        %v739 = vpack.c.b16 %v707, %v703
        %v740 = vpack.c.b16 %v708, %v704
        %v741 = vpack.c.b16 %v709, %v705
        %v742 = vpack.c.b16 %v710, %v706
        %v743 = vpack.c.b16 %v715, %v711
        %v744 = vpack.c.b16 %v716, %v712
        %v745 = vpack.c.b16 %v717, %v713
        %v746 = vpack.c.b16 %v718, %v714
        %v747 = vpack.c.b16 %v723, %v719
        %v748 = vpack.c.b16 %v724, %v720
        %v749 = vpack.c.b16 %v725, %v721
        %v750 = vpack.c.b16 %v726, %v722
        %v751 = vpack.c.b16 %v727, %v727
        %v752 = vpack.c.b16 %v728, %v728
        %v753 = vpack.c.b16 %v729, %v729
        %v754 = vpack.c.b16 %v730, %v730
        %vm775 = vcmask 687104
        %v777 = vsel %vm775, %v613, 0
        %v780 = vsel %vm775, %v614, 0
        %v783 = vsel %vm775, %v615, 0
        %v786 = vsel %vm775, %v616, 0
        %v789 = vsel %vm775, %v617, 0
        %v792 = vsel %vm775, %v618, 0
        %v795 = vsel %vm775, %v619, 0
        %v798 = vsel %vm775, %v620, 0
        %v801 = vsel %vm775, %v621, 0
        %v804 = vsel %vm775, %v622, 0
        %v807 = vsel %vm775, %v623, 0
        %v810 = vsel %vm775, %v624, 0
        %v813 = vsel %vm775, %v625, 0
        %v816 = vsel %vm775, %v626, 0
        %v819 = vsel %vm775, %v627, 0
        %v822 = vsel %vm775, %v628, 0
        %v825 = vsel %vm775, %v629, 0
        %v828 = vsel %vm775, %v630, 0
        %v831 = vsel %vm775, %v631, 0
        %v834 = vsel %vm775, %v632, 0
        %v837 = vsel %vm775, %v633, 0
        %v840 = vsel %vm775, %v634, 0
        %v843 = vsel %vm775, %v635, 0
        %v846 = vsel %vm775, %v636, 0
        %v849 = vsel %vm775, %v637, 0
        %v852 = vsel %vm775, %v638, 0
        %v855 = vsel %vm775, %v639, 0
        %v858 = vsel %vm775, %v640, 0
        %v861 = vsel %vm775, %v641, 0
        %v864 = vsel %vm775, %v642, 0
        %v867 = vsel %vm775, %v643, 0
        %v870 = vsel %vm775, %v644, 0
        %v873 = vsel %vm775, %v645, 0
        %v876 = vsel %vm775, %v646, 0
        %v879 = vsel %vm775, %v647, 0
        %v882 = vsel %vm775, %v648, 0
        %v885 = vsel %vm775, %v649, 0
        %v888 = vsel %vm775, %v650, 0
        %v891 = vsel %vm775, %v651, 0
        %v894 = vsel %vm775, %v652, 0
        %v897 = vsel %vm775, %v653, 0
        %v900 = vsel %vm775, %v654, 0
        %v903 = vsel %vm775, %v655, 0
        %v906 = vsel %vm775, %v656, 0
        %v909 = vsel %vm775, %v657, 0
        %v912 = vsel %vm775, %v658, 0
        %v915 = vsel %vm775, %v659, 0
        %v918 = vsel %vm775, %v660, 0
        %v921 = vsel %vm775, %v661, 0
        %v924 = vsel %vm775, %v662, 0
        %v927 = vsel %vm775, %v663, 0
        %v930 = vsel %vm775, %v664, 0
        %vm932 = vcmask 1041408
        %v934 = vsel %vm932, %v751, 0
        %v937 = vsel %vm932, %v752, 0
        %v940 = vsel %vm932, %v753, 0
        %v943 = vsel %vm932, %v754, 0
        %945 = vmatprep.subr.bf16.mxu0 %v732
        %946 = vmatpush1.bf16.msra.mxu0 %v731
        %947 = vmatprep.subr.bf16.mxu0 %v736
        %948 = vmatpush1.bf16.msra.mxu0 %v735
        %949 = vmatprep.subr.bf16.mxu0 %v740
        %950 = vmatpush1.bf16.msra.mxu0 %v739
        %951 = vmatprep.subr.bf16.mxu0 %v744
        %952 = vmatpush1.bf16.msra.mxu0 %v743
        %953 = vmatprep.subr.bf16.mxu0 %v748
        %954 = vmatpush1.bf16.msra.mxu0 %v747
        %955 = vmatprep.subr.bf16.mxu0 %v937
        %956 = vmatpush1.bf16.msra.mxu0 %v934
        %957 = vmatprep.subr.bf16.mxu0 0
        %958 = vmatpush1.bf16.msra.mxu0 0
        %959 = vmatprep.subr.bf16.mxu0 0
        %960 = vmatpush1.bf16.msra.mxu0 0
        %961 = vmatprep.subr.bf16.mxu0 0
        %962 = vmatpush1.bf16.msra.mxu0 0
        %963 = vmatprep.subr.bf16.mxu0 0
        %964 = vmatpush1.bf16.msra.mxu0 0
        %965 = vmatprep.subr.bf16.mxu0 0
        %966 = vmatpush1.bf16.msra.mxu0 0
        %967 = vmatprep.subr.bf16.mxu0 0
        %968 = vmatpush1.bf16.msra.mxu0 0
        %969 = vmatprep.subr.bf16.mxu0 0
        %970 = vmatpush1.bf16.msra.mxu0 0
        %971 = vmatprep.subr.bf16.mxu0 0
        %972 = vmatpush1.bf16.msra.mxu0 0
        %973 = vmatprep.subr.bf16.mxu0 0
        %974 = vmatpush1.bf16.msra.mxu0 0
        %975 = vmatprep.subr.bf16.mxu0 0
        %976 = vmatpush1.bf16.msra.mxu0 0
        %977 = vmatprep.mubr.bf16.mxu0 0
        %978 = vmatmul.mubr.bf16.gmra.mrb[0].mxu0 %v777
        %v979 = vpop.f32.mrb[0].mxu0
        %v980 = vadd.f32 0.0, %v979
        %v981 = vpop.f32.mrb[0].mxu0
        %v982 = vadd.f32 0.0, %v981
        %v983 = vpop.f32.mrb[0].mxu0
        %v984 = vadd.f32 0.0, %v983
        %v985 = vpop.f32.mrb[0].mxu0
        %v986 = vadd.f32 0.0, %v985
        %987 = vmatprep.mubr.bf16.mxu0 0
        %988 = vmatmul.mubr.bf16.gmra.mrb[0].mxu0 %v780
        %v989 = vpop.f32.mrb[0].mxu0
        %v990 = vadd.f32 0.0, %v989
        %v991 = vpop.f32.mrb[0].mxu0
        %v992 = vadd.f32 0.0, %v991
        %v993 = vpop.f32.mrb[0].mxu0
        %v994 = vadd.f32 0.0, %v993
        %v995 = vpop.f32.mrb[0].mxu0
        %v996 = vadd.f32 0.0, %v995
        %997 = vmatprep.mubr.bf16.mxu0 0
        %998 = vmatmul.mubr.bf16.gmra.mrb[0].mxu0 %v783
        %v999 = vpop.f32.mrb[0].mxu0
        %v1000 = vadd.f32 0.0, %v999
        %v1001 = vpop.f32.mrb[0].mxu0
        %v1002 = vadd.f32 0.0, %v1001
        %v1003 = vpop.f32.mrb[0].mxu0
        %v1004 = vadd.f32 0.0, %v1003
        %v1005 = vpop.f32.mrb[0].mxu0
        %v1006 = vadd.f32 0.0, %v1005
        %1007 = vmatprep.mubr.bf16.mxu0 0
        %1008 = vmatmul.mubr.bf16.gmra.mrb[0].mxu0 %v786
        %v1009 = vpop.f32.mrb[0].mxu0
        %v1010 = vadd.f32 0.0, %v1009
        %v1011 = vpop.f32.mrb[0].mxu0
        %v1012 = vadd.f32 0.0, %v1011
        %v1013 = vpop.f32.mrb[0].mxu0
        %v1014 = vadd.f32 0.0, %v1013
        %v1015 = vpop.f32.mrb[0].mxu0
        %v1016 = vadd.f32 0.0, %v1015
        %1017 = vmatprep.mubr.bf16.mxu0 0
        %1018 = vmatmul.mubr.bf16.gmra.mrb[0].mxu0 %v789
        %v1019 = vpop.f32.mrb[0].mxu0
        %v1020 = vadd.f32 0.0, %v1019
        %v1021 = vpop.f32.mrb[0].mxu0
        %v1022 = vadd.f32 0.0, %v1021
        %v1023 = vpop.f32.mrb[0].mxu0
        %v1024 = vadd.f32 0.0, %v1023
        %v1025 = vpop.f32.mrb[0].mxu0
        %v1026 = vadd.f32 0.0, %v1025
        %1027 = vmatprep.mubr.bf16.mxu0 0
        %1028 = vmatmul.mubr.bf16.gmra.mrb[0].mxu0 %v792
        %v1029 = vpop.f32.mrb[0].mxu0
        %v1030 = vadd.f32 0.0, %v1029
        %v1031 = vpop.f32.mrb[0].mxu0
        %v1032 = vadd.f32 0.0, %v1031
        %v1033 = vpop.f32.mrb[0].mxu0
        %v1034 = vadd.f32 0.0, %v1033
        %v1035 = vpop.f32.mrb[0].mxu0
        %v1036 = vadd.f32 0.0, %v1035
        %1037 = vmatprep.mubr.bf16.mxu0 0
        %1038 = vmatmul.mubr.bf16.gmra.mrb[0].mxu0 %v795
        %v1039 = vpop.f32.mrb[0].mxu0
        %v1040 = vadd.f32 0.0, %v1039
        %v1041 = vpop.f32.mrb[0].mxu0
        %v1042 = vadd.f32 0.0, %v1041
        %v1043 = vpop.f32.mrb[0].mxu0
        %v1044 = vadd.f32 0.0, %v1043
        %v1045 = vpop.f32.mrb[0].mxu0
        %v1046 = vadd.f32 0.0, %v1045
        %1047 = vmatprep.mubr.bf16.mxu0 0
        %1048 = vmatmul.mubr.bf16.gmra.mrb[0].mxu0 %v798
        %v1049 = vpop.f32.mrb[0].mxu0
        %v1050 = vadd.f32 0.0, %v1049
        %v1051 = vpop.f32.mrb[0].mxu0
        %v1052 = vadd.f32 0.0, %v1051
        %v1053 = vpop.f32.mrb[0].mxu0
        %v1054 = vadd.f32 0.0, %v1053
        %v1055 = vpop.f32.mrb[0].mxu0
        %v1056 = vadd.f32 0.0, %v1055
        %1057 = vmatprep.mubr.bf16.mxu0 0
        %1058 = vmatmul.mubr.bf16.gmra.mrb[0].mxu0 %v801
        %v1059 = vpop.f32.mrb[0].mxu0
        %v1060 = vadd.f32 0.0, %v1059
        %v1061 = vpop.f32.mrb[0].mxu0
        %v1062 = vadd.f32 0.0, %v1061
        %v1063 = vpop.f32.mrb[0].mxu0
        %v1064 = vadd.f32 0.0, %v1063
        %v1065 = vpop.f32.mrb[0].mxu0
        %v1066 = vadd.f32 0.0, %v1065
        %1067 = vmatprep.mubr.bf16.mxu0 0
        %1068 = vmatmul.mubr.bf16.gmra.mrb[0].mxu0 %v804
        %v1069 = vpop.f32.mrb[0].mxu0
        %v1070 = vadd.f32 0.0, %v1069
        %v1071 = vpop.f32.mrb[0].mxu0
        %v1072 = vadd.f32 0.0, %v1071
        %v1073 = vpop.f32.mrb[0].mxu0
        %v1074 = vadd.f32 0.0, %v1073
        %v1075 = vpop.f32.mrb[0].mxu0
        %v1076 = vadd.f32 0.0, %v1075
        %1077 = vmatprep.mubr.bf16.mxu0 0
        %1078 = vmatmul.mubr.bf16.gmra.mrb[0].mxu0 %v807
        %v1079 = vpop.f32.mrb[0].mxu0
        %v1080 = vadd.f32 0.0, %v1079
        %v1081 = vpop.f32.mrb[0].mxu0
        %v1082 = vadd.f32 0.0, %v1081
        %v1083 = vpop.f32.mrb[0].mxu0
        %v1084 = vadd.f32 0.0, %v1083
        %v1085 = vpop.f32.mrb[0].mxu0
        %v1086 = vadd.f32 0.0, %v1085
        %1087 = vmatprep.mubr.bf16.mxu0 0
        %1088 = vmatmul.mubr.bf16.gmra.mrb[0].mxu0 %v810
        %v1089 = vpop.f32.mrb[0].mxu0
        %v1090 = vadd.f32 0.0, %v1089
        %v1091 = vpop.f32.mrb[0].mxu0
        %v1092 = vadd.f32 0.0, %v1091
        %v1093 = vpop.f32.mrb[0].mxu0
        %v1094 = vadd.f32 0.0, %v1093
        %v1095 = vpop.f32.mrb[0].mxu0
        %v1096 = vadd.f32 0.0, %v1095
        %1097 = vmatprep.mubr.bf16.mxu0 0
        %1098 = vmatmul.mubr.bf16.gmra.mrb[0].mxu0 %v813
        %v1099 = vpop.f32.mrb[0].mxu0
        %v1100 = vadd.f32 0.0, %v1099
        %v1101 = vpop.f32.mrb[0].mxu0
        %v1102 = vadd.f32 0.0, %v1101
        %v1103 = vpop.f32.mrb[0].mxu0
        %v1104 = vadd.f32 0.0, %v1103
        %v1105 = vpop.f32.mrb[0].mxu0
        %v1106 = vadd.f32 0.0, %v1105
        %1107 = vmatprep.mubr.bf16.mxu0 0
        %1108 = vmatmul.mubr.bf16.gmra.mrb[0].mxu0 %v816
        %v1109 = vpop.f32.mrb[0].mxu0
        %v1110 = vadd.f32 0.0, %v1109
        %v1111 = vpop.f32.mrb[0].mxu0
        %v1112 = vadd.f32 0.0, %v1111
        %v1113 = vpop.f32.mrb[0].mxu0
        %v1114 = vadd.f32 0.0, %v1113
        %v1115 = vpop.f32.mrb[0].mxu0
        %v1116 = vadd.f32 0.0, %v1115
        %1117 = vmatprep.mubr.bf16.mxu0 0
        %1118 = vmatmul.mubr.bf16.gmra.mrb[0].mxu0 %v819
        %v1119 = vpop.f32.mrb[0].mxu0
        %v1120 = vadd.f32 0.0, %v1119
        %v1121 = vpop.f32.mrb[0].mxu0
        %v1122 = vadd.f32 0.0, %v1121
        %v1123 = vpop.f32.mrb[0].mxu0
        %v1124 = vadd.f32 0.0, %v1123
        %v1125 = vpop.f32.mrb[0].mxu0
        %v1126 = vadd.f32 0.0, %v1125
        %1127 = vmatprep.mubr.bf16.mxu0 0
        %1128 = vmatmul.mubr.bf16.gmra.mrb[0].mxu0 %v822
        %v1129 = vpop.f32.mrb[0].mxu0
        %v1130 = vadd.f32 0.0, %v1129
        %v1131 = vpop.f32.mrb[0].mxu0
        %v1132 = vadd.f32 0.0, %v1131
        %v1133 = vpop.f32.mrb[0].mxu0
        %v1134 = vadd.f32 0.0, %v1133
        %v1135 = vpop.f32.mrb[0].mxu0
        %v1136 = vadd.f32 0.0, %v1135
        %1137 = vmatprep.mubr.bf16.mxu0 0
        %1138 = vmatmul.mubr.bf16.gmra.mrb[0].mxu0 %v825
        %v1139 = vpop.f32.mrb[0].mxu0
        %v1140 = vadd.f32 0.0, %v1139
        %v1141 = vpop.f32.mrb[0].mxu0
        %v1142 = vadd.f32 0.0, %v1141
        %v1143 = vpop.f32.mrb[0].mxu0
        %v1144 = vadd.f32 0.0, %v1143
        %v1145 = vpop.f32.mrb[0].mxu0
        %v1146 = vadd.f32 0.0, %v1145
        %1147 = vmatprep.mubr.bf16.mxu0 0
        %1148 = vmatmul.mubr.bf16.gmra.mrb[0].mxu0 %v828
        %v1149 = vpop.f32.mrb[0].mxu0
        %v1150 = vadd.f32 0.0, %v1149
        %v1151 = vpop.f32.mrb[0].mxu0
        %v1152 = vadd.f32 0.0, %v1151
        %v1153 = vpop.f32.mrb[0].mxu0
        %v1154 = vadd.f32 0.0, %v1153
        %v1155 = vpop.f32.mrb[0].mxu0
        %v1156 = vadd.f32 0.0, %v1155
        %1157 = vmatprep.mubr.bf16.mxu0 0
        %1158 = vmatmul.mubr.bf16.gmra.mrb[0].mxu0 %v831
        %v1159 = vpop.f32.mrb[0].mxu0
        %v1160 = vadd.f32 0.0, %v1159
        %v1161 = vpop.f32.mrb[0].mxu0
        %v1162 = vadd.f32 0.0, %v1161
        %v1163 = vpop.f32.mrb[0].mxu0
        %v1164 = vadd.f32 0.0, %v1163
        %v1165 = vpop.f32.mrb[0].mxu0
        %v1166 = vadd.f32 0.0, %v1165
        %1167 = vmatprep.mubr.bf16.mxu0 0
        %1168 = vmatmul.mubr.bf16.gmra.mrb[0].mxu0 %v834
        %v1169 = vpop.f32.mrb[0].mxu0
        %v1170 = vadd.f32 0.0, %v1169
        %v1171 = vpop.f32.mrb[0].mxu0
        %v1172 = vadd.f32 0.0, %v1171
        %v1173 = vpop.f32.mrb[0].mxu0
        %v1174 = vadd.f32 0.0, %v1173
        %v1175 = vpop.f32.mrb[0].mxu0
        %v1176 = vadd.f32 0.0, %v1175
        %1177 = vmatprep.mubr.bf16.mxu0 0
        %1178 = vmatmul.mubr.bf16.gmra.mrb[0].mxu0 %v837
        %v1179 = vpop.f32.mrb[0].mxu0
        %v1180 = vadd.f32 0.0, %v1179
        %v1181 = vpop.f32.mrb[0].mxu0
        %v1182 = vadd.f32 0.0, %v1181
        %v1183 = vpop.f32.mrb[0].mxu0
        %v1184 = vadd.f32 0.0, %v1183
        %v1185 = vpop.f32.mrb[0].mxu0
        %v1186 = vadd.f32 0.0, %v1185
        %1187 = vmatprep.mubr.bf16.mxu0 0
        %1188 = vmatmul.mubr.bf16.gmra.mrb[0].mxu0 %v840
        %v1189 = vpop.f32.mrb[0].mxu0
        %v1190 = vadd.f32 0.0, %v1189
        %v1191 = vpop.f32.mrb[0].mxu0
        %v1192 = vadd.f32 0.0, %v1191
        %v1193 = vpop.f32.mrb[0].mxu0
        %v1194 = vadd.f32 0.0, %v1193
        %v1195 = vpop.f32.mrb[0].mxu0
        %v1196 = vadd.f32 0.0, %v1195
        %1197 = vmatprep.mubr.bf16.mxu0 0
        %1198 = vmatmul.mubr.bf16.gmra.mrb[0].mxu0 %v843
        %v1199 = vpop.f32.mrb[0].mxu0
        %v1200 = vadd.f32 0.0, %v1199
        %v1201 = vpop.f32.mrb[0].mxu0
        %v1202 = vadd.f32 0.0, %v1201
        %v1203 = vpop.f32.mrb[0].mxu0
        %v1204 = vadd.f32 0.0, %v1203
        %v1205 = vpop.f32.mrb[0].mxu0
        %v1206 = vadd.f32 0.0, %v1205
        %1207 = vmatprep.mubr.bf16.mxu0 0
        %1208 = vmatmul.mubr.bf16.gmra.mrb[0].mxu0 %v846
        %v1209 = vpop.f32.mrb[0].mxu0
        %v1210 = vadd.f32 0.0, %v1209
        %v1211 = vpop.f32.mrb[0].mxu0
        %v1212 = vadd.f32 0.0, %v1211
        %v1213 = vpop.f32.mrb[0].mxu0
        %v1214 = vadd.f32 0.0, %v1213
        %v1215 = vpop.f32.mrb[0].mxu0
        %v1216 = vadd.f32 0.0, %v1215
        %1217 = vmatprep.mubr.bf16.mxu0 0
        %1218 = vmatmul.mubr.bf16.gmra.mrb[0].mxu0 %v849
        %v1219 = vpop.f32.mrb[0].mxu0
        %v1220 = vadd.f32 0.0, %v1219
        %v1221 = vpop.f32.mrb[0].mxu0
        %v1222 = vadd.f32 0.0, %v1221
        %v1223 = vpop.f32.mrb[0].mxu0
        %v1224 = vadd.f32 0.0, %v1223
        %v1225 = vpop.f32.mrb[0].mxu0
        %v1226 = vadd.f32 0.0, %v1225
        %1227 = vmatprep.mubr.bf16.mxu0 0
        %1228 = vmatmul.mubr.bf16.gmra.mrb[0].mxu0 %v852
        %v1229 = vpop.f32.mrb[0].mxu0
        %v1230 = vadd.f32 0.0, %v1229
        %v1231 = vpop.f32.mrb[0].mxu0
        %v1232 = vadd.f32 0.0, %v1231
        %v1233 = vpop.f32.mrb[0].mxu0
        %v1234 = vadd.f32 0.0, %v1233
        %v1235 = vpop.f32.mrb[0].mxu0
        %v1236 = vadd.f32 0.0, %v1235
        %1237 = vmatprep.mubr.bf16.mxu0 0
        %1238 = vmatmul.mubr.bf16.gmra.mrb[0].mxu0 %v855
        %v1239 = vpop.f32.mrb[0].mxu0
        %v1240 = vadd.f32 0.0, %v1239
        %v1241 = vpop.f32.mrb[0].mxu0
        %v1242 = vadd.f32 0.0, %v1241
        %v1243 = vpop.f32.mrb[0].mxu0
        %v1244 = vadd.f32 0.0, %v1243
        %v1245 = vpop.f32.mrb[0].mxu0
        %v1246 = vadd.f32 0.0, %v1245
        %1247 = vmatprep.mubr.bf16.mxu0 0
        %1248 = vmatmul.mubr.bf16.gmra.mrb[0].mxu0 %v858
        %v1249 = vpop.f32.mrb[0].mxu0
        %v1250 = vadd.f32 0.0, %v1249
        %v1251 = vpop.f32.mrb[0].mxu0
        %v1252 = vadd.f32 0.0, %v1251
        %v1253 = vpop.f32.mrb[0].mxu0
        %v1254 = vadd.f32 0.0, %v1253
        %v1255 = vpop.f32.mrb[0].mxu0
        %v1256 = vadd.f32 0.0, %v1255
        %1257 = vmatprep.mubr.bf16.mxu0 0
        %1258 = vmatmul.mubr.bf16.gmra.mrb[0].mxu0 %v861
        %v1259 = vpop.f32.mrb[0].mxu0
        %v1260 = vadd.f32 0.0, %v1259
        %v1261 = vpop.f32.mrb[0].mxu0
        %v1262 = vadd.f32 0.0, %v1261
        %v1263 = vpop.f32.mrb[0].mxu0
        %v1264 = vadd.f32 0.0, %v1263
        %v1265 = vpop.f32.mrb[0].mxu0
        %v1266 = vadd.f32 0.0, %v1265
        %1267 = vmatprep.mubr.bf16.mxu0 0
        %1268 = vmatmul.mubr.bf16.gmra.mrb[0].mxu0 %v864
        %v1269 = vpop.f32.mrb[0].mxu0
        %v1270 = vadd.f32 0.0, %v1269
        %v1271 = vpop.f32.mrb[0].mxu0
        %v1272 = vadd.f32 0.0, %v1271
        %v1273 = vpop.f32.mrb[0].mxu0
        %v1274 = vadd.f32 0.0, %v1273
        %v1275 = vpop.f32.mrb[0].mxu0
        %v1276 = vadd.f32 0.0, %v1275
        %1277 = vmatprep.mubr.bf16.mxu0 0
        %1278 = vmatmul.mubr.bf16.gmra.mrb[0].mxu0 %v867
        %v1279 = vpop.f32.mrb[0].mxu0
        %v1280 = vadd.f32 0.0, %v1279
        %v1281 = vpop.f32.mrb[0].mxu0
        %v1282 = vadd.f32 0.0, %v1281
        %v1283 = vpop.f32.mrb[0].mxu0
        %v1284 = vadd.f32 0.0, %v1283
        %v1285 = vpop.f32.mrb[0].mxu0
        %v1286 = vadd.f32 0.0, %v1285
        %1287 = vmatprep.mubr.bf16.mxu0 0
        %1288 = vmatmul.mubr.bf16.gmra.mrb[0].mxu0 %v870
        %v1289 = vpop.f32.mrb[0].mxu0
        %v1290 = vadd.f32 0.0, %v1289
        %v1291 = vpop.f32.mrb[0].mxu0
        %v1292 = vadd.f32 0.0, %v1291
        %v1293 = vpop.f32.mrb[0].mxu0
        %v1294 = vadd.f32 0.0, %v1293
        %v1295 = vpop.f32.mrb[0].mxu0
        %v1296 = vadd.f32 0.0, %v1295
        %1297 = vmatprep.mubr.bf16.mxu0 0
        %1298 = vmatmul.mubr.bf16.gmra.mrb[0].mxu0 %v873
        %v1299 = vpop.f32.mrb[0].mxu0
        %v1300 = vadd.f32 0.0, %v1299
        %v1301 = vpop.f32.mrb[0].mxu0
        %v1302 = vadd.f32 0.0, %v1301
        %v1303 = vpop.f32.mrb[0].mxu0
        %v1304 = vadd.f32 0.0, %v1303
        %v1305 = vpop.f32.mrb[0].mxu0
        %v1306 = vadd.f32 0.0, %v1305
        %1307 = vmatprep.mubr.bf16.mxu0 0
        %1308 = vmatmul.mubr.bf16.gmra.mrb[0].mxu0 %v876
        %v1309 = vpop.f32.mrb[0].mxu0
        %v1310 = vadd.f32 0.0, %v1309
        %v1311 = vpop.f32.mrb[0].mxu0
        %v1312 = vadd.f32 0.0, %v1311
        %v1313 = vpop.f32.mrb[0].mxu0
        %v1314 = vadd.f32 0.0, %v1313
        %v1315 = vpop.f32.mrb[0].mxu0
        %v1316 = vadd.f32 0.0, %v1315
        %1317 = vmatprep.mubr.bf16.mxu0 0
        %1318 = vmatmul.mubr.bf16.gmra.mrb[0].mxu0 %v879
        %v1319 = vpop.f32.mrb[0].mxu0
        %v1320 = vadd.f32 0.0, %v1319
        %v1321 = vpop.f32.mrb[0].mxu0
        %v1322 = vadd.f32 0.0, %v1321
        %v1323 = vpop.f32.mrb[0].mxu0
        %v1324 = vadd.f32 0.0, %v1323
        %v1325 = vpop.f32.mrb[0].mxu0
        %v1326 = vadd.f32 0.0, %v1325
        %1327 = vmatprep.mubr.bf16.mxu0 0
        %1328 = vmatmul.mubr.bf16.gmra.mrb[0].mxu0 %v882
        %v1329 = vpop.f32.mrb[0].mxu0
        %v1330 = vadd.f32 0.0, %v1329
        %v1331 = vpop.f32.mrb[0].mxu0
        %v1332 = vadd.f32 0.0, %v1331
        %v1333 = vpop.f32.mrb[0].mxu0
        %v1334 = vadd.f32 0.0, %v1333
        %v1335 = vpop.f32.mrb[0].mxu0
        %v1336 = vadd.f32 0.0, %v1335
        %1337 = vmatprep.mubr.bf16.mxu0 0
        %1338 = vmatmul.mubr.bf16.gmra.mrb[0].mxu0 %v885
        %v1339 = vpop.f32.mrb[0].mxu0
        %v1340 = vadd.f32 0.0, %v1339
        %v1341 = vpop.f32.mrb[0].mxu0
        %v1342 = vadd.f32 0.0, %v1341
        %v1343 = vpop.f32.mrb[0].mxu0
        %v1344 = vadd.f32 0.0, %v1343
        %v1345 = vpop.f32.mrb[0].mxu0
        %v1346 = vadd.f32 0.0, %v1345
        %1347 = vmatprep.mubr.bf16.mxu0 0
        %1348 = vmatmul.mubr.bf16.gmra.mrb[0].mxu0 %v888
        %v1349 = vpop.f32.mrb[0].mxu0
        %v1350 = vadd.f32 0.0, %v1349
        %v1351 = vpop.f32.mrb[0].mxu0
        %v1352 = vadd.f32 0.0, %v1351
        %v1353 = vpop.f32.mrb[0].mxu0
        %v1354 = vadd.f32 0.0, %v1353
        %v1355 = vpop.f32.mrb[0].mxu0
        %v1356 = vadd.f32 0.0, %v1355
        %1357 = vmatprep.mubr.bf16.mxu0 0
        %1358 = vmatmul.mubr.bf16.gmra.mrb[0].mxu0 %v891
        %v1359 = vpop.f32.mrb[0].mxu0
        %v1360 = vadd.f32 0.0, %v1359
        %v1361 = vpop.f32.mrb[0].mxu0
        %v1362 = vadd.f32 0.0, %v1361
        %v1363 = vpop.f32.mrb[0].mxu0
        %v1364 = vadd.f32 0.0, %v1363
        %v1365 = vpop.f32.mrb[0].mxu0
        %v1366 = vadd.f32 0.0, %v1365
        %1367 = vmatprep.mubr.bf16.mxu0 0
        %1368 = vmatmul.mubr.bf16.gmra.mrb[0].mxu0 %v894
        %v1369 = vpop.f32.mrb[0].mxu0
        %v1370 = vadd.f32 0.0, %v1369
        %v1371 = vpop.f32.mrb[0].mxu0
        %v1372 = vadd.f32 0.0, %v1371
        %v1373 = vpop.f32.mrb[0].mxu0
        %v1374 = vadd.f32 0.0, %v1373
        %v1375 = vpop.f32.mrb[0].mxu0
        %v1376 = vadd.f32 0.0, %v1375
        %1377 = vmatprep.mubr.bf16.mxu0 0
        %1378 = vmatmul.mubr.bf16.gmra.mrb[0].mxu0 %v897
        %v1379 = vpop.f32.mrb[0].mxu0
        %v1380 = vadd.f32 0.0, %v1379
        %v1381 = vpop.f32.mrb[0].mxu0
        %v1382 = vadd.f32 0.0, %v1381
        %v1383 = vpop.f32.mrb[0].mxu0
        %v1384 = vadd.f32 0.0, %v1383
        %v1385 = vpop.f32.mrb[0].mxu0
        %v1386 = vadd.f32 0.0, %v1385
        %1387 = vmatprep.mubr.bf16.mxu0 0
        %1388 = vmatmul.mubr.bf16.gmra.mrb[0].mxu0 %v900
        %v1389 = vpop.f32.mrb[0].mxu0
        %v1390 = vadd.f32 0.0, %v1389
        %v1391 = vpop.f32.mrb[0].mxu0
        %v1392 = vadd.f32 0.0, %v1391
        %v1393 = vpop.f32.mrb[0].mxu0
        %v1394 = vadd.f32 0.0, %v1393
        %v1395 = vpop.f32.mrb[0].mxu0
        %v1396 = vadd.f32 0.0, %v1395
        %1397 = vmatprep.mubr.bf16.mxu0 0
        %1398 = vmatmul.mubr.bf16.gmra.mrb[0].mxu0 %v903
        %v1399 = vpop.f32.mrb[0].mxu0
        %v1400 = vadd.f32 0.0, %v1399
        %v1401 = vpop.f32.mrb[0].mxu0
        %v1402 = vadd.f32 0.0, %v1401
        %v1403 = vpop.f32.mrb[0].mxu0
        %v1404 = vadd.f32 0.0, %v1403
        %v1405 = vpop.f32.mrb[0].mxu0
        %v1406 = vadd.f32 0.0, %v1405
        %1407 = vmatprep.mubr.bf16.mxu0 0
        %1408 = vmatmul.mubr.bf16.gmra.mrb[0].mxu0 %v906
        %v1409 = vpop.f32.mrb[0].mxu0
        %v1410 = vadd.f32 0.0, %v1409
        %v1411 = vpop.f32.mrb[0].mxu0
        %v1412 = vadd.f32 0.0, %v1411
        %v1413 = vpop.f32.mrb[0].mxu0
        %v1414 = vadd.f32 0.0, %v1413
        %v1415 = vpop.f32.mrb[0].mxu0
        %v1416 = vadd.f32 0.0, %v1415
        %1417 = vmatprep.mubr.bf16.mxu0 0
        %1418 = vmatmul.mubr.bf16.gmra.mrb[0].mxu0 %v909
        %v1419 = vpop.f32.mrb[0].mxu0
        %v1420 = vadd.f32 0.0, %v1419
        %v1421 = vpop.f32.mrb[0].mxu0
        %v1422 = vadd.f32 0.0, %v1421
        %v1423 = vpop.f32.mrb[0].mxu0
        %v1424 = vadd.f32 0.0, %v1423
        %v1425 = vpop.f32.mrb[0].mxu0
        %v1426 = vadd.f32 0.0, %v1425
        %1427 = vmatprep.mubr.bf16.mxu0 0
        %1428 = vmatmul.mubr.bf16.gmra.mrb[0].mxu0 %v912
        %v1429 = vpop.f32.mrb[0].mxu0
        %v1430 = vadd.f32 0.0, %v1429
        %v1431 = vpop.f32.mrb[0].mxu0
        %v1432 = vadd.f32 0.0, %v1431
        %v1433 = vpop.f32.mrb[0].mxu0
        %v1434 = vadd.f32 0.0, %v1433
        %v1435 = vpop.f32.mrb[0].mxu0
        %v1436 = vadd.f32 0.0, %v1435
        %1437 = vmatprep.mubr.bf16.mxu0 0
        %1438 = vmatmul.mubr.bf16.gmra.mrb[0].mxu0 %v915
        %v1439 = vpop.f32.mrb[0].mxu0
        %v1440 = vadd.f32 0.0, %v1439
        %v1441 = vpop.f32.mrb[0].mxu0
        %v1442 = vadd.f32 0.0, %v1441
        %v1443 = vpop.f32.mrb[0].mxu0
        %v1444 = vadd.f32 0.0, %v1443
        %v1445 = vpop.f32.mrb[0].mxu0
        %v1446 = vadd.f32 0.0, %v1445
        %1447 = vmatprep.mubr.bf16.mxu0 0
        %1448 = vmatmul.mubr.bf16.gmra.mrb[0].mxu0 %v918
        %v1449 = vpop.f32.mrb[0].mxu0
        %v1450 = vadd.f32 0.0, %v1449
        %v1451 = vpop.f32.mrb[0].mxu0
        %v1452 = vadd.f32 0.0, %v1451
        %v1453 = vpop.f32.mrb[0].mxu0
        %v1454 = vadd.f32 0.0, %v1453
        %v1455 = vpop.f32.mrb[0].mxu0
        %v1456 = vadd.f32 0.0, %v1455
        %1457 = vmatprep.mubr.bf16.mxu0 0
        %1458 = vmatmul.mubr.bf16.gmra.mrb[0].mxu0 %v921
        %v1459 = vpop.f32.mrb[0].mxu0
        %v1460 = vadd.f32 0.0, %v1459
        %v1461 = vpop.f32.mrb[0].mxu0
        %v1462 = vadd.f32 0.0, %v1461
        %v1463 = vpop.f32.mrb[0].mxu0
        %v1464 = vadd.f32 0.0, %v1463
        %v1465 = vpop.f32.mrb[0].mxu0
        %v1466 = vadd.f32 0.0, %v1465
        %1467 = vmatprep.mubr.bf16.mxu0 0
        %1468 = vmatmul.mubr.bf16.gmra.mrb[0].mxu0 %v924
        %v1469 = vpop.f32.mrb[0].mxu0
        %v1470 = vadd.f32 0.0, %v1469
        %v1471 = vpop.f32.mrb[0].mxu0
        %v1472 = vadd.f32 0.0, %v1471
        %v1473 = vpop.f32.mrb[0].mxu0
        %v1474 = vadd.f32 0.0, %v1473
        %v1475 = vpop.f32.mrb[0].mxu0
        %v1476 = vadd.f32 0.0, %v1475
        %1477 = vmatprep.mubr.bf16.mxu0 0
        %1478 = vmatmul.mubr.bf16.gmra.mrb[0].mxu0 %v927
        %v1479 = vpop.f32.mrb[0].mxu0
        %v1480 = vadd.f32 0.0, %v1479
        %v1481 = vpop.f32.mrb[0].mxu0
        %v1482 = vadd.f32 0.0, %v1481
        %v1483 = vpop.f32.mrb[0].mxu0
        %v1484 = vadd.f32 0.0, %v1483
        %v1485 = vpop.f32.mrb[0].mxu0
        %v1486 = vadd.f32 0.0, %v1485
        %1487 = vmatprep.mubr.bf16.mxu0 0
        %1488 = vmatmul.mubr.bf16.gmra.mrb[0].mxu0 %v930
        %v1489 = vpop.f32.mrb[0].mxu0
        %v1490 = vadd.f32 0.0, %v1489
        %v1491 = vpop.f32.mrb[0].mxu0
        %v1492 = vadd.f32 0.0, %v1491
        %v1493 = vpop.f32.mrb[0].mxu0
        %v1494 = vadd.f32 0.0, %v1493
        %v1495 = vpop.f32.mrb[0].mxu0
        %v1496 = vadd.f32 0.0, %v1495
        %1497 = vdwg.mxu0
        %1498 = vmatprep.subr.bf16.mxu0 %v734
        %1499 = vmatpush1.bf16.msra.mxu0 %v733
        %1500 = vmatprep.subr.bf16.mxu0 %v738
        %1501 = vmatpush1.bf16.msra.mxu0 %v737
        %1502 = vmatprep.subr.bf16.mxu0 %v742
        %1503 = vmatpush1.bf16.msra.mxu0 %v741
        %1504 = vmatprep.subr.bf16.mxu0 %v746
        %1505 = vmatpush1.bf16.msra.mxu0 %v745
        %1506 = vmatprep.subr.bf16.mxu0 %v750
        %1507 = vmatpush1.bf16.msra.mxu0 %v749
        %1508 = vmatprep.subr.bf16.mxu0 %v943
        %1509 = vmatpush1.bf16.msra.mxu0 %v940
        %1510 = vmatprep.subr.bf16.mxu0 0
        %1511 = vmatpush1.bf16.msra.mxu0 0
        %1512 = vmatprep.subr.bf16.mxu0 0
        %1513 = vmatpush1.bf16.msra.mxu0 0
        %1514 = vmatprep.subr.bf16.mxu0 0
        %1515 = vmatpush1.bf16.msra.mxu0 0
        %1516 = vmatprep.subr.bf16.mxu0 0
        %1517 = vmatpush1.bf16.msra.mxu0 0
        %1518 = vmatprep.subr.bf16.mxu0 0
        %1519 = vmatpush1.bf16.msra.mxu0 0
        %1520 = vmatprep.subr.bf16.mxu0 0
        %1521 = vmatpush1.bf16.msra.mxu0 0
        %1522 = vmatprep.subr.bf16.mxu0 0
        %1523 = vmatpush1.bf16.msra.mxu0 0
        %1524 = vmatprep.subr.bf16.mxu0 0
        %1525 = vmatpush1.bf16.msra.mxu0 0
        %1526 = vmatprep.subr.bf16.mxu0 0
        %1527 = vmatpush1.bf16.msra.mxu0 0
        %1528 = vmatprep.subr.bf16.mxu0 0
        %1529 = vmatpush1.bf16.msra.mxu0 0
        %1530 = vmatprep.mubr.bf16.mxu0 0
        %1531 = vmatmul.mubr.bf16.gmra.mrb[0].mxu0 %v777
        %v1532 = vpop.f32.mrb[0].mxu0
        %v1533 = vadd.f32 0.0, %v1532
        %v1534 = vpop.f32.mrb[0].mxu0
        %v1535 = vadd.f32 0.0, %v1534
        %v1536 = vpop.f32.mrb[0].mxu0
        %v1537 = vadd.f32 0.0, %v1536
        %v1538 = vpop.f32.mrb[0].mxu0
        %v1539 = vadd.f32 0.0, %v1538
        %1540 = vmatprep.mubr.bf16.mxu0 0
        %1541 = vmatmul.mubr.bf16.gmra.mrb[0].mxu0 %v780
        %v1542 = vpop.f32.mrb[0].mxu0
        %v1543 = vadd.f32 0.0, %v1542
        %v1544 = vpop.f32.mrb[0].mxu0
        %v1545 = vadd.f32 0.0, %v1544
        %v1546 = vpop.f32.mrb[0].mxu0
        %v1547 = vadd.f32 0.0, %v1546
        %v1548 = vpop.f32.mrb[0].mxu0
        %v1549 = vadd.f32 0.0, %v1548
        %1550 = vmatprep.mubr.bf16.mxu0 0
        %1551 = vmatmul.mubr.bf16.gmra.mrb[0].mxu0 %v783
        %v1552 = vpop.f32.mrb[0].mxu0
        %v1553 = vadd.f32 0.0, %v1552
        %v1554 = vpop.f32.mrb[0].mxu0
        %v1555 = vadd.f32 0.0, %v1554
        %v1556 = vpop.f32.mrb[0].mxu0
        %v1557 = vadd.f32 0.0, %v1556
        %v1558 = vpop.f32.mrb[0].mxu0
        %v1559 = vadd.f32 0.0, %v1558
        %1560 = vmatprep.mubr.bf16.mxu0 0
        %1561 = vmatmul.mubr.bf16.gmra.mrb[0].mxu0 %v786
        %v1562 = vpop.f32.mrb[0].mxu0
        %v1563 = vadd.f32 0.0, %v1562
        %v1564 = vpop.f32.mrb[0].mxu0
        %v1565 = vadd.f32 0.0, %v1564
        %v1566 = vpop.f32.mrb[0].mxu0
        %v1567 = vadd.f32 0.0, %v1566
        %v1568 = vpop.f32.mrb[0].mxu0
        %v1569 = vadd.f32 0.0, %v1568
        %1570 = vmatprep.mubr.bf16.mxu0 0
        %1571 = vmatmul.mubr.bf16.gmra.mrb[0].mxu0 %v789
        %v1572 = vpop.f32.mrb[0].mxu0
        %v1573 = vadd.f32 0.0, %v1572
        %v1574 = vpop.f32.mrb[0].mxu0
        %v1575 = vadd.f32 0.0, %v1574
        %v1576 = vpop.f32.mrb[0].mxu0
        %v1577 = vadd.f32 0.0, %v1576
        %v1578 = vpop.f32.mrb[0].mxu0
        %v1579 = vadd.f32 0.0, %v1578
        %1580 = vmatprep.mubr.bf16.mxu0 0
        %1581 = vmatmul.mubr.bf16.gmra.mrb[0].mxu0 %v792
        %v1582 = vpop.f32.mrb[0].mxu0
        %v1583 = vadd.f32 0.0, %v1582
        %v1584 = vpop.f32.mrb[0].mxu0
        %v1585 = vadd.f32 0.0, %v1584
        %v1586 = vpop.f32.mrb[0].mxu0
        %v1587 = vadd.f32 0.0, %v1586
        %v1588 = vpop.f32.mrb[0].mxu0
        %v1589 = vadd.f32 0.0, %v1588
        %1590 = vmatprep.mubr.bf16.mxu0 0
        %1591 = vmatmul.mubr.bf16.gmra.mrb[0].mxu0 %v795
        %v1592 = vpop.f32.mrb[0].mxu0
        %v1593 = vadd.f32 0.0, %v1592
        %v1594 = vpop.f32.mrb[0].mxu0
        %v1595 = vadd.f32 0.0, %v1594
        %v1596 = vpop.f32.mrb[0].mxu0
        %v1597 = vadd.f32 0.0, %v1596
        %v1598 = vpop.f32.mrb[0].mxu0
        %v1599 = vadd.f32 0.0, %v1598
        %1600 = vmatprep.mubr.bf16.mxu0 0
        %1601 = vmatmul.mubr.bf16.gmra.mrb[0].mxu0 %v798
        %v1602 = vpop.f32.mrb[0].mxu0
        %v1603 = vadd.f32 0.0, %v1602
        %v1604 = vpop.f32.mrb[0].mxu0
        %v1605 = vadd.f32 0.0, %v1604
        %v1606 = vpop.f32.mrb[0].mxu0
        %v1607 = vadd.f32 0.0, %v1606
        %v1608 = vpop.f32.mrb[0].mxu0
        %v1609 = vadd.f32 0.0, %v1608
        %1610 = vmatprep.mubr.bf16.mxu0 0
        %1611 = vmatmul.mubr.bf16.gmra.mrb[0].mxu0 %v801
        %v1612 = vpop.f32.mrb[0].mxu0
        %v1613 = vadd.f32 0.0, %v1612
        %v1614 = vpop.f32.mrb[0].mxu0
        %v1615 = vadd.f32 0.0, %v1614
        %v1616 = vpop.f32.mrb[0].mxu0
        %v1617 = vadd.f32 0.0, %v1616
        %v1618 = vpop.f32.mrb[0].mxu0
        %v1619 = vadd.f32 0.0, %v1618
        %1620 = vmatprep.mubr.bf16.mxu0 0
        %1621 = vmatmul.mubr.bf16.gmra.mrb[0].mxu0 %v804
        %v1622 = vpop.f32.mrb[0].mxu0
        %v1623 = vadd.f32 0.0, %v1622
        %v1624 = vpop.f32.mrb[0].mxu0
        %v1625 = vadd.f32 0.0, %v1624
        %v1626 = vpop.f32.mrb[0].mxu0
        %v1627 = vadd.f32 0.0, %v1626
        %v1628 = vpop.f32.mrb[0].mxu0
        %v1629 = vadd.f32 0.0, %v1628
        %1630 = vmatprep.mubr.bf16.mxu0 0
        %1631 = vmatmul.mubr.bf16.gmra.mrb[0].mxu0 %v807
        %v1632 = vpop.f32.mrb[0].mxu0
        %v1633 = vadd.f32 0.0, %v1632
        %v1634 = vpop.f32.mrb[0].mxu0
        %v1635 = vadd.f32 0.0, %v1634
        %v1636 = vpop.f32.mrb[0].mxu0
        %v1637 = vadd.f32 0.0, %v1636
        %v1638 = vpop.f32.mrb[0].mxu0
        %v1639 = vadd.f32 0.0, %v1638
        %1640 = vmatprep.mubr.bf16.mxu0 0
        %1641 = vmatmul.mubr.bf16.gmra.mrb[0].mxu0 %v810
        %v1642 = vpop.f32.mrb[0].mxu0
        %v1643 = vadd.f32 0.0, %v1642
        %v1644 = vpop.f32.mrb[0].mxu0
        %v1645 = vadd.f32 0.0, %v1644
        %v1646 = vpop.f32.mrb[0].mxu0
        %v1647 = vadd.f32 0.0, %v1646
        %v1648 = vpop.f32.mrb[0].mxu0
        %v1649 = vadd.f32 0.0, %v1648
        %1650 = vmatprep.mubr.bf16.mxu0 0
        %1651 = vmatmul.mubr.bf16.gmra.mrb[0].mxu0 %v813
        %v1652 = vpop.f32.mrb[0].mxu0
        %v1653 = vadd.f32 0.0, %v1652
        %v1654 = vpop.f32.mrb[0].mxu0
        %v1655 = vadd.f32 0.0, %v1654
        %v1656 = vpop.f32.mrb[0].mxu0
        %v1657 = vadd.f32 0.0, %v1656
        %v1658 = vpop.f32.mrb[0].mxu0
        %v1659 = vadd.f32 0.0, %v1658
        %1660 = vmatprep.mubr.bf16.mxu0 0
        %1661 = vmatmul.mubr.bf16.gmra.mrb[0].mxu0 %v816
        %v1662 = vpop.f32.mrb[0].mxu0
        %v1663 = vadd.f32 0.0, %v1662
        %v1664 = vpop.f32.mrb[0].mxu0
        %v1665 = vadd.f32 0.0, %v1664
        %v1666 = vpop.f32.mrb[0].mxu0
        %v1667 = vadd.f32 0.0, %v1666
        %v1668 = vpop.f32.mrb[0].mxu0
        %v1669 = vadd.f32 0.0, %v1668
        %1670 = vmatprep.mubr.bf16.mxu0 0
        %1671 = vmatmul.mubr.bf16.gmra.mrb[0].mxu0 %v819
        %v1672 = vpop.f32.mrb[0].mxu0
        %v1673 = vadd.f32 0.0, %v1672
        %v1674 = vpop.f32.mrb[0].mxu0
        %v1675 = vadd.f32 0.0, %v1674
        %v1676 = vpop.f32.mrb[0].mxu0
        %v1677 = vadd.f32 0.0, %v1676
        %v1678 = vpop.f32.mrb[0].mxu0
        %v1679 = vadd.f32 0.0, %v1678
        %1680 = vmatprep.mubr.bf16.mxu0 0
        %1681 = vmatmul.mubr.bf16.gmra.mrb[0].mxu0 %v822
        %v1682 = vpop.f32.mrb[0].mxu0
        %v1683 = vadd.f32 0.0, %v1682
        %v1684 = vpop.f32.mrb[0].mxu0
        %v1685 = vadd.f32 0.0, %v1684
        %v1686 = vpop.f32.mrb[0].mxu0
        %v1687 = vadd.f32 0.0, %v1686
        %v1688 = vpop.f32.mrb[0].mxu0
        %v1689 = vadd.f32 0.0, %v1688
        %1690 = vmatprep.mubr.bf16.mxu0 0
        %1691 = vmatmul.mubr.bf16.gmra.mrb[0].mxu0 %v825
        %v1692 = vpop.f32.mrb[0].mxu0
        %v1693 = vadd.f32 0.0, %v1692
        %v1694 = vpop.f32.mrb[0].mxu0
        %v1695 = vadd.f32 0.0, %v1694
        %v1696 = vpop.f32.mrb[0].mxu0
        %v1697 = vadd.f32 0.0, %v1696
        %v1698 = vpop.f32.mrb[0].mxu0
        %v1699 = vadd.f32 0.0, %v1698
        %1700 = vmatprep.mubr.bf16.mxu0 0
        %1701 = vmatmul.mubr.bf16.gmra.mrb[0].mxu0 %v828
        %v1702 = vpop.f32.mrb[0].mxu0
        %v1703 = vadd.f32 0.0, %v1702
        %v1704 = vpop.f32.mrb[0].mxu0
        %v1705 = vadd.f32 0.0, %v1704
        %v1706 = vpop.f32.mrb[0].mxu0
        %v1707 = vadd.f32 0.0, %v1706
        %v1708 = vpop.f32.mrb[0].mxu0
        %v1709 = vadd.f32 0.0, %v1708
        %1710 = vmatprep.mubr.bf16.mxu0 0
        %1711 = vmatmul.mubr.bf16.gmra.mrb[0].mxu0 %v831
        %v1712 = vpop.f32.mrb[0].mxu0
        %v1713 = vadd.f32 0.0, %v1712
        %v1714 = vpop.f32.mrb[0].mxu0
        %v1715 = vadd.f32 0.0, %v1714
        %v1716 = vpop.f32.mrb[0].mxu0
        %v1717 = vadd.f32 0.0, %v1716
        %v1718 = vpop.f32.mrb[0].mxu0
        %v1719 = vadd.f32 0.0, %v1718
        %1720 = vmatprep.mubr.bf16.mxu0 0
        %1721 = vmatmul.mubr.bf16.gmra.mrb[0].mxu0 %v834
        %v1722 = vpop.f32.mrb[0].mxu0
        %v1723 = vadd.f32 0.0, %v1722
        %v1724 = vpop.f32.mrb[0].mxu0
        %v1725 = vadd.f32 0.0, %v1724
        %v1726 = vpop.f32.mrb[0].mxu0
        %v1727 = vadd.f32 0.0, %v1726
        %v1728 = vpop.f32.mrb[0].mxu0
        %v1729 = vadd.f32 0.0, %v1728
        %1730 = vmatprep.mubr.bf16.mxu0 0
        %1731 = vmatmul.mubr.bf16.gmra.mrb[0].mxu0 %v837
        %v1732 = vpop.f32.mrb[0].mxu0
        %v1733 = vadd.f32 0.0, %v1732
        %v1734 = vpop.f32.mrb[0].mxu0
        %v1735 = vadd.f32 0.0, %v1734
        %v1736 = vpop.f32.mrb[0].mxu0
        %v1737 = vadd.f32 0.0, %v1736
        %v1738 = vpop.f32.mrb[0].mxu0
        %v1739 = vadd.f32 0.0, %v1738
        %1740 = vmatprep.mubr.bf16.mxu0 0
        %1741 = vmatmul.mubr.bf16.gmra.mrb[0].mxu0 %v840
        %v1742 = vpop.f32.mrb[0].mxu0
        %v1743 = vadd.f32 0.0, %v1742
        %v1744 = vpop.f32.mrb[0].mxu0
        %v1745 = vadd.f32 0.0, %v1744
        %v1746 = vpop.f32.mrb[0].mxu0
        %v1747 = vadd.f32 0.0, %v1746
        %v1748 = vpop.f32.mrb[0].mxu0
        %v1749 = vadd.f32 0.0, %v1748
        %1750 = vmatprep.mubr.bf16.mxu0 0
        %1751 = vmatmul.mubr.bf16.gmra.mrb[0].mxu0 %v843
        %v1752 = vpop.f32.mrb[0].mxu0
        %v1753 = vadd.f32 0.0, %v1752
        %v1754 = vpop.f32.mrb[0].mxu0
        %v1755 = vadd.f32 0.0, %v1754
        %v1756 = vpop.f32.mrb[0].mxu0
        %v1757 = vadd.f32 0.0, %v1756
        %v1758 = vpop.f32.mrb[0].mxu0
        %v1759 = vadd.f32 0.0, %v1758
        %1760 = vmatprep.mubr.bf16.mxu0 0
        %1761 = vmatmul.mubr.bf16.gmra.mrb[0].mxu0 %v846
        %v1762 = vpop.f32.mrb[0].mxu0
        %v1763 = vadd.f32 0.0, %v1762
        %v1764 = vpop.f32.mrb[0].mxu0
        %v1765 = vadd.f32 0.0, %v1764
        %v1766 = vpop.f32.mrb[0].mxu0
        %v1767 = vadd.f32 0.0, %v1766
        %v1768 = vpop.f32.mrb[0].mxu0
        %v1769 = vadd.f32 0.0, %v1768
        %1770 = vmatprep.mubr.bf16.mxu0 0
        %1771 = vmatmul.mubr.bf16.gmra.mrb[0].mxu0 %v849
        %v1772 = vpop.f32.mrb[0].mxu0
        %v1773 = vadd.f32 0.0, %v1772
        %v1774 = vpop.f32.mrb[0].mxu0
        %v1775 = vadd.f32 0.0, %v1774
        %v1776 = vpop.f32.mrb[0].mxu0
        %v1777 = vadd.f32 0.0, %v1776
        %v1778 = vpop.f32.mrb[0].mxu0
        %v1779 = vadd.f32 0.0, %v1778
        %1780 = vmatprep.mubr.bf16.mxu0 0
        %1781 = vmatmul.mubr.bf16.gmra.mrb[0].mxu0 %v852
        %v1782 = vpop.f32.mrb[0].mxu0
        %v1783 = vadd.f32 0.0, %v1782
        %v1784 = vpop.f32.mrb[0].mxu0
        %v1785 = vadd.f32 0.0, %v1784
        %v1786 = vpop.f32.mrb[0].mxu0
        %v1787 = vadd.f32 0.0, %v1786
        %v1788 = vpop.f32.mrb[0].mxu0
        %v1789 = vadd.f32 0.0, %v1788
        %1790 = vmatprep.mubr.bf16.mxu0 0
        %1791 = vmatmul.mubr.bf16.gmra.mrb[0].mxu0 %v855
        %v1792 = vpop.f32.mrb[0].mxu0
        %v1793 = vadd.f32 0.0, %v1792
        %v1794 = vpop.f32.mrb[0].mxu0
        %v1795 = vadd.f32 0.0, %v1794
        %v1796 = vpop.f32.mrb[0].mxu0
        %v1797 = vadd.f32 0.0, %v1796
        %v1798 = vpop.f32.mrb[0].mxu0
        %v1799 = vadd.f32 0.0, %v1798
        %1800 = vmatprep.mubr.bf16.mxu0 0
        %1801 = vmatmul.mubr.bf16.gmra.mrb[0].mxu0 %v858
        %v1802 = vpop.f32.mrb[0].mxu0
        %v1803 = vadd.f32 0.0, %v1802
        %v1804 = vpop.f32.mrb[0].mxu0
        %v1805 = vadd.f32 0.0, %v1804
        %v1806 = vpop.f32.mrb[0].mxu0
        %v1807 = vadd.f32 0.0, %v1806
        %v1808 = vpop.f32.mrb[0].mxu0
        %v1809 = vadd.f32 0.0, %v1808
        %1810 = vmatprep.mubr.bf16.mxu0 0
        %1811 = vmatmul.mubr.bf16.gmra.mrb[0].mxu0 %v861
        %v1812 = vpop.f32.mrb[0].mxu0
        %v1813 = vadd.f32 0.0, %v1812
        %v1814 = vpop.f32.mrb[0].mxu0
        %v1815 = vadd.f32 0.0, %v1814
        %v1816 = vpop.f32.mrb[0].mxu0
        %v1817 = vadd.f32 0.0, %v1816
        %v1818 = vpop.f32.mrb[0].mxu0
        %v1819 = vadd.f32 0.0, %v1818
        %1820 = vmatprep.mubr.bf16.mxu0 0
        %1821 = vmatmul.mubr.bf16.gmra.mrb[0].mxu0 %v864
        %v1822 = vpop.f32.mrb[0].mxu0
        %v1823 = vadd.f32 0.0, %v1822
        %v1824 = vpop.f32.mrb[0].mxu0
        %v1825 = vadd.f32 0.0, %v1824
        %v1826 = vpop.f32.mrb[0].mxu0
        %v1827 = vadd.f32 0.0, %v1826
        %v1828 = vpop.f32.mrb[0].mxu0
        %v1829 = vadd.f32 0.0, %v1828
        %1830 = vmatprep.mubr.bf16.mxu0 0
        %1831 = vmatmul.mubr.bf16.gmra.mrb[0].mxu0 %v867
        %v1832 = vpop.f32.mrb[0].mxu0
        %v1833 = vadd.f32 0.0, %v1832
        %v1834 = vpop.f32.mrb[0].mxu0
        %v1835 = vadd.f32 0.0, %v1834
        %v1836 = vpop.f32.mrb[0].mxu0
        %v1837 = vadd.f32 0.0, %v1836
        %v1838 = vpop.f32.mrb[0].mxu0
        %v1839 = vadd.f32 0.0, %v1838
        %1840 = vmatprep.mubr.bf16.mxu0 0
        %1841 = vmatmul.mubr.bf16.gmra.mrb[0].mxu0 %v870
        %v1842 = vpop.f32.mrb[0].mxu0
        %v1843 = vadd.f32 0.0, %v1842
        %v1844 = vpop.f32.mrb[0].mxu0
        %v1845 = vadd.f32 0.0, %v1844
        %v1846 = vpop.f32.mrb[0].mxu0
        %v1847 = vadd.f32 0.0, %v1846
        %v1848 = vpop.f32.mrb[0].mxu0
        %v1849 = vadd.f32 0.0, %v1848
        %1850 = vmatprep.mubr.bf16.mxu0 0
        %1851 = vmatmul.mubr.bf16.gmra.mrb[0].mxu0 %v873
        %v1852 = vpop.f32.mrb[0].mxu0
        %v1853 = vadd.f32 0.0, %v1852
        %v1854 = vpop.f32.mrb[0].mxu0
        %v1855 = vadd.f32 0.0, %v1854
        %v1856 = vpop.f32.mrb[0].mxu0
        %v1857 = vadd.f32 0.0, %v1856
        %v1858 = vpop.f32.mrb[0].mxu0
        %v1859 = vadd.f32 0.0, %v1858
        %1860 = vmatprep.mubr.bf16.mxu0 0
        %1861 = vmatmul.mubr.bf16.gmra.mrb[0].mxu0 %v876
        %v1862 = vpop.f32.mrb[0].mxu0
        %v1863 = vadd.f32 0.0, %v1862
        %v1864 = vpop.f32.mrb[0].mxu0
        %v1865 = vadd.f32 0.0, %v1864
        %v1866 = vpop.f32.mrb[0].mxu0
        %v1867 = vadd.f32 0.0, %v1866
        %v1868 = vpop.f32.mrb[0].mxu0
        %v1869 = vadd.f32 0.0, %v1868
        %1870 = vmatprep.mubr.bf16.mxu0 0
        %1871 = vmatmul.mubr.bf16.gmra.mrb[0].mxu0 %v879
        %v1872 = vpop.f32.mrb[0].mxu0
        %v1873 = vadd.f32 0.0, %v1872
        %v1874 = vpop.f32.mrb[0].mxu0
        %v1875 = vadd.f32 0.0, %v1874
        %v1876 = vpop.f32.mrb[0].mxu0
        %v1877 = vadd.f32 0.0, %v1876
        %v1878 = vpop.f32.mrb[0].mxu0
        %v1879 = vadd.f32 0.0, %v1878
        %1880 = vmatprep.mubr.bf16.mxu0 0
        %1881 = vmatmul.mubr.bf16.gmra.mrb[0].mxu0 %v882
        %v1882 = vpop.f32.mrb[0].mxu0
        %v1883 = vadd.f32 0.0, %v1882
        %v1884 = vpop.f32.mrb[0].mxu0
        %v1885 = vadd.f32 0.0, %v1884
        %v1886 = vpop.f32.mrb[0].mxu0
        %v1887 = vadd.f32 0.0, %v1886
        %v1888 = vpop.f32.mrb[0].mxu0
        %v1889 = vadd.f32 0.0, %v1888
        %1890 = vmatprep.mubr.bf16.mxu0 0
        %1891 = vmatmul.mubr.bf16.gmra.mrb[0].mxu0 %v885
        %v1892 = vpop.f32.mrb[0].mxu0
        %v1893 = vadd.f32 0.0, %v1892
        %v1894 = vpop.f32.mrb[0].mxu0
        %v1895 = vadd.f32 0.0, %v1894
        %v1896 = vpop.f32.mrb[0].mxu0
        %v1897 = vadd.f32 0.0, %v1896
        %v1898 = vpop.f32.mrb[0].mxu0
        %v1899 = vadd.f32 0.0, %v1898
        %1900 = vmatprep.mubr.bf16.mxu0 0
        %1901 = vmatmul.mubr.bf16.gmra.mrb[0].mxu0 %v888
        %v1902 = vpop.f32.mrb[0].mxu0
        %v1903 = vadd.f32 0.0, %v1902
        %v1904 = vpop.f32.mrb[0].mxu0
        %v1905 = vadd.f32 0.0, %v1904
        %v1906 = vpop.f32.mrb[0].mxu0
        %v1907 = vadd.f32 0.0, %v1906
        %v1908 = vpop.f32.mrb[0].mxu0
        %v1909 = vadd.f32 0.0, %v1908
        %1910 = vmatprep.mubr.bf16.mxu0 0
        %1911 = vmatmul.mubr.bf16.gmra.mrb[0].mxu0 %v891
        %v1912 = vpop.f32.mrb[0].mxu0
        %v1913 = vadd.f32 0.0, %v1912
        %v1914 = vpop.f32.mrb[0].mxu0
        %v1915 = vadd.f32 0.0, %v1914
        %v1916 = vpop.f32.mrb[0].mxu0
        %v1917 = vadd.f32 0.0, %v1916
        %v1918 = vpop.f32.mrb[0].mxu0
        %v1919 = vadd.f32 0.0, %v1918
        %1920 = vmatprep.mubr.bf16.mxu0 0
        %1921 = vmatmul.mubr.bf16.gmra.mrb[0].mxu0 %v894
        %v1922 = vpop.f32.mrb[0].mxu0
        %v1923 = vadd.f32 0.0, %v1922
        %v1924 = vpop.f32.mrb[0].mxu0
        %v1925 = vadd.f32 0.0, %v1924
        %v1926 = vpop.f32.mrb[0].mxu0
        %v1927 = vadd.f32 0.0, %v1926
        %v1928 = vpop.f32.mrb[0].mxu0
        %v1929 = vadd.f32 0.0, %v1928
        %1930 = vmatprep.mubr.bf16.mxu0 0
        %1931 = vmatmul.mubr.bf16.gmra.mrb[0].mxu0 %v897
        %v1932 = vpop.f32.mrb[0].mxu0
        %v1933 = vadd.f32 0.0, %v1932
        %v1934 = vpop.f32.mrb[0].mxu0
        %v1935 = vadd.f32 0.0, %v1934
        %v1936 = vpop.f32.mrb[0].mxu0
        %v1937 = vadd.f32 0.0, %v1936
        %v1938 = vpop.f32.mrb[0].mxu0
        %v1939 = vadd.f32 0.0, %v1938
        %1940 = vmatprep.mubr.bf16.mxu0 0
        %1941 = vmatmul.mubr.bf16.gmra.mrb[0].mxu0 %v900
        %v1942 = vpop.f32.mrb[0].mxu0
        %v1943 = vadd.f32 0.0, %v1942
        %v1944 = vpop.f32.mrb[0].mxu0
        %v1945 = vadd.f32 0.0, %v1944
        %v1946 = vpop.f32.mrb[0].mxu0
        %v1947 = vadd.f32 0.0, %v1946
        %v1948 = vpop.f32.mrb[0].mxu0
        %v1949 = vadd.f32 0.0, %v1948
        %1950 = vmatprep.mubr.bf16.mxu0 0
        %1951 = vmatmul.mubr.bf16.gmra.mrb[0].mxu0 %v903
        %v1952 = vpop.f32.mrb[0].mxu0
        %v1953 = vadd.f32 0.0, %v1952
        %v1954 = vpop.f32.mrb[0].mxu0
        %v1955 = vadd.f32 0.0, %v1954
        %v1956 = vpop.f32.mrb[0].mxu0
        %v1957 = vadd.f32 0.0, %v1956
        %v1958 = vpop.f32.mrb[0].mxu0
        %v1959 = vadd.f32 0.0, %v1958
        %1960 = vmatprep.mubr.bf16.mxu0 0
        %1961 = vmatmul.mubr.bf16.gmra.mrb[0].mxu0 %v906
        %v1962 = vpop.f32.mrb[0].mxu0
        %v1963 = vadd.f32 0.0, %v1962
        %v1964 = vpop.f32.mrb[0].mxu0
        %v1965 = vadd.f32 0.0, %v1964
        %v1966 = vpop.f32.mrb[0].mxu0
        %v1967 = vadd.f32 0.0, %v1966
        %v1968 = vpop.f32.mrb[0].mxu0
        %v1969 = vadd.f32 0.0, %v1968
        %1970 = vmatprep.mubr.bf16.mxu0 0
        %1971 = vmatmul.mubr.bf16.gmra.mrb[0].mxu0 %v909
        %v1972 = vpop.f32.mrb[0].mxu0
        %v1973 = vadd.f32 0.0, %v1972
        %v1974 = vpop.f32.mrb[0].mxu0
        %v1975 = vadd.f32 0.0, %v1974
        %v1976 = vpop.f32.mrb[0].mxu0
        %v1977 = vadd.f32 0.0, %v1976
        %v1978 = vpop.f32.mrb[0].mxu0
        %v1979 = vadd.f32 0.0, %v1978
        %1980 = vmatprep.mubr.bf16.mxu0 0
        %1981 = vmatmul.mubr.bf16.gmra.mrb[0].mxu0 %v912
        %v1982 = vpop.f32.mrb[0].mxu0
        %v1983 = vadd.f32 0.0, %v1982
        %v1984 = vpop.f32.mrb[0].mxu0
        %v1985 = vadd.f32 0.0, %v1984
        %v1986 = vpop.f32.mrb[0].mxu0
        %v1987 = vadd.f32 0.0, %v1986
        %v1988 = vpop.f32.mrb[0].mxu0
        %v1989 = vadd.f32 0.0, %v1988
        %1990 = vmatprep.mubr.bf16.mxu0 0
        %1991 = vmatmul.mubr.bf16.gmra.mrb[0].mxu0 %v915
        %v1992 = vpop.f32.mrb[0].mxu0
        %v1993 = vadd.f32 0.0, %v1992
        %v1994 = vpop.f32.mrb[0].mxu0
        %v1995 = vadd.f32 0.0, %v1994
        %v1996 = vpop.f32.mrb[0].mxu0
        %v1997 = vadd.f32 0.0, %v1996
        %v1998 = vpop.f32.mrb[0].mxu0
        %v1999 = vadd.f32 0.0, %v1998
        %2000 = vmatprep.mubr.bf16.mxu0 0
        %2001 = vmatmul.mubr.bf16.gmra.mrb[0].mxu0 %v918
        %v2002 = vpop.f32.mrb[0].mxu0
        %v2003 = vadd.f32 0.0, %v2002
        %v2004 = vpop.f32.mrb[0].mxu0
        %v2005 = vadd.f32 0.0, %v2004
        %v2006 = vpop.f32.mrb[0].mxu0
        %v2007 = vadd.f32 0.0, %v2006
        %v2008 = vpop.f32.mrb[0].mxu0
        %v2009 = vadd.f32 0.0, %v2008
        %2010 = vmatprep.mubr.bf16.mxu0 0
        %2011 = vmatmul.mubr.bf16.gmra.mrb[0].mxu0 %v921
        %v2012 = vpop.f32.mrb[0].mxu0
        %v2013 = vadd.f32 0.0, %v2012
        %v2014 = vpop.f32.mrb[0].mxu0
        %v2015 = vadd.f32 0.0, %v2014
        %v2016 = vpop.f32.mrb[0].mxu0
        %v2017 = vadd.f32 0.0, %v2016
        %v2018 = vpop.f32.mrb[0].mxu0
        %v2019 = vadd.f32 0.0, %v2018
        %2020 = vmatprep.mubr.bf16.mxu0 0
        %2021 = vmatmul.mubr.bf16.gmra.mrb[0].mxu0 %v924
        %v2022 = vpop.f32.mrb[0].mxu0
        %v2023 = vadd.f32 0.0, %v2022
        %v2024 = vpop.f32.mrb[0].mxu0
        %v2025 = vadd.f32 0.0, %v2024
        %v2026 = vpop.f32.mrb[0].mxu0
        %v2027 = vadd.f32 0.0, %v2026
        %v2028 = vpop.f32.mrb[0].mxu0
        %v2029 = vadd.f32 0.0, %v2028
        %2030 = vmatprep.mubr.bf16.mxu0 0
        %2031 = vmatmul.mubr.bf16.gmra.mrb[0].mxu0 %v927
        %v2032 = vpop.f32.mrb[0].mxu0
        %v2033 = vadd.f32 0.0, %v2032
        %v2034 = vpop.f32.mrb[0].mxu0
        %v2035 = vadd.f32 0.0, %v2034
        %v2036 = vpop.f32.mrb[0].mxu0
        %v2037 = vadd.f32 0.0, %v2036
        %v2038 = vpop.f32.mrb[0].mxu0
        %v2039 = vadd.f32 0.0, %v2038
        %2040 = vmatprep.mubr.bf16.mxu0 0
        %2041 = vmatmul.mubr.bf16.gmra.mrb[0].mxu0 %v930
        %v2042 = vpop.f32.mrb[0].mxu0
        %v2043 = vadd.f32 0.0, %v2042
        %v2044 = vpop.f32.mrb[0].mxu0
        %v2045 = vadd.f32 0.0, %v2044
        %v2046 = vpop.f32.mrb[0].mxu0
        %v2047 = vadd.f32 0.0, %v2046
        %v2048 = vpop.f32.mrb[0].mxu0
        %v2049 = vadd.f32 0.0, %v2048
        %2050 = vdwg.mxu0
        %2051 = vst [vmem:[#allocation2] sm:$0xff] %v980
        %2052 = vst [vmem:[#allocation2 + $0x8] sm:$0xff] %v982
        %2053 = vst [vmem:[#allocation2 + $0x10] sm:$0xff] %v1533
        %2054 = vst [vmem:[#allocation2 + $0x18] sm:$0xff] %v1535
        %2055 = vst [vmem:[#allocation2 + $0x20] sm:$0xff] %v984
        %2056 = vst [vmem:[#allocation2 + $0x28] sm:$0xff] %v986
        %2057 = vst [vmem:[#allocation2 + $0x30] sm:$0xff] %v1537
        %2058 = vst [vmem:[#allocation2 + $0x38] sm:$0xff] %v1539
        %2059 = vst [vmem:[#allocation2 + $0x40] sm:$0xff] %v990
        %2060 = vst [vmem:[#allocation2 + $0x48] sm:$0xff] %v992
        %2061 = vst [vmem:[#allocation2 + $0x50] sm:$0xff] %v1543
        %2062 = vst [vmem:[#allocation2 + $0x58] sm:$0xff] %v1545
        %2063 = vst [vmem:[#allocation2 + $0x60] sm:$0xff] %v994
        %2064 = vst [vmem:[#allocation2 + $0x68] sm:$0xff] %v996
        %2065 = vst [vmem:[#allocation2 + $0x70] sm:$0xff] %v1547
        %2066 = vst [vmem:[#allocation2 + $0x78] sm:$0xff] %v1549
        %2067 = vst [vmem:[#allocation2 + $0x80] sm:$0xff] %v1000
        %2068 = vst [vmem:[#allocation2 + $0x88] sm:$0xff] %v1002
        %2069 = vst [vmem:[#allocation2 + $0x90] sm:$0xff] %v1553
        %2070 = vst [vmem:[#allocation2 + $0x98] sm:$0xff] %v1555
        %2071 = vst [vmem:[#allocation2 + $0xa0] sm:$0xff] %v1004
        %2072 = vst [vmem:[#allocation2 + $0xa8] sm:$0xff] %v1006
        %2073 = vst [vmem:[#allocation2 + $0xb0] sm:$0xff] %v1557
        %2074 = vst [vmem:[#allocation2 + $0xb8] sm:$0xff] %v1559
        %2075 = vst [vmem:[#allocation2 + $0xc0] sm:$0xff] %v1010
        %2076 = vst [vmem:[#allocation2 + $0xc8] sm:$0xff] %v1012
        %2077 = vst [vmem:[#allocation2 + $0xd0] sm:$0xff] %v1563
        %2078 = vst [vmem:[#allocation2 + $0xd8] sm:$0xff] %v1565
        %2079 = vst [vmem:[#allocation2 + $0xe0] sm:$0xff] %v1014
        %2080 = vst [vmem:[#allocation2 + $0xe8] sm:$0xff] %v1016
        %2081 = vst [vmem:[#allocation2 + $0xf0] sm:$0xff] %v1567
        %2082 = vst [vmem:[#allocation2 + $0xf8] sm:$0xff] %v1569
        %2083 = vst [vmem:[#allocation2 + $0x100] sm:$0xff] %v1020
        %2084 = vst [vmem:[#allocation2 + $0x108] sm:$0xff] %v1022
        %2085 = vst [vmem:[#allocation2 + $0x110] sm:$0xff] %v1573
        %2086 = vst [vmem:[#allocation2 + $0x118] sm:$0xff] %v1575
        %2087 = vst [vmem:[#allocation2 + $0x120] sm:$0xff] %v1024
        %2088 = vst [vmem:[#allocation2 + $0x128] sm:$0xff] %v1026
        %2089 = vst [vmem:[#allocation2 + $0x130] sm:$0xff] %v1577
        %2090 = vst [vmem:[#allocation2 + $0x138] sm:$0xff] %v1579
        %2091 = vst [vmem:[#allocation2 + $0x140] sm:$0xff] %v1030
        %2092 = vst [vmem:[#allocation2 + $0x148] sm:$0xff] %v1032
        %2093 = vst [vmem:[#allocation2 + $0x150] sm:$0xff] %v1583
        %2094 = vst [vmem:[#allocation2 + $0x158] sm:$0xff] %v1585
        %2095 = vst [vmem:[#allocation2 + $0x160] sm:$0xff] %v1034
        %2096 = vst [vmem:[#allocation2 + $0x168] sm:$0xff] %v1036
        %2097 = vst [vmem:[#allocation2 + $0x170] sm:$0xff] %v1587
        %2098 = vst [vmem:[#allocation2 + $0x178] sm:$0xff] %v1589
        %2099 = vst [vmem:[#allocation2 + $0x180] sm:$0xff] %v1040
        %2100 = vst [vmem:[#allocation2 + $0x188] sm:$0xff] %v1042
        %2101 = vst [vmem:[#allocation2 + $0x190] sm:$0xff] %v1593
        %2102 = vst [vmem:[#allocation2 + $0x198] sm:$0xff] %v1595
        %2103 = vst [vmem:[#allocation2 + $0x1a0] sm:$0xff] %v1044
        %2104 = vst [vmem:[#allocation2 + $0x1a8] sm:$0xff] %v1046
        %2105 = vst [vmem:[#allocation2 + $0x1b0] sm:$0xff] %v1597
        %2106 = vst [vmem:[#allocation2 + $0x1b8] sm:$0xff] %v1599
        %2107 = vst [vmem:[#allocation2 + $0x1c0] sm:$0xff] %v1050
        %2108 = vst [vmem:[#allocation2 + $0x1c8] sm:$0xff] %v1052
        %2109 = vst [vmem:[#allocation2 + $0x1d0] sm:$0xff] %v1603
        %2110 = vst [vmem:[#allocation2 + $0x1d8] sm:$0xff] %v1605
        %2111 = vst [vmem:[#allocation2 + $0x1e0] sm:$0xff] %v1054
        %2112 = vst [vmem:[#allocation2 + $0x1e8] sm:$0xff] %v1056
        %2113 = vst [vmem:[#allocation2 + $0x1f0] sm:$0xff] %v1607
        %2114 = vst [vmem:[#allocation2 + $0x1f8] sm:$0xff] %v1609
        %2115 = vst [vmem:[#allocation2 + $0x200] sm:$0xff] %v1060
        %2116 = vst [vmem:[#allocation2 + $0x208] sm:$0xff] %v1062
        %2117 = vst [vmem:[#allocation2 + $0x210] sm:$0xff] %v1613
        %2118 = vst [vmem:[#allocation2 + $0x218] sm:$0xff] %v1615
        %2119 = vst [vmem:[#allocation2 + $0x220] sm:$0xff] %v1064
        %2120 = vst [vmem:[#allocation2 + $0x228] sm:$0xff] %v1066
        %2121 = vst [vmem:[#allocation2 + $0x230] sm:$0xff] %v1617
        %2122 = vst [vmem:[#allocation2 + $0x238] sm:$0xff] %v1619
        %2123 = vst [vmem:[#allocation2 + $0x240] sm:$0xff] %v1070
        %2124 = vst [vmem:[#allocation2 + $0x248] sm:$0xff] %v1072
        %2125 = vst [vmem:[#allocation2 + $0x250] sm:$0xff] %v1623
        %2126 = vst [vmem:[#allocation2 + $0x258] sm:$0xff] %v1625
        %2127 = vst [vmem:[#allocation2 + $0x260] sm:$0xff] %v1074
        %2128 = vst [vmem:[#allocation2 + $0x268] sm:$0xff] %v1076
        %2129 = vst [vmem:[#allocation2 + $0x270] sm:$0xff] %v1627
        %2130 = vst [vmem:[#allocation2 + $0x278] sm:$0xff] %v1629
        %2131 = vst [vmem:[#allocation2 + $0x280] sm:$0xff] %v1080
        %2132 = vst [vmem:[#allocation2 + $0x288] sm:$0xff] %v1082
        %2133 = vst [vmem:[#allocation2 + $0x290] sm:$0xff] %v1633
        %2134 = vst [vmem:[#allocation2 + $0x298] sm:$0xff] %v1635
        %2135 = vst [vmem:[#allocation2 + $0x2a0] sm:$0xff] %v1084
        %2136 = vst [vmem:[#allocation2 + $0x2a8] sm:$0xff] %v1086
        %2137 = vst [vmem:[#allocation2 + $0x2b0] sm:$0xff] %v1637
        %2138 = vst [vmem:[#allocation2 + $0x2b8] sm:$0xff] %v1639
        %2139 = vst [vmem:[#allocation2 + $0x2c0] sm:$0xff] %v1090
        %2140 = vst [vmem:[#allocation2 + $0x2c8] sm:$0xff] %v1092
        %2141 = vst [vmem:[#allocation2 + $0x2d0] sm:$0xff] %v1643
        %2142 = vst [vmem:[#allocation2 + $0x2d8] sm:$0xff] %v1645
        %2143 = vst [vmem:[#allocation2 + $0x2e0] sm:$0xff] %v1094
        %2144 = vst [vmem:[#allocation2 + $0x2e8] sm:$0xff] %v1096
        %2145 = vst [vmem:[#allocation2 + $0x2f0] sm:$0xff] %v1647
        %2146 = vst [vmem:[#allocation2 + $0x2f8] sm:$0xff] %v1649
        %2147 = vst [vmem:[#allocation2 + $0x300] sm:$0xff] %v1100
        %2148 = vst [vmem:[#allocation2 + $0x308] sm:$0xff] %v1102
        %2149 = vst [vmem:[#allocation2 + $0x310] sm:$0xff] %v1653
        %2150 = vst [vmem:[#allocation2 + $0x318] sm:$0xff] %v1655
        %2151 = vst [vmem:[#allocation2 + $0x320] sm:$0xff] %v1104
        %2152 = vst [vmem:[#allocation2 + $0x328] sm:$0xff] %v1106
        %2153 = vst [vmem:[#allocation2 + $0x330] sm:$0xff] %v1657
        %2154 = vst [vmem:[#allocation2 + $0x338] sm:$0xff] %v1659
        %2155 = vst [vmem:[#allocation2 + $0x340] sm:$0xff] %v1110
        %2156 = vst [vmem:[#allocation2 + $0x348] sm:$0xff] %v1112
        %2157 = vst [vmem:[#allocation2 + $0x350] sm:$0xff] %v1663
        %2158 = vst [vmem:[#allocation2 + $0x358] sm:$0xff] %v1665
        %2159 = vst [vmem:[#allocation2 + $0x360] sm:$0xff] %v1114
        %2160 = vst [vmem:[#allocation2 + $0x368] sm:$0xff] %v1116
        %2161 = vst [vmem:[#allocation2 + $0x370] sm:$0xff] %v1667
        %2162 = vst [vmem:[#allocation2 + $0x378] sm:$0xff] %v1669
        %2163 = vst [vmem:[#allocation2 + $0x380] sm:$0xff] %v1120
        %2164 = vst [vmem:[#allocation2 + $0x388] sm:$0xff] %v1122
        %2165 = vst [vmem:[#allocation2 + $0x390] sm:$0xff] %v1673
        %2166 = vst [vmem:[#allocation2 + $0x398] sm:$0xff] %v1675
        %2167 = vst [vmem:[#allocation2 + $0x3a0] sm:$0xff] %v1124
        %2168 = vst [vmem:[#allocation2 + $0x3a8] sm:$0xff] %v1126
        %2169 = vst [vmem:[#allocation2 + $0x3b0] sm:$0xff] %v1677
        %2170 = vst [vmem:[#allocation2 + $0x3b8] sm:$0xff] %v1679
        %2171 = vst [vmem:[#allocation2 + $0x3c0] sm:$0xff] %v1130
        %2172 = vst [vmem:[#allocation2 + $0x3c8] sm:$0xff] %v1132
        %2173 = vst [vmem:[#allocation2 + $0x3d0] sm:$0xff] %v1683
        %2174 = vst [vmem:[#allocation2 + $0x3d8] sm:$0xff] %v1685
        %2175 = vst [vmem:[#allocation2 + $0x3e0] sm:$0xff] %v1134
        %2176 = vst [vmem:[#allocation2 + $0x3e8] sm:$0xff] %v1136
        %2177 = vst [vmem:[#allocation2 + $0x3f0] sm:$0xff] %v1687
        %2178 = vst [vmem:[#allocation2 + $0x3f8] sm:$0xff] %v1689
        %2179 = vst [vmem:[#allocation2 + $0x400] sm:$0xff] %v1140
        %2180 = vst [vmem:[#allocation2 + $0x408] sm:$0xff] %v1142
        %2181 = vst [vmem:[#allocation2 + $0x410] sm:$0xff] %v1693
        %2182 = vst [vmem:[#allocation2 + $0x418] sm:$0xff] %v1695
        %2183 = vst [vmem:[#allocation2 + $0x420] sm:$0xff] %v1144
        %2184 = vst [vmem:[#allocation2 + $0x428] sm:$0xff] %v1146
        %2185 = vst [vmem:[#allocation2 + $0x430] sm:$0xff] %v1697
        %2186 = vst [vmem:[#allocation2 + $0x438] sm:$0xff] %v1699
        %2187 = vst [vmem:[#allocation2 + $0x440] sm:$0xff] %v1150
        %2188 = vst [vmem:[#allocation2 + $0x448] sm:$0xff] %v1152
        %2189 = vst [vmem:[#allocation2 + $0x450] sm:$0xff] %v1703
        %2190 = vst [vmem:[#allocation2 + $0x458] sm:$0xff] %v1705
        %2191 = vst [vmem:[#allocation2 + $0x460] sm:$0xff] %v1154
        %2192 = vst [vmem:[#allocation2 + $0x468] sm:$0xff] %v1156
        %2193 = vst [vmem:[#allocation2 + $0x470] sm:$0xff] %v1707
        %2194 = vst [vmem:[#allocation2 + $0x478] sm:$0xff] %v1709
        %2195 = vst [vmem:[#allocation2 + $0x480] sm:$0xff] %v1160
        %2196 = vst [vmem:[#allocation2 + $0x488] sm:$0xff] %v1162
        %2197 = vst [vmem:[#allocation2 + $0x490] sm:$0xff] %v1713
        %2198 = vst [vmem:[#allocation2 + $0x498] sm:$0xff] %v1715
        %2199 = vst [vmem:[#allocation2 + $0x4a0] sm:$0xff] %v1164
        %2200 = vst [vmem:[#allocation2 + $0x4a8] sm:$0xff] %v1166
        %2201 = vst [vmem:[#allocation2 + $0x4b0] sm:$0xff] %v1717
        %2202 = vst [vmem:[#allocation2 + $0x4b8] sm:$0xff] %v1719
        %2203 = vst [vmem:[#allocation2 + $0x4c0] sm:$0xff] %v1170
        %2204 = vst [vmem:[#allocation2 + $0x4c8] sm:$0xff] %v1172
        %2205 = vst [vmem:[#allocation2 + $0x4d0] sm:$0xff] %v1723
        %2206 = vst [vmem:[#allocation2 + $0x4d8] sm:$0xff] %v1725
        %2207 = vst [vmem:[#allocation2 + $0x4e0] sm:$0xff] %v1174
        %2208 = vst [vmem:[#allocation2 + $0x4e8] sm:$0xff] %v1176
        %2209 = vst [vmem:[#allocation2 + $0x4f0] sm:$0xff] %v1727
        %2210 = vst [vmem:[#allocation2 + $0x4f8] sm:$0xff] %v1729
        %2211 = vst [vmem:[#allocation2 + $0x500] sm:$0xff] %v1180
        %2212 = vst [vmem:[#allocation2 + $0x508] sm:$0xff] %v1182
        %2213 = vst [vmem:[#allocation2 + $0x510] sm:$0xff] %v1733
        %2214 = vst [vmem:[#allocation2 + $0x518] sm:$0xff] %v1735
        %2215 = vst [vmem:[#allocation2 + $0x520] sm:$0xff] %v1184
        %2216 = vst [vmem:[#allocation2 + $0x528] sm:$0xff] %v1186
        %2217 = vst [vmem:[#allocation2 + $0x530] sm:$0xff] %v1737
        %2218 = vst [vmem:[#allocation2 + $0x538] sm:$0xff] %v1739
        %2219 = vst [vmem:[#allocation2 + $0x540] sm:$0xff] %v1190
        %2220 = vst [vmem:[#allocation2 + $0x548] sm:$0xff] %v1192
        %2221 = vst [vmem:[#allocation2 + $0x550] sm:$0xff] %v1743
        %2222 = vst [vmem:[#allocation2 + $0x558] sm:$0xff] %v1745
        %2223 = vst [vmem:[#allocation2 + $0x560] sm:$0xff] %v1194
        %2224 = vst [vmem:[#allocation2 + $0x568] sm:$0xff] %v1196
        %2225 = vst [vmem:[#allocation2 + $0x570] sm:$0xff] %v1747
        %2226 = vst [vmem:[#allocation2 + $0x578] sm:$0xff] %v1749
        %2227 = vst [vmem:[#allocation2 + $0x580] sm:$0xff] %v1200
        %2228 = vst [vmem:[#allocation2 + $0x588] sm:$0xff] %v1202
        %2229 = vst [vmem:[#allocation2 + $0x590] sm:$0xff] %v1753
        %2230 = vst [vmem:[#allocation2 + $0x598] sm:$0xff] %v1755
        %2231 = vst [vmem:[#allocation2 + $0x5a0] sm:$0xff] %v1204
        %2232 = vst [vmem:[#allocation2 + $0x5a8] sm:$0xff] %v1206
        %2233 = vst [vmem:[#allocation2 + $0x5b0] sm:$0xff] %v1757
        %2234 = vst [vmem:[#allocation2 + $0x5b8] sm:$0xff] %v1759
        %2235 = vst [vmem:[#allocation2 + $0x5c0] sm:$0xff] %v1210
        %2236 = vst [vmem:[#allocation2 + $0x5c8] sm:$0xff] %v1212
        %2237 = vst [vmem:[#allocation2 + $0x5d0] sm:$0xff] %v1763
        %2238 = vst [vmem:[#allocation2 + $0x5d8] sm:$0xff] %v1765
        %2239 = vst [vmem:[#allocation2 + $0x5e0] sm:$0xff] %v1214
        %2240 = vst [vmem:[#allocation2 + $0x5e8] sm:$0xff] %v1216
        %2241 = vst [vmem:[#allocation2 + $0x5f0] sm:$0xff] %v1767
        %2242 = vst [vmem:[#allocation2 + $0x5f8] sm:$0xff] %v1769
        %2243 = vst [vmem:[#allocation2 + $0x600] sm:$0xff] %v1220
        %2244 = vst [vmem:[#allocation2 + $0x608] sm:$0xff] %v1222
        %2245 = vst [vmem:[#allocation2 + $0x610] sm:$0xff] %v1773
        %2246 = vst [vmem:[#allocation2 + $0x618] sm:$0xff] %v1775
        %2247 = vst [vmem:[#allocation2 + $0x620] sm:$0xff] %v1224
        %2248 = vst [vmem:[#allocation2 + $0x628] sm:$0xff] %v1226
        %2249 = vst [vmem:[#allocation2 + $0x630] sm:$0xff] %v1777
        %2250 = vst [vmem:[#allocation2 + $0x638] sm:$0xff] %v1779
        %2251 = vst [vmem:[#allocation2 + $0x640] sm:$0xff] %v1230
        %2252 = vst [vmem:[#allocation2 + $0x648] sm:$0xff] %v1232
        %2253 = vst [vmem:[#allocation2 + $0x650] sm:$0xff] %v1783
        %2254 = vst [vmem:[#allocation2 + $0x658] sm:$0xff] %v1785
        %2255 = vst [vmem:[#allocation2 + $0x660] sm:$0xff] %v1234
        %2256 = vst [vmem:[#allocation2 + $0x668] sm:$0xff] %v1236
        %2257 = vst [vmem:[#allocation2 + $0x670] sm:$0xff] %v1787
        %2258 = vst [vmem:[#allocation2 + $0x678] sm:$0xff] %v1789
        %2259 = vst [vmem:[#allocation2 + $0x680] sm:$0xff] %v1240
        %2260 = vst [vmem:[#allocation2 + $0x688] sm:$0xff] %v1242
        %2261 = vst [vmem:[#allocation2 + $0x690] sm:$0xff] %v1793
        %2262 = vst [vmem:[#allocation2 + $0x698] sm:$0xff] %v1795
        %2263 = vst [vmem:[#allocation2 + $0x6a0] sm:$0xff] %v1244
        %2264 = vst [vmem:[#allocation2 + $0x6a8] sm:$0xff] %v1246
        %2265 = vst [vmem:[#allocation2 + $0x6b0] sm:$0xff] %v1797
        %2266 = vst [vmem:[#allocation2 + $0x6b8] sm:$0xff] %v1799
        %2267 = vst [vmem:[#allocation2 + $0x6c0] sm:$0xff] %v1250
        %2268 = vst [vmem:[#allocation2 + $0x6c8] sm:$0xff] %v1252
        %2269 = vst [vmem:[#allocation2 + $0x6d0] sm:$0xff] %v1803
        %2270 = vst [vmem:[#allocation2 + $0x6d8] sm:$0xff] %v1805
        %2271 = vst [vmem:[#allocation2 + $0x6e0] sm:$0xff] %v1254
        %2272 = vst [vmem:[#allocation2 + $0x6e8] sm:$0xff] %v1256
        %2273 = vst [vmem:[#allocation2 + $0x6f0] sm:$0xff] %v1807
        %2274 = vst [vmem:[#allocation2 + $0x6f8] sm:$0xff] %v1809
        %2275 = vst [vmem:[#allocation2 + $0x700] sm:$0xff] %v1260
        %2276 = vst [vmem:[#allocation2 + $0x708] sm:$0xff] %v1262
        %2277 = vst [vmem:[#allocation2 + $0x710] sm:$0xff] %v1813
        %2278 = vst [vmem:[#allocation2 + $0x718] sm:$0xff] %v1815
        %2279 = vst [vmem:[#allocation2 + $0x720] sm:$0xff] %v1264
        %2280 = vst [vmem:[#allocation2 + $0x728] sm:$0xff] %v1266
        %2281 = vst [vmem:[#allocation2 + $0x730] sm:$0xff] %v1817
        %2282 = vst [vmem:[#allocation2 + $0x738] sm:$0xff] %v1819
        %2283 = vst [vmem:[#allocation2 + $0x740] sm:$0xff] %v1270
        %2284 = vst [vmem:[#allocation2 + $0x748] sm:$0xff] %v1272
        %2285 = vst [vmem:[#allocation2 + $0x750] sm:$0xff] %v1823
        %2286 = vst [vmem:[#allocation2 + $0x758] sm:$0xff] %v1825
        %2287 = vst [vmem:[#allocation2 + $0x760] sm:$0xff] %v1274
        %2288 = vst [vmem:[#allocation2 + $0x768] sm:$0xff] %v1276
        %2289 = vst [vmem:[#allocation2 + $0x770] sm:$0xff] %v1827
        %2290 = vst [vmem:[#allocation2 + $0x778] sm:$0xff] %v1829
        %2291 = vst [vmem:[#allocation2 + $0x780] sm:$0xff] %v1280
        %2292 = vst [vmem:[#allocation2 + $0x788] sm:$0xff] %v1282
        %2293 = vst [vmem:[#allocation2 + $0x790] sm:$0xff] %v1833
        %2294 = vst [vmem:[#allocation2 + $0x798] sm:$0xff] %v1835
        %2295 = vst [vmem:[#allocation2 + $0x7a0] sm:$0xff] %v1284
        %2296 = vst [vmem:[#allocation2 + $0x7a8] sm:$0xff] %v1286
        %2297 = vst [vmem:[#allocation2 + $0x7b0] sm:$0xff] %v1837
        %2298 = vst [vmem:[#allocation2 + $0x7b8] sm:$0xff] %v1839
        %2299 = vst [vmem:[#allocation2 + $0x7c0] sm:$0xff] %v1290
        %2300 = vst [vmem:[#allocation2 + $0x7c8] sm:$0xff] %v1292
        %2301 = vst [vmem:[#allocation2 + $0x7d0] sm:$0xff] %v1843
        %2302 = vst [vmem:[#allocation2 + $0x7d8] sm:$0xff] %v1845
        %2303 = vst [vmem:[#allocation2 + $0x7e0] sm:$0xff] %v1294
        %2304 = vst [vmem:[#allocation2 + $0x7e8] sm:$0xff] %v1296
        %2305 = vst [vmem:[#allocation2 + $0x7f0] sm:$0xff] %v1847
        %2306 = vst [vmem:[#allocation2 + $0x7f8] sm:$0xff] %v1849
        %2307 = vst [vmem:[#allocation2 + $0x800] sm:$0xff] %v1300
        %2308 = vst [vmem:[#allocation2 + $0x808] sm:$0xff] %v1302
        %2309 = vst [vmem:[#allocation2 + $0x810] sm:$0xff] %v1853
        %2310 = vst [vmem:[#allocation2 + $0x818] sm:$0xff] %v1855
        %2311 = vst [vmem:[#allocation2 + $0x820] sm:$0xff] %v1304
        %2312 = vst [vmem:[#allocation2 + $0x828] sm:$0xff] %v1306
        %2313 = vst [vmem:[#allocation2 + $0x830] sm:$0xff] %v1857
        %2314 = vst [vmem:[#allocation2 + $0x838] sm:$0xff] %v1859
        %2315 = vst [vmem:[#allocation2 + $0x840] sm:$0xff] %v1310
        %2316 = vst [vmem:[#allocation2 + $0x848] sm:$0xff] %v1312
        %2317 = vst [vmem:[#allocation2 + $0x850] sm:$0xff] %v1863
        %2318 = vst [vmem:[#allocation2 + $0x858] sm:$0xff] %v1865
        %2319 = vst [vmem:[#allocation2 + $0x860] sm:$0xff] %v1314
        %2320 = vst [vmem:[#allocation2 + $0x868] sm:$0xff] %v1316
        %2321 = vst [vmem:[#allocation2 + $0x870] sm:$0xff] %v1867
        %2322 = vst [vmem:[#allocation2 + $0x878] sm:$0xff] %v1869
        %2323 = vst [vmem:[#allocation2 + $0x880] sm:$0xff] %v1320
        %2324 = vst [vmem:[#allocation2 + $0x888] sm:$0xff] %v1322
        %2325 = vst [vmem:[#allocation2 + $0x890] sm:$0xff] %v1873
        %2326 = vst [vmem:[#allocation2 + $0x898] sm:$0xff] %v1875
        %2327 = vst [vmem:[#allocation2 + $0x8a0] sm:$0xff] %v1324
        %2328 = vst [vmem:[#allocation2 + $0x8a8] sm:$0xff] %v1326
        %2329 = vst [vmem:[#allocation2 + $0x8b0] sm:$0xff] %v1877
        %2330 = vst [vmem:[#allocation2 + $0x8b8] sm:$0xff] %v1879
        %2331 = vst [vmem:[#allocation2 + $0x8c0] sm:$0xff] %v1330
        %2332 = vst [vmem:[#allocation2 + $0x8c8] sm:$0xff] %v1332
        %2333 = vst [vmem:[#allocation2 + $0x8d0] sm:$0xff] %v1883
        %2334 = vst [vmem:[#allocation2 + $0x8d8] sm:$0xff] %v1885
        %2335 = vst [vmem:[#allocation2 + $0x8e0] sm:$0xff] %v1334
        %2336 = vst [vmem:[#allocation2 + $0x8e8] sm:$0xff] %v1336
        %2337 = vst [vmem:[#allocation2 + $0x8f0] sm:$0xff] %v1887
        %2338 = vst [vmem:[#allocation2 + $0x8f8] sm:$0xff] %v1889
        %2339 = vst [vmem:[#allocation2 + $0x900] sm:$0xff] %v1340
        %2340 = vst [vmem:[#allocation2 + $0x908] sm:$0xff] %v1342
        %2341 = vst [vmem:[#allocation2 + $0x910] sm:$0xff] %v1893
        %2342 = vst [vmem:[#allocation2 + $0x918] sm:$0xff] %v1895
        %2343 = vst [vmem:[#allocation2 + $0x920] sm:$0xff] %v1344
        %2344 = vst [vmem:[#allocation2 + $0x928] sm:$0xff] %v1346
        %2345 = vst [vmem:[#allocation2 + $0x930] sm:$0xff] %v1897
        %2346 = vst [vmem:[#allocation2 + $0x938] sm:$0xff] %v1899
        %2347 = vst [vmem:[#allocation2 + $0x940] sm:$0xff] %v1350
        %2348 = vst [vmem:[#allocation2 + $0x948] sm:$0xff] %v1352
        %2349 = vst [vmem:[#allocation2 + $0x950] sm:$0xff] %v1903
        %2350 = vst [vmem:[#allocation2 + $0x958] sm:$0xff] %v1905
        %2351 = vst [vmem:[#allocation2 + $0x960] sm:$0xff] %v1354
        %2352 = vst [vmem:[#allocation2 + $0x968] sm:$0xff] %v1356
        %2353 = vst [vmem:[#allocation2 + $0x970] sm:$0xff] %v1907
        %2354 = vst [vmem:[#allocation2 + $0x978] sm:$0xff] %v1909
        %2355 = vst [vmem:[#allocation2 + $0x980] sm:$0xff] %v1360
        %2356 = vst [vmem:[#allocation2 + $0x988] sm:$0xff] %v1362
        %2357 = vst [vmem:[#allocation2 + $0x990] sm:$0xff] %v1913
        %2358 = vst [vmem:[#allocation2 + $0x998] sm:$0xff] %v1915
        %2359 = vst [vmem:[#allocation2 + $0x9a0] sm:$0xff] %v1364
        %2360 = vst [vmem:[#allocation2 + $0x9a8] sm:$0xff] %v1366
        %2361 = vst [vmem:[#allocation2 + $0x9b0] sm:$0xff] %v1917
        %2362 = vst [vmem:[#allocation2 + $0x9b8] sm:$0xff] %v1919
        %2363 = vst [vmem:[#allocation2 + $0x9c0] sm:$0xff] %v1370
        %2364 = vst [vmem:[#allocation2 + $0x9c8] sm:$0xff] %v1372
        %2365 = vst [vmem:[#allocation2 + $0x9d0] sm:$0xff] %v1923
        %2366 = vst [vmem:[#allocation2 + $0x9d8] sm:$0xff] %v1925
        %2367 = vst [vmem:[#allocation2 + $0x9e0] sm:$0xff] %v1374
        %2368 = vst [vmem:[#allocation2 + $0x9e8] sm:$0xff] %v1376
        %2369 = vst [vmem:[#allocation2 + $0x9f0] sm:$0xff] %v1927
        %2370 = vst [vmem:[#allocation2 + $0x9f8] sm:$0xff] %v1929
        %2371 = vst [vmem:[#allocation2 + $0xa00] sm:$0xff] %v1380
        %2372 = vst [vmem:[#allocation2 + $0xa08] sm:$0xff] %v1382
        %2373 = vst [vmem:[#allocation2 + $0xa10] sm:$0xff] %v1933
        %2374 = vst [vmem:[#allocation2 + $0xa18] sm:$0xff] %v1935
        %2375 = vst [vmem:[#allocation2 + $0xa20] sm:$0xff] %v1384
        %2376 = vst [vmem:[#allocation2 + $0xa28] sm:$0xff] %v1386
        %2377 = vst [vmem:[#allocation2 + $0xa30] sm:$0xff] %v1937
        %2378 = vst [vmem:[#allocation2 + $0xa38] sm:$0xff] %v1939
        %2379 = vst [vmem:[#allocation2 + $0xa40] sm:$0xff] %v1390
        %2380 = vst [vmem:[#allocation2 + $0xa48] sm:$0xff] %v1392
        %2381 = vst [vmem:[#allocation2 + $0xa50] sm:$0xff] %v1943
        %2382 = vst [vmem:[#allocation2 + $0xa58] sm:$0xff] %v1945
        %2383 = vst [vmem:[#allocation2 + $0xa60] sm:$0xff] %v1394
        %2384 = vst [vmem:[#allocation2 + $0xa68] sm:$0xff] %v1396
        %2385 = vst [vmem:[#allocation2 + $0xa70] sm:$0xff] %v1947
        %2386 = vst [vmem:[#allocation2 + $0xa78] sm:$0xff] %v1949
        %2387 = vst [vmem:[#allocation2 + $0xa80] sm:$0xff] %v1400
        %2388 = vst [vmem:[#allocation2 + $0xa88] sm:$0xff] %v1402
        %2389 = vst [vmem:[#allocation2 + $0xa90] sm:$0xff] %v1953
        %2390 = vst [vmem:[#allocation2 + $0xa98] sm:$0xff] %v1955
        %2391 = vst [vmem:[#allocation2 + $0xaa0] sm:$0xff] %v1404
        %2392 = vst [vmem:[#allocation2 + $0xaa8] sm:$0xff] %v1406
        %2393 = vst [vmem:[#allocation2 + $0xab0] sm:$0xff] %v1957
        %2394 = vst [vmem:[#allocation2 + $0xab8] sm:$0xff] %v1959
        %2395 = vst [vmem:[#allocation2 + $0xac0] sm:$0xff] %v1410
        %2396 = vst [vmem:[#allocation2 + $0xac8] sm:$0xff] %v1412
        %2397 = vst [vmem:[#allocation2 + $0xad0] sm:$0xff] %v1963
        %2398 = vst [vmem:[#allocation2 + $0xad8] sm:$0xff] %v1965
        %2399 = vst [vmem:[#allocation2 + $0xae0] sm:$0xff] %v1414
        %2400 = vst [vmem:[#allocation2 + $0xae8] sm:$0xff] %v1416
        %2401 = vst [vmem:[#allocation2 + $0xaf0] sm:$0xff] %v1967
        %2402 = vst [vmem:[#allocation2 + $0xaf8] sm:$0xff] %v1969
        %2403 = vst [vmem:[#allocation2 + $0xb00] sm:$0xff] %v1420
        %2404 = vst [vmem:[#allocation2 + $0xb08] sm:$0xff] %v1422
        %2405 = vst [vmem:[#allocation2 + $0xb10] sm:$0xff] %v1973
        %2406 = vst [vmem:[#allocation2 + $0xb18] sm:$0xff] %v1975
        %2407 = vst [vmem:[#allocation2 + $0xb20] sm:$0xff] %v1424
        %2408 = vst [vmem:[#allocation2 + $0xb28] sm:$0xff] %v1426
        %2409 = vst [vmem:[#allocation2 + $0xb30] sm:$0xff] %v1977
        %2410 = vst [vmem:[#allocation2 + $0xb38] sm:$0xff] %v1979
        %2411 = vst [vmem:[#allocation2 + $0xb40] sm:$0xff] %v1430
        %2412 = vst [vmem:[#allocation2 + $0xb48] sm:$0xff] %v1432
        %2413 = vst [vmem:[#allocation2 + $0xb50] sm:$0xff] %v1983
        %2414 = vst [vmem:[#allocation2 + $0xb58] sm:$0xff] %v1985
        %2415 = vst [vmem:[#allocation2 + $0xb60] sm:$0xff] %v1434
        %2416 = vst [vmem:[#allocation2 + $0xb68] sm:$0xff] %v1436
        %2417 = vst [vmem:[#allocation2 + $0xb70] sm:$0xff] %v1987
        %2418 = vst [vmem:[#allocation2 + $0xb78] sm:$0xff] %v1989
        %2419 = vst [vmem:[#allocation2 + $0xb80] sm:$0xff] %v1440
        %2420 = vst [vmem:[#allocation2 + $0xb88] sm:$0xff] %v1442
        %2421 = vst [vmem:[#allocation2 + $0xb90] sm:$0xff] %v1993
        %2422 = vst [vmem:[#allocation2 + $0xb98] sm:$0xff] %v1995
        %2423 = vst [vmem:[#allocation2 + $0xba0] sm:$0xff] %v1444
        %2424 = vst [vmem:[#allocation2 + $0xba8] sm:$0xff] %v1446
        %2425 = vst [vmem:[#allocation2 + $0xbb0] sm:$0xff] %v1997
        %2426 = vst [vmem:[#allocation2 + $0xbb8] sm:$0xff] %v1999
        %2427 = vst [vmem:[#allocation2 + $0xbc0] sm:$0xff] %v1450
        %2428 = vst [vmem:[#allocation2 + $0xbc8] sm:$0xff] %v1452
        %2429 = vst [vmem:[#allocation2 + $0xbd0] sm:$0xff] %v2003
        %2430 = vst [vmem:[#allocation2 + $0xbd8] sm:$0xff] %v2005
        %2431 = vst [vmem:[#allocation2 + $0xbe0] sm:$0xff] %v1454
        %2432 = vst [vmem:[#allocation2 + $0xbe8] sm:$0xff] %v1456
        %2433 = vst [vmem:[#allocation2 + $0xbf0] sm:$0xff] %v2007
        %2434 = vst [vmem:[#allocation2 + $0xbf8] sm:$0xff] %v2009
        %2435 = vst [vmem:[#allocation2 + $0xc00] sm:$0xff] %v1460
        %2436 = vst [vmem:[#allocation2 + $0xc08] sm:$0xff] %v1462
        %2437 = vst [vmem:[#allocation2 + $0xc10] sm:$0xff] %v2013
        %2438 = vst [vmem:[#allocation2 + $0xc18] sm:$0xff] %v2015
        %2439 = vst [vmem:[#allocation2 + $0xc20] sm:$0xff] %v1464
        %2440 = vst [vmem:[#allocation2 + $0xc28] sm:$0xff] %v1466
        %2441 = vst [vmem:[#allocation2 + $0xc30] sm:$0xff] %v2017
        %2442 = vst [vmem:[#allocation2 + $0xc38] sm:$0xff] %v2019
        %2443 = vst [vmem:[#allocation2 + $0xc40] sm:$0xff] %v1470
        %2444 = vst [vmem:[#allocation2 + $0xc48] sm:$0xff] %v1472
        %2445 = vst [vmem:[#allocation2 + $0xc50] sm:$0xff] %v2023
        %2446 = vst [vmem:[#allocation2 + $0xc58] sm:$0xff] %v2025
        %2447 = vst [vmem:[#allocation2 + $0xc60] sm:$0xff] %v1474
        %2448 = vst [vmem:[#allocation2 + $0xc68] sm:$0xff] %v1476
        %2449 = vst [vmem:[#allocation2 + $0xc70] sm:$0xff] %v2027
        %2450 = vst [vmem:[#allocation2 + $0xc78] sm:$0xff] %v2029
        %2451 = vst [vmem:[#allocation2 + $0xc80] sm:$0xff] %v1480
        %2452 = vst [vmem:[#allocation2 + $0xc88] sm:$0xff] %v1482
        %2453 = vst [vmem:[#allocation2 + $0xc90] sm:$0xff] %v2033
        %2454 = vst [vmem:[#allocation2 + $0xc98] sm:$0xff] %v2035
        %2455 = vst [vmem:[#allocation2 + $0xca0] sm:$0xff] %v1484
        %2456 = vst [vmem:[#allocation2 + $0xca8] sm:$0xff] %v1486
        %2457 = vst [vmem:[#allocation2 + $0xcb0] sm:$0xff] %v2037
        %2458 = vst [vmem:[#allocation2 + $0xcb8] sm:$0xff] %v2039
        %2459 = vst [vmem:[#allocation2 + $0xcc0] sm:$0xff] %v1490
        %2460 = vst [vmem:[#allocation2 + $0xcc8] sm:$0xff] %v1492
        %2461 = vst [vmem:[#allocation2 + $0xcd0] sm:$0xff] %v2043
        %2462 = vst [vmem:[#allocation2 + $0xcd8] sm:$0xff] %v2045
        %2463 = vst [vmem:[#allocation2 + $0xce0] sm:$0xff] %v1494
        %2464 = vst [vmem:[#allocation2 + $0xce8] sm:$0xff] %v1496
        %2465 = vst [vmem:[#allocation2 + $0xcf0] sm:$0xff] %v2047
        %2466 = vst [vmem:[#allocation2 + $0xcf8] sm:$0xff] %v2049
        %vm2467 = vcmask 1048192
        %2468 = vst.msk [vmem:[#allocation3 + $0x8] sm:$0xff] %vm2467, 0
        %2469 = vst.msk [vmem:[#allocation3 + $0x18] sm:$0xff] %vm2467, 0
        %2470 = vst.msk [vmem:[#allocation3 + $0x28] sm:$0xff] %vm2467, 0
        %2471 = vst.msk [vmem:[#allocation3 + $0x38] sm:$0xff] %vm2467, 0
        %2472 = vst.msk [vmem:[#allocation3 + $0x48] sm:$0xff] %vm2467, 0
        %2473 = vst.msk [vmem:[#allocation3 + $0x58] sm:$0xff] %vm2467, 0
        %2474 = vst.msk [vmem:[#allocation3 + $0x68] sm:$0xff] %vm2467, 0
        %2475 = vst.msk [vmem:[#allocation3 + $0x78] sm:$0xff] %vm2467, 0
        %2476 = vst.msk [vmem:[#allocation3 + $0x88] sm:$0xff] %vm2467, 0
        %2477 = vst.msk [vmem:[#allocation3 + $0x98] sm:$0xff] %vm2467, 0
        %2478 = vst.msk [vmem:[#allocation3 + $0xa8] sm:$0xff] %vm2467, 0
        %2479 = vst.msk [vmem:[#allocation3 + $0xb8] sm:$0xff] %vm2467, 0
        %2480 = vst.msk [vmem:[#allocation3 + $0xc8] sm:$0xff] %vm2467, 0
        %2481 = vst.msk [vmem:[#allocation3 + $0xd8] sm:$0xff] %vm2467, 0
        %2482 = vst.msk [vmem:[#allocation3 + $0xe8] sm:$0xff] %vm2467, 0
        %2483 = vst.msk [vmem:[#allocation3 + $0xf8] sm:$0xff] %vm2467, 0
        %2484 = vst.msk [vmem:[#allocation3 + $0x108] sm:$0xff] %vm2467, 0
        %2485 = vst.msk [vmem:[#allocation3 + $0x118] sm:$0xff] %vm2467, 0
        %2486 = vst.msk [vmem:[#allocation3 + $0x128] sm:$0xff] %vm2467, 0
        %2487 = vst.msk [vmem:[#allocation3 + $0x138] sm:$0xff] %vm2467, 0
        %2488 = vst.msk [vmem:[#allocation3 + $0x148] sm:$0xff] %vm2467, 0
        %2489 = vst.msk [vmem:[#allocation3 + $0x158] sm:$0xff] %vm2467, 0
        %2490 = vst.msk [vmem:[#allocation3 + $0x168] sm:$0xff] %vm2467, 0
        %2491 = vst.msk [vmem:[#allocation3 + $0x178] sm:$0xff] %vm2467, 0
        %2492 = vst.msk [vmem:[#allocation3 + $0x188] sm:$0xff] %vm2467, 0
        %2493 = vst.msk [vmem:[#allocation3 + $0x198] sm:$0xff] %vm2467, 0
        %v2494 = vld [vmem:[%s2] sm:$0x3]
        %v2496 = vlaneseq
        %v2497 = vshrl.u32 %v2496, 7
        %v2498 = vsub.s32 0, %v2497
        %v2499 = vrot.slane %v2494, %v2498
        %v2500 = vlaneseq
        %v2501 = vshrl.u32 %v2500, 7
        %v2502 = vsub.s32 1, %v2501
        %v2503 = vrot.slane %v2494, %v2502
        %v2506 = vld [vmem:[#allocation2] sm:$0xff]
        %v2507 = vld [vmem:[#allocation2 + $0x8] sm:$0xff]
        %v2508 = vld [vmem:[#allocation2 + $0x20] sm:$0xff]
        %v2509 = vld [vmem:[#allocation2 + $0x28] sm:$0xff]
        %v2510 = vld [vmem:[#allocation2 + $0x40] sm:$0xff]
        %v2511 = vld [vmem:[#allocation2 + $0x48] sm:$0xff]
        %v2512 = vld [vmem:[#allocation2 + $0x60] sm:$0xff]
        %v2513 = vld [vmem:[#allocation2 + $0x68] sm:$0xff]
        %v2514 = vld [vmem:[#allocation2 + $0x10] sm:$0xff]
        %v2515 = vld [vmem:[#allocation2 + $0x18] sm:$0xff]
        %v2516 = vld [vmem:[#allocation2 + $0x30] sm:$0xff]
        %v2517 = vld [vmem:[#allocation2 + $0x38] sm:$0xff]
        %v2518 = vld [vmem:[#allocation2 + $0x50] sm:$0xff]
        %v2519 = vld [vmem:[#allocation2 + $0x58] sm:$0xff]
        %v2520 = vld [vmem:[#allocation2 + $0x70] sm:$0xff]
        %v2521 = vld [vmem:[#allocation2 + $0x78] sm:$0xff]
        %v2522 = vmax.f32 %v2506, %v2514
        %v2523 = vmax.f32 %v2507, %v2515
        %v2524 = vmax.f32 %v2508, %v2516
        %v2525 = vmax.f32 %v2509, %v2517
        %v2526 = vmax.f32 %v2510, %v2518
        %v2527 = vmax.f32 %v2511, %v2519
        %v2528 = vmax.f32 %v2512, %v2520
        %v2529 = vmax.f32 %v2513, %v2521
        %v2530 = vld [vmem:[#allocation2 + $0x80] sm:$0xff]
        %v2531 = vld [vmem:[#allocation2 + $0x88] sm:$0xff]
        %v2532 = vld [vmem:[#allocation2 + $0xa0] sm:$0xff]
        %v2533 = vld [vmem:[#allocation2 + $0xa8] sm:$0xff]
        %v2534 = vld [vmem:[#allocation2 + $0xc0] sm:$0xff]
        %v2535 = vld [vmem:[#allocation2 + $0xc8] sm:$0xff]
        %v2536 = vld [vmem:[#allocation2 + $0xe0] sm:$0xff]
        %v2537 = vld [vmem:[#allocation2 + $0xe8] sm:$0xff]
        %v2538 = vld [vmem:[#allocation2 + $0x90] sm:$0xff]
        %v2539 = vld [vmem:[#allocation2 + $0x98] sm:$0xff]
        %v2540 = vld [vmem:[#allocation2 + $0xb0] sm:$0xff]
        %v2541 = vld [vmem:[#allocation2 + $0xb8] sm:$0xff]
        %v2542 = vld [vmem:[#allocation2 + $0xd0] sm:$0xff]
        %v2543 = vld [vmem:[#allocation2 + $0xd8] sm:$0xff]
        %v2544 = vld [vmem:[#allocation2 + $0xf0] sm:$0xff]
        %v2545 = vld [vmem:[#allocation2 + $0xf8] sm:$0xff]
        %v2546 = vmax.f32 %v2530, %v2538
        %v2547 = vmax.f32 %v2531, %v2539
        %v2548 = vmax.f32 %v2532, %v2540
        %v2549 = vmax.f32 %v2533, %v2541
        %v2550 = vmax.f32 %v2534, %v2542
        %v2551 = vmax.f32 %v2535, %v2543
        %v2552 = vmax.f32 %v2536, %v2544
        %v2553 = vmax.f32 %v2537, %v2545
        %v2554 = vmax.f32 %v2522, %v2546
        %v2555 = vmax.f32 %v2523, %v2547
        %v2556 = vmax.f32 %v2524, %v2548
        %v2557 = vmax.f32 %v2525, %v2549
        %v2558 = vmax.f32 %v2526, %v2550
        %v2559 = vmax.f32 %v2527, %v2551
        %v2560 = vmax.f32 %v2528, %v2552
        %v2561 = vmax.f32 %v2529, %v2553
        %v2562 = vadd.f32 %v2554, %v2499
        %v2563 = vadd.f32 %v2555, %v2503
        %v2564 = vadd.f32 %v2556, %v2499
        %v2565 = vadd.f32 %v2557, %v2503
        %v2566 = vadd.f32 %v2558, %v2499
        %v2567 = vadd.f32 %v2559, %v2503
        %v2568 = vadd.f32 %v2560, %v2499
        %v2569 = vadd.f32 %v2561, %v2503
        %v2570 = vmax.f32 %v2562, 0.0
        %v2571 = vmax.f32 %v2563, 0.0
        %v2572 = vmax.f32 %v2564, 0.0
        %v2573 = vmax.f32 %v2565, 0.0
        %v2574 = vmax.f32 %v2566, 0.0
        %v2575 = vmax.f32 %v2567, 0.0
        %v2576 = vmax.f32 %v2568, 0.0
        %v2577 = vmax.f32 %v2569, 0.0
        %v2578 = vpack.c.bf16 %v2572, %v2570
        %v2579 = vpack.c.bf16 %v2573, %v2571
        %v2580 = vpack.c.bf16 %v2576, %v2574
        %v2581 = vpack.c.bf16 %v2577, %v2575
        %2582 = vst [vmem:[#allocation3] sm:$0xff] %v2578
        %vm2583 = vcmask 654336
        %2584 = vst.msk [vmem:[#allocation3 + $0x8] sm:$0xff] %vm2583, %v2579
        %2585 = vst [vmem:[#allocation3 + $0x10] sm:$0xff] %v2580
        %2586 = vst.msk [vmem:[#allocation3 + $0x18] sm:$0xff] %vm2583, %v2581
        %v2587 = vld [vmem:[#allocation2 + $0x100] sm:$0xff]
        %v2588 = vld [vmem:[#allocation2 + $0x108] sm:$0xff]
        %v2589 = vld [vmem:[#allocation2 + $0x120] sm:$0xff]
        %v2590 = vld [vmem:[#allocation2 + $0x128] sm:$0xff]
        %v2591 = vld [vmem:[#allocation2 + $0x140] sm:$0xff]
        %v2592 = vld [vmem:[#allocation2 + $0x148] sm:$0xff]
        %v2593 = vld [vmem:[#allocation2 + $0x160] sm:$0xff]
        %v2594 = vld [vmem:[#allocation2 + $0x168] sm:$0xff]
        %v2595 = vld [vmem:[#allocation2 + $0x110] sm:$0xff]
        %v2596 = vld [vmem:[#allocation2 + $0x118] sm:$0xff]
        %v2597 = vld [vmem:[#allocation2 + $0x130] sm:$0xff]
        %v2598 = vld [vmem:[#allocation2 + $0x138] sm:$0xff]
        %v2599 = vld [vmem:[#allocation2 + $0x150] sm:$0xff]
        %v2600 = vld [vmem:[#allocation2 + $0x158] sm:$0xff]
        %v2601 = vld [vmem:[#allocation2 + $0x170] sm:$0xff]
        %v2602 = vld [vmem:[#allocation2 + $0x178] sm:$0xff]
        %v2603 = vmax.f32 %v2587, %v2595
        %v2604 = vmax.f32 %v2588, %v2596
        %v2605 = vmax.f32 %v2589, %v2597
        %v2606 = vmax.f32 %v2590, %v2598
        %v2607 = vmax.f32 %v2591, %v2599
        %v2608 = vmax.f32 %v2592, %v2600
        %v2609 = vmax.f32 %v2593, %v2601
        %v2610 = vmax.f32 %v2594, %v2602
        %v2611 = vld [vmem:[#allocation2 + $0x180] sm:$0xff]
        %v2612 = vld [vmem:[#allocation2 + $0x188] sm:$0xff]
        %v2613 = vld [vmem:[#allocation2 + $0x1a0] sm:$0xff]
        %v2614 = vld [vmem:[#allocation2 + $0x1a8] sm:$0xff]
        %v2615 = vld [vmem:[#allocation2 + $0x1c0] sm:$0xff]
        %v2616 = vld [vmem:[#allocation2 + $0x1c8] sm:$0xff]
        %v2617 = vld [vmem:[#allocation2 + $0x1e0] sm:$0xff]
        %v2618 = vld [vmem:[#allocation2 + $0x1e8] sm:$0xff]
        %v2619 = vld [vmem:[#allocation2 + $0x190] sm:$0xff]
        %v2620 = vld [vmem:[#allocation2 + $0x198] sm:$0xff]
        %v2621 = vld [vmem:[#allocation2 + $0x1b0] sm:$0xff]
        %v2622 = vld [vmem:[#allocation2 + $0x1b8] sm:$0xff]
        %v2623 = vld [vmem:[#allocation2 + $0x1d0] sm:$0xff]
        %v2624 = vld [vmem:[#allocation2 + $0x1d8] sm:$0xff]
        %v2625 = vld [vmem:[#allocation2 + $0x1f0] sm:$0xff]
        %v2626 = vld [vmem:[#allocation2 + $0x1f8] sm:$0xff]
        %v2627 = vmax.f32 %v2611, %v2619
        %v2628 = vmax.f32 %v2612, %v2620
        %v2629 = vmax.f32 %v2613, %v2621
        %v2630 = vmax.f32 %v2614, %v2622
        %v2631 = vmax.f32 %v2615, %v2623
        %v2632 = vmax.f32 %v2616, %v2624
        %v2633 = vmax.f32 %v2617, %v2625
        %v2634 = vmax.f32 %v2618, %v2626
        %v2635 = vmax.f32 %v2603, %v2627
        %v2636 = vmax.f32 %v2604, %v2628
        %v2637 = vmax.f32 %v2605, %v2629
        %v2638 = vmax.f32 %v2606, %v2630
        %v2639 = vmax.f32 %v2607, %v2631
        %v2640 = vmax.f32 %v2608, %v2632
        %v2641 = vmax.f32 %v2609, %v2633
        %v2642 = vmax.f32 %v2610, %v2634
        %v2643 = vadd.f32 %v2635, %v2499
        %v2644 = vadd.f32 %v2636, %v2503
        %v2645 = vadd.f32 %v2637, %v2499
        %v2646 = vadd.f32 %v2638, %v2503
        %v2647 = vadd.f32 %v2639, %v2499
        %v2648 = vadd.f32 %v2640, %v2503
        %v2649 = vadd.f32 %v2641, %v2499
        %v2650 = vadd.f32 %v2642, %v2503
        %v2651 = vmax.f32 %v2643, 0.0
        %v2652 = vmax.f32 %v2644, 0.0
        %v2653 = vmax.f32 %v2645, 0.0
        %v2654 = vmax.f32 %v2646, 0.0
        %v2655 = vmax.f32 %v2647, 0.0
        %v2656 = vmax.f32 %v2648, 0.0
        %v2657 = vmax.f32 %v2649, 0.0
        %v2658 = vmax.f32 %v2650, 0.0
        %v2659 = vpack.c.bf16 %v2653, %v2651
        %v2660 = vpack.c.bf16 %v2654, %v2652
        %v2661 = vpack.c.bf16 %v2657, %v2655
        %v2662 = vpack.c.bf16 %v2658, %v2656
        %2663 = vst [vmem:[#allocation3 + $0x20] sm:$0xff] %v2659
        %2664 = vst.msk [vmem:[#allocation3 + $0x28] sm:$0xff] %vm2583, %v2660
        %2665 = vst [vmem:[#allocation3 + $0x30] sm:$0xff] %v2661
        %2666 = vst.msk [vmem:[#allocation3 + $0x38] sm:$0xff] %vm2583, %v2662
        %v2667 = vld [vmem:[#allocation2 + $0x200] sm:$0xff]
        %v2668 = vld [vmem:[#allocation2 + $0x208] sm:$0xff]
        %v2669 = vld [vmem:[#allocation2 + $0x220] sm:$0xff]
        %v2670 = vld [vmem:[#allocation2 + $0x228] sm:$0xff]
        %v2671 = vld [vmem:[#allocation2 + $0x240] sm:$0xff]
        %v2672 = vld [vmem:[#allocation2 + $0x248] sm:$0xff]
        %v2673 = vld [vmem:[#allocation2 + $0x260] sm:$0xff]
        %v2674 = vld [vmem:[#allocation2 + $0x268] sm:$0xff]
        %v2675 = vld [vmem:[#allocation2 + $0x210] sm:$0xff]
        %v2676 = vld [vmem:[#allocation2 + $0x218] sm:$0xff]
        %v2677 = vld [vmem:[#allocation2 + $0x230] sm:$0xff]
        %v2678 = vld [vmem:[#allocation2 + $0x238] sm:$0xff]
        %v2679 = vld [vmem:[#allocation2 + $0x250] sm:$0xff]
        %v2680 = vld [vmem:[#allocation2 + $0x258] sm:$0xff]
        %v2681 = vld [vmem:[#allocation2 + $0x270] sm:$0xff]
        %v2682 = vld [vmem:[#allocation2 + $0x278] sm:$0xff]
        %v2683 = vmax.f32 %v2667, %v2675
        %v2684 = vmax.f32 %v2668, %v2676
        %v2685 = vmax.f32 %v2669, %v2677
        %v2686 = vmax.f32 %v2670, %v2678
        %v2687 = vmax.f32 %v2671, %v2679
        %v2688 = vmax.f32 %v2672, %v2680
        %v2689 = vmax.f32 %v2673, %v2681
        %v2690 = vmax.f32 %v2674, %v2682
        %v2691 = vld [vmem:[#allocation2 + $0x280] sm:$0xff]
        %v2692 = vld [vmem:[#allocation2 + $0x288] sm:$0xff]
        %v2693 = vld [vmem:[#allocation2 + $0x2a0] sm:$0xff]
        %v2694 = vld [vmem:[#allocation2 + $0x2a8] sm:$0xff]
        %v2695 = vld [vmem:[#allocation2 + $0x2c0] sm:$0xff]
        %v2696 = vld [vmem:[#allocation2 + $0x2c8] sm:$0xff]
        %v2697 = vld [vmem:[#allocation2 + $0x2e0] sm:$0xff]
        %v2698 = vld [vmem:[#allocation2 + $0x2e8] sm:$0xff]
        %v2699 = vld [vmem:[#allocation2 + $0x290] sm:$0xff]
        %v2700 = vld [vmem:[#allocation2 + $0x298] sm:$0xff]
        %v2701 = vld [vmem:[#allocation2 + $0x2b0] sm:$0xff]
        %v2702 = vld [vmem:[#allocation2 + $0x2b8] sm:$0xff]
        %v2703 = vld [vmem:[#allocation2 + $0x2d0] sm:$0xff]
        %v2704 = vld [vmem:[#allocation2 + $0x2d8] sm:$0xff]
        %v2705 = vld [vmem:[#allocation2 + $0x2f0] sm:$0xff]
        %v2706 = vld [vmem:[#allocation2 + $0x2f8] sm:$0xff]
        %v2707 = vmax.f32 %v2691, %v2699
        %v2708 = vmax.f32 %v2692, %v2700
        %v2709 = vmax.f32 %v2693, %v2701
        %v2710 = vmax.f32 %v2694, %v2702
        %v2711 = vmax.f32 %v2695, %v2703
        %v2712 = vmax.f32 %v2696, %v2704
        %v2713 = vmax.f32 %v2697, %v2705
        %v2714 = vmax.f32 %v2698, %v2706
        %v2715 = vmax.f32 %v2683, %v2707
        %v2716 = vmax.f32 %v2684, %v2708
        %v2717 = vmax.f32 %v2685, %v2709
        %v2718 = vmax.f32 %v2686, %v2710
        %v2719 = vmax.f32 %v2687, %v2711
        %v2720 = vmax.f32 %v2688, %v2712
        %v2721 = vmax.f32 %v2689, %v2713
        %v2722 = vmax.f32 %v2690, %v2714
        %v2723 = vadd.f32 %v2715, %v2499
        %v2724 = vadd.f32 %v2716, %v2503
        %v2725 = vadd.f32 %v2717, %v2499
        %v2726 = vadd.f32 %v2718, %v2503
        %v2727 = vadd.f32 %v2719, %v2499
        %v2728 = vadd.f32 %v2720, %v2503
        %v2729 = vadd.f32 %v2721, %v2499
        %v2730 = vadd.f32 %v2722, %v2503
        %v2731 = vmax.f32 %v2723, 0.0
        %v2732 = vmax.f32 %v2724, 0.0
        %v2733 = vmax.f32 %v2725, 0.0
        %v2734 = vmax.f32 %v2726, 0.0
        %v2735 = vmax.f32 %v2727, 0.0
        %v2736 = vmax.f32 %v2728, 0.0
        %v2737 = vmax.f32 %v2729, 0.0
        %v2738 = vmax.f32 %v2730, 0.0
        %v2739 = vpack.c.bf16 %v2733, %v2731
        %v2740 = vpack.c.bf16 %v2734, %v2732
        %v2741 = vpack.c.bf16 %v2737, %v2735
        %v2742 = vpack.c.bf16 %v2738, %v2736
        %2743 = vst [vmem:[#allocation3 + $0x40] sm:$0xff] %v2739
        %2744 = vst.msk [vmem:[#allocation3 + $0x48] sm:$0xff] %vm2583, %v2740
        %2745 = vst [vmem:[#allocation3 + $0x50] sm:$0xff] %v2741
        %2746 = vst.msk [vmem:[#allocation3 + $0x58] sm:$0xff] %vm2583, %v2742
        %v2747 = vld [vmem:[#allocation2 + $0x300] sm:$0xff]
        %v2748 = vld [vmem:[#allocation2 + $0x308] sm:$0xff]
        %v2749 = vld [vmem:[#allocation2 + $0x320] sm:$0xff]
        %v2750 = vld [vmem:[#allocation2 + $0x328] sm:$0xff]
        %v2751 = vld [vmem:[#allocation2 + $0x340] sm:$0xff]
        %v2752 = vld [vmem:[#allocation2 + $0x348] sm:$0xff]
        %v2753 = vld [vmem:[#allocation2 + $0x360] sm:$0xff]
        %v2754 = vld [vmem:[#allocation2 + $0x368] sm:$0xff]
        %v2755 = vld [vmem:[#allocation2 + $0x310] sm:$0xff]
        %v2756 = vld [vmem:[#allocation2 + $0x318] sm:$0xff]
        %v2757 = vld [vmem:[#allocation2 + $0x330] sm:$0xff]
        %v2758 = vld [vmem:[#allocation2 + $0x338] sm:$0xff]
        %v2759 = vld [vmem:[#allocation2 + $0x350] sm:$0xff]
        %v2760 = vld [vmem:[#allocation2 + $0x358] sm:$0xff]
        %v2761 = vld [vmem:[#allocation2 + $0x370] sm:$0xff]
        %v2762 = vld [vmem:[#allocation2 + $0x378] sm:$0xff]
        %v2763 = vmax.f32 %v2747, %v2755
        %v2764 = vmax.f32 %v2748, %v2756
        %v2765 = vmax.f32 %v2749, %v2757
        %v2766 = vmax.f32 %v2750, %v2758
        %v2767 = vmax.f32 %v2751, %v2759
        %v2768 = vmax.f32 %v2752, %v2760
        %v2769 = vmax.f32 %v2753, %v2761
        %v2770 = vmax.f32 %v2754, %v2762
        %v2771 = vld [vmem:[#allocation2 + $0x380] sm:$0xff]
        %v2772 = vld [vmem:[#allocation2 + $0x388] sm:$0xff]
        %v2773 = vld [vmem:[#allocation2 + $0x3a0] sm:$0xff]
        %v2774 = vld [vmem:[#allocation2 + $0x3a8] sm:$0xff]
        %v2775 = vld [vmem:[#allocation2 + $0x3c0] sm:$0xff]
        %v2776 = vld [vmem:[#allocation2 + $0x3c8] sm:$0xff]
        %v2777 = vld [vmem:[#allocation2 + $0x3e0] sm:$0xff]
        %v2778 = vld [vmem:[#allocation2 + $0x3e8] sm:$0xff]
        %v2779 = vld [vmem:[#allocation2 + $0x390] sm:$0xff]
        %v2780 = vld [vmem:[#allocation2 + $0x398] sm:$0xff]
        %v2781 = vld [vmem:[#allocation2 + $0x3b0] sm:$0xff]
        %v2782 = vld [vmem:[#allocation2 + $0x3b8] sm:$0xff]
        %v2783 = vld [vmem:[#allocation2 + $0x3d0] sm:$0xff]
        %v2784 = vld [vmem:[#allocation2 + $0x3d8] sm:$0xff]
        %v2785 = vld [vmem:[#allocation2 + $0x3f0] sm:$0xff]
        %v2786 = vld [vmem:[#allocation2 + $0x3f8] sm:$0xff]
        %v2787 = vmax.f32 %v2771, %v2779
        %v2788 = vmax.f32 %v2772, %v2780
        %v2789 = vmax.f32 %v2773, %v2781
        %v2790 = vmax.f32 %v2774, %v2782
        %v2791 = vmax.f32 %v2775, %v2783
        %v2792 = vmax.f32 %v2776, %v2784
        %v2793 = vmax.f32 %v2777, %v2785
        %v2794 = vmax.f32 %v2778, %v2786
        %v2795 = vmax.f32 %v2763, %v2787
        %v2796 = vmax.f32 %v2764, %v2788
        %v2797 = vmax.f32 %v2765, %v2789
        %v2798 = vmax.f32 %v2766, %v2790
        %v2799 = vmax.f32 %v2767, %v2791
        %v2800 = vmax.f32 %v2768, %v2792
        %v2801 = vmax.f32 %v2769, %v2793
        %v2802 = vmax.f32 %v2770, %v2794
        %v2803 = vadd.f32 %v2795, %v2499
        %v2804 = vadd.f32 %v2796, %v2503
        %v2805 = vadd.f32 %v2797, %v2499
        %v2806 = vadd.f32 %v2798, %v2503
        %v2807 = vadd.f32 %v2799, %v2499
        %v2808 = vadd.f32 %v2800, %v2503
        %v2809 = vadd.f32 %v2801, %v2499
        %v2810 = vadd.f32 %v2802, %v2503
        %v2811 = vmax.f32 %v2803, 0.0
        %v2812 = vmax.f32 %v2804, 0.0
        %v2813 = vmax.f32 %v2805, 0.0
        %v2814 = vmax.f32 %v2806, 0.0
        %v2815 = vmax.f32 %v2807, 0.0
        %v2816 = vmax.f32 %v2808, 0.0
        %v2817 = vmax.f32 %v2809, 0.0
        %v2818 = vmax.f32 %v2810, 0.0
        %v2819 = vpack.c.bf16 %v2813, %v2811
        %v2820 = vpack.c.bf16 %v2814, %v2812
        %v2821 = vpack.c.bf16 %v2817, %v2815
        %v2822 = vpack.c.bf16 %v2818, %v2816
        %2823 = vst [vmem:[#allocation3 + $0x60] sm:$0xff] %v2819
        %2824 = vst.msk [vmem:[#allocation3 + $0x68] sm:$0xff] %vm2583, %v2820
        %2825 = vst [vmem:[#allocation3 + $0x70] sm:$0xff] %v2821
        %2826 = vst.msk [vmem:[#allocation3 + $0x78] sm:$0xff] %vm2583, %v2822
        %v2827 = vld [vmem:[#allocation2 + $0x400] sm:$0xff]
        %v2828 = vld [vmem:[#allocation2 + $0x408] sm:$0xff]
        %v2829 = vld [vmem:[#allocation2 + $0x420] sm:$0xff]
        %v2830 = vld [vmem:[#allocation2 + $0x428] sm:$0xff]
        %v2831 = vld [vmem:[#allocation2 + $0x440] sm:$0xff]
        %v2832 = vld [vmem:[#allocation2 + $0x448] sm:$0xff]
        %v2833 = vld [vmem:[#allocation2 + $0x460] sm:$0xff]
        %v2834 = vld [vmem:[#allocation2 + $0x468] sm:$0xff]
        %v2835 = vld [vmem:[#allocation2 + $0x410] sm:$0xff]
        %v2836 = vld [vmem:[#allocation2 + $0x418] sm:$0xff]
        %v2837 = vld [vmem:[#allocation2 + $0x430] sm:$0xff]
        %v2838 = vld [vmem:[#allocation2 + $0x438] sm:$0xff]
        %v2839 = vld [vmem:[#allocation2 + $0x450] sm:$0xff]
        %v2840 = vld [vmem:[#allocation2 + $0x458] sm:$0xff]
        %v2841 = vld [vmem:[#allocation2 + $0x470] sm:$0xff]
        %v2842 = vld [vmem:[#allocation2 + $0x478] sm:$0xff]
        %v2843 = vmax.f32 %v2827, %v2835
        %v2844 = vmax.f32 %v2828, %v2836
        %v2845 = vmax.f32 %v2829, %v2837
        %v2846 = vmax.f32 %v2830, %v2838
        %v2847 = vmax.f32 %v2831, %v2839
        %v2848 = vmax.f32 %v2832, %v2840
        %v2849 = vmax.f32 %v2833, %v2841
        %v2850 = vmax.f32 %v2834, %v2842
        %v2851 = vld [vmem:[#allocation2 + $0x480] sm:$0xff]
        %v2852 = vld [vmem:[#allocation2 + $0x488] sm:$0xff]
        %v2853 = vld [vmem:[#allocation2 + $0x4a0] sm:$0xff]
        %v2854 = vld [vmem:[#allocation2 + $0x4a8] sm:$0xff]
        %v2855 = vld [vmem:[#allocation2 + $0x4c0] sm:$0xff]
        %v2856 = vld [vmem:[#allocation2 + $0x4c8] sm:$0xff]
        %v2857 = vld [vmem:[#allocation2 + $0x4e0] sm:$0xff]
        %v2858 = vld [vmem:[#allocation2 + $0x4e8] sm:$0xff]
        %v2859 = vld [vmem:[#allocation2 + $0x490] sm:$0xff]
        %v2860 = vld [vmem:[#allocation2 + $0x498] sm:$0xff]
        %v2861 = vld [vmem:[#allocation2 + $0x4b0] sm:$0xff]
        %v2862 = vld [vmem:[#allocation2 + $0x4b8] sm:$0xff]
        %v2863 = vld [vmem:[#allocation2 + $0x4d0] sm:$0xff]
        %v2864 = vld [vmem:[#allocation2 + $0x4d8] sm:$0xff]
        %v2865 = vld [vmem:[#allocation2 + $0x4f0] sm:$0xff]
        %v2866 = vld [vmem:[#allocation2 + $0x4f8] sm:$0xff]
        %v2867 = vmax.f32 %v2851, %v2859
        %v2868 = vmax.f32 %v2852, %v2860
        %v2869 = vmax.f32 %v2853, %v2861
        %v2870 = vmax.f32 %v2854, %v2862
        %v2871 = vmax.f32 %v2855, %v2863
        %v2872 = vmax.f32 %v2856, %v2864
        %v2873 = vmax.f32 %v2857, %v2865
        %v2874 = vmax.f32 %v2858, %v2866
        %v2875 = vmax.f32 %v2843, %v2867
        %v2876 = vmax.f32 %v2844, %v2868
        %v2877 = vmax.f32 %v2845, %v2869
        %v2878 = vmax.f32 %v2846, %v2870
        %v2879 = vmax.f32 %v2847, %v2871
        %v2880 = vmax.f32 %v2848, %v2872
        %v2881 = vmax.f32 %v2849, %v2873
        %v2882 = vmax.f32 %v2850, %v2874
        %v2883 = vadd.f32 %v2875, %v2499
        %v2884 = vadd.f32 %v2876, %v2503
        %v2885 = vadd.f32 %v2877, %v2499
        %v2886 = vadd.f32 %v2878, %v2503
        %v2887 = vadd.f32 %v2879, %v2499
        %v2888 = vadd.f32 %v2880, %v2503
        %v2889 = vadd.f32 %v2881, %v2499
        %v2890 = vadd.f32 %v2882, %v2503
        %v2891 = vmax.f32 %v2883, 0.0
        %v2892 = vmax.f32 %v2884, 0.0
        %v2893 = vmax.f32 %v2885, 0.0
        %v2894 = vmax.f32 %v2886, 0.0
        %v2895 = vmax.f32 %v2887, 0.0
        %v2896 = vmax.f32 %v2888, 0.0
        %v2897 = vmax.f32 %v2889, 0.0
        %v2898 = vmax.f32 %v2890, 0.0
        %v2899 = vpack.c.bf16 %v2893, %v2891
        %v2900 = vpack.c.bf16 %v2894, %v2892
        %v2901 = vpack.c.bf16 %v2897, %v2895
        %v2902 = vpack.c.bf16 %v2898, %v2896
        %2903 = vst [vmem:[#allocation3 + $0x80] sm:$0xff] %v2899
        %2904 = vst.msk [vmem:[#allocation3 + $0x88] sm:$0xff] %vm2583, %v2900
        %2905 = vst [vmem:[#allocation3 + $0x90] sm:$0xff] %v2901
        %2906 = vst.msk [vmem:[#allocation3 + $0x98] sm:$0xff] %vm2583, %v2902
        %v2907 = vld [vmem:[#allocation2 + $0x500] sm:$0xff]
        %v2908 = vld [vmem:[#allocation2 + $0x508] sm:$0xff]
        %v2909 = vld [vmem:[#allocation2 + $0x520] sm:$0xff]
        %v2910 = vld [vmem:[#allocation2 + $0x528] sm:$0xff]
        %v2911 = vld [vmem:[#allocation2 + $0x540] sm:$0xff]
        %v2912 = vld [vmem:[#allocation2 + $0x548] sm:$0xff]
        %v2913 = vld [vmem:[#allocation2 + $0x560] sm:$0xff]
        %v2914 = vld [vmem:[#allocation2 + $0x568] sm:$0xff]
        %v2915 = vld [vmem:[#allocation2 + $0x510] sm:$0xff]
        %v2916 = vld [vmem:[#allocation2 + $0x518] sm:$0xff]
        %v2917 = vld [vmem:[#allocation2 + $0x530] sm:$0xff]
        %v2918 = vld [vmem:[#allocation2 + $0x538] sm:$0xff]
        %v2919 = vld [vmem:[#allocation2 + $0x550] sm:$0xff]
        %v2920 = vld [vmem:[#allocation2 + $0x558] sm:$0xff]
        %v2921 = vld [vmem:[#allocation2 + $0x570] sm:$0xff]
        %v2922 = vld [vmem:[#allocation2 + $0x578] sm:$0xff]
        %v2923 = vmax.f32 %v2907, %v2915
        %v2924 = vmax.f32 %v2908, %v2916
        %v2925 = vmax.f32 %v2909, %v2917
        %v2926 = vmax.f32 %v2910, %v2918
        %v2927 = vmax.f32 %v2911, %v2919
        %v2928 = vmax.f32 %v2912, %v2920
        %v2929 = vmax.f32 %v2913, %v2921
        %v2930 = vmax.f32 %v2914, %v2922
        %v2931 = vld [vmem:[#allocation2 + $0x580] sm:$0xff]
        %v2932 = vld [vmem:[#allocation2 + $0x588] sm:$0xff]
        %v2933 = vld [vmem:[#allocation2 + $0x5a0] sm:$0xff]
        %v2934 = vld [vmem:[#allocation2 + $0x5a8] sm:$0xff]
        %v2935 = vld [vmem:[#allocation2 + $0x5c0] sm:$0xff]
        %v2936 = vld [vmem:[#allocation2 + $0x5c8] sm:$0xff]
        %v2937 = vld [vmem:[#allocation2 + $0x5e0] sm:$0xff]
        %v2938 = vld [vmem:[#allocation2 + $0x5e8] sm:$0xff]
        %v2939 = vld [vmem:[#allocation2 + $0x590] sm:$0xff]
        %v2940 = vld [vmem:[#allocation2 + $0x598] sm:$0xff]
        %v2941 = vld [vmem:[#allocation2 + $0x5b0] sm:$0xff]
        %v2942 = vld [vmem:[#allocation2 + $0x5b8] sm:$0xff]
        %v2943 = vld [vmem:[#allocation2 + $0x5d0] sm:$0xff]
        %v2944 = vld [vmem:[#allocation2 + $0x5d8] sm:$0xff]
        %v2945 = vld [vmem:[#allocation2 + $0x5f0] sm:$0xff]
        %v2946 = vld [vmem:[#allocation2 + $0x5f8] sm:$0xff]
        %v2947 = vmax.f32 %v2931, %v2939
        %v2948 = vmax.f32 %v2932, %v2940
        %v2949 = vmax.f32 %v2933, %v2941
        %v2950 = vmax.f32 %v2934, %v2942
        %v2951 = vmax.f32 %v2935, %v2943
        %v2952 = vmax.f32 %v2936, %v2944
        %v2953 = vmax.f32 %v2937, %v2945
        %v2954 = vmax.f32 %v2938, %v2946
        %v2955 = vmax.f32 %v2923, %v2947
        %v2956 = vmax.f32 %v2924, %v2948
        %v2957 = vmax.f32 %v2925, %v2949
        %v2958 = vmax.f32 %v2926, %v2950
        %v2959 = vmax.f32 %v2927, %v2951
        %v2960 = vmax.f32 %v2928, %v2952
        %v2961 = vmax.f32 %v2929, %v2953
        %v2962 = vmax.f32 %v2930, %v2954
        %v2963 = vadd.f32 %v2955, %v2499
        %v2964 = vadd.f32 %v2956, %v2503
        %v2965 = vadd.f32 %v2957, %v2499
        %v2966 = vadd.f32 %v2958, %v2503
        %v2967 = vadd.f32 %v2959, %v2499
        %v2968 = vadd.f32 %v2960, %v2503
        %v2969 = vadd.f32 %v2961, %v2499
        %v2970 = vadd.f32 %v2962, %v2503
        %v2971 = vmax.f32 %v2963, 0.0
        %v2972 = vmax.f32 %v2964, 0.0
        %v2973 = vmax.f32 %v2965, 0.0
        %v2974 = vmax.f32 %v2966, 0.0
        %v2975 = vmax.f32 %v2967, 0.0
        %v2976 = vmax.f32 %v2968, 0.0
        %v2977 = vmax.f32 %v2969, 0.0
        %v2978 = vmax.f32 %v2970, 0.0
        %v2979 = vpack.c.bf16 %v2973, %v2971
        %v2980 = vpack.c.bf16 %v2974, %v2972
        %v2981 = vpack.c.bf16 %v2977, %v2975
        %v2982 = vpack.c.bf16 %v2978, %v2976
        %2983 = vst [vmem:[#allocation3 + $0xa0] sm:$0xff] %v2979
        %2984 = vst.msk [vmem:[#allocation3 + $0xa8] sm:$0xff] %vm2583, %v2980
        %2985 = vst [vmem:[#allocation3 + $0xb0] sm:$0xff] %v2981
        %2986 = vst.msk [vmem:[#allocation3 + $0xb8] sm:$0xff] %vm2583, %v2982
        %v2987 = vld [vmem:[#allocation2 + $0x600] sm:$0xff]
        %v2988 = vld [vmem:[#allocation2 + $0x608] sm:$0xff]
        %v2989 = vld [vmem:[#allocation2 + $0x620] sm:$0xff]
        %v2990 = vld [vmem:[#allocation2 + $0x628] sm:$0xff]
        %v2991 = vld [vmem:[#allocation2 + $0x640] sm:$0xff]
        %v2992 = vld [vmem:[#allocation2 + $0x648] sm:$0xff]
        %v2993 = vld [vmem:[#allocation2 + $0x660] sm:$0xff]
        %v2994 = vld [vmem:[#allocation2 + $0x668] sm:$0xff]
        %v2995 = vld [vmem:[#allocation2 + $0x610] sm:$0xff]
        %v2996 = vld [vmem:[#allocation2 + $0x618] sm:$0xff]
        %v2997 = vld [vmem:[#allocation2 + $0x630] sm:$0xff]
        %v2998 = vld [vmem:[#allocation2 + $0x638] sm:$0xff]
        %v2999 = vld [vmem:[#allocation2 + $0x650] sm:$0xff]
        %v3000 = vld [vmem:[#allocation2 + $0x658] sm:$0xff]
        %v3001 = vld [vmem:[#allocation2 + $0x670] sm:$0xff]
        %v3002 = vld [vmem:[#allocation2 + $0x678] sm:$0xff]
        %v3003 = vmax.f32 %v2987, %v2995
        %v3004 = vmax.f32 %v2988, %v2996
        %v3005 = vmax.f32 %v2989, %v2997
        %v3006 = vmax.f32 %v2990, %v2998
        %v3007 = vmax.f32 %v2991, %v2999
        %v3008 = vmax.f32 %v2992, %v3000
        %v3009 = vmax.f32 %v2993, %v3001
        %v3010 = vmax.f32 %v2994, %v3002
        %v3011 = vld [vmem:[#allocation2 + $0x680] sm:$0xff]
        %v3012 = vld [vmem:[#allocation2 + $0x688] sm:$0xff]
        %v3013 = vld [vmem:[#allocation2 + $0x6a0] sm:$0xff]
        %v3014 = vld [vmem:[#allocation2 + $0x6a8] sm:$0xff]
        %v3015 = vld [vmem:[#allocation2 + $0x6c0] sm:$0xff]
        %v3016 = vld [vmem:[#allocation2 + $0x6c8] sm:$0xff]
        %v3017 = vld [vmem:[#allocation2 + $0x6e0] sm:$0xff]
        %v3018 = vld [vmem:[#allocation2 + $0x6e8] sm:$0xff]
        %v3019 = vld [vmem:[#allocation2 + $0x690] sm:$0xff]
        %v3020 = vld [vmem:[#allocation2 + $0x698] sm:$0xff]
        %v3021 = vld [vmem:[#allocation2 + $0x6b0] sm:$0xff]
        %v3022 = vld [vmem:[#allocation2 + $0x6b8] sm:$0xff]
        %v3023 = vld [vmem:[#allocation2 + $0x6d0] sm:$0xff]
        %v3024 = vld [vmem:[#allocation2 + $0x6d8] sm:$0xff]
        %v3025 = vld [vmem:[#allocation2 + $0x6f0] sm:$0xff]
        %v3026 = vld [vmem:[#allocation2 + $0x6f8] sm:$0xff]
        %v3027 = vmax.f32 %v3011, %v3019
        %v3028 = vmax.f32 %v3012, %v3020
        %v3029 = vmax.f32 %v3013, %v3021
        %v3030 = vmax.f32 %v3014, %v3022
        %v3031 = vmax.f32 %v3015, %v3023
        %v3032 = vmax.f32 %v3016, %v3024
        %v3033 = vmax.f32 %v3017, %v3025
        %v3034 = vmax.f32 %v3018, %v3026
        %v3035 = vmax.f32 %v3003, %v3027
        %v3036 = vmax.f32 %v3004, %v3028
        %v3037 = vmax.f32 %v3005, %v3029
        %v3038 = vmax.f32 %v3006, %v3030
        %v3039 = vmax.f32 %v3007, %v3031
        %v3040 = vmax.f32 %v3008, %v3032
        %v3041 = vmax.f32 %v3009, %v3033
        %v3042 = vmax.f32 %v3010, %v3034
        %v3043 = vadd.f32 %v3035, %v2499
        %v3044 = vadd.f32 %v3036, %v2503
        %v3045 = vadd.f32 %v3037, %v2499
        %v3046 = vadd.f32 %v3038, %v2503
        %v3047 = vadd.f32 %v3039, %v2499
        %v3048 = vadd.f32 %v3040, %v2503
        %v3049 = vadd.f32 %v3041, %v2499
        %v3050 = vadd.f32 %v3042, %v2503
        %v3051 = vmax.f32 %v3043, 0.0
        %v3052 = vmax.f32 %v3044, 0.0
        %v3053 = vmax.f32 %v3045, 0.0
        %v3054 = vmax.f32 %v3046, 0.0
        %v3055 = vmax.f32 %v3047, 0.0
        %v3056 = vmax.f32 %v3048, 0.0
        %v3057 = vmax.f32 %v3049, 0.0
        %v3058 = vmax.f32 %v3050, 0.0
        %v3059 = vpack.c.bf16 %v3053, %v3051
        %v3060 = vpack.c.bf16 %v3054, %v3052
        %v3061 = vpack.c.bf16 %v3057, %v3055
        %v3062 = vpack.c.bf16 %v3058, %v3056
        %3063 = vst [vmem:[#allocation3 + $0xc0] sm:$0xff] %v3059
        %3064 = vst.msk [vmem:[#allocation3 + $0xc8] sm:$0xff] %vm2583, %v3060
        %3065 = vst [vmem:[#allocation3 + $0xd0] sm:$0xff] %v3061
        %3066 = vst.msk [vmem:[#allocation3 + $0xd8] sm:$0xff] %vm2583, %v3062
        %v3067 = vld [vmem:[#allocation2 + $0x700] sm:$0xff]
        %v3068 = vld [vmem:[#allocation2 + $0x708] sm:$0xff]
        %v3069 = vld [vmem:[#allocation2 + $0x720] sm:$0xff]
        %v3070 = vld [vmem:[#allocation2 + $0x728] sm:$0xff]
        %v3071 = vld [vmem:[#allocation2 + $0x740] sm:$0xff]
        %v3072 = vld [vmem:[#allocation2 + $0x748] sm:$0xff]
        %v3073 = vld [vmem:[#allocation2 + $0x760] sm:$0xff]
        %v3074 = vld [vmem:[#allocation2 + $0x768] sm:$0xff]
        %v3075 = vld [vmem:[#allocation2 + $0x710] sm:$0xff]
        %v3076 = vld [vmem:[#allocation2 + $0x718] sm:$0xff]
        %v3077 = vld [vmem:[#allocation2 + $0x730] sm:$0xff]
        %v3078 = vld [vmem:[#allocation2 + $0x738] sm:$0xff]
        %v3079 = vld [vmem:[#allocation2 + $0x750] sm:$0xff]
        %v3080 = vld [vmem:[#allocation2 + $0x758] sm:$0xff]
        %v3081 = vld [vmem:[#allocation2 + $0x770] sm:$0xff]
        %v3082 = vld [vmem:[#allocation2 + $0x778] sm:$0xff]
        %v3083 = vmax.f32 %v3067, %v3075
        %v3084 = vmax.f32 %v3068, %v3076
        %v3085 = vmax.f32 %v3069, %v3077
        %v3086 = vmax.f32 %v3070, %v3078
        %v3087 = vmax.f32 %v3071, %v3079
        %v3088 = vmax.f32 %v3072, %v3080
        %v3089 = vmax.f32 %v3073, %v3081
        %v3090 = vmax.f32 %v3074, %v3082
        %v3091 = vld [vmem:[#allocation2 + $0x780] sm:$0xff]
        %v3092 = vld [vmem:[#allocation2 + $0x788] sm:$0xff]
        %v3093 = vld [vmem:[#allocation2 + $0x7a0] sm:$0xff]
        %v3094 = vld [vmem:[#allocation2 + $0x7a8] sm:$0xff]
        %v3095 = vld [vmem:[#allocation2 + $0x7c0] sm:$0xff]
        %v3096 = vld [vmem:[#allocation2 + $0x7c8] sm:$0xff]
        %v3097 = vld [vmem:[#allocation2 + $0x7e0] sm:$0xff]
        %v3098 = vld [vmem:[#allocation2 + $0x7e8] sm:$0xff]
        %v3099 = vld [vmem:[#allocation2 + $0x790] sm:$0xff]
        %v3100 = vld [vmem:[#allocation2 + $0x798] sm:$0xff]
        %v3101 = vld [vmem:[#allocation2 + $0x7b0] sm:$0xff]
        %v3102 = vld [vmem:[#allocation2 + $0x7b8] sm:$0xff]
        %v3103 = vld [vmem:[#allocation2 + $0x7d0] sm:$0xff]
        %v3104 = vld [vmem:[#allocation2 + $0x7d8] sm:$0xff]
        %v3105 = vld [vmem:[#allocation2 + $0x7f0] sm:$0xff]
        %v3106 = vld [vmem:[#allocation2 + $0x7f8] sm:$0xff]
        %v3107 = vmax.f32 %v3091, %v3099
        %v3108 = vmax.f32 %v3092, %v3100
        %v3109 = vmax.f32 %v3093, %v3101
        %v3110 = vmax.f32 %v3094, %v3102
        %v3111 = vmax.f32 %v3095, %v3103
        %v3112 = vmax.f32 %v3096, %v3104
        %v3113 = vmax.f32 %v3097, %v3105
        %v3114 = vmax.f32 %v3098, %v3106
        %v3115 = vmax.f32 %v3083, %v3107
        %v3116 = vmax.f32 %v3084, %v3108
        %v3117 = vmax.f32 %v3085, %v3109
        %v3118 = vmax.f32 %v3086, %v3110
        %v3119 = vmax.f32 %v3087, %v3111
        %v3120 = vmax.f32 %v3088, %v3112
        %v3121 = vmax.f32 %v3089, %v3113
        %v3122 = vmax.f32 %v3090, %v3114
        %v3123 = vadd.f32 %v3115, %v2499
        %v3124 = vadd.f32 %v3116, %v2503
        %v3125 = vadd.f32 %v3117, %v2499
        %v3126 = vadd.f32 %v3118, %v2503
        %v3127 = vadd.f32 %v3119, %v2499
        %v3128 = vadd.f32 %v3120, %v2503
        %v3129 = vadd.f32 %v3121, %v2499
        %v3130 = vadd.f32 %v3122, %v2503
        %v3131 = vmax.f32 %v3123, 0.0
        %v3132 = vmax.f32 %v3124, 0.0
        %v3133 = vmax.f32 %v3125, 0.0
        %v3134 = vmax.f32 %v3126, 0.0
        %v3135 = vmax.f32 %v3127, 0.0
        %v3136 = vmax.f32 %v3128, 0.0
        %v3137 = vmax.f32 %v3129, 0.0
        %v3138 = vmax.f32 %v3130, 0.0
        %v3139 = vpack.c.bf16 %v3133, %v3131
        %v3140 = vpack.c.bf16 %v3134, %v3132
        %v3141 = vpack.c.bf16 %v3137, %v3135
        %v3142 = vpack.c.bf16 %v3138, %v3136
        %3143 = vst [vmem:[#allocation3 + $0xe0] sm:$0xff] %v3139
        %3144 = vst.msk [vmem:[#allocation3 + $0xe8] sm:$0xff] %vm2583, %v3140
        %3145 = vst [vmem:[#allocation3 + $0xf0] sm:$0xff] %v3141
        %3146 = vst.msk [vmem:[#allocation3 + $0xf8] sm:$0xff] %vm2583, %v3142
        %v3147 = vld [vmem:[#allocation2 + $0x800] sm:$0xff]
        %v3148 = vld [vmem:[#allocation2 + $0x808] sm:$0xff]
        %v3149 = vld [vmem:[#allocation2 + $0x820] sm:$0xff]
        %v3150 = vld [vmem:[#allocation2 + $0x828] sm:$0xff]
        %v3151 = vld [vmem:[#allocation2 + $0x840] sm:$0xff]
        %v3152 = vld [vmem:[#allocation2 + $0x848] sm:$0xff]
        %v3153 = vld [vmem:[#allocation2 + $0x860] sm:$0xff]
        %v3154 = vld [vmem:[#allocation2 + $0x868] sm:$0xff]
        %v3155 = vld [vmem:[#allocation2 + $0x810] sm:$0xff]
        %v3156 = vld [vmem:[#allocation2 + $0x818] sm:$0xff]
        %v3157 = vld [vmem:[#allocation2 + $0x830] sm:$0xff]
        %v3158 = vld [vmem:[#allocation2 + $0x838] sm:$0xff]
        %v3159 = vld [vmem:[#allocation2 + $0x850] sm:$0xff]
        %v3160 = vld [vmem:[#allocation2 + $0x858] sm:$0xff]
        %v3161 = vld [vmem:[#allocation2 + $0x870] sm:$0xff]
        %v3162 = vld [vmem:[#allocation2 + $0x878] sm:$0xff]
        %v3163 = vmax.f32 %v3147, %v3155
        %v3164 = vmax.f32 %v3148, %v3156
        %v3165 = vmax.f32 %v3149, %v3157
        %v3166 = vmax.f32 %v3150, %v3158
        %v3167 = vmax.f32 %v3151, %v3159
        %v3168 = vmax.f32 %v3152, %v3160
        %v3169 = vmax.f32 %v3153, %v3161
        %v3170 = vmax.f32 %v3154, %v3162
        %v3171 = vld [vmem:[#allocation2 + $0x880] sm:$0xff]
        %v3172 = vld [vmem:[#allocation2 + $0x888] sm:$0xff]
        %v3173 = vld [vmem:[#allocation2 + $0x8a0] sm:$0xff]
        %v3174 = vld [vmem:[#allocation2 + $0x8a8] sm:$0xff]
        %v3175 = vld [vmem:[#allocation2 + $0x8c0] sm:$0xff]
        %v3176 = vld [vmem:[#allocation2 + $0x8c8] sm:$0xff]
        %v3177 = vld [vmem:[#allocation2 + $0x8e0] sm:$0xff]
        %v3178 = vld [vmem:[#allocation2 + $0x8e8] sm:$0xff]
        %v3179 = vld [vmem:[#allocation2 + $0x890] sm:$0xff]
        %v3180 = vld [vmem:[#allocation2 + $0x898] sm:$0xff]
        %v3181 = vld [vmem:[#allocation2 + $0x8b0] sm:$0xff]
        %v3182 = vld [vmem:[#allocation2 + $0x8b8] sm:$0xff]
        %v3183 = vld [vmem:[#allocation2 + $0x8d0] sm:$0xff]
        %v3184 = vld [vmem:[#allocation2 + $0x8d8] sm:$0xff]
        %v3185 = vld [vmem:[#allocation2 + $0x8f0] sm:$0xff]
        %v3186 = vld [vmem:[#allocation2 + $0x8f8] sm:$0xff]
        %v3187 = vmax.f32 %v3171, %v3179
        %v3188 = vmax.f32 %v3172, %v3180
        %v3189 = vmax.f32 %v3173, %v3181
        %v3190 = vmax.f32 %v3174, %v3182
        %v3191 = vmax.f32 %v3175, %v3183
        %v3192 = vmax.f32 %v3176, %v3184
        %v3193 = vmax.f32 %v3177, %v3185
        %v3194 = vmax.f32 %v3178, %v3186
        %v3195 = vmax.f32 %v3163, %v3187
        %v3196 = vmax.f32 %v3164, %v3188
        %v3197 = vmax.f32 %v3165, %v3189
        %v3198 = vmax.f32 %v3166, %v3190
        %v3199 = vmax.f32 %v3167, %v3191
        %v3200 = vmax.f32 %v3168, %v3192
        %v3201 = vmax.f32 %v3169, %v3193
        %v3202 = vmax.f32 %v3170, %v3194
        %v3203 = vadd.f32 %v3195, %v2499
        %v3204 = vadd.f32 %v3196, %v2503
        %v3205 = vadd.f32 %v3197, %v2499
        %v3206 = vadd.f32 %v3198, %v2503
        %v3207 = vadd.f32 %v3199, %v2499
        %v3208 = vadd.f32 %v3200, %v2503
        %v3209 = vadd.f32 %v3201, %v2499
        %v3210 = vadd.f32 %v3202, %v2503
        %v3211 = vmax.f32 %v3203, 0.0
        %v3212 = vmax.f32 %v3204, 0.0
        %v3213 = vmax.f32 %v3205, 0.0
        %v3214 = vmax.f32 %v3206, 0.0
        %v3215 = vmax.f32 %v3207, 0.0
        %v3216 = vmax.f32 %v3208, 0.0
        %v3217 = vmax.f32 %v3209, 0.0
        %v3218 = vmax.f32 %v3210, 0.0
        %v3219 = vpack.c.bf16 %v3213, %v3211
        %v3220 = vpack.c.bf16 %v3214, %v3212
        %v3221 = vpack.c.bf16 %v3217, %v3215
        %v3222 = vpack.c.bf16 %v3218, %v3216
        %3223 = vst [vmem:[#allocation3 + $0x100] sm:$0xff] %v3219
        %3224 = vst.msk [vmem:[#allocation3 + $0x108] sm:$0xff] %vm2583, %v3220
        %3225 = vst [vmem:[#allocation3 + $0x110] sm:$0xff] %v3221
        %3226 = vst.msk [vmem:[#allocation3 + $0x118] sm:$0xff] %vm2583, %v3222
        %v3227 = vld [vmem:[#allocation2 + $0x900] sm:$0xff]
        %v3228 = vld [vmem:[#allocation2 + $0x908] sm:$0xff]
        %v3229 = vld [vmem:[#allocation2 + $0x920] sm:$0xff]
        %v3230 = vld [vmem:[#allocation2 + $0x928] sm:$0xff]
        %v3231 = vld [vmem:[#allocation2 + $0x940] sm:$0xff]
        %v3232 = vld [vmem:[#allocation2 + $0x948] sm:$0xff]
        %v3233 = vld [vmem:[#allocation2 + $0x960] sm:$0xff]
        %v3234 = vld [vmem:[#allocation2 + $0x968] sm:$0xff]
        %v3235 = vld [vmem:[#allocation2 + $0x910] sm:$0xff]
        %v3236 = vld [vmem:[#allocation2 + $0x918] sm:$0xff]
        %v3237 = vld [vmem:[#allocation2 + $0x930] sm:$0xff]
        %v3238 = vld [vmem:[#allocation2 + $0x938] sm:$0xff]
        %v3239 = vld [vmem:[#allocation2 + $0x950] sm:$0xff]
        %v3240 = vld [vmem:[#allocation2 + $0x958] sm:$0xff]
        %v3241 = vld [vmem:[#allocation2 + $0x970] sm:$0xff]
        %v3242 = vld [vmem:[#allocation2 + $0x978] sm:$0xff]
        %v3243 = vmax.f32 %v3227, %v3235
        %v3244 = vmax.f32 %v3228, %v3236
        %v3245 = vmax.f32 %v3229, %v3237
        %v3246 = vmax.f32 %v3230, %v3238
        %v3247 = vmax.f32 %v3231, %v3239
        %v3248 = vmax.f32 %v3232, %v3240
        %v3249 = vmax.f32 %v3233, %v3241
        %v3250 = vmax.f32 %v3234, %v3242
        %v3251 = vld [vmem:[#allocation2 + $0x980] sm:$0xff]
        %v3252 = vld [vmem:[#allocation2 + $0x988] sm:$0xff]
        %v3253 = vld [vmem:[#allocation2 + $0x9a0] sm:$0xff]
        %v3254 = vld [vmem:[#allocation2 + $0x9a8] sm:$0xff]
        %v3255 = vld [vmem:[#allocation2 + $0x9c0] sm:$0xff]
        %v3256 = vld [vmem:[#allocation2 + $0x9c8] sm:$0xff]
        %v3257 = vld [vmem:[#allocation2 + $0x9e0] sm:$0xff]
        %v3258 = vld [vmem:[#allocation2 + $0x9e8] sm:$0xff]
        %v3259 = vld [vmem:[#allocation2 + $0x990] sm:$0xff]
        %v3260 = vld [vmem:[#allocation2 + $0x998] sm:$0xff]
        %v3261 = vld [vmem:[#allocation2 + $0x9b0] sm:$0xff]
        %v3262 = vld [vmem:[#allocation2 + $0x9b8] sm:$0xff]
        %v3263 = vld [vmem:[#allocation2 + $0x9d0] sm:$0xff]
        %v3264 = vld [vmem:[#allocation2 + $0x9d8] sm:$0xff]
        %v3265 = vld [vmem:[#allocation2 + $0x9f0] sm:$0xff]
        %v3266 = vld [vmem:[#allocation2 + $0x9f8] sm:$0xff]
        %v3267 = vmax.f32 %v3251, %v3259
        %v3268 = vmax.f32 %v3252, %v3260
        %v3269 = vmax.f32 %v3253, %v3261
        %v3270 = vmax.f32 %v3254, %v3262
        %v3271 = vmax.f32 %v3255, %v3263
        %v3272 = vmax.f32 %v3256, %v3264
        %v3273 = vmax.f32 %v3257, %v3265
        %v3274 = vmax.f32 %v3258, %v3266
        %v3275 = vmax.f32 %v3243, %v3267
        %v3276 = vmax.f32 %v3244, %v3268
        %v3277 = vmax.f32 %v3245, %v3269
        %v3278 = vmax.f32 %v3246, %v3270
        %v3279 = vmax.f32 %v3247, %v3271
        %v3280 = vmax.f32 %v3248, %v3272
        %v3281 = vmax.f32 %v3249, %v3273
        %v3282 = vmax.f32 %v3250, %v3274
        %v3283 = vadd.f32 %v3275, %v2499
        %v3284 = vadd.f32 %v3276, %v2503
        %v3285 = vadd.f32 %v3277, %v2499
        %v3286 = vadd.f32 %v3278, %v2503
        %v3287 = vadd.f32 %v3279, %v2499
        %v3288 = vadd.f32 %v3280, %v2503
        %v3289 = vadd.f32 %v3281, %v2499
        %v3290 = vadd.f32 %v3282, %v2503
        %v3291 = vmax.f32 %v3283, 0.0
        %v3292 = vmax.f32 %v3284, 0.0
        %v3293 = vmax.f32 %v3285, 0.0
        %v3294 = vmax.f32 %v3286, 0.0
        %v3295 = vmax.f32 %v3287, 0.0
        %v3296 = vmax.f32 %v3288, 0.0
        %v3297 = vmax.f32 %v3289, 0.0
        %v3298 = vmax.f32 %v3290, 0.0
        %v3299 = vpack.c.bf16 %v3293, %v3291
        %v3300 = vpack.c.bf16 %v3294, %v3292
        %v3301 = vpack.c.bf16 %v3297, %v3295
        %v3302 = vpack.c.bf16 %v3298, %v3296
        %3303 = vst [vmem:[#allocation3 + $0x120] sm:$0xff] %v3299
        %3304 = vst.msk [vmem:[#allocation3 + $0x128] sm:$0xff] %vm2583, %v3300
        %3305 = vst [vmem:[#allocation3 + $0x130] sm:$0xff] %v3301
        %3306 = vst.msk [vmem:[#allocation3 + $0x138] sm:$0xff] %vm2583, %v3302
        %v3307 = vld [vmem:[#allocation2 + $0xa00] sm:$0xff]
        %v3308 = vld [vmem:[#allocation2 + $0xa08] sm:$0xff]
        %v3309 = vld [vmem:[#allocation2 + $0xa20] sm:$0xff]
        %v3310 = vld [vmem:[#allocation2 + $0xa28] sm:$0xff]
        %v3311 = vld [vmem:[#allocation2 + $0xa40] sm:$0xff]
        %v3312 = vld [vmem:[#allocation2 + $0xa48] sm:$0xff]
        %v3313 = vld [vmem:[#allocation2 + $0xa60] sm:$0xff]
        %v3314 = vld [vmem:[#allocation2 + $0xa68] sm:$0xff]
        %v3315 = vld [vmem:[#allocation2 + $0xa10] sm:$0xff]
        %v3316 = vld [vmem:[#allocation2 + $0xa18] sm:$0xff]
        %v3317 = vld [vmem:[#allocation2 + $0xa30] sm:$0xff]
        %v3318 = vld [vmem:[#allocation2 + $0xa38] sm:$0xff]
        %v3319 = vld [vmem:[#allocation2 + $0xa50] sm:$0xff]
        %v3320 = vld [vmem:[#allocation2 + $0xa58] sm:$0xff]
        %v3321 = vld [vmem:[#allocation2 + $0xa70] sm:$0xff]
        %v3322 = vld [vmem:[#allocation2 + $0xa78] sm:$0xff]
        %v3323 = vmax.f32 %v3307, %v3315
        %v3324 = vmax.f32 %v3308, %v3316
        %v3325 = vmax.f32 %v3309, %v3317
        %v3326 = vmax.f32 %v3310, %v3318
        %v3327 = vmax.f32 %v3311, %v3319
        %v3328 = vmax.f32 %v3312, %v3320
        %v3329 = vmax.f32 %v3313, %v3321
        %v3330 = vmax.f32 %v3314, %v3322
        %v3331 = vld [vmem:[#allocation2 + $0xa80] sm:$0xff]
        %v3332 = vld [vmem:[#allocation2 + $0xa88] sm:$0xff]
        %v3333 = vld [vmem:[#allocation2 + $0xaa0] sm:$0xff]
        %v3334 = vld [vmem:[#allocation2 + $0xaa8] sm:$0xff]
        %v3335 = vld [vmem:[#allocation2 + $0xac0] sm:$0xff]
        %v3336 = vld [vmem:[#allocation2 + $0xac8] sm:$0xff]
        %v3337 = vld [vmem:[#allocation2 + $0xae0] sm:$0xff]
        %v3338 = vld [vmem:[#allocation2 + $0xae8] sm:$0xff]
        %v3339 = vld [vmem:[#allocation2 + $0xa90] sm:$0xff]
        %v3340 = vld [vmem:[#allocation2 + $0xa98] sm:$0xff]
        %v3341 = vld [vmem:[#allocation2 + $0xab0] sm:$0xff]
        %v3342 = vld [vmem:[#allocation2 + $0xab8] sm:$0xff]
        %v3343 = vld [vmem:[#allocation2 + $0xad0] sm:$0xff]
        %v3344 = vld [vmem:[#allocation2 + $0xad8] sm:$0xff]
        %v3345 = vld [vmem:[#allocation2 + $0xaf0] sm:$0xff]
        %v3346 = vld [vmem:[#allocation2 + $0xaf8] sm:$0xff]
        %v3347 = vmax.f32 %v3331, %v3339
        %v3348 = vmax.f32 %v3332, %v3340
        %v3349 = vmax.f32 %v3333, %v3341
        %v3350 = vmax.f32 %v3334, %v3342
        %v3351 = vmax.f32 %v3335, %v3343
        %v3352 = vmax.f32 %v3336, %v3344
        %v3353 = vmax.f32 %v3337, %v3345
        %v3354 = vmax.f32 %v3338, %v3346
        %v3355 = vmax.f32 %v3323, %v3347
        %v3356 = vmax.f32 %v3324, %v3348
        %v3357 = vmax.f32 %v3325, %v3349
        %v3358 = vmax.f32 %v3326, %v3350
        %v3359 = vmax.f32 %v3327, %v3351
        %v3360 = vmax.f32 %v3328, %v3352
        %v3361 = vmax.f32 %v3329, %v3353
        %v3362 = vmax.f32 %v3330, %v3354
        %v3363 = vadd.f32 %v3355, %v2499
        %v3364 = vadd.f32 %v3356, %v2503
        %v3365 = vadd.f32 %v3357, %v2499
        %v3366 = vadd.f32 %v3358, %v2503
        %v3367 = vadd.f32 %v3359, %v2499
        %v3368 = vadd.f32 %v3360, %v2503
        %v3369 = vadd.f32 %v3361, %v2499
        %v3370 = vadd.f32 %v3362, %v2503
        %v3371 = vmax.f32 %v3363, 0.0
        %v3372 = vmax.f32 %v3364, 0.0
        %v3373 = vmax.f32 %v3365, 0.0
        %v3374 = vmax.f32 %v3366, 0.0
        %v3375 = vmax.f32 %v3367, 0.0
        %v3376 = vmax.f32 %v3368, 0.0
        %v3377 = vmax.f32 %v3369, 0.0
        %v3378 = vmax.f32 %v3370, 0.0
        %v3379 = vpack.c.bf16 %v3373, %v3371
        %v3380 = vpack.c.bf16 %v3374, %v3372
        %v3381 = vpack.c.bf16 %v3377, %v3375
        %v3382 = vpack.c.bf16 %v3378, %v3376
        %3383 = vst [vmem:[#allocation3 + $0x140] sm:$0xff] %v3379
        %3384 = vst.msk [vmem:[#allocation3 + $0x148] sm:$0xff] %vm2583, %v3380
        %3385 = vst [vmem:[#allocation3 + $0x150] sm:$0xff] %v3381
        %3386 = vst.msk [vmem:[#allocation3 + $0x158] sm:$0xff] %vm2583, %v3382
        %v3387 = vld [vmem:[#allocation2 + $0xb00] sm:$0xff]
        %v3388 = vld [vmem:[#allocation2 + $0xb08] sm:$0xff]
        %v3389 = vld [vmem:[#allocation2 + $0xb20] sm:$0xff]
        %v3390 = vld [vmem:[#allocation2 + $0xb28] sm:$0xff]
        %v3391 = vld [vmem:[#allocation2 + $0xb40] sm:$0xff]
        %v3392 = vld [vmem:[#allocation2 + $0xb48] sm:$0xff]
        %v3393 = vld [vmem:[#allocation2 + $0xb60] sm:$0xff]
        %v3394 = vld [vmem:[#allocation2 + $0xb68] sm:$0xff]
        %v3395 = vld [vmem:[#allocation2 + $0xb10] sm:$0xff]
        %v3396 = vld [vmem:[#allocation2 + $0xb18] sm:$0xff]
        %v3397 = vld [vmem:[#allocation2 + $0xb30] sm:$0xff]
        %v3398 = vld [vmem:[#allocation2 + $0xb38] sm:$0xff]
        %v3399 = vld [vmem:[#allocation2 + $0xb50] sm:$0xff]
        %v3400 = vld [vmem:[#allocation2 + $0xb58] sm:$0xff]
        %v3401 = vld [vmem:[#allocation2 + $0xb70] sm:$0xff]
        %v3402 = vld [vmem:[#allocation2 + $0xb78] sm:$0xff]
        %v3403 = vmax.f32 %v3387, %v3395
        %v3404 = vmax.f32 %v3388, %v3396
        %v3405 = vmax.f32 %v3389, %v3397
        %v3406 = vmax.f32 %v3390, %v3398
        %v3407 = vmax.f32 %v3391, %v3399
        %v3408 = vmax.f32 %v3392, %v3400
        %v3409 = vmax.f32 %v3393, %v3401
        %v3410 = vmax.f32 %v3394, %v3402
        %v3411 = vld [vmem:[#allocation2 + $0xb80] sm:$0xff]
        %v3412 = vld [vmem:[#allocation2 + $0xb88] sm:$0xff]
        %v3413 = vld [vmem:[#allocation2 + $0xba0] sm:$0xff]
        %v3414 = vld [vmem:[#allocation2 + $0xba8] sm:$0xff]
        %v3415 = vld [vmem:[#allocation2 + $0xbc0] sm:$0xff]
        %v3416 = vld [vmem:[#allocation2 + $0xbc8] sm:$0xff]
        %v3417 = vld [vmem:[#allocation2 + $0xbe0] sm:$0xff]
        %v3418 = vld [vmem:[#allocation2 + $0xbe8] sm:$0xff]
        %v3419 = vld [vmem:[#allocation2 + $0xb90] sm:$0xff]
        %v3420 = vld [vmem:[#allocation2 + $0xb98] sm:$0xff]
        %v3421 = vld [vmem:[#allocation2 + $0xbb0] sm:$0xff]
        %v3422 = vld [vmem:[#allocation2 + $0xbb8] sm:$0xff]
        %v3423 = vld [vmem:[#allocation2 + $0xbd0] sm:$0xff]
        %v3424 = vld [vmem:[#allocation2 + $0xbd8] sm:$0xff]
        %v3425 = vld [vmem:[#allocation2 + $0xbf0] sm:$0xff]
        %v3426 = vld [vmem:[#allocation2 + $0xbf8] sm:$0xff]
        %v3427 = vmax.f32 %v3411, %v3419
        %v3428 = vmax.f32 %v3412, %v3420
        %v3429 = vmax.f32 %v3413, %v3421
        %v3430 = vmax.f32 %v3414, %v3422
        %v3431 = vmax.f32 %v3415, %v3423
        %v3432 = vmax.f32 %v3416, %v3424
        %v3433 = vmax.f32 %v3417, %v3425
        %v3434 = vmax.f32 %v3418, %v3426
        %v3435 = vmax.f32 %v3403, %v3427
        %v3436 = vmax.f32 %v3404, %v3428
        %v3437 = vmax.f32 %v3405, %v3429
        %v3438 = vmax.f32 %v3406, %v3430
        %v3439 = vmax.f32 %v3407, %v3431
        %v3440 = vmax.f32 %v3408, %v3432
        %v3441 = vmax.f32 %v3409, %v3433
        %v3442 = vmax.f32 %v3410, %v3434
        %v3443 = vadd.f32 %v3435, %v2499
        %v3444 = vadd.f32 %v3436, %v2503
        %v3445 = vadd.f32 %v3437, %v2499
        %v3446 = vadd.f32 %v3438, %v2503
        %v3447 = vadd.f32 %v3439, %v2499
        %v3448 = vadd.f32 %v3440, %v2503
        %v3449 = vadd.f32 %v3441, %v2499
        %v3450 = vadd.f32 %v3442, %v2503
        %v3451 = vmax.f32 %v3443, 0.0
        %v3452 = vmax.f32 %v3444, 0.0
        %v3453 = vmax.f32 %v3445, 0.0
        %v3454 = vmax.f32 %v3446, 0.0
        %v3455 = vmax.f32 %v3447, 0.0
        %v3456 = vmax.f32 %v3448, 0.0
        %v3457 = vmax.f32 %v3449, 0.0
        %v3458 = vmax.f32 %v3450, 0.0
        %v3459 = vpack.c.bf16 %v3453, %v3451
        %v3460 = vpack.c.bf16 %v3454, %v3452
        %v3461 = vpack.c.bf16 %v3457, %v3455
        %v3462 = vpack.c.bf16 %v3458, %v3456
        %3463 = vst [vmem:[#allocation3 + $0x160] sm:$0xff] %v3459
        %3464 = vst.msk [vmem:[#allocation3 + $0x168] sm:$0xff] %vm2583, %v3460
        %3465 = vst [vmem:[#allocation3 + $0x170] sm:$0xff] %v3461
        %3466 = vst.msk [vmem:[#allocation3 + $0x178] sm:$0xff] %vm2583, %v3462
        %v3467 = vld [vmem:[#allocation2 + $0xc00] sm:$0xff]
        %v3468 = vld [vmem:[#allocation2 + $0xc08] sm:$0xff]
        %v3469 = vld [vmem:[#allocation2 + $0xc20] sm:$0xff]
        %v3470 = vld [vmem:[#allocation2 + $0xc28] sm:$0xff]
        %v3471 = vld [vmem:[#allocation2 + $0xc40] sm:$0xff]
        %v3472 = vld [vmem:[#allocation2 + $0xc48] sm:$0xff]
        %v3473 = vld [vmem:[#allocation2 + $0xc60] sm:$0xff]
        %v3474 = vld [vmem:[#allocation2 + $0xc68] sm:$0xff]
        %v3475 = vld [vmem:[#allocation2 + $0xc10] sm:$0xff]
        %v3476 = vld [vmem:[#allocation2 + $0xc18] sm:$0xff]
        %v3477 = vld [vmem:[#allocation2 + $0xc30] sm:$0xff]
        %v3478 = vld [vmem:[#allocation2 + $0xc38] sm:$0xff]
        %v3479 = vld [vmem:[#allocation2 + $0xc50] sm:$0xff]
        %v3480 = vld [vmem:[#allocation2 + $0xc58] sm:$0xff]
        %v3481 = vld [vmem:[#allocation2 + $0xc70] sm:$0xff]
        %v3482 = vld [vmem:[#allocation2 + $0xc78] sm:$0xff]
        %v3483 = vmax.f32 %v3467, %v3475
        %v3484 = vmax.f32 %v3468, %v3476
        %v3485 = vmax.f32 %v3469, %v3477
        %v3486 = vmax.f32 %v3470, %v3478
        %v3487 = vmax.f32 %v3471, %v3479
        %v3488 = vmax.f32 %v3472, %v3480
        %v3489 = vmax.f32 %v3473, %v3481
        %v3490 = vmax.f32 %v3474, %v3482
        %v3491 = vld [vmem:[#allocation2 + $0xc80] sm:$0xff]
        %v3492 = vld [vmem:[#allocation2 + $0xc88] sm:$0xff]
        %v3493 = vld [vmem:[#allocation2 + $0xca0] sm:$0xff]
        %v3494 = vld [vmem:[#allocation2 + $0xca8] sm:$0xff]
        %v3495 = vld [vmem:[#allocation2 + $0xcc0] sm:$0xff]
        %v3496 = vld [vmem:[#allocation2 + $0xcc8] sm:$0xff]
        %v3497 = vld [vmem:[#allocation2 + $0xce0] sm:$0xff]
        %v3498 = vld [vmem:[#allocation2 + $0xce8] sm:$0xff]
        %v3499 = vld [vmem:[#allocation2 + $0xc90] sm:$0xff]
        %v3500 = vld [vmem:[#allocation2 + $0xc98] sm:$0xff]
        %v3501 = vld [vmem:[#allocation2 + $0xcb0] sm:$0xff]
        %v3502 = vld [vmem:[#allocation2 + $0xcb8] sm:$0xff]
        %v3503 = vld [vmem:[#allocation2 + $0xcd0] sm:$0xff]
        %v3504 = vld [vmem:[#allocation2 + $0xcd8] sm:$0xff]
        %v3505 = vld [vmem:[#allocation2 + $0xcf0] sm:$0xff]
        %v3506 = vld [vmem:[#allocation2 + $0xcf8] sm:$0xff]
        %v3507 = vmax.f32 %v3491, %v3499
        %v3508 = vmax.f32 %v3492, %v3500
        %v3509 = vmax.f32 %v3493, %v3501
        %v3510 = vmax.f32 %v3494, %v3502
        %v3511 = vmax.f32 %v3495, %v3503
        %v3512 = vmax.f32 %v3496, %v3504
        %v3513 = vmax.f32 %v3497, %v3505
        %v3514 = vmax.f32 %v3498, %v3506
        %v3515 = vmax.f32 %v3483, %v3507
        %v3516 = vmax.f32 %v3484, %v3508
        %v3517 = vmax.f32 %v3485, %v3509
        %v3518 = vmax.f32 %v3486, %v3510
        %v3519 = vmax.f32 %v3487, %v3511
        %v3520 = vmax.f32 %v3488, %v3512
        %v3521 = vmax.f32 %v3489, %v3513
        %v3522 = vmax.f32 %v3490, %v3514
        %v3523 = vadd.f32 %v3515, %v2499
        %v3524 = vadd.f32 %v3516, %v2503
        %v3525 = vadd.f32 %v3517, %v2499
        %v3526 = vadd.f32 %v3518, %v2503
        %v3527 = vadd.f32 %v3519, %v2499
        %v3528 = vadd.f32 %v3520, %v2503
        %v3529 = vadd.f32 %v3521, %v2499
        %v3530 = vadd.f32 %v3522, %v2503
        %v3531 = vmax.f32 %v3523, 0.0
        %v3532 = vmax.f32 %v3524, 0.0
        %v3533 = vmax.f32 %v3525, 0.0
        %v3534 = vmax.f32 %v3526, 0.0
        %v3535 = vmax.f32 %v3527, 0.0
        %v3536 = vmax.f32 %v3528, 0.0
        %v3537 = vmax.f32 %v3529, 0.0
        %v3538 = vmax.f32 %v3530, 0.0
        %v3539 = vpack.c.bf16 %v3533, %v3531
        %v3540 = vpack.c.bf16 %v3534, %v3532
        %v3541 = vpack.c.bf16 %v3537, %v3535
        %v3542 = vpack.c.bf16 %v3538, %v3536
        %3543 = vst [vmem:[#allocation3 + $0x180] sm:$0xff] %v3539
        %3544 = vst.msk [vmem:[#allocation3 + $0x188] sm:$0xff] %vm2583, %v3540
        %3545 = vst [vmem:[#allocation3 + $0x190] sm:$0xff] %v3541
        %3546 = vst.msk [vmem:[#allocation3 + $0x198] sm:$0xff] %vm2583, %v3542
        %v3547 = vld [vmem:[#allocation3] sm:$0xff]
        %v3548 = vld [vmem:[#allocation3 + $0x8] sm:$0xff]
        %v3549 = vld [vmem:[#allocation3 + $0x10] sm:$0xff]
        %v3550 = vld [vmem:[#allocation3 + $0x18] sm:$0xff]
        %v3551 = vld [vmem:[#allocation3 + $0x20] sm:$0xff]
        %v3552 = vld [vmem:[#allocation3 + $0x28] sm:$0xff]
        %v3553 = vld [vmem:[#allocation3 + $0x30] sm:$0xff]
        %v3554 = vld [vmem:[#allocation3 + $0x38] sm:$0xff]
        %v3555 = vld [vmem:[#allocation3 + $0x40] sm:$0xff]
        %v3556 = vld [vmem:[#allocation3 + $0x48] sm:$0xff]
        %v3557 = vld [vmem:[#allocation3 + $0x50] sm:$0xff]
        %v3558 = vld [vmem:[#allocation3 + $0x58] sm:$0xff]
        %v3559 = vld [vmem:[#allocation3 + $0x60] sm:$0xff]
        %v3560 = vld [vmem:[#allocation3 + $0x68] sm:$0xff]
        %v3561 = vld [vmem:[#allocation3 + $0x70] sm:$0xff]
        %v3562 = vld [vmem:[#allocation3 + $0x78] sm:$0xff]
        %v3563 = vld [vmem:[#allocation3 + $0x80] sm:$0xff]
        %v3564 = vld [vmem:[#allocation3 + $0x88] sm:$0xff]
        %v3565 = vld [vmem:[#allocation3 + $0x90] sm:$0xff]
        %v3566 = vld [vmem:[#allocation3 + $0x98] sm:$0xff]
        %v3567 = vld [vmem:[#allocation3 + $0xa0] sm:$0xff]
        %v3568 = vld [vmem:[#allocation3 + $0xa8] sm:$0xff]
        %v3569 = vld [vmem:[#allocation3 + $0xb0] sm:$0xff]
        %v3570 = vld [vmem:[#allocation3 + $0xb8] sm:$0xff]
        %v3571 = vld [vmem:[#allocation3 + $0xc0] sm:$0xff]
        %v3572 = vld [vmem:[#allocation3 + $0xc8] sm:$0xff]
        %v3573 = vld [vmem:[#allocation3 + $0xd0] sm:$0xff]
        %v3574 = vld [vmem:[#allocation3 + $0xd8] sm:$0xff]
        %v3575 = vld [vmem:[#allocation3 + $0xe0] sm:$0xff]
        %v3576 = vld [vmem:[#allocation3 + $0xe8] sm:$0xff]
        %v3577 = vld [vmem:[#allocation3 + $0xf0] sm:$0xff]
        %v3578 = vld [vmem:[#allocation3 + $0xf8] sm:$0xff]
        %v3579 = vld [vmem:[#allocation3 + $0x100] sm:$0xff]
        %v3580 = vld [vmem:[#allocation3 + $0x108] sm:$0xff]
        %v3581 = vld [vmem:[#allocation3 + $0x110] sm:$0xff]
        %v3582 = vld [vmem:[#allocation3 + $0x118] sm:$0xff]
        %v3583 = vld [vmem:[#allocation3 + $0x120] sm:$0xff]
        %v3584 = vld [vmem:[#allocation3 + $0x128] sm:$0xff]
        %v3585 = vld [vmem:[#allocation3 + $0x130] sm:$0xff]
        %v3586 = vld [vmem:[#allocation3 + $0x138] sm:$0xff]
        %v3587 = vld [vmem:[%s3] sm:$0xff]
        %v3588 = vld [vmem:[%s3 + $0x8] sm:$0xff]
        %v3589 = vld [vmem:[%s3 + $0x10] sm:$0xff]
        %v3590 = vld [vmem:[%s3 + $0x18] sm:$0xff]
        %v3591 = vld [vmem:[%s3 + $0x20] sm:$0xff]
        %v3592 = vld [vmem:[%s3 + $0x28] sm:$0xff]
        %v3593 = vld [vmem:[%s3 + $0x30] sm:$0xff]
        %v3594 = vld [vmem:[%s3 + $0x38] sm:$0xff]
        %v3595 = vld [vmem:[%s3 + $0x40] sm:$0xff]
        %v3596 = vld [vmem:[%s3 + $0x48] sm:$0xff]
        %v3597 = vld [vmem:[%s3 + $0x50] sm:$0xff]
        %v3598 = vld [vmem:[%s3 + $0x58] sm:$0xff]
        %v3599 = vld [vmem:[%s3 + $0x60] sm:$0xff]
        %v3600 = vld [vmem:[%s3 + $0x68] sm:$0xff]
        %v3601 = vld [vmem:[%s3 + $0x70] sm:$0xff]
        %v3602 = vld [vmem:[%s3 + $0x78] sm:$0xff]
        %v3603 = vld [vmem:[%s3 + $0x80] sm:$0xff]
        %v3604 = vld [vmem:[%s3 + $0x88] sm:$0xff]
        %v3605 = vld [vmem:[%s3 + $0x90] sm:$0xff]
        %v3606 = vld [vmem:[%s3 + $0x98] sm:$0xff]
        %v3607 = vld [vmem:[%s3 + $0xa0] sm:$0xff]
        %v3608 = vld [vmem:[%s3 + $0xa8] sm:$0xff]
        %v3609 = vld [vmem:[%s3 + $0xb0] sm:$0xff]
        %v3610 = vld [vmem:[%s3 + $0xb8] sm:$0xff]
        %v3611 = vld [vmem:[%s3 + $0xc0] sm:$0xff]
        %v3612 = vld [vmem:[%s3 + $0xc8] sm:$0xff]
        %v3613 = vld [vmem:[%s3 + $0xd0] sm:$0xff]
        %v3614 = vld [vmem:[%s3 + $0xd8] sm:$0xff]
        %v3615 = vld [vmem:[%s3 + $0xe0] sm:$0xff]
        %v3616 = vld [vmem:[%s3 + $0xe8] sm:$0xff]
        %v3617 = vld [vmem:[%s3 + $0xf0] sm:$0xff]
        %v3618 = vld [vmem:[%s3 + $0xf8] sm:$0xff]
        %v3619 = vld [vmem:[%s3 + $0x100] sm:$0xff]
        %v3620 = vld [vmem:[%s3 + $0x108] sm:$0xff]
        %v3621 = vld [vmem:[%s3 + $0x110] sm:$0xff]
        %v3622 = vld [vmem:[%s3 + $0x118] sm:$0xff]
        %v3623 = vld [vmem:[%s3 + $0x120] sm:$0xff]
        %v3624 = vld [vmem:[%s3 + $0x128] sm:$0xff]
        %v3625 = vld [vmem:[%s3 + $0x130] sm:$0xff]
        %v3626 = vld [vmem:[%s3 + $0x138] sm:$0xff]
        %v3627 = vld [vmem:[%s3 + $0x140] sm:$0xff]
        %v3628 = vld [vmem:[%s3 + $0x148] sm:$0xff]
        %v3629 = vld [vmem:[%s3 + $0x150] sm:$0xff]
        %v3630 = vld [vmem:[%s3 + $0x158] sm:$0xff]
        %v3631 = vld [vmem:[%s3 + $0x160] sm:$0xff]
        %v3632 = vld [vmem:[%s3 + $0x168] sm:$0xff]
        %v3633 = vld [vmem:[%s3 + $0x170] sm:$0xff]
        %v3634 = vld [vmem:[%s3 + $0x178] sm:$0xff]
        %v3635 = vld [vmem:[%s3 + $0x180] sm:$0xff]
        %v3636 = vld [vmem:[%s3 + $0x188] sm:$0xff]
        %v3637 = vld [vmem:[%s3 + $0x190] sm:$0xff]
        %v3638 = vld [vmem:[%s3 + $0x198] sm:$0xff]
        %v3639 = vld [vmem:[%s3 + $0x1a0] sm:$0xff]
        %v3640 = vld [vmem:[%s3 + $0x1a8] sm:$0xff]
        %v3641 = vld [vmem:[%s3 + $0x1b0] sm:$0xff]
        %v3642 = vld [vmem:[%s3 + $0x1b8] sm:$0xff]
        %v3643 = vld [vmem:[%s3 + $0x1c0] sm:$0xff]
        %v3644 = vld [vmem:[%s3 + $0x1c8] sm:$0xff]
        %v3645 = vld [vmem:[%s3 + $0x1d0] sm:$0xff]
        %v3646 = vld [vmem:[%s3 + $0x1d8] sm:$0xff]
        %v3647 = vld [vmem:[%s3 + $0x1e0] sm:$0xff]
        %v3648 = vld [vmem:[%s3 + $0x1e8] sm:$0xff]
        %v3649 = vld [vmem:[%s3 + $0x1f0] sm:$0xff]
        %v3650 = vld [vmem:[%s3 + $0x1f8] sm:$0xff]
        %v3651 = vld [vmem:[#allocation3 + $0x140] sm:$0xff]
        %v3652 = vld [vmem:[#allocation3 + $0x148] sm:$0xff]
        %v3653 = vld [vmem:[#allocation3 + $0x150] sm:$0xff]
        %v3654 = vld [vmem:[#allocation3 + $0x158] sm:$0xff]
        %s3655 = scalar_lea.vmem %s3, 512
        %v3656 = vld [vmem:[%s3655] sm:$0xff]
        %v3657 = vld [vmem:[%s3655 + $0x8] sm:$0xff]
        %v3658 = vld [vmem:[%s3655 + $0x10] sm:$0xff]
        %v3659 = vld [vmem:[%s3655 + $0x18] sm:$0xff]
        %v3660 = vld [vmem:[%s3655 + $0x20] sm:$0xff]
        %v3661 = vld [vmem:[%s3655 + $0x28] sm:$0xff]
        %v3662 = vld [vmem:[%s3655 + $0x30] sm:$0xff]
        %v3663 = vld [vmem:[%s3655 + $0x38] sm:$0xff]
        %v3664 = vld [vmem:[%s3655 + $0x40] sm:$0xff]
        %v3665 = vld [vmem:[%s3655 + $0x48] sm:$0xff]
        %v3666 = vld [vmem:[%s3655 + $0x50] sm:$0xff]
        %v3667 = vld [vmem:[%s3655 + $0x58] sm:$0xff]
        %v3668 = vld [vmem:[%s3655 + $0x60] sm:$0xff]
        %v3669 = vld [vmem:[%s3655 + $0x68] sm:$0xff]
        %v3670 = vld [vmem:[%s3655 + $0x70] sm:$0xff]
        %v3671 = vld [vmem:[%s3655 + $0x78] sm:$0xff]
        %v3672 = vld [vmem:[%s3655 + $0x80] sm:$0xff]
        %v3673 = vld [vmem:[%s3655 + $0x88] sm:$0xff]
        %v3674 = vld [vmem:[%s3655 + $0x90] sm:$0xff]
        %v3675 = vld [vmem:[%s3655 + $0x98] sm:$0xff]
        %v3676 = vld [vmem:[%s3655 + $0xa0] sm:$0xff]
        %v3677 = vld [vmem:[%s3655 + $0xa8] sm:$0xff]
        %v3678 = vld [vmem:[%s3655 + $0xb0] sm:$0xff]
        %v3679 = vld [vmem:[%s3655 + $0xb8] sm:$0xff]
        %v3680 = vld [vmem:[%s3655 + $0xc0] sm:$0xff]
        %v3681 = vld [vmem:[%s3655 + $0xc8] sm:$0xff]
        %v3682 = vld [vmem:[%s3655 + $0xd0] sm:$0xff]
        %v3683 = vld [vmem:[%s3655 + $0xd8] sm:$0xff]
        %v3684 = vld [vmem:[%s3655 + $0xe0] sm:$0xff]
        %v3685 = vld [vmem:[%s3655 + $0xe8] sm:$0xff]
        %v3686 = vld [vmem:[%s3655 + $0xf0] sm:$0xff]
        %v3687 = vld [vmem:[%s3655 + $0xf8] sm:$0xff]
        %v3688 = vld [vmem:[%s3655 + $0x100] sm:$0xff]
        %v3689 = vld [vmem:[%s3655 + $0x108] sm:$0xff]
        %v3690 = vld [vmem:[%s3655 + $0x110] sm:$0xff]
        %v3691 = vld [vmem:[%s3655 + $0x118] sm:$0xff]
        %v3692 = vld [vmem:[%s3655 + $0x120] sm:$0xff]
        %v3693 = vld [vmem:[%s3655 + $0x128] sm:$0xff]
        %v3694 = vld [vmem:[%s3655 + $0x130] sm:$0xff]
        %v3695 = vld [vmem:[%s3655 + $0x138] sm:$0xff]
        %v3696 = vld [vmem:[%s3655 + $0x140] sm:$0xff]
        %v3697 = vld [vmem:[%s3655 + $0x148] sm:$0xff]
        %v3698 = vld [vmem:[%s3655 + $0x150] sm:$0xff]
        %v3699 = vld [vmem:[%s3655 + $0x158] sm:$0xff]
        %v3700 = vld [vmem:[%s3655 + $0x160] sm:$0xff]
        %v3701 = vld [vmem:[%s3655 + $0x168] sm:$0xff]
        %v3702 = vld [vmem:[%s3655 + $0x170] sm:$0xff]
        %v3703 = vld [vmem:[%s3655 + $0x178] sm:$0xff]
        %v3704 = vld [vmem:[%s3655 + $0x180] sm:$0xff]
        %v3705 = vld [vmem:[%s3655 + $0x188] sm:$0xff]
        %v3706 = vld [vmem:[%s3655 + $0x190] sm:$0xff]
        %v3707 = vld [vmem:[%s3655 + $0x198] sm:$0xff]
        %v3708 = vld [vmem:[%s3655 + $0x1a0] sm:$0xff]
        %v3709 = vld [vmem:[%s3655 + $0x1a8] sm:$0xff]
        %v3710 = vld [vmem:[%s3655 + $0x1b0] sm:$0xff]
        %v3711 = vld [vmem:[%s3655 + $0x1b8] sm:$0xff]
        %v3712 = vld [vmem:[%s3655 + $0x1c0] sm:$0xff]
        %v3713 = vld [vmem:[%s3655 + $0x1c8] sm:$0xff]
        %v3714 = vld [vmem:[%s3655 + $0x1d0] sm:$0xff]
        %v3715 = vld [vmem:[%s3655 + $0x1d8] sm:$0xff]
        %v3716 = vld [vmem:[%s3655 + $0x1e0] sm:$0xff]
        %v3717 = vld [vmem:[%s3655 + $0x1e8] sm:$0xff]
        %v3718 = vld [vmem:[%s3655 + $0x1f0] sm:$0xff]
        %v3719 = vld [vmem:[%s3655 + $0x1f8] sm:$0xff]
        %v3784 = vunpack.c.l.b16 %v3656
        %v3785 = vunpack.c.h.b16 %v3656
        %v3786 = vunpack.c.l.b16 %v3657
        %v3787 = vunpack.c.h.b16 %v3657
        %v3788 = vunpack.c.l.b16 %v3658
        %v3789 = vunpack.c.h.b16 %v3658
        %v3790 = vunpack.c.l.b16 %v3659
        %v3791 = vunpack.c.h.b16 %v3659
        %v3792 = vunpack.c.l.b16 %v3660
        %v3793 = vunpack.c.h.b16 %v3660
        %v3794 = vunpack.c.l.b16 %v3661
        %v3795 = vunpack.c.h.b16 %v3661
        %v3796 = vunpack.c.l.b16 %v3662
        %v3797 = vunpack.c.h.b16 %v3662
        %v3798 = vunpack.c.l.b16 %v3663
        %v3799 = vunpack.c.h.b16 %v3663
        %v3800 = vunpack.c.l.b16 %v3664
        %v3801 = vunpack.c.h.b16 %v3664
        %v3802 = vunpack.c.l.b16 %v3665
        %v3803 = vunpack.c.h.b16 %v3665
        %v3804 = vunpack.c.l.b16 %v3666
        %v3805 = vunpack.c.h.b16 %v3666
        %v3806 = vunpack.c.l.b16 %v3667
        %v3807 = vunpack.c.h.b16 %v3667
        %v3808 = vunpack.c.l.b16 %v3668
        %v3809 = vunpack.c.h.b16 %v3668
        %v3810 = vunpack.c.l.b16 %v3669
        %v3811 = vunpack.c.h.b16 %v3669
        %v3812 = vunpack.c.l.b16 %v3670
        %v3813 = vunpack.c.h.b16 %v3670
        %v3814 = vunpack.c.l.b16 %v3671
        %v3815 = vunpack.c.h.b16 %v3671
        %v3816 = vunpack.c.l.b16 %v3672
        %v3817 = vunpack.c.h.b16 %v3672
        %v3818 = vunpack.c.l.b16 %v3673
        %v3819 = vunpack.c.h.b16 %v3673
        %v3820 = vunpack.c.l.b16 %v3674
        %v3821 = vunpack.c.h.b16 %v3674
        %v3822 = vunpack.c.l.b16 %v3675
        %v3823 = vunpack.c.h.b16 %v3675
        %v3824 = vunpack.c.l.b16 %v3676
        %v3825 = vunpack.c.h.b16 %v3676
        %v3826 = vunpack.c.l.b16 %v3677
        %v3827 = vunpack.c.h.b16 %v3677
        %v3828 = vunpack.c.l.b16 %v3678
        %v3829 = vunpack.c.h.b16 %v3678
        %v3830 = vunpack.c.l.b16 %v3679
        %v3831 = vunpack.c.h.b16 %v3679
        %v3832 = vunpack.c.l.b16 %v3680
        %v3833 = vunpack.c.h.b16 %v3680
        %v3834 = vunpack.c.l.b16 %v3681
        %v3835 = vunpack.c.h.b16 %v3681
        %v3836 = vunpack.c.l.b16 %v3682
        %v3837 = vunpack.c.h.b16 %v3682
        %v3838 = vunpack.c.l.b16 %v3683
        %v3839 = vunpack.c.h.b16 %v3683
        %v3840 = vunpack.c.l.b16 %v3684
        %v3841 = vunpack.c.h.b16 %v3684
        %v3842 = vunpack.c.l.b16 %v3685
        %v3843 = vunpack.c.h.b16 %v3685
        %v3844 = vunpack.c.l.b16 %v3686
        %v3845 = vunpack.c.h.b16 %v3686
        %v3846 = vunpack.c.l.b16 %v3687
        %v3847 = vunpack.c.h.b16 %v3687
        %v3848 = vunpack.c.l.b16 %v3688
        %v3849 = vunpack.c.h.b16 %v3688
        %v3850 = vunpack.c.l.b16 %v3689
        %v3851 = vunpack.c.h.b16 %v3689
        %v3852 = vunpack.c.l.b16 %v3690
        %v3853 = vunpack.c.h.b16 %v3690
        %v3854 = vunpack.c.l.b16 %v3691
        %v3855 = vunpack.c.h.b16 %v3691
        %v3856 = vunpack.c.l.b16 %v3692
        %v3857 = vunpack.c.h.b16 %v3692
        %v3858 = vunpack.c.l.b16 %v3693
        %v3859 = vunpack.c.h.b16 %v3693
        %v3860 = vunpack.c.l.b16 %v3694
        %v3861 = vunpack.c.h.b16 %v3694
        %v3862 = vunpack.c.l.b16 %v3695
        %v3863 = vunpack.c.h.b16 %v3695
        %v3864 = vunpack.c.l.b16 %v3696
        %v3865 = vunpack.c.h.b16 %v3696
        %v3866 = vunpack.c.l.b16 %v3697
        %v3867 = vunpack.c.h.b16 %v3697
        %v3868 = vunpack.c.l.b16 %v3698
        %v3869 = vunpack.c.h.b16 %v3698
        %v3870 = vunpack.c.l.b16 %v3699
        %v3871 = vunpack.c.h.b16 %v3699
        %v3872 = vunpack.c.l.b16 %v3700
        %v3873 = vunpack.c.h.b16 %v3700
        %v3874 = vunpack.c.l.b16 %v3701
        %v3875 = vunpack.c.h.b16 %v3701
        %v3876 = vunpack.c.l.b16 %v3702
        %v3877 = vunpack.c.h.b16 %v3702
        %v3878 = vunpack.c.l.b16 %v3703
        %v3879 = vunpack.c.h.b16 %v3703
        %v3880 = vunpack.c.l.b16 %v3704
        %v3881 = vunpack.c.h.b16 %v3704
        %v3882 = vunpack.c.l.b16 %v3705
        %v3883 = vunpack.c.h.b16 %v3705
        %v3884 = vunpack.c.l.b16 %v3706
        %v3885 = vunpack.c.h.b16 %v3706
        %v3886 = vunpack.c.l.b16 %v3707
        %v3887 = vunpack.c.h.b16 %v3707
        %v3888 = vunpack.c.l.b16 %v3708
        %v3889 = vunpack.c.h.b16 %v3708
        %v3890 = vunpack.c.l.b16 %v3709
        %v3891 = vunpack.c.h.b16 %v3709
        %v3892 = vunpack.c.l.b16 %v3710
        %v3893 = vunpack.c.h.b16 %v3710
        %v3894 = vunpack.c.l.b16 %v3711
        %v3895 = vunpack.c.h.b16 %v3711
        %v3896 = vunpack.c.l.b16 %v3712
        %v3897 = vunpack.c.h.b16 %v3712
        %v3898 = vunpack.c.l.b16 %v3713
        %v3899 = vunpack.c.h.b16 %v3713
        %v3900 = vunpack.c.l.b16 %v3714
        %v3901 = vunpack.c.h.b16 %v3714
        %v3902 = vunpack.c.l.b16 %v3715
        %v3903 = vunpack.c.h.b16 %v3715
        %v3904 = vunpack.c.l.b16 %v3716
        %v3905 = vunpack.c.h.b16 %v3716
        %v3906 = vunpack.c.l.b16 %v3717
        %v3907 = vunpack.c.h.b16 %v3717
        %v3908 = vunpack.c.l.b16 %v3718
        %v3909 = vunpack.c.h.b16 %v3718
        %v3910 = vunpack.c.l.b16 %v3719
        %v3911 = vunpack.c.h.b16 %v3719
        %v3912 = vpack.c.b16 %v3788, %v3784
        %v3913 = vpack.c.b16 %v3789, %v3785
        %v3914 = vpack.c.b16 %v3790, %v3786
        %v3915 = vpack.c.b16 %v3791, %v3787
        %v3916 = vpack.c.b16 %v3796, %v3792
        %v3917 = vpack.c.b16 %v3797, %v3793
        %v3918 = vpack.c.b16 %v3798, %v3794
        %v3919 = vpack.c.b16 %v3799, %v3795
        %v3920 = vpack.c.b16 %v3804, %v3800
        %v3921 = vpack.c.b16 %v3805, %v3801
        %v3922 = vpack.c.b16 %v3806, %v3802
        %v3923 = vpack.c.b16 %v3807, %v3803
        %v3924 = vpack.c.b16 %v3812, %v3808
        %v3925 = vpack.c.b16 %v3813, %v3809
        %v3926 = vpack.c.b16 %v3814, %v3810
        %v3927 = vpack.c.b16 %v3815, %v3811
        %v3928 = vpack.c.b16 %v3820, %v3816
        %v3929 = vpack.c.b16 %v3821, %v3817
        %v3930 = vpack.c.b16 %v3822, %v3818
        %v3931 = vpack.c.b16 %v3823, %v3819
        %v3932 = vpack.c.b16 %v3828, %v3824
        %v3933 = vpack.c.b16 %v3829, %v3825
        %v3934 = vpack.c.b16 %v3830, %v3826
        %v3935 = vpack.c.b16 %v3831, %v3827
        %v3936 = vpack.c.b16 %v3836, %v3832
        %v3937 = vpack.c.b16 %v3837, %v3833
        %v3938 = vpack.c.b16 %v3838, %v3834
        %v3939 = vpack.c.b16 %v3839, %v3835
        %v3940 = vpack.c.b16 %v3844, %v3840
        %v3941 = vpack.c.b16 %v3845, %v3841
        %v3942 = vpack.c.b16 %v3846, %v3842
        %v3943 = vpack.c.b16 %v3847, %v3843
        %v3944 = vpack.c.b16 %v3852, %v3848
        %v3945 = vpack.c.b16 %v3853, %v3849
        %v3946 = vpack.c.b16 %v3854, %v3850
        %v3947 = vpack.c.b16 %v3855, %v3851
        %v3948 = vpack.c.b16 %v3860, %v3856
        %v3949 = vpack.c.b16 %v3861, %v3857
        %v3950 = vpack.c.b16 %v3862, %v3858
        %v3951 = vpack.c.b16 %v3863, %v3859
        %v3952 = vpack.c.b16 %v3868, %v3864
        %v3953 = vpack.c.b16 %v3869, %v3865
        %v3954 = vpack.c.b16 %v3870, %v3866
        %v3955 = vpack.c.b16 %v3871, %v3867
        %v3956 = vpack.c.b16 %v3876, %v3872
        %v3957 = vpack.c.b16 %v3877, %v3873
        %v3958 = vpack.c.b16 %v3878, %v3874
        %v3959 = vpack.c.b16 %v3879, %v3875
        %v3960 = vpack.c.b16 %v3884, %v3880
        %v3961 = vpack.c.b16 %v3885, %v3881
        %v3962 = vpack.c.b16 %v3886, %v3882
        %v3963 = vpack.c.b16 %v3887, %v3883
        %v3964 = vpack.c.b16 %v3892, %v3888
        %v3965 = vpack.c.b16 %v3893, %v3889
        %v3966 = vpack.c.b16 %v3894, %v3890
        %v3967 = vpack.c.b16 %v3895, %v3891
        %v3968 = vpack.c.b16 %v3900, %v3896
        %v3969 = vpack.c.b16 %v3901, %v3897
        %v3970 = vpack.c.b16 %v3902, %v3898
        %v3971 = vpack.c.b16 %v3903, %v3899
        %v3972 = vpack.c.b16 %v3908, %v3904
        %v3973 = vpack.c.b16 %v3909, %v3905
        %v3974 = vpack.c.b16 %v3910, %v3906
        %v3975 = vpack.c.b16 %v3911, %v3907
        %4040 = vmatprep.subr.bf16.mxu0 %v3913
        %4041 = vmatpush1.bf16.msra.mxu0 %v3912
        %4042 = vmatprep.subr.bf16.mxu0 %v3917
        %4043 = vmatpush1.bf16.msra.mxu0 %v3916
        %4044 = vmatprep.subr.bf16.mxu0 %v3921
        %4045 = vmatpush1.bf16.msra.mxu0 %v3920
        %4046 = vmatprep.subr.bf16.mxu0 %v3925
        %4047 = vmatpush1.bf16.msra.mxu0 %v3924
        %4048 = vmatprep.subr.bf16.mxu0 %v3929
        %4049 = vmatpush1.bf16.msra.mxu0 %v3928
        %4050 = vmatprep.subr.bf16.mxu0 %v3933
        %4051 = vmatpush1.bf16.msra.mxu0 %v3932
        %4052 = vmatprep.subr.bf16.mxu0 %v3937
        %4053 = vmatpush1.bf16.msra.mxu0 %v3936
        %4054 = vmatprep.subr.bf16.mxu0 %v3941
        %4055 = vmatpush1.bf16.msra.mxu0 %v3940
        %4056 = vmatprep.subr.bf16.mxu0 %v3945
        %4057 = vmatpush1.bf16.msra.mxu0 %v3944
        %4058 = vmatprep.subr.bf16.mxu0 %v3949
        %4059 = vmatpush1.bf16.msra.mxu0 %v3948
        %4060 = vmatprep.subr.bf16.mxu0 %v3953
        %4061 = vmatpush1.bf16.msra.mxu0 %v3952
        %4062 = vmatprep.subr.bf16.mxu0 %v3957
        %4063 = vmatpush1.bf16.msra.mxu0 %v3956
        %4064 = vmatprep.subr.bf16.mxu0 %v3961
        %4065 = vmatpush1.bf16.msra.mxu0 %v3960
        %4066 = vmatprep.subr.bf16.mxu0 %v3965
        %4067 = vmatpush1.bf16.msra.mxu0 %v3964
        %4068 = vmatprep.subr.bf16.mxu0 %v3969
        %4069 = vmatpush1.bf16.msra.mxu0 %v3968
        %4070 = vmatprep.subr.bf16.mxu0 %v3973
        %4071 = vmatpush1.bf16.msra.mxu0 %v3972
        %4072 = vmatprep.mubr.bf16.mxu0 %v3552
        %4073 = vmatmul.mubr.bf16.gmra.mrb[0].mxu0 %v3551
        %v4074 = vpop.f32.mrb[0].mxu0
        %v4075 = vadd.f32 0.0, %v4074
        %v4076 = vpop.f32.mrb[0].mxu0
        %v4077 = vadd.f32 0.0, %v4076
        %v4078 = vpop.f32.mrb[0].mxu0
        %v4079 = vadd.f32 0.0, %v4078
        %v4080 = vpop.f32.mrb[0].mxu0
        %v4081 = vadd.f32 0.0, %v4080
        %4082 = vmatprep.mubr.bf16.mxu0 %v3554
        %4083 = vmatmul.mubr.bf16.gmra.mrb[0].mxu0 %v3553
        %v4084 = vpop.f32.mrb[0].mxu0
        %v4085 = vadd.f32 0.0, %v4084
        %v4086 = vpop.f32.mrb[0].mxu0
        %v4087 = vadd.f32 0.0, %v4086
        %v4088 = vpop.f32.mrb[0].mxu0
        %v4089 = vadd.f32 0.0, %v4088
        %v4090 = vpop.f32.mrb[0].mxu0
        %v4091 = vadd.f32 0.0, %v4090
        %4092 = vmatprep.mubr.bf16.mxu0 %v3556
        %4093 = vmatmul.mubr.bf16.gmra.mrb[0].mxu0 %v3555
        %v4094 = vpop.f32.mrb[0].mxu0
        %v4095 = vadd.f32 0.0, %v4094
        %v4096 = vpop.f32.mrb[0].mxu0
        %v4097 = vadd.f32 0.0, %v4096
        %v4098 = vpop.f32.mrb[0].mxu0
        %v4099 = vadd.f32 0.0, %v4098
        %v4100 = vpop.f32.mrb[0].mxu0
        %v4101 = vadd.f32 0.0, %v4100
        %4102 = vmatprep.mubr.bf16.mxu0 %v3558
        %4103 = vmatmul.mubr.bf16.gmra.mrb[0].mxu0 %v3557
        %v4104 = vpop.f32.mrb[0].mxu0
        %v4105 = vadd.f32 0.0, %v4104
        %v4106 = vpop.f32.mrb[0].mxu0
        %v4107 = vadd.f32 0.0, %v4106
        %v4108 = vpop.f32.mrb[0].mxu0
        %v4109 = vadd.f32 0.0, %v4108
        %v4110 = vpop.f32.mrb[0].mxu0
        %v4111 = vadd.f32 0.0, %v4110
        %4112 = vmatprep.mubr.bf16.mxu0 %v3560
        %4113 = vmatmul.mubr.bf16.gmra.mrb[0].mxu0 %v3559
        %v4114 = vpop.f32.mrb[0].mxu0
        %v4115 = vadd.f32 0.0, %v4114
        %v4116 = vpop.f32.mrb[0].mxu0
        %v4117 = vadd.f32 0.0, %v4116
        %v4118 = vpop.f32.mrb[0].mxu0
        %v4119 = vadd.f32 0.0, %v4118
        %v4120 = vpop.f32.mrb[0].mxu0
        %v4121 = vadd.f32 0.0, %v4120
        %4122 = vmatprep.mubr.bf16.mxu0 %v3562
        %4123 = vmatmul.mubr.bf16.gmra.mrb[0].mxu0 %v3561
        %v4124 = vpop.f32.mrb[0].mxu0
        %v4125 = vadd.f32 0.0, %v4124
        %v4126 = vpop.f32.mrb[0].mxu0
        %v4127 = vadd.f32 0.0, %v4126
        %v4128 = vpop.f32.mrb[0].mxu0
        %v4129 = vadd.f32 0.0, %v4128
        %v4130 = vpop.f32.mrb[0].mxu0
        %v4131 = vadd.f32 0.0, %v4130
        %4132 = vmatprep.mubr.bf16.mxu0 %v3564
        %4133 = vmatmul.mubr.bf16.gmra.mrb[0].mxu0 %v3563
        %v4134 = vpop.f32.mrb[0].mxu0
        %v4135 = vadd.f32 0.0, %v4134
        %v4136 = vpop.f32.mrb[0].mxu0
        %v4137 = vadd.f32 0.0, %v4136
        %v4138 = vpop.f32.mrb[0].mxu0
        %v4139 = vadd.f32 0.0, %v4138
        %v4140 = vpop.f32.mrb[0].mxu0
        %v4141 = vadd.f32 0.0, %v4140
        %4142 = vmatprep.mubr.bf16.mxu0 %v3566
        %4143 = vmatmul.mubr.bf16.gmra.mrb[0].mxu0 %v3565
        %v4144 = vpop.f32.mrb[0].mxu0
        %v4145 = vadd.f32 0.0, %v4144
        %v4146 = vpop.f32.mrb[0].mxu0
        %v4147 = vadd.f32 0.0, %v4146
        %v4148 = vpop.f32.mrb[0].mxu0
        %v4149 = vadd.f32 0.0, %v4148
        %v4150 = vpop.f32.mrb[0].mxu0
        %v4151 = vadd.f32 0.0, %v4150
        %4152 = vmatprep.mubr.bf16.mxu0 %v3568
        %4153 = vmatmul.mubr.bf16.gmra.mrb[0].mxu0 %v3567
        %v4154 = vpop.f32.mrb[0].mxu0
        %v4155 = vadd.f32 0.0, %v4154
        %v4156 = vpop.f32.mrb[0].mxu0
        %v4157 = vadd.f32 0.0, %v4156
        %v4158 = vpop.f32.mrb[0].mxu0
        %v4159 = vadd.f32 0.0, %v4158
        %v4160 = vpop.f32.mrb[0].mxu0
        %v4161 = vadd.f32 0.0, %v4160
        %4162 = vmatprep.mubr.bf16.mxu0 %v3570
        %4163 = vmatmul.mubr.bf16.gmra.mrb[0].mxu0 %v3569
        %v4164 = vpop.f32.mrb[0].mxu0
        %v4165 = vadd.f32 0.0, %v4164
        %v4166 = vpop.f32.mrb[0].mxu0
        %v4167 = vadd.f32 0.0, %v4166
        %v4168 = vpop.f32.mrb[0].mxu0
        %v4169 = vadd.f32 0.0, %v4168
        %v4170 = vpop.f32.mrb[0].mxu0
        %v4171 = vadd.f32 0.0, %v4170
        %4172 = vmatprep.mubr.bf16.mxu0 %v3572
        %4173 = vmatmul.mubr.bf16.gmra.mrb[0].mxu0 %v3571
        %v4174 = vpop.f32.mrb[0].mxu0
        %v4175 = vadd.f32 0.0, %v4174
        %v4176 = vpop.f32.mrb[0].mxu0
        %v4177 = vadd.f32 0.0, %v4176
        %v4178 = vpop.f32.mrb[0].mxu0
        %v4179 = vadd.f32 0.0, %v4178
        %v4180 = vpop.f32.mrb[0].mxu0
        %v4181 = vadd.f32 0.0, %v4180
        %4182 = vmatprep.mubr.bf16.mxu0 %v3574
        %4183 = vmatmul.mubr.bf16.gmra.mrb[0].mxu0 %v3573
        %v4184 = vpop.f32.mrb[0].mxu0
        %v4185 = vadd.f32 0.0, %v4184
        %v4186 = vpop.f32.mrb[0].mxu0
        %v4187 = vadd.f32 0.0, %v4186
        %v4188 = vpop.f32.mrb[0].mxu0
        %v4189 = vadd.f32 0.0, %v4188
        %v4190 = vpop.f32.mrb[0].mxu0
        %v4191 = vadd.f32 0.0, %v4190
        %4192 = vmatprep.mubr.bf16.mxu0 %v3576
        %4193 = vmatmul.mubr.bf16.gmra.mrb[0].mxu0 %v3575
        %v4194 = vpop.f32.mrb[0].mxu0
        %v4195 = vadd.f32 0.0, %v4194
        %v4196 = vpop.f32.mrb[0].mxu0
        %v4197 = vadd.f32 0.0, %v4196
        %v4198 = vpop.f32.mrb[0].mxu0
        %v4199 = vadd.f32 0.0, %v4198
        %v4200 = vpop.f32.mrb[0].mxu0
        %v4201 = vadd.f32 0.0, %v4200
        %4202 = vmatprep.mubr.bf16.mxu0 %v3578
        %4203 = vmatmul.mubr.bf16.gmra.mrb[0].mxu0 %v3577
        %v4204 = vpop.f32.mrb[0].mxu0
        %v4205 = vadd.f32 0.0, %v4204
        %v4206 = vpop.f32.mrb[0].mxu0
        %v4207 = vadd.f32 0.0, %v4206
        %v4208 = vpop.f32.mrb[0].mxu0
        %v4209 = vadd.f32 0.0, %v4208
        %v4210 = vpop.f32.mrb[0].mxu0
        %v4211 = vadd.f32 0.0, %v4210
        %4212 = vmatprep.mubr.bf16.mxu0 %v3580
        %4213 = vmatmul.mubr.bf16.gmra.mrb[0].mxu0 %v3579
        %v4214 = vpop.f32.mrb[0].mxu0
        %v4215 = vadd.f32 0.0, %v4214
        %v4216 = vpop.f32.mrb[0].mxu0
        %v4217 = vadd.f32 0.0, %v4216
        %v4218 = vpop.f32.mrb[0].mxu0
        %v4219 = vadd.f32 0.0, %v4218
        %v4220 = vpop.f32.mrb[0].mxu0
        %v4221 = vadd.f32 0.0, %v4220
        %4222 = vmatprep.mubr.bf16.mxu0 %v3582
        %4223 = vmatmul.mubr.bf16.gmra.mrb[0].mxu0 %v3581
        %v4224 = vpop.f32.mrb[0].mxu0
        %v4225 = vadd.f32 0.0, %v4224
        %v4226 = vpop.f32.mrb[0].mxu0
        %v4227 = vadd.f32 0.0, %v4226
        %v4228 = vpop.f32.mrb[0].mxu0
        %v4229 = vadd.f32 0.0, %v4228
        %v4230 = vpop.f32.mrb[0].mxu0
        %v4231 = vadd.f32 0.0, %v4230
        %4232 = vmatprep.mubr.bf16.mxu0 %v3584
        %4233 = vmatmul.mubr.bf16.gmra.mrb[0].mxu0 %v3583
        %v4234 = vpop.f32.mrb[0].mxu0
        %v4235 = vadd.f32 0.0, %v4234
        %v4236 = vpop.f32.mrb[0].mxu0
        %v4237 = vadd.f32 0.0, %v4236
        %v4238 = vpop.f32.mrb[0].mxu0
        %v4239 = vadd.f32 0.0, %v4238
        %v4240 = vpop.f32.mrb[0].mxu0
        %v4241 = vadd.f32 0.0, %v4240
        %4242 = vmatprep.mubr.bf16.mxu0 %v3586
        %4243 = vmatmul.mubr.bf16.gmra.mrb[0].mxu0 %v3585
        %v4244 = vpop.f32.mrb[0].mxu0
        %v4245 = vadd.f32 0.0, %v4244
        %v4246 = vpop.f32.mrb[0].mxu0
        %v4247 = vadd.f32 0.0, %v4246
        %v4248 = vpop.f32.mrb[0].mxu0
        %v4249 = vadd.f32 0.0, %v4248
        %v4250 = vpop.f32.mrb[0].mxu0
        %v4251 = vadd.f32 0.0, %v4250
        %4252 = vmatprep.mubr.bf16.mxu0 %v3652
        %4253 = vmatmul.mubr.bf16.gmra.mrb[0].mxu0 %v3651
        %v4254 = vpop.f32.mrb[0].mxu0
        %v4255 = vadd.f32 0.0, %v4254
        %v4256 = vpop.f32.mrb[0].mxu0
        %v4257 = vadd.f32 0.0, %v4256
        %v4258 = vpop.f32.mrb[0].mxu0
        %v4259 = vadd.f32 0.0, %v4258
        %v4260 = vpop.f32.mrb[0].mxu0
        %v4261 = vadd.f32 0.0, %v4260
        %4262 = vmatprep.mubr.bf16.mxu0 %v3654
        %4263 = vmatmul.mubr.bf16.gmra.mrb[0].mxu0 %v3653
        %v4264 = vpop.f32.mrb[0].mxu0
        %v4265 = vadd.f32 0.0, %v4264
        %v4266 = vpop.f32.mrb[0].mxu0
        %v4267 = vadd.f32 0.0, %v4266
        %v4268 = vpop.f32.mrb[0].mxu0
        %v4269 = vadd.f32 0.0, %v4268
        %v4270 = vpop.f32.mrb[0].mxu0
        %v4271 = vadd.f32 0.0, %v4270
        %4272 = vdwg.mxu0
        %4273 = vmatprep.subr.bf16.mxu0 %v3915
        %4274 = vmatpush1.bf16.msra.mxu0 %v3914
        %4275 = vmatprep.subr.bf16.mxu0 %v3919
        %4276 = vmatpush1.bf16.msra.mxu0 %v3918
        %4277 = vmatprep.subr.bf16.mxu0 %v3923
        %4278 = vmatpush1.bf16.msra.mxu0 %v3922
        %4279 = vmatprep.subr.bf16.mxu0 %v3927
        %4280 = vmatpush1.bf16.msra.mxu0 %v3926
        %4281 = vmatprep.subr.bf16.mxu0 %v3931
        %4282 = vmatpush1.bf16.msra.mxu0 %v3930
        %4283 = vmatprep.subr.bf16.mxu0 %v3935
        %4284 = vmatpush1.bf16.msra.mxu0 %v3934
        %4285 = vmatprep.subr.bf16.mxu0 %v3939
        %4286 = vmatpush1.bf16.msra.mxu0 %v3938
        %4287 = vmatprep.subr.bf16.mxu0 %v3943
        %4288 = vmatpush1.bf16.msra.mxu0 %v3942
        %4289 = vmatprep.subr.bf16.mxu0 %v3947
        %4290 = vmatpush1.bf16.msra.mxu0 %v3946
        %4291 = vmatprep.subr.bf16.mxu0 %v3951
        %4292 = vmatpush1.bf16.msra.mxu0 %v3950
        %4293 = vmatprep.subr.bf16.mxu0 %v3955
        %4294 = vmatpush1.bf16.msra.mxu0 %v3954
        %4295 = vmatprep.subr.bf16.mxu0 %v3959
        %4296 = vmatpush1.bf16.msra.mxu0 %v3958
        %4297 = vmatprep.subr.bf16.mxu0 %v3963
        %4298 = vmatpush1.bf16.msra.mxu0 %v3962
        %4299 = vmatprep.subr.bf16.mxu0 %v3967
        %4300 = vmatpush1.bf16.msra.mxu0 %v3966
        %4301 = vmatprep.subr.bf16.mxu0 %v3971
        %4302 = vmatpush1.bf16.msra.mxu0 %v3970
        %4303 = vmatprep.subr.bf16.mxu0 %v3975
        %4304 = vmatpush1.bf16.msra.mxu0 %v3974
        %4305 = vmatprep.mubr.bf16.mxu0 %v3552
        %4306 = vmatmul.mubr.bf16.gmra.mrb[0].mxu0 %v3551
        %v4307 = vpop.f32.mrb[0].mxu0
        %v4308 = vadd.f32 0.0, %v4307
        %v4309 = vpop.f32.mrb[0].mxu0
        %v4310 = vadd.f32 0.0, %v4309
        %v4311 = vpop.f32.mrb[0].mxu0
        %v4312 = vadd.f32 0.0, %v4311
        %v4313 = vpop.f32.mrb[0].mxu0
        %v4314 = vadd.f32 0.0, %v4313
        %4315 = vmatprep.mubr.bf16.mxu0 %v3554
        %4316 = vmatmul.mubr.bf16.gmra.mrb[0].mxu0 %v3553
        %v4317 = vpop.f32.mrb[0].mxu0
        %v4318 = vadd.f32 0.0, %v4317
        %v4319 = vpop.f32.mrb[0].mxu0
        %v4320 = vadd.f32 0.0, %v4319
        %v4321 = vpop.f32.mrb[0].mxu0
        %v4322 = vadd.f32 0.0, %v4321
        %v4323 = vpop.f32.mrb[0].mxu0
        %v4324 = vadd.f32 0.0, %v4323
        %4325 = vmatprep.mubr.bf16.mxu0 %v3556
        %4326 = vmatmul.mubr.bf16.gmra.mrb[0].mxu0 %v3555
        %v4327 = vpop.f32.mrb[0].mxu0
        %v4328 = vadd.f32 0.0, %v4327
        %v4329 = vpop.f32.mrb[0].mxu0
        %v4330 = vadd.f32 0.0, %v4329
        %v4331 = vpop.f32.mrb[0].mxu0
        %v4332 = vadd.f32 0.0, %v4331
        %v4333 = vpop.f32.mrb[0].mxu0
        %v4334 = vadd.f32 0.0, %v4333
        %4335 = vmatprep.mubr.bf16.mxu0 %v3558
        %4336 = vmatmul.mubr.bf16.gmra.mrb[0].mxu0 %v3557
        %v4337 = vpop.f32.mrb[0].mxu0
        %v4338 = vadd.f32 0.0, %v4337
        %v4339 = vpop.f32.mrb[0].mxu0
        %v4340 = vadd.f32 0.0, %v4339
        %v4341 = vpop.f32.mrb[0].mxu0
        %v4342 = vadd.f32 0.0, %v4341
        %v4343 = vpop.f32.mrb[0].mxu0
        %v4344 = vadd.f32 0.0, %v4343
        %4345 = vmatprep.mubr.bf16.mxu0 %v3560
        %4346 = vmatmul.mubr.bf16.gmra.mrb[0].mxu0 %v3559
        %v4347 = vpop.f32.mrb[0].mxu0
        %v4348 = vadd.f32 0.0, %v4347
        %v4349 = vpop.f32.mrb[0].mxu0
        %v4350 = vadd.f32 0.0, %v4349
        %v4351 = vpop.f32.mrb[0].mxu0
        %v4352 = vadd.f32 0.0, %v4351
        %v4353 = vpop.f32.mrb[0].mxu0
        %v4354 = vadd.f32 0.0, %v4353
        %4355 = vmatprep.mubr.bf16.mxu0 %v3562
        %4356 = vmatmul.mubr.bf16.gmra.mrb[0].mxu0 %v3561
        %v4357 = vpop.f32.mrb[0].mxu0
        %v4358 = vadd.f32 0.0, %v4357
        %v4359 = vpop.f32.mrb[0].mxu0
        %v4360 = vadd.f32 0.0, %v4359
        %v4361 = vpop.f32.mrb[0].mxu0
        %v4362 = vadd.f32 0.0, %v4361
        %v4363 = vpop.f32.mrb[0].mxu0
        %v4364 = vadd.f32 0.0, %v4363
        %4365 = vmatprep.mubr.bf16.mxu0 %v3564
        %4366 = vmatmul.mubr.bf16.gmra.mrb[0].mxu0 %v3563
        %v4367 = vpop.f32.mrb[0].mxu0
        %v4368 = vadd.f32 0.0, %v4367
        %v4369 = vpop.f32.mrb[0].mxu0
        %v4370 = vadd.f32 0.0, %v4369
        %v4371 = vpop.f32.mrb[0].mxu0
        %v4372 = vadd.f32 0.0, %v4371
        %v4373 = vpop.f32.mrb[0].mxu0
        %v4374 = vadd.f32 0.0, %v4373
        %4375 = vmatprep.mubr.bf16.mxu0 %v3566
        %4376 = vmatmul.mubr.bf16.gmra.mrb[0].mxu0 %v3565
        %v4377 = vpop.f32.mrb[0].mxu0
        %v4378 = vadd.f32 0.0, %v4377
        %v4379 = vpop.f32.mrb[0].mxu0
        %v4380 = vadd.f32 0.0, %v4379
        %v4381 = vpop.f32.mrb[0].mxu0
        %v4382 = vadd.f32 0.0, %v4381
        %v4383 = vpop.f32.mrb[0].mxu0
        %v4384 = vadd.f32 0.0, %v4383
        %4385 = vmatprep.mubr.bf16.mxu0 %v3568
        %4386 = vmatmul.mubr.bf16.gmra.mrb[0].mxu0 %v3567
        %v4387 = vpop.f32.mrb[0].mxu0
        %v4388 = vadd.f32 0.0, %v4387
        %v4389 = vpop.f32.mrb[0].mxu0
        %v4390 = vadd.f32 0.0, %v4389
        %v4391 = vpop.f32.mrb[0].mxu0
        %v4392 = vadd.f32 0.0, %v4391
        %v4393 = vpop.f32.mrb[0].mxu0
        %v4394 = vadd.f32 0.0, %v4393
        %4395 = vmatprep.mubr.bf16.mxu0 %v3570
        %4396 = vmatmul.mubr.bf16.gmra.mrb[0].mxu0 %v3569
        %v4397 = vpop.f32.mrb[0].mxu0
        %v4398 = vadd.f32 0.0, %v4397
        %v4399 = vpop.f32.mrb[0].mxu0
        %v4400 = vadd.f32 0.0, %v4399
        %v4401 = vpop.f32.mrb[0].mxu0
        %v4402 = vadd.f32 0.0, %v4401
        %v4403 = vpop.f32.mrb[0].mxu0
        %v4404 = vadd.f32 0.0, %v4403
        %4405 = vmatprep.mubr.bf16.mxu0 %v3572
        %4406 = vmatmul.mubr.bf16.gmra.mrb[0].mxu0 %v3571
        %v4407 = vpop.f32.mrb[0].mxu0
        %v4408 = vadd.f32 0.0, %v4407
        %v4409 = vpop.f32.mrb[0].mxu0
        %v4410 = vadd.f32 0.0, %v4409
        %v4411 = vpop.f32.mrb[0].mxu0
        %v4412 = vadd.f32 0.0, %v4411
        %v4413 = vpop.f32.mrb[0].mxu0
        %v4414 = vadd.f32 0.0, %v4413
        %4415 = vmatprep.mubr.bf16.mxu0 %v3574
        %4416 = vmatmul.mubr.bf16.gmra.mrb[0].mxu0 %v3573
        %v4417 = vpop.f32.mrb[0].mxu0
        %v4418 = vadd.f32 0.0, %v4417
        %v4419 = vpop.f32.mrb[0].mxu0
        %v4420 = vadd.f32 0.0, %v4419
        %v4421 = vpop.f32.mrb[0].mxu0
        %v4422 = vadd.f32 0.0, %v4421
        %v4423 = vpop.f32.mrb[0].mxu0
        %v4424 = vadd.f32 0.0, %v4423
        %4425 = vmatprep.mubr.bf16.mxu0 %v3576
        %4426 = vmatmul.mubr.bf16.gmra.mrb[0].mxu0 %v3575
        %v4427 = vpop.f32.mrb[0].mxu0
        %v4428 = vadd.f32 0.0, %v4427
        %v4429 = vpop.f32.mrb[0].mxu0
        %v4430 = vadd.f32 0.0, %v4429
        %v4431 = vpop.f32.mrb[0].mxu0
        %v4432 = vadd.f32 0.0, %v4431
        %v4433 = vpop.f32.mrb[0].mxu0
        %v4434 = vadd.f32 0.0, %v4433
        %4435 = vmatprep.mubr.bf16.mxu0 %v3578
        %4436 = vmatmul.mubr.bf16.gmra.mrb[0].mxu0 %v3577
        %v4437 = vpop.f32.mrb[0].mxu0
        %v4438 = vadd.f32 0.0, %v4437
        %v4439 = vpop.f32.mrb[0].mxu0
        %v4440 = vadd.f32 0.0, %v4439
        %v4441 = vpop.f32.mrb[0].mxu0
        %v4442 = vadd.f32 0.0, %v4441
        %v4443 = vpop.f32.mrb[0].mxu0
        %v4444 = vadd.f32 0.0, %v4443
        %4445 = vmatprep.mubr.bf16.mxu0 %v3580
        %4446 = vmatmul.mubr.bf16.gmra.mrb[0].mxu0 %v3579
        %v4447 = vpop.f32.mrb[0].mxu0
        %v4448 = vadd.f32 0.0, %v4447
        %v4449 = vpop.f32.mrb[0].mxu0
        %v4450 = vadd.f32 0.0, %v4449
        %v4451 = vpop.f32.mrb[0].mxu0
        %v4452 = vadd.f32 0.0, %v4451
        %v4453 = vpop.f32.mrb[0].mxu0
        %v4454 = vadd.f32 0.0, %v4453
        %4455 = vmatprep.mubr.bf16.mxu0 %v3582
        %4456 = vmatmul.mubr.bf16.gmra.mrb[0].mxu0 %v3581
        %v4457 = vpop.f32.mrb[0].mxu0
        %v4458 = vadd.f32 0.0, %v4457
        %v4459 = vpop.f32.mrb[0].mxu0
        %v4460 = vadd.f32 0.0, %v4459
        %v4461 = vpop.f32.mrb[0].mxu0
        %v4462 = vadd.f32 0.0, %v4461
        %v4463 = vpop.f32.mrb[0].mxu0
        %v4464 = vadd.f32 0.0, %v4463
        %4465 = vmatprep.mubr.bf16.mxu0 %v3584
        %4466 = vmatmul.mubr.bf16.gmra.mrb[0].mxu0 %v3583
        %v4467 = vpop.f32.mrb[0].mxu0
        %v4468 = vadd.f32 0.0, %v4467
        %v4469 = vpop.f32.mrb[0].mxu0
        %v4470 = vadd.f32 0.0, %v4469
        %v4471 = vpop.f32.mrb[0].mxu0
        %v4472 = vadd.f32 0.0, %v4471
        %v4473 = vpop.f32.mrb[0].mxu0
        %v4474 = vadd.f32 0.0, %v4473
        %4475 = vmatprep.mubr.bf16.mxu0 %v3586
        %4476 = vmatmul.mubr.bf16.gmra.mrb[0].mxu0 %v3585
        %v4477 = vpop.f32.mrb[0].mxu0
        %v4478 = vadd.f32 0.0, %v4477
        %v4479 = vpop.f32.mrb[0].mxu0
        %v4480 = vadd.f32 0.0, %v4479
        %v4481 = vpop.f32.mrb[0].mxu0
        %v4482 = vadd.f32 0.0, %v4481
        %v4483 = vpop.f32.mrb[0].mxu0
        %v4484 = vadd.f32 0.0, %v4483
        %4485 = vmatprep.mubr.bf16.mxu0 %v3652
        %4486 = vmatmul.mubr.bf16.gmra.mrb[0].mxu0 %v3651
        %v4487 = vpop.f32.mrb[0].mxu0
        %v4488 = vadd.f32 0.0, %v4487
        %v4489 = vpop.f32.mrb[0].mxu0
        %v4490 = vadd.f32 0.0, %v4489
        %v4491 = vpop.f32.mrb[0].mxu0
        %v4492 = vadd.f32 0.0, %v4491
        %v4493 = vpop.f32.mrb[0].mxu0
        %v4494 = vadd.f32 0.0, %v4493
        %4495 = vmatprep.mubr.bf16.mxu0 %v3654
        %4496 = vmatmul.mubr.bf16.gmra.mrb[0].mxu0 %v3653
        %v4497 = vpop.f32.mrb[0].mxu0
        %v4498 = vadd.f32 0.0, %v4497
        %v4499 = vpop.f32.mrb[0].mxu0
        %v4500 = vadd.f32 0.0, %v4499
        %v4501 = vpop.f32.mrb[0].mxu0
        %v4502 = vadd.f32 0.0, %v4501
        %v4503 = vpop.f32.mrb[0].mxu0
        %v4504 = vadd.f32 0.0, %v4503
        %4505 = vdwg.mxu0
        %v4570 = vunpack.c.l.b16 %v3587
        %v4571 = vunpack.c.h.b16 %v3587
        %v4572 = vunpack.c.l.b16 %v3588
        %v4573 = vunpack.c.h.b16 %v3588
        %v4574 = vunpack.c.l.b16 %v3589
        %v4575 = vunpack.c.h.b16 %v3589
        %v4576 = vunpack.c.l.b16 %v3590
        %v4577 = vunpack.c.h.b16 %v3590
        %v4578 = vunpack.c.l.b16 %v3591
        %v4579 = vunpack.c.h.b16 %v3591
        %v4580 = vunpack.c.l.b16 %v3592
        %v4581 = vunpack.c.h.b16 %v3592
        %v4582 = vunpack.c.l.b16 %v3593
        %v4583 = vunpack.c.h.b16 %v3593
        %v4584 = vunpack.c.l.b16 %v3594
        %v4585 = vunpack.c.h.b16 %v3594
        %v4586 = vunpack.c.l.b16 %v3595
        %v4587 = vunpack.c.h.b16 %v3595
        %v4588 = vunpack.c.l.b16 %v3596
        %v4589 = vunpack.c.h.b16 %v3596
        %v4590 = vunpack.c.l.b16 %v3597
        %v4591 = vunpack.c.h.b16 %v3597
        %v4592 = vunpack.c.l.b16 %v3598
        %v4593 = vunpack.c.h.b16 %v3598
        %v4594 = vunpack.c.l.b16 %v3599
        %v4595 = vunpack.c.h.b16 %v3599
        %v4596 = vunpack.c.l.b16 %v3600
        %v4597 = vunpack.c.h.b16 %v3600
        %v4598 = vunpack.c.l.b16 %v3601
        %v4599 = vunpack.c.h.b16 %v3601
        %v4600 = vunpack.c.l.b16 %v3602
        %v4601 = vunpack.c.h.b16 %v3602
        %v4602 = vunpack.c.l.b16 %v3603
        %v4603 = vunpack.c.h.b16 %v3603
        %v4604 = vunpack.c.l.b16 %v3604
        %v4605 = vunpack.c.h.b16 %v3604
        %v4606 = vunpack.c.l.b16 %v3605
        %v4607 = vunpack.c.h.b16 %v3605
        %v4608 = vunpack.c.l.b16 %v3606
        %v4609 = vunpack.c.h.b16 %v3606
        %v4610 = vunpack.c.l.b16 %v3607
        %v4611 = vunpack.c.h.b16 %v3607
        %v4612 = vunpack.c.l.b16 %v3608
        %v4613 = vunpack.c.h.b16 %v3608
        %v4614 = vunpack.c.l.b16 %v3609
        %v4615 = vunpack.c.h.b16 %v3609
        %v4616 = vunpack.c.l.b16 %v3610
        %v4617 = vunpack.c.h.b16 %v3610
        %v4618 = vunpack.c.l.b16 %v3611
        %v4619 = vunpack.c.h.b16 %v3611
        %v4620 = vunpack.c.l.b16 %v3612
        %v4621 = vunpack.c.h.b16 %v3612
        %v4622 = vunpack.c.l.b16 %v3613
        %v4623 = vunpack.c.h.b16 %v3613
        %v4624 = vunpack.c.l.b16 %v3614
        %v4625 = vunpack.c.h.b16 %v3614
        %v4626 = vunpack.c.l.b16 %v3615
        %v4627 = vunpack.c.h.b16 %v3615
        %v4628 = vunpack.c.l.b16 %v3616
        %v4629 = vunpack.c.h.b16 %v3616
        %v4630 = vunpack.c.l.b16 %v3617
        %v4631 = vunpack.c.h.b16 %v3617
        %v4632 = vunpack.c.l.b16 %v3618
        %v4633 = vunpack.c.h.b16 %v3618
        %v4634 = vunpack.c.l.b16 %v3619
        %v4635 = vunpack.c.h.b16 %v3619
        %v4636 = vunpack.c.l.b16 %v3620
        %v4637 = vunpack.c.h.b16 %v3620
        %v4638 = vunpack.c.l.b16 %v3621
        %v4639 = vunpack.c.h.b16 %v3621
        %v4640 = vunpack.c.l.b16 %v3622
        %v4641 = vunpack.c.h.b16 %v3622
        %v4642 = vunpack.c.l.b16 %v3623
        %v4643 = vunpack.c.h.b16 %v3623
        %v4644 = vunpack.c.l.b16 %v3624
        %v4645 = vunpack.c.h.b16 %v3624
        %v4646 = vunpack.c.l.b16 %v3625
        %v4647 = vunpack.c.h.b16 %v3625
        %v4648 = vunpack.c.l.b16 %v3626
        %v4649 = vunpack.c.h.b16 %v3626
        %v4650 = vunpack.c.l.b16 %v3627
        %v4651 = vunpack.c.h.b16 %v3627
        %v4652 = vunpack.c.l.b16 %v3628
        %v4653 = vunpack.c.h.b16 %v3628
        %v4654 = vunpack.c.l.b16 %v3629
        %v4655 = vunpack.c.h.b16 %v3629
        %v4656 = vunpack.c.l.b16 %v3630
        %v4657 = vunpack.c.h.b16 %v3630
        %v4658 = vunpack.c.l.b16 %v3631
        %v4659 = vunpack.c.h.b16 %v3631
        %v4660 = vunpack.c.l.b16 %v3632
        %v4661 = vunpack.c.h.b16 %v3632
        %v4662 = vunpack.c.l.b16 %v3633
        %v4663 = vunpack.c.h.b16 %v3633
        %v4664 = vunpack.c.l.b16 %v3634
        %v4665 = vunpack.c.h.b16 %v3634
        %v4666 = vunpack.c.l.b16 %v3635
        %v4667 = vunpack.c.h.b16 %v3635
        %v4668 = vunpack.c.l.b16 %v3636
        %v4669 = vunpack.c.h.b16 %v3636
        %v4670 = vunpack.c.l.b16 %v3637
        %v4671 = vunpack.c.h.b16 %v3637
        %v4672 = vunpack.c.l.b16 %v3638
        %v4673 = vunpack.c.h.b16 %v3638
        %v4674 = vunpack.c.l.b16 %v3639
        %v4675 = vunpack.c.h.b16 %v3639
        %v4676 = vunpack.c.l.b16 %v3640
        %v4677 = vunpack.c.h.b16 %v3640
        %v4678 = vunpack.c.l.b16 %v3641
        %v4679 = vunpack.c.h.b16 %v3641
        %v4680 = vunpack.c.l.b16 %v3642
        %v4681 = vunpack.c.h.b16 %v3642
        %v4682 = vunpack.c.l.b16 %v3643
        %v4683 = vunpack.c.h.b16 %v3643
        %v4684 = vunpack.c.l.b16 %v3644
        %v4685 = vunpack.c.h.b16 %v3644
        %v4686 = vunpack.c.l.b16 %v3645
        %v4687 = vunpack.c.h.b16 %v3645
        %v4688 = vunpack.c.l.b16 %v3646
        %v4689 = vunpack.c.h.b16 %v3646
        %v4690 = vunpack.c.l.b16 %v3647
        %v4691 = vunpack.c.h.b16 %v3647
        %v4692 = vunpack.c.l.b16 %v3648
        %v4693 = vunpack.c.h.b16 %v3648
        %v4694 = vunpack.c.l.b16 %v3649
        %v4695 = vunpack.c.h.b16 %v3649
        %v4696 = vunpack.c.l.b16 %v3650
        %v4697 = vunpack.c.h.b16 %v3650
        %v4698 = vpack.c.b16 %v4574, %v4570
        %v4699 = vpack.c.b16 %v4575, %v4571
        %v4700 = vpack.c.b16 %v4576, %v4572
        %v4701 = vpack.c.b16 %v4577, %v4573
        %v4702 = vpack.c.b16 %v4582, %v4578
        %v4703 = vpack.c.b16 %v4583, %v4579
        %v4704 = vpack.c.b16 %v4584, %v4580
        %v4705 = vpack.c.b16 %v4585, %v4581
        %v4706 = vpack.c.b16 %v4590, %v4586
        %v4707 = vpack.c.b16 %v4591, %v4587
        %v4708 = vpack.c.b16 %v4592, %v4588
        %v4709 = vpack.c.b16 %v4593, %v4589
        %v4710 = vpack.c.b16 %v4598, %v4594
        %v4711 = vpack.c.b16 %v4599, %v4595
        %v4712 = vpack.c.b16 %v4600, %v4596
        %v4713 = vpack.c.b16 %v4601, %v4597
        %v4714 = vpack.c.b16 %v4606, %v4602
        %v4715 = vpack.c.b16 %v4607, %v4603
        %v4716 = vpack.c.b16 %v4608, %v4604
        %v4717 = vpack.c.b16 %v4609, %v4605
        %v4718 = vpack.c.b16 %v4614, %v4610
        %v4719 = vpack.c.b16 %v4615, %v4611
        %v4720 = vpack.c.b16 %v4616, %v4612
        %v4721 = vpack.c.b16 %v4617, %v4613
        %v4722 = vpack.c.b16 %v4622, %v4618
        %v4723 = vpack.c.b16 %v4623, %v4619
        %v4724 = vpack.c.b16 %v4624, %v4620
        %v4725 = vpack.c.b16 %v4625, %v4621
        %v4726 = vpack.c.b16 %v4630, %v4626
        %v4727 = vpack.c.b16 %v4631, %v4627
        %v4728 = vpack.c.b16 %v4632, %v4628
        %v4729 = vpack.c.b16 %v4633, %v4629
        %v4730 = vpack.c.b16 %v4638, %v4634
        %v4731 = vpack.c.b16 %v4639, %v4635
        %v4732 = vpack.c.b16 %v4640, %v4636
        %v4733 = vpack.c.b16 %v4641, %v4637
        %v4734 = vpack.c.b16 %v4646, %v4642
        %v4735 = vpack.c.b16 %v4647, %v4643
        %v4736 = vpack.c.b16 %v4648, %v4644
        %v4737 = vpack.c.b16 %v4649, %v4645
        %v4738 = vpack.c.b16 %v4654, %v4650
        %v4739 = vpack.c.b16 %v4655, %v4651
        %v4740 = vpack.c.b16 %v4656, %v4652
        %v4741 = vpack.c.b16 %v4657, %v4653
        %v4742 = vpack.c.b16 %v4662, %v4658
        %v4743 = vpack.c.b16 %v4663, %v4659
        %v4744 = vpack.c.b16 %v4664, %v4660
        %v4745 = vpack.c.b16 %v4665, %v4661
        %v4746 = vpack.c.b16 %v4670, %v4666
        %v4747 = vpack.c.b16 %v4671, %v4667
        %v4748 = vpack.c.b16 %v4672, %v4668
        %v4749 = vpack.c.b16 %v4673, %v4669
        %v4750 = vpack.c.b16 %v4678, %v4674
        %v4751 = vpack.c.b16 %v4679, %v4675
        %v4752 = vpack.c.b16 %v4680, %v4676
        %v4753 = vpack.c.b16 %v4681, %v4677
        %v4754 = vpack.c.b16 %v4686, %v4682
        %v4755 = vpack.c.b16 %v4687, %v4683
        %v4756 = vpack.c.b16 %v4688, %v4684
        %v4757 = vpack.c.b16 %v4689, %v4685
        %v4758 = vpack.c.b16 %v4694, %v4690
        %v4759 = vpack.c.b16 %v4695, %v4691
        %v4760 = vpack.c.b16 %v4696, %v4692
        %v4761 = vpack.c.b16 %v4697, %v4693
        %4826 = vmatprep.subr.bf16.mxu0 %v4699
        %4827 = vmatpush1.bf16.msra.mxu0 %v4698
        %4828 = vmatprep.subr.bf16.mxu0 %v4703
        %4829 = vmatpush1.bf16.msra.mxu0 %v4702
        %4830 = vmatprep.subr.bf16.mxu0 %v4707
        %4831 = vmatpush1.bf16.msra.mxu0 %v4706
        %4832 = vmatprep.subr.bf16.mxu0 %v4711
        %4833 = vmatpush1.bf16.msra.mxu0 %v4710
        %4834 = vmatprep.subr.bf16.mxu0 %v4715
        %4835 = vmatpush1.bf16.msra.mxu0 %v4714
        %4836 = vmatprep.subr.bf16.mxu0 %v4719
        %4837 = vmatpush1.bf16.msra.mxu0 %v4718
        %4838 = vmatprep.subr.bf16.mxu0 %v4723
        %4839 = vmatpush1.bf16.msra.mxu0 %v4722
        %4840 = vmatprep.subr.bf16.mxu0 %v4727
        %4841 = vmatpush1.bf16.msra.mxu0 %v4726
        %4842 = vmatprep.subr.bf16.mxu0 %v4731
        %4843 = vmatpush1.bf16.msra.mxu0 %v4730
        %4844 = vmatprep.subr.bf16.mxu0 %v4735
        %4845 = vmatpush1.bf16.msra.mxu0 %v4734
        %4846 = vmatprep.subr.bf16.mxu0 %v4739
        %4847 = vmatpush1.bf16.msra.mxu0 %v4738
        %4848 = vmatprep.subr.bf16.mxu0 %v4743
        %4849 = vmatpush1.bf16.msra.mxu0 %v4742
        %4850 = vmatprep.subr.bf16.mxu0 %v4747
        %4851 = vmatpush1.bf16.msra.mxu0 %v4746
        %4852 = vmatprep.subr.bf16.mxu0 %v4751
        %4853 = vmatpush1.bf16.msra.mxu0 %v4750
        %4854 = vmatprep.subr.bf16.mxu0 %v4755
        %4855 = vmatpush1.bf16.msra.mxu0 %v4754
        %4856 = vmatprep.subr.bf16.mxu0 %v4759
        %4857 = vmatpush1.bf16.msra.mxu0 %v4758
        %4858 = vmatprep.mubr.bf16.mxu0 %v3548
        %4859 = vmatmul.mubr.bf16.gmra.mrb[0].mxu0 %v3547
        %v4860 = vpop.f32.mrb[0].mxu0
        %v4861 = vadd.f32 %v4075, %v4860
        %v4862 = vpop.f32.mrb[0].mxu0
        %v4863 = vadd.f32 %v4077, %v4862
        %v4864 = vpop.f32.mrb[0].mxu0
        %v4865 = vadd.f32 %v4079, %v4864
        %v4866 = vpop.f32.mrb[0].mxu0
        %v4867 = vadd.f32 %v4081, %v4866
        %4868 = vmatprep.mubr.bf16.mxu0 %v3550
        %4869 = vmatmul.mubr.bf16.gmra.mrb[0].mxu0 %v3549
        %v4870 = vpop.f32.mrb[0].mxu0
        %v4871 = vadd.f32 %v4085, %v4870
        %v4872 = vpop.f32.mrb[0].mxu0
        %v4873 = vadd.f32 %v4087, %v4872
        %v4874 = vpop.f32.mrb[0].mxu0
        %v4875 = vadd.f32 %v4089, %v4874
        %v4876 = vpop.f32.mrb[0].mxu0
        %v4877 = vadd.f32 %v4091, %v4876
        %4878 = vmatprep.mubr.bf16.mxu0 %v3552
        %4879 = vmatmul.mubr.bf16.gmra.mrb[0].mxu0 %v3551
        %v4880 = vpop.f32.mrb[0].mxu0
        %v4881 = vadd.f32 %v4095, %v4880
        %v4882 = vpop.f32.mrb[0].mxu0
        %v4883 = vadd.f32 %v4097, %v4882
        %v4884 = vpop.f32.mrb[0].mxu0
        %v4885 = vadd.f32 %v4099, %v4884
        %v4886 = vpop.f32.mrb[0].mxu0
        %v4887 = vadd.f32 %v4101, %v4886
        %4888 = vmatprep.mubr.bf16.mxu0 %v3554
        %4889 = vmatmul.mubr.bf16.gmra.mrb[0].mxu0 %v3553
        %v4890 = vpop.f32.mrb[0].mxu0
        %v4891 = vadd.f32 %v4105, %v4890
        %v4892 = vpop.f32.mrb[0].mxu0
        %v4893 = vadd.f32 %v4107, %v4892
        %v4894 = vpop.f32.mrb[0].mxu0
        %v4895 = vadd.f32 %v4109, %v4894
        %v4896 = vpop.f32.mrb[0].mxu0
        %v4897 = vadd.f32 %v4111, %v4896
        %4898 = vmatprep.mubr.bf16.mxu0 %v3556
        %4899 = vmatmul.mubr.bf16.gmra.mrb[0].mxu0 %v3555
        %v4900 = vpop.f32.mrb[0].mxu0
        %v4901 = vadd.f32 %v4115, %v4900
        %v4902 = vpop.f32.mrb[0].mxu0
        %v4903 = vadd.f32 %v4117, %v4902
        %v4904 = vpop.f32.mrb[0].mxu0
        %v4905 = vadd.f32 %v4119, %v4904
        %v4906 = vpop.f32.mrb[0].mxu0
        %v4907 = vadd.f32 %v4121, %v4906
        %4908 = vmatprep.mubr.bf16.mxu0 %v3558
        %4909 = vmatmul.mubr.bf16.gmra.mrb[0].mxu0 %v3557
        %v4910 = vpop.f32.mrb[0].mxu0
        %v4911 = vadd.f32 %v4125, %v4910
        %v4912 = vpop.f32.mrb[0].mxu0
        %v4913 = vadd.f32 %v4127, %v4912
        %v4914 = vpop.f32.mrb[0].mxu0
        %v4915 = vadd.f32 %v4129, %v4914
        %v4916 = vpop.f32.mrb[0].mxu0
        %v4917 = vadd.f32 %v4131, %v4916
        %4918 = vmatprep.mubr.bf16.mxu0 %v3560
        %4919 = vmatmul.mubr.bf16.gmra.mrb[0].mxu0 %v3559
        %v4920 = vpop.f32.mrb[0].mxu0
        %v4921 = vadd.f32 %v4135, %v4920
        %v4922 = vpop.f32.mrb[0].mxu0
        %v4923 = vadd.f32 %v4137, %v4922
        %v4924 = vpop.f32.mrb[0].mxu0
        %v4925 = vadd.f32 %v4139, %v4924
        %v4926 = vpop.f32.mrb[0].mxu0
        %v4927 = vadd.f32 %v4141, %v4926
        %4928 = vmatprep.mubr.bf16.mxu0 %v3562
        %4929 = vmatmul.mubr.bf16.gmra.mrb[0].mxu0 %v3561
        %v4930 = vpop.f32.mrb[0].mxu0
        %v4931 = vadd.f32 %v4145, %v4930
        %v4932 = vpop.f32.mrb[0].mxu0
        %v4933 = vadd.f32 %v4147, %v4932
        %v4934 = vpop.f32.mrb[0].mxu0
        %v4935 = vadd.f32 %v4149, %v4934
        %v4936 = vpop.f32.mrb[0].mxu0
        %v4937 = vadd.f32 %v4151, %v4936
        %4938 = vmatprep.mubr.bf16.mxu0 %v3564
        %4939 = vmatmul.mubr.bf16.gmra.mrb[0].mxu0 %v3563
        %v4940 = vpop.f32.mrb[0].mxu0
        %v4941 = vadd.f32 %v4155, %v4940
        %v4942 = vpop.f32.mrb[0].mxu0
        %v4943 = vadd.f32 %v4157, %v4942
        %v4944 = vpop.f32.mrb[0].mxu0
        %v4945 = vadd.f32 %v4159, %v4944
        %v4946 = vpop.f32.mrb[0].mxu0
        %v4947 = vadd.f32 %v4161, %v4946
        %4948 = vmatprep.mubr.bf16.mxu0 %v3566
        %4949 = vmatmul.mubr.bf16.gmra.mrb[0].mxu0 %v3565
        %v4950 = vpop.f32.mrb[0].mxu0
        %v4951 = vadd.f32 %v4165, %v4950
        %v4952 = vpop.f32.mrb[0].mxu0
        %v4953 = vadd.f32 %v4167, %v4952
        %v4954 = vpop.f32.mrb[0].mxu0
        %v4955 = vadd.f32 %v4169, %v4954
        %v4956 = vpop.f32.mrb[0].mxu0
        %v4957 = vadd.f32 %v4171, %v4956
        %4958 = vmatprep.mubr.bf16.mxu0 %v3568
        %4959 = vmatmul.mubr.bf16.gmra.mrb[0].mxu0 %v3567
        %v4960 = vpop.f32.mrb[0].mxu0
        %v4961 = vadd.f32 %v4175, %v4960
        %v4962 = vpop.f32.mrb[0].mxu0
        %v4963 = vadd.f32 %v4177, %v4962
        %v4964 = vpop.f32.mrb[0].mxu0
        %v4965 = vadd.f32 %v4179, %v4964
        %v4966 = vpop.f32.mrb[0].mxu0
        %v4967 = vadd.f32 %v4181, %v4966
        %4968 = vmatprep.mubr.bf16.mxu0 %v3570
        %4969 = vmatmul.mubr.bf16.gmra.mrb[0].mxu0 %v3569
        %v4970 = vpop.f32.mrb[0].mxu0
        %v4971 = vadd.f32 %v4185, %v4970
        %v4972 = vpop.f32.mrb[0].mxu0
        %v4973 = vadd.f32 %v4187, %v4972
        %v4974 = vpop.f32.mrb[0].mxu0
        %v4975 = vadd.f32 %v4189, %v4974
        %v4976 = vpop.f32.mrb[0].mxu0
        %v4977 = vadd.f32 %v4191, %v4976
        %4978 = vmatprep.mubr.bf16.mxu0 %v3572
        %4979 = vmatmul.mubr.bf16.gmra.mrb[0].mxu0 %v3571
        %v4980 = vpop.f32.mrb[0].mxu0
        %v4981 = vadd.f32 %v4195, %v4980
        %v4982 = vpop.f32.mrb[0].mxu0
        %v4983 = vadd.f32 %v4197, %v4982
        %v4984 = vpop.f32.mrb[0].mxu0
        %v4985 = vadd.f32 %v4199, %v4984
        %v4986 = vpop.f32.mrb[0].mxu0
        %v4987 = vadd.f32 %v4201, %v4986
        %4988 = vmatprep.mubr.bf16.mxu0 %v3574
        %4989 = vmatmul.mubr.bf16.gmra.mrb[0].mxu0 %v3573
        %v4990 = vpop.f32.mrb[0].mxu0
        %v4991 = vadd.f32 %v4205, %v4990
        %v4992 = vpop.f32.mrb[0].mxu0
        %v4993 = vadd.f32 %v4207, %v4992
        %v4994 = vpop.f32.mrb[0].mxu0
        %v4995 = vadd.f32 %v4209, %v4994
        %v4996 = vpop.f32.mrb[0].mxu0
        %v4997 = vadd.f32 %v4211, %v4996
        %4998 = vmatprep.mubr.bf16.mxu0 %v3576
        %4999 = vmatmul.mubr.bf16.gmra.mrb[0].mxu0 %v3575
        %v5000 = vpop.f32.mrb[0].mxu0
        %v5001 = vadd.f32 %v4215, %v5000
        %v5002 = vpop.f32.mrb[0].mxu0
        %v5003 = vadd.f32 %v4217, %v5002
        %v5004 = vpop.f32.mrb[0].mxu0
        %v5005 = vadd.f32 %v4219, %v5004
        %v5006 = vpop.f32.mrb[0].mxu0
        %v5007 = vadd.f32 %v4221, %v5006
        %5008 = vmatprep.mubr.bf16.mxu0 %v3578
        %5009 = vmatmul.mubr.bf16.gmra.mrb[0].mxu0 %v3577
        %v5010 = vpop.f32.mrb[0].mxu0
        %v5011 = vadd.f32 %v4225, %v5010
        %v5012 = vpop.f32.mrb[0].mxu0
        %v5013 = vadd.f32 %v4227, %v5012
        %v5014 = vpop.f32.mrb[0].mxu0
        %v5015 = vadd.f32 %v4229, %v5014
        %v5016 = vpop.f32.mrb[0].mxu0
        %v5017 = vadd.f32 %v4231, %v5016
        %5018 = vmatprep.mubr.bf16.mxu0 %v3580
        %5019 = vmatmul.mubr.bf16.gmra.mrb[0].mxu0 %v3579
        %v5020 = vpop.f32.mrb[0].mxu0
        %v5021 = vadd.f32 %v4235, %v5020
        %v5022 = vpop.f32.mrb[0].mxu0
        %v5023 = vadd.f32 %v4237, %v5022
        %v5024 = vpop.f32.mrb[0].mxu0
        %v5025 = vadd.f32 %v4239, %v5024
        %v5026 = vpop.f32.mrb[0].mxu0
        %v5027 = vadd.f32 %v4241, %v5026
        %5028 = vmatprep.mubr.bf16.mxu0 %v3582
        %5029 = vmatmul.mubr.bf16.gmra.mrb[0].mxu0 %v3581
        %v5030 = vpop.f32.mrb[0].mxu0
        %v5031 = vadd.f32 %v4245, %v5030
        %v5032 = vpop.f32.mrb[0].mxu0
        %v5033 = vadd.f32 %v4247, %v5032
        %v5034 = vpop.f32.mrb[0].mxu0
        %v5035 = vadd.f32 %v4249, %v5034
        %v5036 = vpop.f32.mrb[0].mxu0
        %v5037 = vadd.f32 %v4251, %v5036
        %5038 = vmatprep.mubr.bf16.mxu0 %v3584
        %5039 = vmatmul.mubr.bf16.gmra.mrb[0].mxu0 %v3583
        %v5040 = vpop.f32.mrb[0].mxu0
        %v5041 = vadd.f32 %v4255, %v5040
        %v5042 = vpop.f32.mrb[0].mxu0
        %v5043 = vadd.f32 %v4257, %v5042
        %v5044 = vpop.f32.mrb[0].mxu0
        %v5045 = vadd.f32 %v4259, %v5044
        %v5046 = vpop.f32.mrb[0].mxu0
        %v5047 = vadd.f32 %v4261, %v5046
        %5048 = vmatprep.mubr.bf16.mxu0 %v3586
        %5049 = vmatmul.mubr.bf16.gmra.mrb[0].mxu0 %v3585
        %v5050 = vpop.f32.mrb[0].mxu0
        %v5051 = vadd.f32 %v4265, %v5050
        %v5052 = vpop.f32.mrb[0].mxu0
        %v5053 = vadd.f32 %v4267, %v5052
        %v5054 = vpop.f32.mrb[0].mxu0
        %v5055 = vadd.f32 %v4269, %v5054
        %v5056 = vpop.f32.mrb[0].mxu0
        %v5057 = vadd.f32 %v4271, %v5056
        %5058 = vdwg.mxu0
        %5059 = vmatprep.subr.bf16.mxu0 %v4701
        %5060 = vmatpush1.bf16.msra.mxu0 %v4700
        %5061 = vmatprep.subr.bf16.mxu0 %v4705
        %5062 = vmatpush1.bf16.msra.mxu0 %v4704
        %5063 = vmatprep.subr.bf16.mxu0 %v4709
        %5064 = vmatpush1.bf16.msra.mxu0 %v4708
        %5065 = vmatprep.subr.bf16.mxu0 %v4713
        %5066 = vmatpush1.bf16.msra.mxu0 %v4712
        %5067 = vmatprep.subr.bf16.mxu0 %v4717
        %5068 = vmatpush1.bf16.msra.mxu0 %v4716
        %5069 = vmatprep.subr.bf16.mxu0 %v4721
        %5070 = vmatpush1.bf16.msra.mxu0 %v4720
        %5071 = vmatprep.subr.bf16.mxu0 %v4725
        %5072 = vmatpush1.bf16.msra.mxu0 %v4724
        %5073 = vmatprep.subr.bf16.mxu0 %v4729
        %5074 = vmatpush1.bf16.msra.mxu0 %v4728
        %5075 = vmatprep.subr.bf16.mxu0 %v4733
        %5076 = vmatpush1.bf16.msra.mxu0 %v4732
        %5077 = vmatprep.subr.bf16.mxu0 %v4737
        %5078 = vmatpush1.bf16.msra.mxu0 %v4736
        %5079 = vmatprep.subr.bf16.mxu0 %v4741
        %5080 = vmatpush1.bf16.msra.mxu0 %v4740
        %5081 = vmatprep.subr.bf16.mxu0 %v4745
        %5082 = vmatpush1.bf16.msra.mxu0 %v4744
        %5083 = vmatprep.subr.bf16.mxu0 %v4749
        %5084 = vmatpush1.bf16.msra.mxu0 %v4748
        %5085 = vmatprep.subr.bf16.mxu0 %v4753
        %5086 = vmatpush1.bf16.msra.mxu0 %v4752
        %5087 = vmatprep.subr.bf16.mxu0 %v4757
        %5088 = vmatpush1.bf16.msra.mxu0 %v4756
        %5089 = vmatprep.subr.bf16.mxu0 %v4761
        %5090 = vmatpush1.bf16.msra.mxu0 %v4760
        %5091 = vmatprep.mubr.bf16.mxu0 %v3548
        %5092 = vmatmul.mubr.bf16.gmra.mrb[0].mxu0 %v3547
        %v5093 = vpop.f32.mrb[0].mxu0
        %v5094 = vadd.f32 %v4308, %v5093
        %v5095 = vpop.f32.mrb[0].mxu0
        %v5096 = vadd.f32 %v4310, %v5095
        %v5097 = vpop.f32.mrb[0].mxu0
        %v5098 = vadd.f32 %v4312, %v5097
        %v5099 = vpop.f32.mrb[0].mxu0
        %v5100 = vadd.f32 %v4314, %v5099
        %5101 = vmatprep.mubr.bf16.mxu0 %v3550
        %5102 = vmatmul.mubr.bf16.gmra.mrb[0].mxu0 %v3549
        %v5103 = vpop.f32.mrb[0].mxu0
        %v5104 = vadd.f32 %v4318, %v5103
        %v5105 = vpop.f32.mrb[0].mxu0
        %v5106 = vadd.f32 %v4320, %v5105
        %v5107 = vpop.f32.mrb[0].mxu0
        %v5108 = vadd.f32 %v4322, %v5107
        %v5109 = vpop.f32.mrb[0].mxu0
        %v5110 = vadd.f32 %v4324, %v5109
        %5111 = vmatprep.mubr.bf16.mxu0 %v3552
        %5112 = vmatmul.mubr.bf16.gmra.mrb[0].mxu0 %v3551
        %v5113 = vpop.f32.mrb[0].mxu0
        %v5114 = vadd.f32 %v4328, %v5113
        %v5115 = vpop.f32.mrb[0].mxu0
        %v5116 = vadd.f32 %v4330, %v5115
        %v5117 = vpop.f32.mrb[0].mxu0
        %v5118 = vadd.f32 %v4332, %v5117
        %v5119 = vpop.f32.mrb[0].mxu0
        %v5120 = vadd.f32 %v4334, %v5119
        %5121 = vmatprep.mubr.bf16.mxu0 %v3554
        %5122 = vmatmul.mubr.bf16.gmra.mrb[0].mxu0 %v3553
        %v5123 = vpop.f32.mrb[0].mxu0
        %v5124 = vadd.f32 %v4338, %v5123
        %v5125 = vpop.f32.mrb[0].mxu0
        %v5126 = vadd.f32 %v4340, %v5125
        %v5127 = vpop.f32.mrb[0].mxu0
        %v5128 = vadd.f32 %v4342, %v5127
        %v5129 = vpop.f32.mrb[0].mxu0
        %v5130 = vadd.f32 %v4344, %v5129
        %5131 = vmatprep.mubr.bf16.mxu0 %v3556
        %5132 = vmatmul.mubr.bf16.gmra.mrb[0].mxu0 %v3555
        %v5133 = vpop.f32.mrb[0].mxu0
        %v5134 = vadd.f32 %v4348, %v5133
        %v5135 = vpop.f32.mrb[0].mxu0
        %v5136 = vadd.f32 %v4350, %v5135
        %v5137 = vpop.f32.mrb[0].mxu0
        %v5138 = vadd.f32 %v4352, %v5137
        %v5139 = vpop.f32.mrb[0].mxu0
        %v5140 = vadd.f32 %v4354, %v5139
        %5141 = vmatprep.mubr.bf16.mxu0 %v3558
        %5142 = vmatmul.mubr.bf16.gmra.mrb[0].mxu0 %v3557
        %v5143 = vpop.f32.mrb[0].mxu0
        %v5144 = vadd.f32 %v4358, %v5143
        %v5145 = vpop.f32.mrb[0].mxu0
        %v5146 = vadd.f32 %v4360, %v5145
        %v5147 = vpop.f32.mrb[0].mxu0
        %v5148 = vadd.f32 %v4362, %v5147
        %v5149 = vpop.f32.mrb[0].mxu0
        %v5150 = vadd.f32 %v4364, %v5149
        %5151 = vmatprep.mubr.bf16.mxu0 %v3560
        %5152 = vmatmul.mubr.bf16.gmra.mrb[0].mxu0 %v3559
        %v5153 = vpop.f32.mrb[0].mxu0
        %v5154 = vadd.f32 %v4368, %v5153
        %v5155 = vpop.f32.mrb[0].mxu0
        %v5156 = vadd.f32 %v4370, %v5155
        %v5157 = vpop.f32.mrb[0].mxu0
        %v5158 = vadd.f32 %v4372, %v5157
        %v5159 = vpop.f32.mrb[0].mxu0
        %v5160 = vadd.f32 %v4374, %v5159
        %5161 = vmatprep.mubr.bf16.mxu0 %v3562
        %5162 = vmatmul.mubr.bf16.gmra.mrb[0].mxu0 %v3561
        %v5163 = vpop.f32.mrb[0].mxu0
        %v5164 = vadd.f32 %v4378, %v5163
        %v5165 = vpop.f32.mrb[0].mxu0
        %v5166 = vadd.f32 %v4380, %v5165
        %v5167 = vpop.f32.mrb[0].mxu0
        %v5168 = vadd.f32 %v4382, %v5167
        %v5169 = vpop.f32.mrb[0].mxu0
        %v5170 = vadd.f32 %v4384, %v5169
        %5171 = vmatprep.mubr.bf16.mxu0 %v3564
        %5172 = vmatmul.mubr.bf16.gmra.mrb[0].mxu0 %v3563
        %v5173 = vpop.f32.mrb[0].mxu0
        %v5174 = vadd.f32 %v4388, %v5173
        %v5175 = vpop.f32.mrb[0].mxu0
        %v5176 = vadd.f32 %v4390, %v5175
        %v5177 = vpop.f32.mrb[0].mxu0
        %v5178 = vadd.f32 %v4392, %v5177
        %v5179 = vpop.f32.mrb[0].mxu0
        %v5180 = vadd.f32 %v4394, %v5179
        %5181 = vmatprep.mubr.bf16.mxu0 %v3566
        %5182 = vmatmul.mubr.bf16.gmra.mrb[0].mxu0 %v3565
        %v5183 = vpop.f32.mrb[0].mxu0
        %v5184 = vadd.f32 %v4398, %v5183
        %v5185 = vpop.f32.mrb[0].mxu0
        %v5186 = vadd.f32 %v4400, %v5185
        %v5187 = vpop.f32.mrb[0].mxu0
        %v5188 = vadd.f32 %v4402, %v5187
        %v5189 = vpop.f32.mrb[0].mxu0
        %v5190 = vadd.f32 %v4404, %v5189
        %5191 = vmatprep.mubr.bf16.mxu0 %v3568
        %5192 = vmatmul.mubr.bf16.gmra.mrb[0].mxu0 %v3567
        %v5193 = vpop.f32.mrb[0].mxu0
        %v5194 = vadd.f32 %v4408, %v5193
        %v5195 = vpop.f32.mrb[0].mxu0
        %v5196 = vadd.f32 %v4410, %v5195
        %v5197 = vpop.f32.mrb[0].mxu0
        %v5198 = vadd.f32 %v4412, %v5197
        %v5199 = vpop.f32.mrb[0].mxu0
        %v5200 = vadd.f32 %v4414, %v5199
        %5201 = vmatprep.mubr.bf16.mxu0 %v3570
        %5202 = vmatmul.mubr.bf16.gmra.mrb[0].mxu0 %v3569
        %v5203 = vpop.f32.mrb[0].mxu0
        %v5204 = vadd.f32 %v4418, %v5203
        %v5205 = vpop.f32.mrb[0].mxu0
        %v5206 = vadd.f32 %v4420, %v5205
        %v5207 = vpop.f32.mrb[0].mxu0
        %v5208 = vadd.f32 %v4422, %v5207
        %v5209 = vpop.f32.mrb[0].mxu0
        %v5210 = vadd.f32 %v4424, %v5209
        %5211 = vmatprep.mubr.bf16.mxu0 %v3572
        %5212 = vmatmul.mubr.bf16.gmra.mrb[0].mxu0 %v3571
        %v5213 = vpop.f32.mrb[0].mxu0
        %v5214 = vadd.f32 %v4428, %v5213
        %v5215 = vpop.f32.mrb[0].mxu0
        %v5216 = vadd.f32 %v4430, %v5215
        %v5217 = vpop.f32.mrb[0].mxu0
        %v5218 = vadd.f32 %v4432, %v5217
        %v5219 = vpop.f32.mrb[0].mxu0
        %v5220 = vadd.f32 %v4434, %v5219
        %5221 = vmatprep.mubr.bf16.mxu0 %v3574
        %5222 = vmatmul.mubr.bf16.gmra.mrb[0].mxu0 %v3573
        %v5223 = vpop.f32.mrb[0].mxu0
        %v5224 = vadd.f32 %v4438, %v5223
        %v5225 = vpop.f32.mrb[0].mxu0
        %v5226 = vadd.f32 %v4440, %v5225
        %v5227 = vpop.f32.mrb[0].mxu0
        %v5228 = vadd.f32 %v4442, %v5227
        %v5229 = vpop.f32.mrb[0].mxu0
        %v5230 = vadd.f32 %v4444, %v5229
        %5231 = vmatprep.mubr.bf16.mxu0 %v3576
        %5232 = vmatmul.mubr.bf16.gmra.mrb[0].mxu0 %v3575
        %v5233 = vpop.f32.mrb[0].mxu0
        %v5234 = vadd.f32 %v4448, %v5233
        %v5235 = vpop.f32.mrb[0].mxu0
        %v5236 = vadd.f32 %v4450, %v5235
        %v5237 = vpop.f32.mrb[0].mxu0
        %v5238 = vadd.f32 %v4452, %v5237
        %v5239 = vpop.f32.mrb[0].mxu0
        %v5240 = vadd.f32 %v4454, %v5239
        %5241 = vmatprep.mubr.bf16.mxu0 %v3578
        %5242 = vmatmul.mubr.bf16.gmra.mrb[0].mxu0 %v3577
        %v5243 = vpop.f32.mrb[0].mxu0
        %v5244 = vadd.f32 %v4458, %v5243
        %v5245 = vpop.f32.mrb[0].mxu0
        %v5246 = vadd.f32 %v4460, %v5245
        %v5247 = vpop.f32.mrb[0].mxu0
        %v5248 = vadd.f32 %v4462, %v5247
        %v5249 = vpop.f32.mrb[0].mxu0
        %v5250 = vadd.f32 %v4464, %v5249
        %5251 = vmatprep.mubr.bf16.mxu0 %v3580
        %5252 = vmatmul.mubr.bf16.gmra.mrb[0].mxu0 %v3579
        %v5253 = vpop.f32.mrb[0].mxu0
        %v5254 = vadd.f32 %v4468, %v5253
        %v5255 = vpop.f32.mrb[0].mxu0
        %v5256 = vadd.f32 %v4470, %v5255
        %v5257 = vpop.f32.mrb[0].mxu0
        %v5258 = vadd.f32 %v4472, %v5257
        %v5259 = vpop.f32.mrb[0].mxu0
        %v5260 = vadd.f32 %v4474, %v5259
        %5261 = vmatprep.mubr.bf16.mxu0 %v3582
        %5262 = vmatmul.mubr.bf16.gmra.mrb[0].mxu0 %v3581
        %v5263 = vpop.f32.mrb[0].mxu0
        %v5264 = vadd.f32 %v4478, %v5263
        %v5265 = vpop.f32.mrb[0].mxu0
        %v5266 = vadd.f32 %v4480, %v5265
        %v5267 = vpop.f32.mrb[0].mxu0
        %v5268 = vadd.f32 %v4482, %v5267
        %v5269 = vpop.f32.mrb[0].mxu0
        %v5270 = vadd.f32 %v4484, %v5269
        %5271 = vmatprep.mubr.bf16.mxu0 %v3584
        %5272 = vmatmul.mubr.bf16.gmra.mrb[0].mxu0 %v3583
        %v5273 = vpop.f32.mrb[0].mxu0
        %v5274 = vadd.f32 %v4488, %v5273
        %v5275 = vpop.f32.mrb[0].mxu0
        %v5276 = vadd.f32 %v4490, %v5275
        %v5277 = vpop.f32.mrb[0].mxu0
        %v5278 = vadd.f32 %v4492, %v5277
        %v5279 = vpop.f32.mrb[0].mxu0
        %v5280 = vadd.f32 %v4494, %v5279
        %5281 = vmatprep.mubr.bf16.mxu0 %v3586
        %5282 = vmatmul.mubr.bf16.gmra.mrb[0].mxu0 %v3585
        %v5283 = vpop.f32.mrb[0].mxu0
        %v5284 = vadd.f32 %v4498, %v5283
        %v5285 = vpop.f32.mrb[0].mxu0
        %v5286 = vadd.f32 %v4500, %v5285
        %v5287 = vpop.f32.mrb[0].mxu0
        %v5288 = vadd.f32 %v4502, %v5287
        %v5289 = vpop.f32.mrb[0].mxu0
        %v5290 = vadd.f32 %v4504, %v5289
        %5291 = vdwg.mxu0
        %v5292 = vld [vmem:[#allocation3 + $0x40] sm:$0xff]
        %v5293 = vld [vmem:[#allocation3 + $0x48] sm:$0xff]
        %v5294 = vld [vmem:[#allocation3 + $0x50] sm:$0xff]
        %v5295 = vld [vmem:[#allocation3 + $0x58] sm:$0xff]
        %v5296 = vld [vmem:[#allocation3 + $0x60] sm:$0xff]
        %v5297 = vld [vmem:[#allocation3 + $0x68] sm:$0xff]
        %v5298 = vld [vmem:[#allocation3 + $0x70] sm:$0xff]
        %v5299 = vld [vmem:[#allocation3 + $0x78] sm:$0xff]
        %v5300 = vld [vmem:[#allocation3 + $0x80] sm:$0xff]
        %v5301 = vld [vmem:[#allocation3 + $0x88] sm:$0xff]
        %v5302 = vld [vmem:[#allocation3 + $0x90] sm:$0xff]
        %v5303 = vld [vmem:[#allocation3 + $0x98] sm:$0xff]
        %v5304 = vld [vmem:[#allocation3 + $0xa0] sm:$0xff]
        %v5305 = vld [vmem:[#allocation3 + $0xa8] sm:$0xff]
        %v5306 = vld [vmem:[#allocation3 + $0xb0] sm:$0xff]
        %v5307 = vld [vmem:[#allocation3 + $0xb8] sm:$0xff]
        %v5308 = vld [vmem:[#allocation3 + $0xc0] sm:$0xff]
        %v5309 = vld [vmem:[#allocation3 + $0xc8] sm:$0xff]
        %v5310 = vld [vmem:[#allocation3 + $0xd0] sm:$0xff]
        %v5311 = vld [vmem:[#allocation3 + $0xd8] sm:$0xff]
        %v5312 = vld [vmem:[#allocation3 + $0xe0] sm:$0xff]
        %v5313 = vld [vmem:[#allocation3 + $0xe8] sm:$0xff]
        %v5314 = vld [vmem:[#allocation3 + $0xf0] sm:$0xff]
        %v5315 = vld [vmem:[#allocation3 + $0xf8] sm:$0xff]
        %v5316 = vld [vmem:[#allocation3 + $0x100] sm:$0xff]
        %v5317 = vld [vmem:[#allocation3 + $0x108] sm:$0xff]
        %v5318 = vld [vmem:[#allocation3 + $0x110] sm:$0xff]
        %v5319 = vld [vmem:[#allocation3 + $0x118] sm:$0xff]
        %v5320 = vld [vmem:[#allocation3 + $0x120] sm:$0xff]
        %v5321 = vld [vmem:[#allocation3 + $0x128] sm:$0xff]
        %v5322 = vld [vmem:[#allocation3 + $0x130] sm:$0xff]
        %v5323 = vld [vmem:[#allocation3 + $0x138] sm:$0xff]
        %v5324 = vld [vmem:[#allocation3 + $0x140] sm:$0xff]
        %v5325 = vld [vmem:[#allocation3 + $0x148] sm:$0xff]
        %v5326 = vld [vmem:[#allocation3 + $0x150] sm:$0xff]
        %v5327 = vld [vmem:[#allocation3 + $0x158] sm:$0xff]
        %v5328 = vld [vmem:[#allocation3 + $0x160] sm:$0xff]
        %v5329 = vld [vmem:[#allocation3 + $0x168] sm:$0xff]
        %v5330 = vld [vmem:[#allocation3 + $0x170] sm:$0xff]
        %v5331 = vld [vmem:[#allocation3 + $0x178] sm:$0xff]
        %s5332 = scalar_lea.vmem %s3, 1024
        %v5333 = vld [vmem:[%s5332] sm:$0xff]
        %v5334 = vld [vmem:[%s5332 + $0x8] sm:$0xff]
        %v5335 = vld [vmem:[%s5332 + $0x10] sm:$0xff]
        %v5336 = vld [vmem:[%s5332 + $0x18] sm:$0xff]
        %v5337 = vld [vmem:[%s5332 + $0x20] sm:$0xff]
        %v5338 = vld [vmem:[%s5332 + $0x28] sm:$0xff]
        %v5339 = vld [vmem:[%s5332 + $0x30] sm:$0xff]
        %v5340 = vld [vmem:[%s5332 + $0x38] sm:$0xff]
        %v5341 = vld [vmem:[%s5332 + $0x40] sm:$0xff]
        %v5342 = vld [vmem:[%s5332 + $0x48] sm:$0xff]
        %v5343 = vld [vmem:[%s5332 + $0x50] sm:$0xff]
        %v5344 = vld [vmem:[%s5332 + $0x58] sm:$0xff]
        %v5345 = vld [vmem:[%s5332 + $0x60] sm:$0xff]
        %v5346 = vld [vmem:[%s5332 + $0x68] sm:$0xff]
        %v5347 = vld [vmem:[%s5332 + $0x70] sm:$0xff]
        %v5348 = vld [vmem:[%s5332 + $0x78] sm:$0xff]
        %v5349 = vld [vmem:[%s5332 + $0x80] sm:$0xff]
        %v5350 = vld [vmem:[%s5332 + $0x88] sm:$0xff]
        %v5351 = vld [vmem:[%s5332 + $0x90] sm:$0xff]
        %v5352 = vld [vmem:[%s5332 + $0x98] sm:$0xff]
        %v5353 = vld [vmem:[%s5332 + $0xa0] sm:$0xff]
        %v5354 = vld [vmem:[%s5332 + $0xa8] sm:$0xff]
        %v5355 = vld [vmem:[%s5332 + $0xb0] sm:$0xff]
        %v5356 = vld [vmem:[%s5332 + $0xb8] sm:$0xff]
        %v5357 = vld [vmem:[%s5332 + $0xc0] sm:$0xff]
        %v5358 = vld [vmem:[%s5332 + $0xc8] sm:$0xff]
        %v5359 = vld [vmem:[%s5332 + $0xd0] sm:$0xff]
        %v5360 = vld [vmem:[%s5332 + $0xd8] sm:$0xff]
        %v5361 = vld [vmem:[%s5332 + $0xe0] sm:$0xff]
        %v5362 = vld [vmem:[%s5332 + $0xe8] sm:$0xff]
        %v5363 = vld [vmem:[%s5332 + $0xf0] sm:$0xff]
        %v5364 = vld [vmem:[%s5332 + $0xf8] sm:$0xff]
        %v5365 = vld [vmem:[%s5332 + $0x100] sm:$0xff]
        %v5366 = vld [vmem:[%s5332 + $0x108] sm:$0xff]
        %v5367 = vld [vmem:[%s5332 + $0x110] sm:$0xff]
        %v5368 = vld [vmem:[%s5332 + $0x118] sm:$0xff]
        %v5369 = vld [vmem:[%s5332 + $0x120] sm:$0xff]
        %v5370 = vld [vmem:[%s5332 + $0x128] sm:$0xff]
        %v5371 = vld [vmem:[%s5332 + $0x130] sm:$0xff]
        %v5372 = vld [vmem:[%s5332 + $0x138] sm:$0xff]
        %v5373 = vld [vmem:[%s5332 + $0x140] sm:$0xff]
        %v5374 = vld [vmem:[%s5332 + $0x148] sm:$0xff]
        %v5375 = vld [vmem:[%s5332 + $0x150] sm:$0xff]
        %v5376 = vld [vmem:[%s5332 + $0x158] sm:$0xff]
        %v5377 = vld [vmem:[%s5332 + $0x160] sm:$0xff]
        %v5378 = vld [vmem:[%s5332 + $0x168] sm:$0xff]
        %v5379 = vld [vmem:[%s5332 + $0x170] sm:$0xff]
        %v5380 = vld [vmem:[%s5332 + $0x178] sm:$0xff]
        %v5381 = vld [vmem:[%s5332 + $0x180] sm:$0xff]
        %v5382 = vld [vmem:[%s5332 + $0x188] sm:$0xff]
        %v5383 = vld [vmem:[%s5332 + $0x190] sm:$0xff]
        %v5384 = vld [vmem:[%s5332 + $0x198] sm:$0xff]
        %v5385 = vld [vmem:[%s5332 + $0x1a0] sm:$0xff]
        %v5386 = vld [vmem:[%s5332 + $0x1a8] sm:$0xff]
        %v5387 = vld [vmem:[%s5332 + $0x1b0] sm:$0xff]
        %v5388 = vld [vmem:[%s5332 + $0x1b8] sm:$0xff]
        %v5389 = vld [vmem:[%s5332 + $0x1c0] sm:$0xff]
        %v5390 = vld [vmem:[%s5332 + $0x1c8] sm:$0xff]
        %v5391 = vld [vmem:[%s5332 + $0x1d0] sm:$0xff]
        %v5392 = vld [vmem:[%s5332 + $0x1d8] sm:$0xff]
        %v5393 = vld [vmem:[%s5332 + $0x1e0] sm:$0xff]
        %v5394 = vld [vmem:[%s5332 + $0x1e8] sm:$0xff]
        %v5395 = vld [vmem:[%s5332 + $0x1f0] sm:$0xff]
        %v5396 = vld [vmem:[%s5332 + $0x1f8] sm:$0xff]
        %v5461 = vunpack.c.l.b16 %v5333
        %v5462 = vunpack.c.h.b16 %v5333
        %v5463 = vunpack.c.l.b16 %v5334
        %v5464 = vunpack.c.h.b16 %v5334
        %v5465 = vunpack.c.l.b16 %v5335
        %v5466 = vunpack.c.h.b16 %v5335
        %v5467 = vunpack.c.l.b16 %v5336
        %v5468 = vunpack.c.h.b16 %v5336
        %v5469 = vunpack.c.l.b16 %v5337
        %v5470 = vunpack.c.h.b16 %v5337
        %v5471 = vunpack.c.l.b16 %v5338
        %v5472 = vunpack.c.h.b16 %v5338
        %v5473 = vunpack.c.l.b16 %v5339
        %v5474 = vunpack.c.h.b16 %v5339
        %v5475 = vunpack.c.l.b16 %v5340
        %v5476 = vunpack.c.h.b16 %v5340
        %v5477 = vunpack.c.l.b16 %v5341
        %v5478 = vunpack.c.h.b16 %v5341
        %v5479 = vunpack.c.l.b16 %v5342
        %v5480 = vunpack.c.h.b16 %v5342
        %v5481 = vunpack.c.l.b16 %v5343
        %v5482 = vunpack.c.h.b16 %v5343
        %v5483 = vunpack.c.l.b16 %v5344
        %v5484 = vunpack.c.h.b16 %v5344
        %v5485 = vunpack.c.l.b16 %v5345
        %v5486 = vunpack.c.h.b16 %v5345
        %v5487 = vunpack.c.l.b16 %v5346
        %v5488 = vunpack.c.h.b16 %v5346
        %v5489 = vunpack.c.l.b16 %v5347
        %v5490 = vunpack.c.h.b16 %v5347
        %v5491 = vunpack.c.l.b16 %v5348
        %v5492 = vunpack.c.h.b16 %v5348
        %v5493 = vunpack.c.l.b16 %v5349
        %v5494 = vunpack.c.h.b16 %v5349
        %v5495 = vunpack.c.l.b16 %v5350
        %v5496 = vunpack.c.h.b16 %v5350
        %v5497 = vunpack.c.l.b16 %v5351
        %v5498 = vunpack.c.h.b16 %v5351
        %v5499 = vunpack.c.l.b16 %v5352
        %v5500 = vunpack.c.h.b16 %v5352
        %v5501 = vunpack.c.l.b16 %v5353
        %v5502 = vunpack.c.h.b16 %v5353
        %v5503 = vunpack.c.l.b16 %v5354
        %v5504 = vunpack.c.h.b16 %v5354
        %v5505 = vunpack.c.l.b16 %v5355
        %v5506 = vunpack.c.h.b16 %v5355
        %v5507 = vunpack.c.l.b16 %v5356
        %v5508 = vunpack.c.h.b16 %v5356
        %v5509 = vunpack.c.l.b16 %v5357
        %v5510 = vunpack.c.h.b16 %v5357
        %v5511 = vunpack.c.l.b16 %v5358
        %v5512 = vunpack.c.h.b16 %v5358
        %v5513 = vunpack.c.l.b16 %v5359
        %v5514 = vunpack.c.h.b16 %v5359
        %v5515 = vunpack.c.l.b16 %v5360
        %v5516 = vunpack.c.h.b16 %v5360
        %v5517 = vunpack.c.l.b16 %v5361
        %v5518 = vunpack.c.h.b16 %v5361
        %v5519 = vunpack.c.l.b16 %v5362
        %v5520 = vunpack.c.h.b16 %v5362
        %v5521 = vunpack.c.l.b16 %v5363
        %v5522 = vunpack.c.h.b16 %v5363
        %v5523 = vunpack.c.l.b16 %v5364
        %v5524 = vunpack.c.h.b16 %v5364
        %v5525 = vunpack.c.l.b16 %v5365
        %v5526 = vunpack.c.h.b16 %v5365
        %v5527 = vunpack.c.l.b16 %v5366
        %v5528 = vunpack.c.h.b16 %v5366
        %v5529 = vunpack.c.l.b16 %v5367
        %v5530 = vunpack.c.h.b16 %v5367
        %v5531 = vunpack.c.l.b16 %v5368
        %v5532 = vunpack.c.h.b16 %v5368
        %v5533 = vunpack.c.l.b16 %v5369
        %v5534 = vunpack.c.h.b16 %v5369
        %v5535 = vunpack.c.l.b16 %v5370
        %v5536 = vunpack.c.h.b16 %v5370
        %v5537 = vunpack.c.l.b16 %v5371
        %v5538 = vunpack.c.h.b16 %v5371
        %v5539 = vunpack.c.l.b16 %v5372
        %v5540 = vunpack.c.h.b16 %v5372
        %v5541 = vunpack.c.l.b16 %v5373
        %v5542 = vunpack.c.h.b16 %v5373
        %v5543 = vunpack.c.l.b16 %v5374
        %v5544 = vunpack.c.h.b16 %v5374
        %v5545 = vunpack.c.l.b16 %v5375
        %v5546 = vunpack.c.h.b16 %v5375
        %v5547 = vunpack.c.l.b16 %v5376
        %v5548 = vunpack.c.h.b16 %v5376
        %v5549 = vunpack.c.l.b16 %v5377
        %v5550 = vunpack.c.h.b16 %v5377
        %v5551 = vunpack.c.l.b16 %v5378
        %v5552 = vunpack.c.h.b16 %v5378
        %v5553 = vunpack.c.l.b16 %v5379
        %v5554 = vunpack.c.h.b16 %v5379
        %v5555 = vunpack.c.l.b16 %v5380
        %v5556 = vunpack.c.h.b16 %v5380
        %v5557 = vunpack.c.l.b16 %v5381
        %v5558 = vunpack.c.h.b16 %v5381
        %v5559 = vunpack.c.l.b16 %v5382
        %v5560 = vunpack.c.h.b16 %v5382
        %v5561 = vunpack.c.l.b16 %v5383
        %v5562 = vunpack.c.h.b16 %v5383
        %v5563 = vunpack.c.l.b16 %v5384
        %v5564 = vunpack.c.h.b16 %v5384
        %v5565 = vunpack.c.l.b16 %v5385
        %v5566 = vunpack.c.h.b16 %v5385
        %v5567 = vunpack.c.l.b16 %v5386
        %v5568 = vunpack.c.h.b16 %v5386
        %v5569 = vunpack.c.l.b16 %v5387
        %v5570 = vunpack.c.h.b16 %v5387
        %v5571 = vunpack.c.l.b16 %v5388
        %v5572 = vunpack.c.h.b16 %v5388
        %v5573 = vunpack.c.l.b16 %v5389
        %v5574 = vunpack.c.h.b16 %v5389
        %v5575 = vunpack.c.l.b16 %v5390
        %v5576 = vunpack.c.h.b16 %v5390
        %v5577 = vunpack.c.l.b16 %v5391
        %v5578 = vunpack.c.h.b16 %v5391
        %v5579 = vunpack.c.l.b16 %v5392
        %v5580 = vunpack.c.h.b16 %v5392
        %v5581 = vunpack.c.l.b16 %v5393
        %v5582 = vunpack.c.h.b16 %v5393
        %v5583 = vunpack.c.l.b16 %v5394
        %v5584 = vunpack.c.h.b16 %v5394
        %v5585 = vunpack.c.l.b16 %v5395
        %v5586 = vunpack.c.h.b16 %v5395
        %v5587 = vunpack.c.l.b16 %v5396
        %v5588 = vunpack.c.h.b16 %v5396
        %v5589 = vpack.c.b16 %v5465, %v5461
        %v5590 = vpack.c.b16 %v5466, %v5462
        %v5591 = vpack.c.b16 %v5467, %v5463
        %v5592 = vpack.c.b16 %v5468, %v5464
        %v5593 = vpack.c.b16 %v5473, %v5469
        %v5594 = vpack.c.b16 %v5474, %v5470
        %v5595 = vpack.c.b16 %v5475, %v5471
        %v5596 = vpack.c.b16 %v5476, %v5472
        %v5597 = vpack.c.b16 %v5481, %v5477
        %v5598 = vpack.c.b16 %v5482, %v5478
        %v5599 = vpack.c.b16 %v5483, %v5479
        %v5600 = vpack.c.b16 %v5484, %v5480
        %v5601 = vpack.c.b16 %v5489, %v5485
        %v5602 = vpack.c.b16 %v5490, %v5486
        %v5603 = vpack.c.b16 %v5491, %v5487
        %v5604 = vpack.c.b16 %v5492, %v5488
        %v5605 = vpack.c.b16 %v5497, %v5493
        %v5606 = vpack.c.b16 %v5498, %v5494
        %v5607 = vpack.c.b16 %v5499, %v5495
        %v5608 = vpack.c.b16 %v5500, %v5496
        %v5609 = vpack.c.b16 %v5505, %v5501
        %v5610 = vpack.c.b16 %v5506, %v5502
        %v5611 = vpack.c.b16 %v5507, %v5503
        %v5612 = vpack.c.b16 %v5508, %v5504
        %v5613 = vpack.c.b16 %v5513, %v5509
        %v5614 = vpack.c.b16 %v5514, %v5510
        %v5615 = vpack.c.b16 %v5515, %v5511
        %v5616 = vpack.c.b16 %v5516, %v5512
        %v5617 = vpack.c.b16 %v5521, %v5517
        %v5618 = vpack.c.b16 %v5522, %v5518
        %v5619 = vpack.c.b16 %v5523, %v5519
        %v5620 = vpack.c.b16 %v5524, %v5520
        %v5621 = vpack.c.b16 %v5529, %v5525
        %v5622 = vpack.c.b16 %v5530, %v5526
        %v5623 = vpack.c.b16 %v5531, %v5527
        %v5624 = vpack.c.b16 %v5532, %v5528
        %v5625 = vpack.c.b16 %v5537, %v5533
        %v5626 = vpack.c.b16 %v5538, %v5534
        %v5627 = vpack.c.b16 %v5539, %v5535
        %v5628 = vpack.c.b16 %v5540, %v5536
        %v5629 = vpack.c.b16 %v5545, %v5541
        %v5630 = vpack.c.b16 %v5546, %v5542
        %v5631 = vpack.c.b16 %v5547, %v5543
        %v5632 = vpack.c.b16 %v5548, %v5544
        %v5633 = vpack.c.b16 %v5553, %v5549
        %v5634 = vpack.c.b16 %v5554, %v5550
        %v5635 = vpack.c.b16 %v5555, %v5551
        %v5636 = vpack.c.b16 %v5556, %v5552
        %v5637 = vpack.c.b16 %v5561, %v5557
        %v5638 = vpack.c.b16 %v5562, %v5558
        %v5639 = vpack.c.b16 %v5563, %v5559
        %v5640 = vpack.c.b16 %v5564, %v5560
        %v5641 = vpack.c.b16 %v5569, %v5565
        %v5642 = vpack.c.b16 %v5570, %v5566
        %v5643 = vpack.c.b16 %v5571, %v5567
        %v5644 = vpack.c.b16 %v5572, %v5568
        %v5645 = vpack.c.b16 %v5577, %v5573
        %v5646 = vpack.c.b16 %v5578, %v5574
        %v5647 = vpack.c.b16 %v5579, %v5575
        %v5648 = vpack.c.b16 %v5580, %v5576
        %v5649 = vpack.c.b16 %v5585, %v5581
        %v5650 = vpack.c.b16 %v5586, %v5582
        %v5651 = vpack.c.b16 %v5587, %v5583
        %v5652 = vpack.c.b16 %v5588, %v5584
        %5717 = vmatprep.subr.bf16.mxu0 %v5590
        %5718 = vmatpush1.bf16.msra.mxu0 %v5589
        %5719 = vmatprep.subr.bf16.mxu0 %v5594
        %5720 = vmatpush1.bf16.msra.mxu0 %v5593
        %5721 = vmatprep.subr.bf16.mxu0 %v5598
        %5722 = vmatpush1.bf16.msra.mxu0 %v5597
        %5723 = vmatprep.subr.bf16.mxu0 %v5602
        %5724 = vmatpush1.bf16.msra.mxu0 %v5601
        %5725 = vmatprep.subr.bf16.mxu0 %v5606
        %5726 = vmatpush1.bf16.msra.mxu0 %v5605
        %5727 = vmatprep.subr.bf16.mxu0 %v5610
        %5728 = vmatpush1.bf16.msra.mxu0 %v5609
        %5729 = vmatprep.subr.bf16.mxu0 %v5614
        %5730 = vmatpush1.bf16.msra.mxu0 %v5613
        %5731 = vmatprep.subr.bf16.mxu0 %v5618
        %5732 = vmatpush1.bf16.msra.mxu0 %v5617
        %5733 = vmatprep.subr.bf16.mxu0 %v5622
        %5734 = vmatpush1.bf16.msra.mxu0 %v5621
        %5735 = vmatprep.subr.bf16.mxu0 %v5626
        %5736 = vmatpush1.bf16.msra.mxu0 %v5625
        %5737 = vmatprep.subr.bf16.mxu0 %v5630
        %5738 = vmatpush1.bf16.msra.mxu0 %v5629
        %5739 = vmatprep.subr.bf16.mxu0 %v5634
        %5740 = vmatpush1.bf16.msra.mxu0 %v5633
        %5741 = vmatprep.subr.bf16.mxu0 %v5638
        %5742 = vmatpush1.bf16.msra.mxu0 %v5637
        %5743 = vmatprep.subr.bf16.mxu0 %v5642
        %5744 = vmatpush1.bf16.msra.mxu0 %v5641
        %5745 = vmatprep.subr.bf16.mxu0 %v5646
        %5746 = vmatpush1.bf16.msra.mxu0 %v5645
        %5747 = vmatprep.subr.bf16.mxu0 %v5650
        %5748 = vmatpush1.bf16.msra.mxu0 %v5649
        %5749 = vmatprep.mubr.bf16.mxu0 %v5293
        %5750 = vmatmul.mubr.bf16.gmra.mrb[0].mxu0 %v5292
        %v5751 = vpop.f32.mrb[0].mxu0
        %v5752 = vadd.f32 0.0, %v5751
        %v5753 = vpop.f32.mrb[0].mxu0
        %v5754 = vadd.f32 0.0, %v5753
        %v5755 = vpop.f32.mrb[0].mxu0
        %v5756 = vadd.f32 0.0, %v5755
        %v5757 = vpop.f32.mrb[0].mxu0
        %v5758 = vadd.f32 0.0, %v5757
        %5759 = vmatprep.mubr.bf16.mxu0 %v5295
        %5760 = vmatmul.mubr.bf16.gmra.mrb[0].mxu0 %v5294
        %v5761 = vpop.f32.mrb[0].mxu0
        %v5762 = vadd.f32 0.0, %v5761
        %v5763 = vpop.f32.mrb[0].mxu0
        %v5764 = vadd.f32 0.0, %v5763
        %v5765 = vpop.f32.mrb[0].mxu0
        %v5766 = vadd.f32 0.0, %v5765
        %v5767 = vpop.f32.mrb[0].mxu0
        %v5768 = vadd.f32 0.0, %v5767
        %5769 = vmatprep.mubr.bf16.mxu0 %v5297
        %5770 = vmatmul.mubr.bf16.gmra.mrb[0].mxu0 %v5296
        %v5771 = vpop.f32.mrb[0].mxu0
        %v5772 = vadd.f32 0.0, %v5771
        %v5773 = vpop.f32.mrb[0].mxu0
        %v5774 = vadd.f32 0.0, %v5773
        %v5775 = vpop.f32.mrb[0].mxu0
        %v5776 = vadd.f32 0.0, %v5775
        %v5777 = vpop.f32.mrb[0].mxu0
        %v5778 = vadd.f32 0.0, %v5777
        %5779 = vmatprep.mubr.bf16.mxu0 %v5299
        %5780 = vmatmul.mubr.bf16.gmra.mrb[0].mxu0 %v5298
        %v5781 = vpop.f32.mrb[0].mxu0
        %v5782 = vadd.f32 0.0, %v5781
        %v5783 = vpop.f32.mrb[0].mxu0
        %v5784 = vadd.f32 0.0, %v5783
        %v5785 = vpop.f32.mrb[0].mxu0
        %v5786 = vadd.f32 0.0, %v5785
        %v5787 = vpop.f32.mrb[0].mxu0
        %v5788 = vadd.f32 0.0, %v5787
        %5789 = vmatprep.mubr.bf16.mxu0 %v5301
        %5790 = vmatmul.mubr.bf16.gmra.mrb[0].mxu0 %v5300
        %v5791 = vpop.f32.mrb[0].mxu0
        %v5792 = vadd.f32 0.0, %v5791
        %v5793 = vpop.f32.mrb[0].mxu0
        %v5794 = vadd.f32 0.0, %v5793
        %v5795 = vpop.f32.mrb[0].mxu0
        %v5796 = vadd.f32 0.0, %v5795
        %v5797 = vpop.f32.mrb[0].mxu0
        %v5798 = vadd.f32 0.0, %v5797
        %5799 = vmatprep.mubr.bf16.mxu0 %v5303
        %5800 = vmatmul.mubr.bf16.gmra.mrb[0].mxu0 %v5302
        %v5801 = vpop.f32.mrb[0].mxu0
        %v5802 = vadd.f32 0.0, %v5801
        %v5803 = vpop.f32.mrb[0].mxu0
        %v5804 = vadd.f32 0.0, %v5803
        %v5805 = vpop.f32.mrb[0].mxu0
        %v5806 = vadd.f32 0.0, %v5805
        %v5807 = vpop.f32.mrb[0].mxu0
        %v5808 = vadd.f32 0.0, %v5807
        %5809 = vmatprep.mubr.bf16.mxu0 %v5305
        %5810 = vmatmul.mubr.bf16.gmra.mrb[0].mxu0 %v5304
        %v5811 = vpop.f32.mrb[0].mxu0
        %v5812 = vadd.f32 0.0, %v5811
        %v5813 = vpop.f32.mrb[0].mxu0
        %v5814 = vadd.f32 0.0, %v5813
        %v5815 = vpop.f32.mrb[0].mxu0
        %v5816 = vadd.f32 0.0, %v5815
        %v5817 = vpop.f32.mrb[0].mxu0
        %v5818 = vadd.f32 0.0, %v5817
        %5819 = vmatprep.mubr.bf16.mxu0 %v5307
        %5820 = vmatmul.mubr.bf16.gmra.mrb[0].mxu0 %v5306
        %v5821 = vpop.f32.mrb[0].mxu0
        %v5822 = vadd.f32 0.0, %v5821
        %v5823 = vpop.f32.mrb[0].mxu0
        %v5824 = vadd.f32 0.0, %v5823
        %v5825 = vpop.f32.mrb[0].mxu0
        %v5826 = vadd.f32 0.0, %v5825
        %v5827 = vpop.f32.mrb[0].mxu0
        %v5828 = vadd.f32 0.0, %v5827
        %5829 = vmatprep.mubr.bf16.mxu0 %v5309
        %5830 = vmatmul.mubr.bf16.gmra.mrb[0].mxu0 %v5308
        %v5831 = vpop.f32.mrb[0].mxu0
        %v5832 = vadd.f32 0.0, %v5831
        %v5833 = vpop.f32.mrb[0].mxu0
        %v5834 = vadd.f32 0.0, %v5833
        %v5835 = vpop.f32.mrb[0].mxu0
        %v5836 = vadd.f32 0.0, %v5835
        %v5837 = vpop.f32.mrb[0].mxu0
        %v5838 = vadd.f32 0.0, %v5837
        %5839 = vmatprep.mubr.bf16.mxu0 %v5311
        %5840 = vmatmul.mubr.bf16.gmra.mrb[0].mxu0 %v5310
        %v5841 = vpop.f32.mrb[0].mxu0
        %v5842 = vadd.f32 0.0, %v5841
        %v5843 = vpop.f32.mrb[0].mxu0
        %v5844 = vadd.f32 0.0, %v5843
        %v5845 = vpop.f32.mrb[0].mxu0
        %v5846 = vadd.f32 0.0, %v5845
        %v5847 = vpop.f32.mrb[0].mxu0
        %v5848 = vadd.f32 0.0, %v5847
        %5849 = vmatprep.mubr.bf16.mxu0 %v5313
        %5850 = vmatmul.mubr.bf16.gmra.mrb[0].mxu0 %v5312
        %v5851 = vpop.f32.mrb[0].mxu0
        %v5852 = vadd.f32 0.0, %v5851
        %v5853 = vpop.f32.mrb[0].mxu0
        %v5854 = vadd.f32 0.0, %v5853
        %v5855 = vpop.f32.mrb[0].mxu0
        %v5856 = vadd.f32 0.0, %v5855
        %v5857 = vpop.f32.mrb[0].mxu0
        %v5858 = vadd.f32 0.0, %v5857
        %5859 = vmatprep.mubr.bf16.mxu0 %v5315
        %5860 = vmatmul.mubr.bf16.gmra.mrb[0].mxu0 %v5314
        %v5861 = vpop.f32.mrb[0].mxu0
        %v5862 = vadd.f32 0.0, %v5861
        %v5863 = vpop.f32.mrb[0].mxu0
        %v5864 = vadd.f32 0.0, %v5863
        %v5865 = vpop.f32.mrb[0].mxu0
        %v5866 = vadd.f32 0.0, %v5865
        %v5867 = vpop.f32.mrb[0].mxu0
        %v5868 = vadd.f32 0.0, %v5867
        %5869 = vmatprep.mubr.bf16.mxu0 %v5317
        %5870 = vmatmul.mubr.bf16.gmra.mrb[0].mxu0 %v5316
        %v5871 = vpop.f32.mrb[0].mxu0
        %v5872 = vadd.f32 0.0, %v5871
        %v5873 = vpop.f32.mrb[0].mxu0
        %v5874 = vadd.f32 0.0, %v5873
        %v5875 = vpop.f32.mrb[0].mxu0
        %v5876 = vadd.f32 0.0, %v5875
        %v5877 = vpop.f32.mrb[0].mxu0
        %v5878 = vadd.f32 0.0, %v5877
        %5879 = vmatprep.mubr.bf16.mxu0 %v5319
        %5880 = vmatmul.mubr.bf16.gmra.mrb[0].mxu0 %v5318
        %v5881 = vpop.f32.mrb[0].mxu0
        %v5882 = vadd.f32 0.0, %v5881
        %v5883 = vpop.f32.mrb[0].mxu0
        %v5884 = vadd.f32 0.0, %v5883
        %v5885 = vpop.f32.mrb[0].mxu0
        %v5886 = vadd.f32 0.0, %v5885
        %v5887 = vpop.f32.mrb[0].mxu0
        %v5888 = vadd.f32 0.0, %v5887
        %5889 = vmatprep.mubr.bf16.mxu0 %v5321
        %5890 = vmatmul.mubr.bf16.gmra.mrb[0].mxu0 %v5320
        %v5891 = vpop.f32.mrb[0].mxu0
        %v5892 = vadd.f32 0.0, %v5891
        %v5893 = vpop.f32.mrb[0].mxu0
        %v5894 = vadd.f32 0.0, %v5893
        %v5895 = vpop.f32.mrb[0].mxu0
        %v5896 = vadd.f32 0.0, %v5895
        %v5897 = vpop.f32.mrb[0].mxu0
        %v5898 = vadd.f32 0.0, %v5897
        %5899 = vmatprep.mubr.bf16.mxu0 %v5323
        %5900 = vmatmul.mubr.bf16.gmra.mrb[0].mxu0 %v5322
        %v5901 = vpop.f32.mrb[0].mxu0
        %v5902 = vadd.f32 0.0, %v5901
        %v5903 = vpop.f32.mrb[0].mxu0
        %v5904 = vadd.f32 0.0, %v5903
        %v5905 = vpop.f32.mrb[0].mxu0
        %v5906 = vadd.f32 0.0, %v5905
        %v5907 = vpop.f32.mrb[0].mxu0
        %v5908 = vadd.f32 0.0, %v5907
        %5909 = vmatprep.mubr.bf16.mxu0 %v5325
        %5910 = vmatmul.mubr.bf16.gmra.mrb[0].mxu0 %v5324
        %v5911 = vpop.f32.mrb[0].mxu0
        %v5912 = vadd.f32 0.0, %v5911
        %v5913 = vpop.f32.mrb[0].mxu0
        %v5914 = vadd.f32 0.0, %v5913
        %v5915 = vpop.f32.mrb[0].mxu0
        %v5916 = vadd.f32 0.0, %v5915
        %v5917 = vpop.f32.mrb[0].mxu0
        %v5918 = vadd.f32 0.0, %v5917
        %5919 = vmatprep.mubr.bf16.mxu0 %v5327
        %5920 = vmatmul.mubr.bf16.gmra.mrb[0].mxu0 %v5326
        %v5921 = vpop.f32.mrb[0].mxu0
        %v5922 = vadd.f32 0.0, %v5921
        %v5923 = vpop.f32.mrb[0].mxu0
        %v5924 = vadd.f32 0.0, %v5923
        %v5925 = vpop.f32.mrb[0].mxu0
        %v5926 = vadd.f32 0.0, %v5925
        %v5927 = vpop.f32.mrb[0].mxu0
        %v5928 = vadd.f32 0.0, %v5927
        %5929 = vmatprep.mubr.bf16.mxu0 %v5329
        %5930 = vmatmul.mubr.bf16.gmra.mrb[0].mxu0 %v5328
        %v5931 = vpop.f32.mrb[0].mxu0
        %v5932 = vadd.f32 0.0, %v5931
        %v5933 = vpop.f32.mrb[0].mxu0
        %v5934 = vadd.f32 0.0, %v5933
        %v5935 = vpop.f32.mrb[0].mxu0
        %v5936 = vadd.f32 0.0, %v5935
        %v5937 = vpop.f32.mrb[0].mxu0
        %v5938 = vadd.f32 0.0, %v5937
        %5939 = vmatprep.mubr.bf16.mxu0 %v5331
        %5940 = vmatmul.mubr.bf16.gmra.mrb[0].mxu0 %v5330
        %v5941 = vpop.f32.mrb[0].mxu0
        %v5942 = vadd.f32 0.0, %v5941
        %v5943 = vpop.f32.mrb[0].mxu0
        %v5944 = vadd.f32 0.0, %v5943
        %v5945 = vpop.f32.mrb[0].mxu0
        %v5946 = vadd.f32 0.0, %v5945
        %v5947 = vpop.f32.mrb[0].mxu0
        %v5948 = vadd.f32 0.0, %v5947
        %5949 = vdwg.mxu0
        %5950 = vmatprep.subr.bf16.mxu0 %v5592
        %5951 = vmatpush1.bf16.msra.mxu0 %v5591
        %5952 = vmatprep.subr.bf16.mxu0 %v5596
        %5953 = vmatpush1.bf16.msra.mxu0 %v5595
        %5954 = vmatprep.subr.bf16.mxu0 %v5600
        %5955 = vmatpush1.bf16.msra.mxu0 %v5599
        %5956 = vmatprep.subr.bf16.mxu0 %v5604
        %5957 = vmatpush1.bf16.msra.mxu0 %v5603
        %5958 = vmatprep.subr.bf16.mxu0 %v5608
        %5959 = vmatpush1.bf16.msra.mxu0 %v5607
        %5960 = vmatprep.subr.bf16.mxu0 %v5612
        %5961 = vmatpush1.bf16.msra.mxu0 %v5611
        %5962 = vmatprep.subr.bf16.mxu0 %v5616
        %5963 = vmatpush1.bf16.msra.mxu0 %v5615
        %5964 = vmatprep.subr.bf16.mxu0 %v5620
        %5965 = vmatpush1.bf16.msra.mxu0 %v5619
        %5966 = vmatprep.subr.bf16.mxu0 %v5624
        %5967 = vmatpush1.bf16.msra.mxu0 %v5623
        %5968 = vmatprep.subr.bf16.mxu0 %v5628
        %5969 = vmatpush1.bf16.msra.mxu0 %v5627
        %5970 = vmatprep.subr.bf16.mxu0 %v5632
        %5971 = vmatpush1.bf16.msra.mxu0 %v5631
        %5972 = vmatprep.subr.bf16.mxu0 %v5636
        %5973 = vmatpush1.bf16.msra.mxu0 %v5635
        %5974 = vmatprep.subr.bf16.mxu0 %v5640
        %5975 = vmatpush1.bf16.msra.mxu0 %v5639
        %5976 = vmatprep.subr.bf16.mxu0 %v5644
        %5977 = vmatpush1.bf16.msra.mxu0 %v5643
        %5978 = vmatprep.subr.bf16.mxu0 %v5648
        %5979 = vmatpush1.bf16.msra.mxu0 %v5647
        %5980 = vmatprep.subr.bf16.mxu0 %v5652
        %5981 = vmatpush1.bf16.msra.mxu0 %v5651
        %5982 = vmatprep.mubr.bf16.mxu0 %v5293
        %5983 = vmatmul.mubr.bf16.gmra.mrb[0].mxu0 %v5292
        %v5984 = vpop.f32.mrb[0].mxu0
        %v5985 = vadd.f32 0.0, %v5984
        %v5986 = vpop.f32.mrb[0].mxu0
        %v5987 = vadd.f32 0.0, %v5986
        %v5988 = vpop.f32.mrb[0].mxu0
        %v5989 = vadd.f32 0.0, %v5988
        %v5990 = vpop.f32.mrb[0].mxu0
        %v5991 = vadd.f32 0.0, %v5990
        %5992 = vmatprep.mubr.bf16.mxu0 %v5295
        %5993 = vmatmul.mubr.bf16.gmra.mrb[0].mxu0 %v5294
        %v5994 = vpop.f32.mrb[0].mxu0
        %v5995 = vadd.f32 0.0, %v5994
        %v5996 = vpop.f32.mrb[0].mxu0
        %v5997 = vadd.f32 0.0, %v5996
        %v5998 = vpop.f32.mrb[0].mxu0
        %v5999 = vadd.f32 0.0, %v5998
        %v6000 = vpop.f32.mrb[0].mxu0
        %v6001 = vadd.f32 0.0, %v6000
        %6002 = vmatprep.mubr.bf16.mxu0 %v5297
        %6003 = vmatmul.mubr.bf16.gmra.mrb[0].mxu0 %v5296
        %v6004 = vpop.f32.mrb[0].mxu0
        %v6005 = vadd.f32 0.0, %v6004
        %v6006 = vpop.f32.mrb[0].mxu0
        %v6007 = vadd.f32 0.0, %v6006
        %v6008 = vpop.f32.mrb[0].mxu0
        %v6009 = vadd.f32 0.0, %v6008
        %v6010 = vpop.f32.mrb[0].mxu0
        %v6011 = vadd.f32 0.0, %v6010
        %6012 = vmatprep.mubr.bf16.mxu0 %v5299
        %6013 = vmatmul.mubr.bf16.gmra.mrb[0].mxu0 %v5298
        %v6014 = vpop.f32.mrb[0].mxu0
        %v6015 = vadd.f32 0.0, %v6014
        %v6016 = vpop.f32.mrb[0].mxu0
        %v6017 = vadd.f32 0.0, %v6016
        %v6018 = vpop.f32.mrb[0].mxu0
        %v6019 = vadd.f32 0.0, %v6018
        %v6020 = vpop.f32.mrb[0].mxu0
        %v6021 = vadd.f32 0.0, %v6020
        %6022 = vmatprep.mubr.bf16.mxu0 %v5301
        %6023 = vmatmul.mubr.bf16.gmra.mrb[0].mxu0 %v5300
        %v6024 = vpop.f32.mrb[0].mxu0
        %v6025 = vadd.f32 0.0, %v6024
        %v6026 = vpop.f32.mrb[0].mxu0
        %v6027 = vadd.f32 0.0, %v6026
        %v6028 = vpop.f32.mrb[0].mxu0
        %v6029 = vadd.f32 0.0, %v6028
        %v6030 = vpop.f32.mrb[0].mxu0
        %v6031 = vadd.f32 0.0, %v6030
        %6032 = vmatprep.mubr.bf16.mxu0 %v5303
        %6033 = vmatmul.mubr.bf16.gmra.mrb[0].mxu0 %v5302
        %v6034 = vpop.f32.mrb[0].mxu0
        %v6035 = vadd.f32 0.0, %v6034
        %v6036 = vpop.f32.mrb[0].mxu0
        %v6037 = vadd.f32 0.0, %v6036
        %v6038 = vpop.f32.mrb[0].mxu0
        %v6039 = vadd.f32 0.0, %v6038
        %v6040 = vpop.f32.mrb[0].mxu0
        %v6041 = vadd.f32 0.0, %v6040
        %6042 = vmatprep.mubr.bf16.mxu0 %v5305
        %6043 = vmatmul.mubr.bf16.gmra.mrb[0].mxu0 %v5304
        %v6044 = vpop.f32.mrb[0].mxu0
        %v6045 = vadd.f32 0.0, %v6044
        %v6046 = vpop.f32.mrb[0].mxu0
        %v6047 = vadd.f32 0.0, %v6046
        %v6048 = vpop.f32.mrb[0].mxu0
        %v6049 = vadd.f32 0.0, %v6048
        %v6050 = vpop.f32.mrb[0].mxu0
        %v6051 = vadd.f32 0.0, %v6050
        %6052 = vmatprep.mubr.bf16.mxu0 %v5307
        %6053 = vmatmul.mubr.bf16.gmra.mrb[0].mxu0 %v5306
        %v6054 = vpop.f32.mrb[0].mxu0
        %v6055 = vadd.f32 0.0, %v6054
        %v6056 = vpop.f32.mrb[0].mxu0
        %v6057 = vadd.f32 0.0, %v6056
        %v6058 = vpop.f32.mrb[0].mxu0
        %v6059 = vadd.f32 0.0, %v6058
        %v6060 = vpop.f32.mrb[0].mxu0
        %v6061 = vadd.f32 0.0, %v6060
        %6062 = vmatprep.mubr.bf16.mxu0 %v5309
        %6063 = vmatmul.mubr.bf16.gmra.mrb[0].mxu0 %v5308
        %v6064 = vpop.f32.mrb[0].mxu0
        %v6065 = vadd.f32 0.0, %v6064
        %v6066 = vpop.f32.mrb[0].mxu0
        %v6067 = vadd.f32 0.0, %v6066
        %v6068 = vpop.f32.mrb[0].mxu0
        %v6069 = vadd.f32 0.0, %v6068
        %v6070 = vpop.f32.mrb[0].mxu0
        %v6071 = vadd.f32 0.0, %v6070
        %6072 = vmatprep.mubr.bf16.mxu0 %v5311
        %6073 = vmatmul.mubr.bf16.gmra.mrb[0].mxu0 %v5310
        %v6074 = vpop.f32.mrb[0].mxu0
        %v6075 = vadd.f32 0.0, %v6074
        %v6076 = vpop.f32.mrb[0].mxu0
        %v6077 = vadd.f32 0.0, %v6076
        %v6078 = vpop.f32.mrb[0].mxu0
        %v6079 = vadd.f32 0.0, %v6078
        %v6080 = vpop.f32.mrb[0].mxu0
        %v6081 = vadd.f32 0.0, %v6080
        %6082 = vmatprep.mubr.bf16.mxu0 %v5313
        %6083 = vmatmul.mubr.bf16.gmra.mrb[0].mxu0 %v5312
        %v6084 = vpop.f32.mrb[0].mxu0
        %v6085 = vadd.f32 0.0, %v6084
        %v6086 = vpop.f32.mrb[0].mxu0
        %v6087 = vadd.f32 0.0, %v6086
        %v6088 = vpop.f32.mrb[0].mxu0
        %v6089 = vadd.f32 0.0, %v6088
        %v6090 = vpop.f32.mrb[0].mxu0
        %v6091 = vadd.f32 0.0, %v6090
        %6092 = vmatprep.mubr.bf16.mxu0 %v5315
        %6093 = vmatmul.mubr.bf16.gmra.mrb[0].mxu0 %v5314
        %v6094 = vpop.f32.mrb[0].mxu0
        %v6095 = vadd.f32 0.0, %v6094
        %v6096 = vpop.f32.mrb[0].mxu0
        %v6097 = vadd.f32 0.0, %v6096
        %v6098 = vpop.f32.mrb[0].mxu0
        %v6099 = vadd.f32 0.0, %v6098
        %v6100 = vpop.f32.mrb[0].mxu0
        %v6101 = vadd.f32 0.0, %v6100
        %6102 = vmatprep.mubr.bf16.mxu0 %v5317
        %6103 = vmatmul.mubr.bf16.gmra.mrb[0].mxu0 %v5316
        %v6104 = vpop.f32.mrb[0].mxu0
        %v6105 = vadd.f32 0.0, %v6104
        %v6106 = vpop.f32.mrb[0].mxu0
        %v6107 = vadd.f32 0.0, %v6106
        %v6108 = vpop.f32.mrb[0].mxu0
        %v6109 = vadd.f32 0.0, %v6108
        %v6110 = vpop.f32.mrb[0].mxu0
        %v6111 = vadd.f32 0.0, %v6110
        %6112 = vmatprep.mubr.bf16.mxu0 %v5319
        %6113 = vmatmul.mubr.bf16.gmra.mrb[0].mxu0 %v5318
        %v6114 = vpop.f32.mrb[0].mxu0
        %v6115 = vadd.f32 0.0, %v6114
        %v6116 = vpop.f32.mrb[0].mxu0
        %v6117 = vadd.f32 0.0, %v6116
        %v6118 = vpop.f32.mrb[0].mxu0
        %v6119 = vadd.f32 0.0, %v6118
        %v6120 = vpop.f32.mrb[0].mxu0
        %v6121 = vadd.f32 0.0, %v6120
        %6122 = vmatprep.mubr.bf16.mxu0 %v5321
        %6123 = vmatmul.mubr.bf16.gmra.mrb[0].mxu0 %v5320
        %v6124 = vpop.f32.mrb[0].mxu0
        %v6125 = vadd.f32 0.0, %v6124
        %v6126 = vpop.f32.mrb[0].mxu0
        %v6127 = vadd.f32 0.0, %v6126
        %v6128 = vpop.f32.mrb[0].mxu0
        %v6129 = vadd.f32 0.0, %v6128
        %v6130 = vpop.f32.mrb[0].mxu0
        %v6131 = vadd.f32 0.0, %v6130
        %6132 = vmatprep.mubr.bf16.mxu0 %v5323
        %6133 = vmatmul.mubr.bf16.gmra.mrb[0].mxu0 %v5322
        %v6134 = vpop.f32.mrb[0].mxu0
        %v6135 = vadd.f32 0.0, %v6134
        %v6136 = vpop.f32.mrb[0].mxu0
        %v6137 = vadd.f32 0.0, %v6136
        %v6138 = vpop.f32.mrb[0].mxu0
        %v6139 = vadd.f32 0.0, %v6138
        %v6140 = vpop.f32.mrb[0].mxu0
        %v6141 = vadd.f32 0.0, %v6140
        %6142 = vmatprep.mubr.bf16.mxu0 %v5325
        %6143 = vmatmul.mubr.bf16.gmra.mrb[0].mxu0 %v5324
        %v6144 = vpop.f32.mrb[0].mxu0
        %v6145 = vadd.f32 0.0, %v6144
        %v6146 = vpop.f32.mrb[0].mxu0
        %v6147 = vadd.f32 0.0, %v6146
        %v6148 = vpop.f32.mrb[0].mxu0
        %v6149 = vadd.f32 0.0, %v6148
        %v6150 = vpop.f32.mrb[0].mxu0
        %v6151 = vadd.f32 0.0, %v6150
        %6152 = vmatprep.mubr.bf16.mxu0 %v5327
        %6153 = vmatmul.mubr.bf16.gmra.mrb[0].mxu0 %v5326
        %v6154 = vpop.f32.mrb[0].mxu0
        %v6155 = vadd.f32 0.0, %v6154
        %v6156 = vpop.f32.mrb[0].mxu0
        %v6157 = vadd.f32 0.0, %v6156
        %v6158 = vpop.f32.mrb[0].mxu0
        %v6159 = vadd.f32 0.0, %v6158
        %v6160 = vpop.f32.mrb[0].mxu0
        %v6161 = vadd.f32 0.0, %v6160
        %6162 = vmatprep.mubr.bf16.mxu0 %v5329
        %6163 = vmatmul.mubr.bf16.gmra.mrb[0].mxu0 %v5328
        %v6164 = vpop.f32.mrb[0].mxu0
        %v6165 = vadd.f32 0.0, %v6164
        %v6166 = vpop.f32.mrb[0].mxu0
        %v6167 = vadd.f32 0.0, %v6166
        %v6168 = vpop.f32.mrb[0].mxu0
        %v6169 = vadd.f32 0.0, %v6168
        %v6170 = vpop.f32.mrb[0].mxu0
        %v6171 = vadd.f32 0.0, %v6170
        %6172 = vmatprep.mubr.bf16.mxu0 %v5331
        %6173 = vmatmul.mubr.bf16.gmra.mrb[0].mxu0 %v5330
        %v6174 = vpop.f32.mrb[0].mxu0
        %v6175 = vadd.f32 0.0, %v6174
        %v6176 = vpop.f32.mrb[0].mxu0
        %v6177 = vadd.f32 0.0, %v6176
        %v6178 = vpop.f32.mrb[0].mxu0
        %v6179 = vadd.f32 0.0, %v6178
        %v6180 = vpop.f32.mrb[0].mxu0
        %v6181 = vadd.f32 0.0, %v6180
        %6182 = vdwg.mxu0
        %v6183 = vadd.f32 %v4861, %v5752
        %v6184 = vadd.f32 %v4863, %v5754
        %v6185 = vadd.f32 %v5094, %v5985
        %v6186 = vadd.f32 %v5096, %v5987
        %v6187 = vadd.f32 %v4865, %v5756
        %v6188 = vadd.f32 %v4867, %v5758
        %v6189 = vadd.f32 %v5098, %v5989
        %v6190 = vadd.f32 %v5100, %v5991
        %v6191 = vadd.f32 %v4871, %v5762
        %v6192 = vadd.f32 %v4873, %v5764
        %v6193 = vadd.f32 %v5104, %v5995
        %v6194 = vadd.f32 %v5106, %v5997
        %v6195 = vadd.f32 %v4875, %v5766
        %v6196 = vadd.f32 %v4877, %v5768
        %v6197 = vadd.f32 %v5108, %v5999
        %v6198 = vadd.f32 %v5110, %v6001
        %v6199 = vadd.f32 %v4881, %v5772
        %v6200 = vadd.f32 %v4883, %v5774
        %v6201 = vadd.f32 %v5114, %v6005
        %v6202 = vadd.f32 %v5116, %v6007
        %v6203 = vadd.f32 %v4885, %v5776
        %v6204 = vadd.f32 %v4887, %v5778
        %v6205 = vadd.f32 %v5118, %v6009
        %v6206 = vadd.f32 %v5120, %v6011
        %v6207 = vadd.f32 %v4891, %v5782
        %v6208 = vadd.f32 %v4893, %v5784
        %v6209 = vadd.f32 %v5124, %v6015
        %v6210 = vadd.f32 %v5126, %v6017
        %v6211 = vadd.f32 %v4895, %v5786
        %v6212 = vadd.f32 %v4897, %v5788
        %v6213 = vadd.f32 %v5128, %v6019
        %v6214 = vadd.f32 %v5130, %v6021
        %v6215 = vadd.f32 %v4901, %v5792
        %v6216 = vadd.f32 %v4903, %v5794
        %v6217 = vadd.f32 %v5134, %v6025
        %v6218 = vadd.f32 %v5136, %v6027
        %v6219 = vadd.f32 %v4905, %v5796
        %v6220 = vadd.f32 %v4907, %v5798
        %v6221 = vadd.f32 %v5138, %v6029
        %v6222 = vadd.f32 %v5140, %v6031
        %v6223 = vadd.f32 %v4911, %v5802
        %v6224 = vadd.f32 %v4913, %v5804
        %v6225 = vadd.f32 %v5144, %v6035
        %v6226 = vadd.f32 %v5146, %v6037
        %v6227 = vadd.f32 %v4915, %v5806
        %v6228 = vadd.f32 %v4917, %v5808
        %v6229 = vadd.f32 %v5148, %v6039
        %v6230 = vadd.f32 %v5150, %v6041
        %v6231 = vadd.f32 %v4921, %v5812
        %v6232 = vadd.f32 %v4923, %v5814
        %v6233 = vadd.f32 %v5154, %v6045
        %v6234 = vadd.f32 %v5156, %v6047
        %v6235 = vadd.f32 %v4925, %v5816
        %v6236 = vadd.f32 %v4927, %v5818
        %v6237 = vadd.f32 %v5158, %v6049
        %v6238 = vadd.f32 %v5160, %v6051
        %v6239 = vadd.f32 %v4931, %v5822
        %v6240 = vadd.f32 %v4933, %v5824
        %v6241 = vadd.f32 %v5164, %v6055
        %v6242 = vadd.f32 %v5166, %v6057
        %v6243 = vadd.f32 %v4935, %v5826
        %v6244 = vadd.f32 %v4937, %v5828
        %v6245 = vadd.f32 %v5168, %v6059
        %v6246 = vadd.f32 %v5170, %v6061
        %v6247 = vadd.f32 %v4941, %v5832
        %v6248 = vadd.f32 %v4943, %v5834
        %v6249 = vadd.f32 %v5174, %v6065
        %v6250 = vadd.f32 %v5176, %v6067
        %v6251 = vadd.f32 %v4945, %v5836
        %v6252 = vadd.f32 %v4947, %v5838
        %v6253 = vadd.f32 %v5178, %v6069
        %v6254 = vadd.f32 %v5180, %v6071
        %v6255 = vadd.f32 %v4951, %v5842
        %v6256 = vadd.f32 %v4953, %v5844
        %v6257 = vadd.f32 %v5184, %v6075
        %v6258 = vadd.f32 %v5186, %v6077
        %v6259 = vadd.f32 %v4955, %v5846
        %v6260 = vadd.f32 %v4957, %v5848
        %v6261 = vadd.f32 %v5188, %v6079
        %v6262 = vadd.f32 %v5190, %v6081
        %v6263 = vadd.f32 %v4961, %v5852
        %v6264 = vadd.f32 %v4963, %v5854
        %v6265 = vadd.f32 %v5194, %v6085
        %v6266 = vadd.f32 %v5196, %v6087
        %v6267 = vadd.f32 %v4965, %v5856
        %v6268 = vadd.f32 %v4967, %v5858
        %v6269 = vadd.f32 %v5198, %v6089
        %v6270 = vadd.f32 %v5200, %v6091
        %v6271 = vadd.f32 %v4971, %v5862
        %v6272 = vadd.f32 %v4973, %v5864
        %v6273 = vadd.f32 %v5204, %v6095
        %v6274 = vadd.f32 %v5206, %v6097
        %v6275 = vadd.f32 %v4975, %v5866
        %v6276 = vadd.f32 %v4977, %v5868
        %v6277 = vadd.f32 %v5208, %v6099
        %v6278 = vadd.f32 %v5210, %v6101
        %v6279 = vadd.f32 %v4981, %v5872
        %v6280 = vadd.f32 %v4983, %v5874
        %v6281 = vadd.f32 %v5214, %v6105
        %v6282 = vadd.f32 %v5216, %v6107
        %v6283 = vadd.f32 %v4985, %v5876
        %v6284 = vadd.f32 %v4987, %v5878
        %v6285 = vadd.f32 %v5218, %v6109
        %v6286 = vadd.f32 %v5220, %v6111
        %v6287 = vadd.f32 %v4991, %v5882
        %v6288 = vadd.f32 %v4993, %v5884
        %v6289 = vadd.f32 %v5224, %v6115
        %v6290 = vadd.f32 %v5226, %v6117
        %v6291 = vadd.f32 %v4995, %v5886
        %v6292 = vadd.f32 %v4997, %v5888
        %v6293 = vadd.f32 %v5228, %v6119
        %v6294 = vadd.f32 %v5230, %v6121
        %v6295 = vadd.f32 %v5001, %v5892
        %v6296 = vadd.f32 %v5003, %v5894
        %v6297 = vadd.f32 %v5234, %v6125
        %v6298 = vadd.f32 %v5236, %v6127
        %v6299 = vadd.f32 %v5005, %v5896
        %v6300 = vadd.f32 %v5007, %v5898
        %v6301 = vadd.f32 %v5238, %v6129
        %v6302 = vadd.f32 %v5240, %v6131
        %v6303 = vadd.f32 %v5011, %v5902
        %v6304 = vadd.f32 %v5013, %v5904
        %v6305 = vadd.f32 %v5244, %v6135
        %v6306 = vadd.f32 %v5246, %v6137
        %v6307 = vadd.f32 %v5015, %v5906
        %v6308 = vadd.f32 %v5017, %v5908
        %v6309 = vadd.f32 %v5248, %v6139
        %v6310 = vadd.f32 %v5250, %v6141
        %v6311 = vadd.f32 %v5021, %v5912
        %v6312 = vadd.f32 %v5023, %v5914
        %v6313 = vadd.f32 %v5254, %v6145
        %v6314 = vadd.f32 %v5256, %v6147
        %v6315 = vadd.f32 %v5025, %v5916
        %v6316 = vadd.f32 %v5027, %v5918
        %v6317 = vadd.f32 %v5258, %v6149
        %v6318 = vadd.f32 %v5260, %v6151
        %v6319 = vadd.f32 %v5031, %v5922
        %v6320 = vadd.f32 %v5033, %v5924
        %v6321 = vadd.f32 %v5264, %v6155
        %v6322 = vadd.f32 %v5266, %v6157
        %v6323 = vadd.f32 %v5035, %v5926
        %v6324 = vadd.f32 %v5037, %v5928
        %v6325 = vadd.f32 %v5268, %v6159
        %v6326 = vadd.f32 %v5270, %v6161
        %v6327 = vadd.f32 %v5041, %v5932
        %v6328 = vadd.f32 %v5043, %v5934
        %v6329 = vadd.f32 %v5274, %v6165
        %v6330 = vadd.f32 %v5276, %v6167
        %v6331 = vadd.f32 %v5045, %v5936
        %v6332 = vadd.f32 %v5047, %v5938
        %v6333 = vadd.f32 %v5278, %v6169
        %v6334 = vadd.f32 %v5280, %v6171
        %v6335 = vadd.f32 %v5051, %v5942
        %v6336 = vadd.f32 %v5053, %v5944
        %v6337 = vadd.f32 %v5284, %v6175
        %v6338 = vadd.f32 %v5286, %v6177
        %v6339 = vadd.f32 %v5055, %v5946
        %v6340 = vadd.f32 %v5057, %v5948
        %v6341 = vadd.f32 %v5288, %v6179
        %v6342 = vadd.f32 %v5290, %v6181
        %6343 = vst [vmem:[#allocation4] sm:$0xff] %v6183
        %6344 = vst [vmem:[#allocation4 + $0x8] sm:$0xff] %v6184
        %6345 = vst [vmem:[#allocation4 + $0x10] sm:$0xff] %v6185
        %vm6346 = vcmask 261120
        %6347 = vst.msk [vmem:[#allocation4 + $0x18] sm:$0xff] %vm6346, %v6186
        %6348 = vst [vmem:[#allocation4 + $0x20] sm:$0xff] %v6187
        %6349 = vst [vmem:[#allocation4 + $0x28] sm:$0xff] %v6188
        %6350 = vst [vmem:[#allocation4 + $0x30] sm:$0xff] %v6189
        %6351 = vst.msk [vmem:[#allocation4 + $0x38] sm:$0xff] %vm6346, %v6190
        %6352 = vst [vmem:[#allocation4 + $0x40] sm:$0xff] %v6191
        %6353 = vst [vmem:[#allocation4 + $0x48] sm:$0xff] %v6192
        %6354 = vst [vmem:[#allocation4 + $0x50] sm:$0xff] %v6193
        %6355 = vst.msk [vmem:[#allocation4 + $0x58] sm:$0xff] %vm6346, %v6194
        %6356 = vst [vmem:[#allocation4 + $0x60] sm:$0xff] %v6195
        %6357 = vst [vmem:[#allocation4 + $0x68] sm:$0xff] %v6196
        %6358 = vst [vmem:[#allocation4 + $0x70] sm:$0xff] %v6197
        %6359 = vst.msk [vmem:[#allocation4 + $0x78] sm:$0xff] %vm6346, %v6198
        %6360 = vst [vmem:[#allocation4 + $0x80] sm:$0xff] %v6199
        %6361 = vst [vmem:[#allocation4 + $0x88] sm:$0xff] %v6200
        %6362 = vst [vmem:[#allocation4 + $0x90] sm:$0xff] %v6201
        %6363 = vst.msk [vmem:[#allocation4 + $0x98] sm:$0xff] %vm6346, %v6202
        %6364 = vst [vmem:[#allocation4 + $0xa0] sm:$0xff] %v6203
        %6365 = vst [vmem:[#allocation4 + $0xa8] sm:$0xff] %v6204
        %6366 = vst [vmem:[#allocation4 + $0xb0] sm:$0xff] %v6205
        %6367 = vst.msk [vmem:[#allocation4 + $0xb8] sm:$0xff] %vm6346, %v6206
        %6368 = vst [vmem:[#allocation4 + $0xc0] sm:$0xff] %v6207
        %6369 = vst [vmem:[#allocation4 + $0xc8] sm:$0xff] %v6208
        %6370 = vst [vmem:[#allocation4 + $0xd0] sm:$0xff] %v6209
        %6371 = vst.msk [vmem:[#allocation4 + $0xd8] sm:$0xff] %vm6346, %v6210
        %6372 = vst [vmem:[#allocation4 + $0xe0] sm:$0xff] %v6211
        %6373 = vst [vmem:[#allocation4 + $0xe8] sm:$0xff] %v6212
        %6374 = vst [vmem:[#allocation4 + $0xf0] sm:$0xff] %v6213
        %6375 = vst.msk [vmem:[#allocation4 + $0xf8] sm:$0xff] %vm6346, %v6214
        %6376 = vst [vmem:[#allocation4 + $0x100] sm:$0xff] %v6215
        %6377 = vst [vmem:[#allocation4 + $0x108] sm:$0xff] %v6216
        %6378 = vst [vmem:[#allocation4 + $0x110] sm:$0xff] %v6217
        %6379 = vst.msk [vmem:[#allocation4 + $0x118] sm:$0xff] %vm6346, %v6218
        %6380 = vst [vmem:[#allocation4 + $0x120] sm:$0xff] %v6219
        %6381 = vst [vmem:[#allocation4 + $0x128] sm:$0xff] %v6220
        %6382 = vst [vmem:[#allocation4 + $0x130] sm:$0xff] %v6221
        %6383 = vst.msk [vmem:[#allocation4 + $0x138] sm:$0xff] %vm6346, %v6222
        %6384 = vst [vmem:[#allocation4 + $0x140] sm:$0xff] %v6223
        %6385 = vst [vmem:[#allocation4 + $0x148] sm:$0xff] %v6224
        %6386 = vst [vmem:[#allocation4 + $0x150] sm:$0xff] %v6225
        %6387 = vst.msk [vmem:[#allocation4 + $0x158] sm:$0xff] %vm6346, %v6226
        %6388 = vst [vmem:[#allocation4 + $0x160] sm:$0xff] %v6227
        %6389 = vst [vmem:[#allocation4 + $0x168] sm:$0xff] %v6228
        %6390 = vst [vmem:[#allocation4 + $0x170] sm:$0xff] %v6229
        %6391 = vst.msk [vmem:[#allocation4 + $0x178] sm:$0xff] %vm6346, %v6230
        %6392 = vst [vmem:[#allocation4 + $0x180] sm:$0xff] %v6231
        %6393 = vst [vmem:[#allocation4 + $0x188] sm:$0xff] %v6232
        %6394 = vst [vmem:[#allocation4 + $0x190] sm:$0xff] %v6233
        %6395 = vst.msk [vmem:[#allocation4 + $0x198] sm:$0xff] %vm6346, %v6234
        %6396 = vst [vmem:[#allocation4 + $0x1a0] sm:$0xff] %v6235
        %6397 = vst [vmem:[#allocation4 + $0x1a8] sm:$0xff] %v6236
        %6398 = vst [vmem:[#allocation4 + $0x1b0] sm:$0xff] %v6237
        %6399 = vst.msk [vmem:[#allocation4 + $0x1b8] sm:$0xff] %vm6346, %v6238
        %6400 = vst [vmem:[#allocation4 + $0x1c0] sm:$0xff] %v6239
        %6401 = vst [vmem:[#allocation4 + $0x1c8] sm:$0xff] %v6240
        %6402 = vst [vmem:[#allocation4 + $0x1d0] sm:$0xff] %v6241
        %6403 = vst.msk [vmem:[#allocation4 + $0x1d8] sm:$0xff] %vm6346, %v6242
        %6404 = vst [vmem:[#allocation4 + $0x1e0] sm:$0xff] %v6243
        %6405 = vst [vmem:[#allocation4 + $0x1e8] sm:$0xff] %v6244
        %6406 = vst [vmem:[#allocation4 + $0x1f0] sm:$0xff] %v6245
        %6407 = vst.msk [vmem:[#allocation4 + $0x1f8] sm:$0xff] %vm6346, %v6246
        %6408 = vst [vmem:[#allocation4 + $0x200] sm:$0xff] %v6247
        %6409 = vst [vmem:[#allocation4 + $0x208] sm:$0xff] %v6248
        %6410 = vst [vmem:[#allocation4 + $0x210] sm:$0xff] %v6249
        %6411 = vst.msk [vmem:[#allocation4 + $0x218] sm:$0xff] %vm6346, %v6250
        %6412 = vst [vmem:[#allocation4 + $0x220] sm:$0xff] %v6251
        %6413 = vst [vmem:[#allocation4 + $0x228] sm:$0xff] %v6252
        %6414 = vst [vmem:[#allocation4 + $0x230] sm:$0xff] %v6253
        %6415 = vst.msk [vmem:[#allocation4 + $0x238] sm:$0xff] %vm6346, %v6254
        %6416 = vst [vmem:[#allocation4 + $0x240] sm:$0xff] %v6255
        %6417 = vst [vmem:[#allocation4 + $0x248] sm:$0xff] %v6256
        %6418 = vst [vmem:[#allocation4 + $0x250] sm:$0xff] %v6257
        %6419 = vst.msk [vmem:[#allocation4 + $0x258] sm:$0xff] %vm6346, %v6258
        %6420 = vst [vmem:[#allocation4 + $0x260] sm:$0xff] %v6259
        %6421 = vst [vmem:[#allocation4 + $0x268] sm:$0xff] %v6260
        %6422 = vst [vmem:[#allocation4 + $0x270] sm:$0xff] %v6261
        %6423 = vst.msk [vmem:[#allocation4 + $0x278] sm:$0xff] %vm6346, %v6262
        %6424 = vst [vmem:[#allocation4 + $0x280] sm:$0xff] %v6263
        %6425 = vst [vmem:[#allocation4 + $0x288] sm:$0xff] %v6264
        %6426 = vst [vmem:[#allocation4 + $0x290] sm:$0xff] %v6265
        %6427 = vst.msk [vmem:[#allocation4 + $0x298] sm:$0xff] %vm6346, %v6266
        %6428 = vst [vmem:[#allocation4 + $0x2a0] sm:$0xff] %v6267
        %6429 = vst [vmem:[#allocation4 + $0x2a8] sm:$0xff] %v6268
        %6430 = vst [vmem:[#allocation4 + $0x2b0] sm:$0xff] %v6269
        %6431 = vst.msk [vmem:[#allocation4 + $0x2b8] sm:$0xff] %vm6346, %v6270
        %6432 = vst [vmem:[#allocation4 + $0x2c0] sm:$0xff] %v6271
        %6433 = vst [vmem:[#allocation4 + $0x2c8] sm:$0xff] %v6272
        %6434 = vst [vmem:[#allocation4 + $0x2d0] sm:$0xff] %v6273
        %6435 = vst.msk [vmem:[#allocation4 + $0x2d8] sm:$0xff] %vm6346, %v6274
        %6436 = vst [vmem:[#allocation4 + $0x2e0] sm:$0xff] %v6275
        %6437 = vst [vmem:[#allocation4 + $0x2e8] sm:$0xff] %v6276
        %6438 = vst [vmem:[#allocation4 + $0x2f0] sm:$0xff] %v6277
        %6439 = vst.msk [vmem:[#allocation4 + $0x2f8] sm:$0xff] %vm6346, %v6278
        %6440 = vst [vmem:[#allocation4 + $0x300] sm:$0xff] %v6279
        %6441 = vst [vmem:[#allocation4 + $0x308] sm:$0xff] %v6280
        %6442 = vst [vmem:[#allocation4 + $0x310] sm:$0xff] %v6281
        %6443 = vst.msk [vmem:[#allocation4 + $0x318] sm:$0xff] %vm6346, %v6282
        %6444 = vst [vmem:[#allocation4 + $0x320] sm:$0xff] %v6283
        %6445 = vst [vmem:[#allocation4 + $0x328] sm:$0xff] %v6284
        %6446 = vst [vmem:[#allocation4 + $0x330] sm:$0xff] %v6285
        %6447 = vst.msk [vmem:[#allocation4 + $0x338] sm:$0xff] %vm6346, %v6286
        %6448 = vst [vmem:[#allocation4 + $0x340] sm:$0xff] %v6287
        %6449 = vst [vmem:[#allocation4 + $0x348] sm:$0xff] %v6288
        %6450 = vst [vmem:[#allocation4 + $0x350] sm:$0xff] %v6289
        %6451 = vst.msk [vmem:[#allocation4 + $0x358] sm:$0xff] %vm6346, %v6290
        %6452 = vst [vmem:[#allocation4 + $0x360] sm:$0xff] %v6291
        %6453 = vst [vmem:[#allocation4 + $0x368] sm:$0xff] %v6292
        %6454 = vst [vmem:[#allocation4 + $0x370] sm:$0xff] %v6293
        %6455 = vst.msk [vmem:[#allocation4 + $0x378] sm:$0xff] %vm6346, %v6294
        %6456 = vst [vmem:[#allocation4 + $0x380] sm:$0xff] %v6295
        %6457 = vst [vmem:[#allocation4 + $0x388] sm:$0xff] %v6296
        %6458 = vst [vmem:[#allocation4 + $0x390] sm:$0xff] %v6297
        %6459 = vst.msk [vmem:[#allocation4 + $0x398] sm:$0xff] %vm6346, %v6298
        %6460 = vst [vmem:[#allocation4 + $0x3a0] sm:$0xff] %v6299
        %6461 = vst [vmem:[#allocation4 + $0x3a8] sm:$0xff] %v6300
        %6462 = vst [vmem:[#allocation4 + $0x3b0] sm:$0xff] %v6301
        %6463 = vst.msk [vmem:[#allocation4 + $0x3b8] sm:$0xff] %vm6346, %v6302
        %6464 = vst [vmem:[#allocation4 + $0x3c0] sm:$0xff] %v6303
        %6465 = vst [vmem:[#allocation4 + $0x3c8] sm:$0xff] %v6304
        %6466 = vst [vmem:[#allocation4 + $0x3d0] sm:$0xff] %v6305
        %6467 = vst.msk [vmem:[#allocation4 + $0x3d8] sm:$0xff] %vm6346, %v6306
        %6468 = vst [vmem:[#allocation4 + $0x3e0] sm:$0xff] %v6307
        %6469 = vst [vmem:[#allocation4 + $0x3e8] sm:$0xff] %v6308
        %6470 = vst [vmem:[#allocation4 + $0x3f0] sm:$0xff] %v6309
        %6471 = vst.msk [vmem:[#allocation4 + $0x3f8] sm:$0xff] %vm6346, %v6310
        %6472 = vst [vmem:[#allocation4 + $0x400] sm:$0xff] %v6311
        %6473 = vst [vmem:[#allocation4 + $0x408] sm:$0xff] %v6312
        %6474 = vst [vmem:[#allocation4 + $0x410] sm:$0xff] %v6313
        %6475 = vst.msk [vmem:[#allocation4 + $0x418] sm:$0xff] %vm6346, %v6314
        %6476 = vst [vmem:[#allocation4 + $0x420] sm:$0xff] %v6315
        %6477 = vst [vmem:[#allocation4 + $0x428] sm:$0xff] %v6316
        %6478 = vst [vmem:[#allocation4 + $0x430] sm:$0xff] %v6317
        %6479 = vst.msk [vmem:[#allocation4 + $0x438] sm:$0xff] %vm6346, %v6318
        %6480 = vst [vmem:[#allocation4 + $0x440] sm:$0xff] %v6319
        %6481 = vst [vmem:[#allocation4 + $0x448] sm:$0xff] %v6320
        %6482 = vst [vmem:[#allocation4 + $0x450] sm:$0xff] %v6321
        %6483 = vst.msk [vmem:[#allocation4 + $0x458] sm:$0xff] %vm6346, %v6322
        %6484 = vst [vmem:[#allocation4 + $0x460] sm:$0xff] %v6323
        %6485 = vst [vmem:[#allocation4 + $0x468] sm:$0xff] %v6324
        %6486 = vst [vmem:[#allocation4 + $0x470] sm:$0xff] %v6325
        %6487 = vst.msk [vmem:[#allocation4 + $0x478] sm:$0xff] %vm6346, %v6326
        %6488 = vst [vmem:[#allocation4 + $0x480] sm:$0xff] %v6327
        %6489 = vst [vmem:[#allocation4 + $0x488] sm:$0xff] %v6328
        %6490 = vst [vmem:[#allocation4 + $0x490] sm:$0xff] %v6329
        %6491 = vst.msk [vmem:[#allocation4 + $0x498] sm:$0xff] %vm6346, %v6330
        %6492 = vst [vmem:[#allocation4 + $0x4a0] sm:$0xff] %v6331
        %6493 = vst [vmem:[#allocation4 + $0x4a8] sm:$0xff] %v6332
        %6494 = vst [vmem:[#allocation4 + $0x4b0] sm:$0xff] %v6333
        %6495 = vst.msk [vmem:[#allocation4 + $0x4b8] sm:$0xff] %vm6346, %v6334
        %6496 = vst [vmem:[#allocation4 + $0x4c0] sm:$0xff] %v6335
        %6497 = vst [vmem:[#allocation4 + $0x4c8] sm:$0xff] %v6336
        %6498 = vst [vmem:[#allocation4 + $0x4d0] sm:$0xff] %v6337
        %6499 = vst.msk [vmem:[#allocation4 + $0x4d8] sm:$0xff] %vm6346, %v6338
        %6500 = vst [vmem:[#allocation4 + $0x4e0] sm:$0xff] %v6339
        %6501 = vst [vmem:[#allocation4 + $0x4e8] sm:$0xff] %v6340
        %6502 = vst [vmem:[#allocation4 + $0x4f0] sm:$0xff] %v6341
        %6503 = vst.msk [vmem:[#allocation4 + $0x4f8] sm:$0xff] %vm6346, %v6342
        %v6504 = vld [vmem:[%s4] sm:$0x3]
        %v6506 = vlaneseq
        %v6507 = vshrl.u32 %v6506, 7
        %v6508 = vsub.s32 0, %v6507
        %v6509 = vrot.slane %v6504, %v6508
        %v6510 = vlaneseq
        %v6511 = vshrl.u32 %v6510, 7
        %v6512 = vsub.s32 1, %v6511
        %v6513 = vrot.slane %v6504, %v6512
        %v6516 = vld [vmem:[#allocation4] sm:$0xff]
        %v6517 = vld [vmem:[#allocation4 + $0x8] sm:$0xff]
        %v6518 = vld [vmem:[#allocation4 + $0x20] sm:$0xff]
        %v6519 = vld [vmem:[#allocation4 + $0x28] sm:$0xff]
        %v6520 = vld [vmem:[#allocation4 + $0x40] sm:$0xff]
        %v6521 = vld [vmem:[#allocation4 + $0x48] sm:$0xff]
        %v6522 = vld [vmem:[#allocation4 + $0x60] sm:$0xff]
        %v6523 = vld [vmem:[#allocation4 + $0x68] sm:$0xff]
        %v6524 = vld [vmem:[#allocation4 + $0x10] sm:$0xff]
        %v6525 = vld [vmem:[#allocation4 + $0x18] sm:$0xff]
        %v6526 = vld [vmem:[#allocation4 + $0x30] sm:$0xff]
        %v6527 = vld [vmem:[#allocation4 + $0x38] sm:$0xff]
        %v6528 = vld [vmem:[#allocation4 + $0x50] sm:$0xff]
        %v6529 = vld [vmem:[#allocation4 + $0x58] sm:$0xff]
        %v6530 = vld [vmem:[#allocation4 + $0x70] sm:$0xff]
        %v6531 = vld [vmem:[#allocation4 + $0x78] sm:$0xff]
        %v6532 = vmax.f32 %v6516, %v6524
        %v6533 = vmax.f32 %v6517, %v6525
        %v6534 = vmax.f32 %v6518, %v6526
        %v6535 = vmax.f32 %v6519, %v6527
        %v6536 = vmax.f32 %v6520, %v6528
        %v6537 = vmax.f32 %v6521, %v6529
        %v6538 = vmax.f32 %v6522, %v6530
        %v6539 = vmax.f32 %v6523, %v6531
        %v6540 = vld [vmem:[#allocation4 + $0x80] sm:$0xff]
        %v6541 = vld [vmem:[#allocation4 + $0x88] sm:$0xff]
        %v6542 = vld [vmem:[#allocation4 + $0xa0] sm:$0xff]
        %v6543 = vld [vmem:[#allocation4 + $0xa8] sm:$0xff]
        %v6544 = vld [vmem:[#allocation4 + $0xc0] sm:$0xff]
        %v6545 = vld [vmem:[#allocation4 + $0xc8] sm:$0xff]
        %v6546 = vld [vmem:[#allocation4 + $0xe0] sm:$0xff]
        %v6547 = vld [vmem:[#allocation4 + $0xe8] sm:$0xff]
        %v6548 = vld [vmem:[#allocation4 + $0x90] sm:$0xff]
        %v6549 = vld [vmem:[#allocation4 + $0x98] sm:$0xff]
        %v6550 = vld [vmem:[#allocation4 + $0xb0] sm:$0xff]
        %v6551 = vld [vmem:[#allocation4 + $0xb8] sm:$0xff]
        %v6552 = vld [vmem:[#allocation4 + $0xd0] sm:$0xff]
        %v6553 = vld [vmem:[#allocation4 + $0xd8] sm:$0xff]
        %v6554 = vld [vmem:[#allocation4 + $0xf0] sm:$0xff]
        %v6555 = vld [vmem:[#allocation4 + $0xf8] sm:$0xff]
        %v6556 = vmax.f32 %v6540, %v6548
        %v6557 = vmax.f32 %v6541, %v6549
        %v6558 = vmax.f32 %v6542, %v6550
        %v6559 = vmax.f32 %v6543, %v6551
        %v6560 = vmax.f32 %v6544, %v6552
        %v6561 = vmax.f32 %v6545, %v6553
        %v6562 = vmax.f32 %v6546, %v6554
        %v6563 = vmax.f32 %v6547, %v6555
        %v6564 = vmax.f32 %v6532, %v6556
        %v6565 = vmax.f32 %v6533, %v6557
        %v6566 = vmax.f32 %v6534, %v6558
        %v6567 = vmax.f32 %v6535, %v6559
        %v6568 = vmax.f32 %v6536, %v6560
        %v6569 = vmax.f32 %v6537, %v6561
        %v6570 = vmax.f32 %v6538, %v6562
        %v6571 = vmax.f32 %v6539, %v6563
        %v6572 = vadd.f32 %v6564, %v6509
        %v6573 = vadd.f32 %v6565, %v6513
        %v6574 = vadd.f32 %v6566, %v6509
        %v6575 = vadd.f32 %v6567, %v6513
        %v6576 = vadd.f32 %v6568, %v6509
        %v6577 = vadd.f32 %v6569, %v6513
        %v6578 = vadd.f32 %v6570, %v6509
        %v6579 = vadd.f32 %v6571, %v6513
        %v6580 = vmax.f32 %v6572, 0.0
        %v6581 = vmax.f32 %v6573, 0.0
        %v6582 = vmax.f32 %v6574, 0.0
        %v6583 = vmax.f32 %v6575, 0.0
        %v6584 = vmax.f32 %v6576, 0.0
        %v6585 = vmax.f32 %v6577, 0.0
        %v6586 = vmax.f32 %v6578, 0.0
        %v6587 = vmax.f32 %v6579, 0.0
        %v6588 = vpack.c.bf16 %v6582, %v6580
        %v6589 = vpack.c.bf16 %v6583, %v6581
        %v6590 = vpack.c.bf16 %v6586, %v6584
        %v6591 = vpack.c.bf16 %v6587, %v6585
        %v6592 = vld [vmem:[%s5] sm:$0xf]
        %v6593 = vld [vmem:[%s5 + $0x4] sm:$0xf]
        %v6594 = vld [vmem:[%s5 + $0x8] sm:$0xf]
        %v6595 = vld [vmem:[%s5 + $0xc] sm:$0xf]
        %v6596 = vld [vmem:[%s5 + $0x10] sm:$0xf]
        %v6597 = vld [vmem:[%s5 + $0x14] sm:$0xf]
        %v6598 = vld [vmem:[%s5 + $0x18] sm:$0xf]
        %v6599 = vld [vmem:[%s5 + $0x1c] sm:$0xf]
        %v6600 = vld [vmem:[%s5 + $0x20] sm:$0xf]
        %v6601 = vld [vmem:[%s5 + $0x24] sm:$0xf]
        %v6602 = vld [vmem:[%s5 + $0x28] sm:$0xf]
        %v6603 = vld [vmem:[%s5 + $0x2c] sm:$0xf]
        %v6604 = vld [vmem:[%s5 + $0x30] sm:$0xf]
        %v6605 = vld [vmem:[%s5 + $0x34] sm:$0xf]
        %v6606 = vld [vmem:[%s5 + $0x38] sm:$0xf]
        %v6607 = vld [vmem:[%s5 + $0x3c] sm:$0xf]
        %v6608 = vld [vmem:[%s5 + $0x40] sm:$0xf]
        %v6609 = vld [vmem:[%s5 + $0x44] sm:$0xf]
        %v6610 = vld [vmem:[%s5 + $0x48] sm:$0xf]
        %v6611 = vld [vmem:[%s5 + $0x4c] sm:$0xf]
        %v6612 = vld [vmem:[#allocation4 + $0x100] sm:$0xff]
        %v6613 = vld [vmem:[#allocation4 + $0x108] sm:$0xff]
        %v6614 = vld [vmem:[#allocation4 + $0x120] sm:$0xff]
        %v6615 = vld [vmem:[#allocation4 + $0x128] sm:$0xff]
        %v6616 = vld [vmem:[#allocation4 + $0x140] sm:$0xff]
        %v6617 = vld [vmem:[#allocation4 + $0x148] sm:$0xff]
        %v6618 = vld [vmem:[#allocation4 + $0x160] sm:$0xff]
        %v6619 = vld [vmem:[#allocation4 + $0x168] sm:$0xff]
        %v6620 = vld [vmem:[#allocation4 + $0x110] sm:$0xff]
        %v6621 = vld [vmem:[#allocation4 + $0x118] sm:$0xff]
        %v6622 = vld [vmem:[#allocation4 + $0x130] sm:$0xff]
        %v6623 = vld [vmem:[#allocation4 + $0x138] sm:$0xff]
        %v6624 = vld [vmem:[#allocation4 + $0x150] sm:$0xff]
        %v6625 = vld [vmem:[#allocation4 + $0x158] sm:$0xff]
        %v6626 = vld [vmem:[#allocation4 + $0x170] sm:$0xff]
        %v6627 = vld [vmem:[#allocation4 + $0x178] sm:$0xff]
        %v6628 = vmax.f32 %v6612, %v6620
        %v6629 = vmax.f32 %v6613, %v6621
        %v6630 = vmax.f32 %v6614, %v6622
        %v6631 = vmax.f32 %v6615, %v6623
        %v6632 = vmax.f32 %v6616, %v6624
        %v6633 = vmax.f32 %v6617, %v6625
        %v6634 = vmax.f32 %v6618, %v6626
        %v6635 = vmax.f32 %v6619, %v6627
        %v6636 = vld [vmem:[#allocation4 + $0x180] sm:$0xff]
        %v6637 = vld [vmem:[#allocation4 + $0x188] sm:$0xff]
        %v6638 = vld [vmem:[#allocation4 + $0x1a0] sm:$0xff]
        %v6639 = vld [vmem:[#allocation4 + $0x1a8] sm:$0xff]
        %v6640 = vld [vmem:[#allocation4 + $0x1c0] sm:$0xff]
        %v6641 = vld [vmem:[#allocation4 + $0x1c8] sm:$0xff]
        %v6642 = vld [vmem:[#allocation4 + $0x1e0] sm:$0xff]
        %v6643 = vld [vmem:[#allocation4 + $0x1e8] sm:$0xff]
        %v6644 = vld [vmem:[#allocation4 + $0x190] sm:$0xff]
        %v6645 = vld [vmem:[#allocation4 + $0x198] sm:$0xff]
        %v6646 = vld [vmem:[#allocation4 + $0x1b0] sm:$0xff]
        %v6647 = vld [vmem:[#allocation4 + $0x1b8] sm:$0xff]
        %v6648 = vld [vmem:[#allocation4 + $0x1d0] sm:$0xff]
        %v6649 = vld [vmem:[#allocation4 + $0x1d8] sm:$0xff]
        %v6650 = vld [vmem:[#allocation4 + $0x1f0] sm:$0xff]
        %v6651 = vld [vmem:[#allocation4 + $0x1f8] sm:$0xff]
        %v6652 = vmax.f32 %v6636, %v6644
        %v6653 = vmax.f32 %v6637, %v6645
        %v6654 = vmax.f32 %v6638, %v6646
        %v6655 = vmax.f32 %v6639, %v6647
        %v6656 = vmax.f32 %v6640, %v6648
        %v6657 = vmax.f32 %v6641, %v6649
        %v6658 = vmax.f32 %v6642, %v6650
        %v6659 = vmax.f32 %v6643, %v6651
        %v6660 = vmax.f32 %v6628, %v6652
        %v6661 = vmax.f32 %v6629, %v6653
        %v6662 = vmax.f32 %v6630, %v6654
        %v6663 = vmax.f32 %v6631, %v6655
        %v6664 = vmax.f32 %v6632, %v6656
        %v6665 = vmax.f32 %v6633, %v6657
        %v6666 = vmax.f32 %v6634, %v6658
        %v6667 = vmax.f32 %v6635, %v6659
        %v6668 = vadd.f32 %v6660, %v6509
        %v6669 = vadd.f32 %v6661, %v6513
        %v6670 = vadd.f32 %v6662, %v6509
        %v6671 = vadd.f32 %v6663, %v6513
        %v6672 = vadd.f32 %v6664, %v6509
        %v6673 = vadd.f32 %v6665, %v6513
        %v6674 = vadd.f32 %v6666, %v6509
        %v6675 = vadd.f32 %v6667, %v6513
        %v6676 = vmax.f32 %v6668, 0.0
        %v6677 = vmax.f32 %v6669, 0.0
        %v6678 = vmax.f32 %v6670, 0.0
        %v6679 = vmax.f32 %v6671, 0.0
        %v6680 = vmax.f32 %v6672, 0.0
        %v6681 = vmax.f32 %v6673, 0.0
        %v6682 = vmax.f32 %v6674, 0.0
        %v6683 = vmax.f32 %v6675, 0.0
        %v6684 = vpack.c.bf16 %v6678, %v6676
        %v6685 = vpack.c.bf16 %v6679, %v6677
        %v6686 = vpack.c.bf16 %v6682, %v6680
        %v6687 = vpack.c.bf16 %v6683, %v6681
        %s6688 = scalar_lea.vmem %s5, 80
        %v6689 = vld [vmem:[%s6688] sm:$0xf]
        %v6690 = vld [vmem:[%s6688 + $0x4] sm:$0xf]
        %v6691 = vld [vmem:[%s6688 + $0x8] sm:$0xf]
        %v6692 = vld [vmem:[%s6688 + $0xc] sm:$0xf]
        %v6693 = vld [vmem:[%s6688 + $0x10] sm:$0xf]
        %v6694 = vld [vmem:[%s6688 + $0x14] sm:$0xf]
        %v6695 = vld [vmem:[%s6688 + $0x18] sm:$0xf]
        %v6696 = vld [vmem:[%s6688 + $0x1c] sm:$0xf]
        %v6697 = vld [vmem:[%s6688 + $0x20] sm:$0xf]
        %v6698 = vld [vmem:[%s6688 + $0x24] sm:$0xf]
        %v6699 = vld [vmem:[%s6688 + $0x28] sm:$0xf]
        %v6700 = vld [vmem:[%s6688 + $0x2c] sm:$0xf]
        %v6701 = vld [vmem:[%s6688 + $0x30] sm:$0xf]
        %v6702 = vld [vmem:[%s6688 + $0x34] sm:$0xf]
        %v6703 = vld [vmem:[%s6688 + $0x38] sm:$0xf]
        %v6704 = vld [vmem:[%s6688 + $0x3c] sm:$0xf]
        %v6705 = vld [vmem:[%s6688 + $0x40] sm:$0xf]
        %v6706 = vld [vmem:[%s6688 + $0x44] sm:$0xf]
        %v6707 = vld [vmem:[%s6688 + $0x48] sm:$0xf]
        %v6708 = vld [vmem:[%s6688 + $0x4c] sm:$0xf]
        %v6729 = vunpack.c.l.b16 %v6689
        %v6730 = vunpack.c.l.b16 %v6690
        %v6731 = vunpack.c.l.b16 %v6691
        %v6732 = vunpack.c.l.b16 %v6692
        %v6733 = vunpack.c.l.b16 %v6693
        %v6734 = vunpack.c.l.b16 %v6694
        %v6735 = vunpack.c.l.b16 %v6695
        %v6736 = vunpack.c.l.b16 %v6696
        %v6737 = vunpack.c.l.b16 %v6697
        %v6738 = vunpack.c.l.b16 %v6698
        %v6739 = vunpack.c.l.b16 %v6699
        %v6740 = vunpack.c.l.b16 %v6700
        %v6741 = vunpack.c.l.b16 %v6701
        %v6742 = vunpack.c.l.b16 %v6702
        %v6743 = vunpack.c.l.b16 %v6703
        %v6744 = vunpack.c.l.b16 %v6704
        %v6745 = vunpack.c.l.b16 %v6705
        %v6746 = vunpack.c.l.b16 %v6706
        %v6747 = vunpack.c.l.b16 %v6707
        %v6748 = vunpack.c.l.b16 %v6708
        %v6749 = vpack.c.b16 %v6730, %v6729
        %v6750 = vpack.c.b16 %v6732, %v6731
        %v6751 = vpack.c.b16 %v6734, %v6733
        %v6752 = vpack.c.b16 %v6736, %v6735
        %v6753 = vpack.c.b16 %v6738, %v6737
        %v6754 = vpack.c.b16 %v6740, %v6739
        %v6755 = vpack.c.b16 %v6742, %v6741
        %v6756 = vpack.c.b16 %v6744, %v6743
        %v6757 = vpack.c.b16 %v6746, %v6745
        %v6758 = vpack.c.b16 %v6748, %v6747
        %v6770 = vsel %vm6346, %v6685, 0
        %v6773 = vsel %vm6346, %v6687, 0
        %6775 = vmatprep.subr.bf16.mxu0 0
        %6776 = vmatpush1.bf16.msra.mxu0 %v6749
        %6777 = vmatprep.subr.bf16.mxu0 0
        %6778 = vmatpush1.bf16.msra.mxu0 %v6750
        %6779 = vmatprep.subr.bf16.mxu0 0
        %6780 = vmatpush1.bf16.msra.mxu0 %v6751
        %6781 = vmatprep.subr.bf16.mxu0 0
        %6782 = vmatpush1.bf16.msra.mxu0 %v6752
        %6783 = vmatprep.subr.bf16.mxu0 0
        %6784 = vmatpush1.bf16.msra.mxu0 %v6753
        %6785 = vmatprep.subr.bf16.mxu0 0
        %6786 = vmatpush1.bf16.msra.mxu0 %v6754
        %6787 = vmatprep.subr.bf16.mxu0 0
        %6788 = vmatpush1.bf16.msra.mxu0 %v6755
        %6789 = vmatprep.subr.bf16.mxu0 0
        %6790 = vmatpush1.bf16.msra.mxu0 %v6756
        %6791 = vmatprep.subr.bf16.mxu0 0
        %6792 = vmatpush1.bf16.msra.mxu0 %v6757
        %6793 = vmatprep.subr.bf16.mxu0 0
        %6794 = vmatpush1.bf16.msra.mxu0 %v6758
        %6795 = vmatprep.subr.bf16.mxu0 0
        %6796 = vmatpush1.bf16.msra.mxu0 0
        %6797 = vmatprep.subr.bf16.mxu0 0
        %6798 = vmatpush1.bf16.msra.mxu0 0
        %6799 = vmatprep.subr.bf16.mxu0 0
        %6800 = vmatpush1.bf16.msra.mxu0 0
        %6801 = vmatprep.subr.bf16.mxu0 0
        %6802 = vmatpush1.bf16.msra.mxu0 0
        %6803 = vmatprep.subr.bf16.mxu0 0
        %6804 = vmatpush1.bf16.msra.mxu0 0
        %6805 = vmatprep.subr.bf16.mxu0 0
        %6806 = vmatpush1.bf16.msra.mxu0 0
        %6807 = vmatprep.mubr.bf16.mxu0 %v6770
        %6808 = vmatmul.mubr.bf16.gmra.mrb[0].mxu0 %v6684
        %v6809 = vpop.f32.mrb[0].mxu0
        %v6810 = vadd.f32 0.0, %v6809
        %v6811 = vpop.f32.mrb[0].mxu0
        %v6812 = vpop.f32.mrb[0].mxu0
        %v6813 = vadd.f32 0.0, %v6812
        %v6814 = vpop.f32.mrb[0].mxu0
        %6815 = vmatprep.mubr.bf16.mxu0 %v6773
        %6816 = vmatmul.mubr.bf16.gmra.mrb[0].mxu0 %v6686
        %v6817 = vpop.f32.mrb[0].mxu0
        %v6818 = vadd.f32 0.0, %v6817
        %v6819 = vpop.f32.mrb[0].mxu0
        %v6820 = vpop.f32.mrb[0].mxu0
        %v6821 = vadd.f32 0.0, %v6820
        %v6822 = vpop.f32.mrb[0].mxu0
        %6823 = vdwg.mxu0
        %v6844 = vunpack.c.l.b16 %v6592
        %v6845 = vunpack.c.l.b16 %v6593
        %v6846 = vunpack.c.l.b16 %v6594
        %v6847 = vunpack.c.l.b16 %v6595
        %v6848 = vunpack.c.l.b16 %v6596
        %v6849 = vunpack.c.l.b16 %v6597
        %v6850 = vunpack.c.l.b16 %v6598
        %v6851 = vunpack.c.l.b16 %v6599
        %v6852 = vunpack.c.l.b16 %v6600
        %v6853 = vunpack.c.l.b16 %v6601
        %v6854 = vunpack.c.l.b16 %v6602
        %v6855 = vunpack.c.l.b16 %v6603
        %v6856 = vunpack.c.l.b16 %v6604
        %v6857 = vunpack.c.l.b16 %v6605
        %v6858 = vunpack.c.l.b16 %v6606
        %v6859 = vunpack.c.l.b16 %v6607
        %v6860 = vunpack.c.l.b16 %v6608
        %v6861 = vunpack.c.l.b16 %v6609
        %v6862 = vunpack.c.l.b16 %v6610
        %v6863 = vunpack.c.l.b16 %v6611
        %v6864 = vpack.c.b16 %v6845, %v6844
        %v6865 = vpack.c.b16 %v6847, %v6846
        %v6866 = vpack.c.b16 %v6849, %v6848
        %v6867 = vpack.c.b16 %v6851, %v6850
        %v6868 = vpack.c.b16 %v6853, %v6852
        %v6869 = vpack.c.b16 %v6855, %v6854
        %v6870 = vpack.c.b16 %v6857, %v6856
        %v6871 = vpack.c.b16 %v6859, %v6858
        %v6872 = vpack.c.b16 %v6861, %v6860
        %v6873 = vpack.c.b16 %v6863, %v6862
        %v6885 = vsel %vm6346, %v6589, 0
        %v6888 = vsel %vm6346, %v6591, 0
        %6890 = vmatprep.subr.bf16.mxu0 0
        %6891 = vmatpush1.bf16.msra.mxu0 %v6864
        %6892 = vmatprep.subr.bf16.mxu0 0
        %6893 = vmatpush1.bf16.msra.mxu0 %v6865
        %6894 = vmatprep.subr.bf16.mxu0 0
        %6895 = vmatpush1.bf16.msra.mxu0 %v6866
        %6896 = vmatprep.subr.bf16.mxu0 0
        %6897 = vmatpush1.bf16.msra.mxu0 %v6867
        %6898 = vmatprep.subr.bf16.mxu0 0
        %6899 = vmatpush1.bf16.msra.mxu0 %v6868
        %6900 = vmatprep.subr.bf16.mxu0 0
        %6901 = vmatpush1.bf16.msra.mxu0 %v6869
        %6902 = vmatprep.subr.bf16.mxu0 0
        %6903 = vmatpush1.bf16.msra.mxu0 %v6870
        %6904 = vmatprep.subr.bf16.mxu0 0
        %6905 = vmatpush1.bf16.msra.mxu0 %v6871
        %6906 = vmatprep.subr.bf16.mxu0 0
        %6907 = vmatpush1.bf16.msra.mxu0 %v6872
        %6908 = vmatprep.subr.bf16.mxu0 0
        %6909 = vmatpush1.bf16.msra.mxu0 %v6873
        %6910 = vmatprep.subr.bf16.mxu0 0
        %6911 = vmatpush1.bf16.msra.mxu0 0
        %6912 = vmatprep.subr.bf16.mxu0 0
        %6913 = vmatpush1.bf16.msra.mxu0 0
        %6914 = vmatprep.subr.bf16.mxu0 0
        %6915 = vmatpush1.bf16.msra.mxu0 0
        %6916 = vmatprep.subr.bf16.mxu0 0
        %6917 = vmatpush1.bf16.msra.mxu0 0
        %6918 = vmatprep.subr.bf16.mxu0 0
        %6919 = vmatpush1.bf16.msra.mxu0 0
        %6920 = vmatprep.subr.bf16.mxu0 0
        %6921 = vmatpush1.bf16.msra.mxu0 0
        %6922 = vmatprep.mubr.bf16.mxu0 %v6885
        %6923 = vmatmul.mubr.bf16.gmra.mrb[0].mxu0 %v6588
        %v6924 = vpop.f32.mrb[0].mxu0
        %v6925 = vadd.f32 %v6810, %v6924
        %v6926 = vpop.f32.mrb[0].mxu0
        %v6927 = vpop.f32.mrb[0].mxu0
        %v6928 = vadd.f32 %v6813, %v6927
        %v6929 = vpop.f32.mrb[0].mxu0
        %6930 = vmatprep.mubr.bf16.mxu0 %v6888
        %6931 = vmatmul.mubr.bf16.gmra.mrb[0].mxu0 %v6590
        %v6932 = vpop.f32.mrb[0].mxu0
        %v6933 = vadd.f32 %v6818, %v6932
        %v6934 = vpop.f32.mrb[0].mxu0
        %v6935 = vpop.f32.mrb[0].mxu0
        %v6936 = vadd.f32 %v6821, %v6935
        %v6937 = vpop.f32.mrb[0].mxu0
        %6938 = vdwg.mxu0
        %v6939 = vld [vmem:[#allocation4 + $0x200] sm:$0xff]
        %v6940 = vld [vmem:[#allocation4 + $0x208] sm:$0xff]
        %v6941 = vld [vmem:[#allocation4 + $0x220] sm:$0xff]
        %v6942 = vld [vmem:[#allocation4 + $0x228] sm:$0xff]
        %v6943 = vld [vmem:[#allocation4 + $0x240] sm:$0xff]
        %v6944 = vld [vmem:[#allocation4 + $0x248] sm:$0xff]
        %v6945 = vld [vmem:[#allocation4 + $0x260] sm:$0xff]
        %v6946 = vld [vmem:[#allocation4 + $0x268] sm:$0xff]
        %v6947 = vld [vmem:[#allocation4 + $0x210] sm:$0xff]
        %v6948 = vld [vmem:[#allocation4 + $0x218] sm:$0xff]
        %v6949 = vld [vmem:[#allocation4 + $0x230] sm:$0xff]
        %v6950 = vld [vmem:[#allocation4 + $0x238] sm:$0xff]
        %v6951 = vld [vmem:[#allocation4 + $0x250] sm:$0xff]
        %v6952 = vld [vmem:[#allocation4 + $0x258] sm:$0xff]
        %v6953 = vld [vmem:[#allocation4 + $0x270] sm:$0xff]
        %v6954 = vld [vmem:[#allocation4 + $0x278] sm:$0xff]
        %v6955 = vmax.f32 %v6939, %v6947
        %v6956 = vmax.f32 %v6940, %v6948
        %v6957 = vmax.f32 %v6941, %v6949
        %v6958 = vmax.f32 %v6942, %v6950
        %v6959 = vmax.f32 %v6943, %v6951
        %v6960 = vmax.f32 %v6944, %v6952
        %v6961 = vmax.f32 %v6945, %v6953
        %v6962 = vmax.f32 %v6946, %v6954
        %v6963 = vld [vmem:[#allocation4 + $0x280] sm:$0xff]
        %v6964 = vld [vmem:[#allocation4 + $0x288] sm:$0xff]
        %v6965 = vld [vmem:[#allocation4 + $0x2a0] sm:$0xff]
        %v6966 = vld [vmem:[#allocation4 + $0x2a8] sm:$0xff]
        %v6967 = vld [vmem:[#allocation4 + $0x2c0] sm:$0xff]
        %v6968 = vld [vmem:[#allocation4 + $0x2c8] sm:$0xff]
        %v6969 = vld [vmem:[#allocation4 + $0x2e0] sm:$0xff]
        %v6970 = vld [vmem:[#allocation4 + $0x2e8] sm:$0xff]
        %v6971 = vld [vmem:[#allocation4 + $0x290] sm:$0xff]
        %v6972 = vld [vmem:[#allocation4 + $0x298] sm:$0xff]
        %v6973 = vld [vmem:[#allocation4 + $0x2b0] sm:$0xff]
        %v6974 = vld [vmem:[#allocation4 + $0x2b8] sm:$0xff]
        %v6975 = vld [vmem:[#allocation4 + $0x2d0] sm:$0xff]
        %v6976 = vld [vmem:[#allocation4 + $0x2d8] sm:$0xff]
        %v6977 = vld [vmem:[#allocation4 + $0x2f0] sm:$0xff]
        %v6978 = vld [vmem:[#allocation4 + $0x2f8] sm:$0xff]
        %v6979 = vmax.f32 %v6963, %v6971
        %v6980 = vmax.f32 %v6964, %v6972
        %v6981 = vmax.f32 %v6965, %v6973
        %v6982 = vmax.f32 %v6966, %v6974
        %v6983 = vmax.f32 %v6967, %v6975
        %v6984 = vmax.f32 %v6968, %v6976
        %v6985 = vmax.f32 %v6969, %v6977
        %v6986 = vmax.f32 %v6970, %v6978
        %v6987 = vmax.f32 %v6955, %v6979
        %v6988 = vmax.f32 %v6956, %v6980
        %v6989 = vmax.f32 %v6957, %v6981
        %v6990 = vmax.f32 %v6958, %v6982
        %v6991 = vmax.f32 %v6959, %v6983
        %v6992 = vmax.f32 %v6960, %v6984
        %v6993 = vmax.f32 %v6961, %v6985
        %v6994 = vmax.f32 %v6962, %v6986
        %v6995 = vadd.f32 %v6987, %v6509
        %v6996 = vadd.f32 %v6988, %v6513
        %v6997 = vadd.f32 %v6989, %v6509
        %v6998 = vadd.f32 %v6990, %v6513
        %v6999 = vadd.f32 %v6991, %v6509
        %v7000 = vadd.f32 %v6992, %v6513
        %v7001 = vadd.f32 %v6993, %v6509
        %v7002 = vadd.f32 %v6994, %v6513
        %v7003 = vmax.f32 %v6995, 0.0
        %v7004 = vmax.f32 %v6996, 0.0
        %v7005 = vmax.f32 %v6997, 0.0
        %v7006 = vmax.f32 %v6998, 0.0
        %v7007 = vmax.f32 %v6999, 0.0
        %v7008 = vmax.f32 %v7000, 0.0
        %v7009 = vmax.f32 %v7001, 0.0
        %v7010 = vmax.f32 %v7002, 0.0
        %v7011 = vpack.c.bf16 %v7005, %v7003
        %v7012 = vpack.c.bf16 %v7006, %v7004
        %v7013 = vpack.c.bf16 %v7009, %v7007
        %v7014 = vpack.c.bf16 %v7010, %v7008
        %s7015 = scalar_lea.vmem %s5, 160
        %v7016 = vld [vmem:[%s7015] sm:$0xf]
        %v7017 = vld [vmem:[%s7015 + $0x4] sm:$0xf]
        %v7018 = vld [vmem:[%s7015 + $0x8] sm:$0xf]
        %v7019 = vld [vmem:[%s7015 + $0xc] sm:$0xf]
        %v7020 = vld [vmem:[%s7015 + $0x10] sm:$0xf]
        %v7021 = vld [vmem:[%s7015 + $0x14] sm:$0xf]
        %v7022 = vld [vmem:[%s7015 + $0x18] sm:$0xf]
        %v7023 = vld [vmem:[%s7015 + $0x1c] sm:$0xf]
        %v7024 = vld [vmem:[%s7015 + $0x20] sm:$0xf]
        %v7025 = vld [vmem:[%s7015 + $0x24] sm:$0xf]
        %v7026 = vld [vmem:[%s7015 + $0x28] sm:$0xf]
        %v7027 = vld [vmem:[%s7015 + $0x2c] sm:$0xf]
        %v7028 = vld [vmem:[%s7015 + $0x30] sm:$0xf]
        %v7029 = vld [vmem:[%s7015 + $0x34] sm:$0xf]
        %v7030 = vld [vmem:[%s7015 + $0x38] sm:$0xf]
        %v7031 = vld [vmem:[%s7015 + $0x3c] sm:$0xf]
        %v7032 = vld [vmem:[%s7015 + $0x40] sm:$0xf]
        %v7033 = vld [vmem:[%s7015 + $0x44] sm:$0xf]
        %v7034 = vld [vmem:[%s7015 + $0x48] sm:$0xf]
        %v7035 = vld [vmem:[%s7015 + $0x4c] sm:$0xf]
        %v7056 = vunpack.c.l.b16 %v7016
        %v7057 = vunpack.c.l.b16 %v7017
        %v7058 = vunpack.c.l.b16 %v7018
        %v7059 = vunpack.c.l.b16 %v7019
        %v7060 = vunpack.c.l.b16 %v7020
        %v7061 = vunpack.c.l.b16 %v7021
        %v7062 = vunpack.c.l.b16 %v7022
        %v7063 = vunpack.c.l.b16 %v7023
        %v7064 = vunpack.c.l.b16 %v7024
        %v7065 = vunpack.c.l.b16 %v7025
        %v7066 = vunpack.c.l.b16 %v7026
        %v7067 = vunpack.c.l.b16 %v7027
        %v7068 = vunpack.c.l.b16 %v7028
        %v7069 = vunpack.c.l.b16 %v7029
        %v7070 = vunpack.c.l.b16 %v7030
        %v7071 = vunpack.c.l.b16 %v7031
        %v7072 = vunpack.c.l.b16 %v7032
        %v7073 = vunpack.c.l.b16 %v7033
        %v7074 = vunpack.c.l.b16 %v7034
        %v7075 = vunpack.c.l.b16 %v7035
        %v7076 = vpack.c.b16 %v7057, %v7056
        %v7077 = vpack.c.b16 %v7059, %v7058
        %v7078 = vpack.c.b16 %v7061, %v7060
        %v7079 = vpack.c.b16 %v7063, %v7062
        %v7080 = vpack.c.b16 %v7065, %v7064
        %v7081 = vpack.c.b16 %v7067, %v7066
        %v7082 = vpack.c.b16 %v7069, %v7068
        %v7083 = vpack.c.b16 %v7071, %v7070
        %v7084 = vpack.c.b16 %v7073, %v7072
        %v7085 = vpack.c.b16 %v7075, %v7074
        %v7097 = vsel %vm6346, %v7012, 0
        %v7100 = vsel %vm6346, %v7014, 0
        %7102 = vmatprep.subr.bf16.mxu0 0
        %7103 = vmatpush1.bf16.msra.mxu0 %v7076
        %7104 = vmatprep.subr.bf16.mxu0 0
        %7105 = vmatpush1.bf16.msra.mxu0 %v7077
        %7106 = vmatprep.subr.bf16.mxu0 0
        %7107 = vmatpush1.bf16.msra.mxu0 %v7078
        %7108 = vmatprep.subr.bf16.mxu0 0
        %7109 = vmatpush1.bf16.msra.mxu0 %v7079
        %7110 = vmatprep.subr.bf16.mxu0 0
        %7111 = vmatpush1.bf16.msra.mxu0 %v7080
        %7112 = vmatprep.subr.bf16.mxu0 0
        %7113 = vmatpush1.bf16.msra.mxu0 %v7081
        %7114 = vmatprep.subr.bf16.mxu0 0
        %7115 = vmatpush1.bf16.msra.mxu0 %v7082
        %7116 = vmatprep.subr.bf16.mxu0 0
        %7117 = vmatpush1.bf16.msra.mxu0 %v7083
        %7118 = vmatprep.subr.bf16.mxu0 0
        %7119 = vmatpush1.bf16.msra.mxu0 %v7084
        %7120 = vmatprep.subr.bf16.mxu0 0
        %7121 = vmatpush1.bf16.msra.mxu0 %v7085
        %7122 = vmatprep.subr.bf16.mxu0 0
        %7123 = vmatpush1.bf16.msra.mxu0 0
        %7124 = vmatprep.subr.bf16.mxu0 0
        %7125 = vmatpush1.bf16.msra.mxu0 0
        %7126 = vmatprep.subr.bf16.mxu0 0
        %7127 = vmatpush1.bf16.msra.mxu0 0
        %7128 = vmatprep.subr.bf16.mxu0 0
        %7129 = vmatpush1.bf16.msra.mxu0 0
        %7130 = vmatprep.subr.bf16.mxu0 0
        %7131 = vmatpush1.bf16.msra.mxu0 0
        %7132 = vmatprep.subr.bf16.mxu0 0
        %7133 = vmatpush1.bf16.msra.mxu0 0
        %7134 = vmatprep.mubr.bf16.mxu0 %v7097
        %7135 = vmatmul.mubr.bf16.gmra.mrb[0].mxu0 %v7011
        %v7136 = vpop.f32.mrb[0].mxu0
        %v7137 = vadd.f32 0.0, %v7136
        %v7138 = vpop.f32.mrb[0].mxu0
        %v7139 = vpop.f32.mrb[0].mxu0
        %v7140 = vadd.f32 0.0, %v7139
        %v7141 = vpop.f32.mrb[0].mxu0
        %7142 = vmatprep.mubr.bf16.mxu0 %v7100
        %7143 = vmatmul.mubr.bf16.gmra.mrb[0].mxu0 %v7013
        %v7144 = vpop.f32.mrb[0].mxu0
        %v7145 = vadd.f32 0.0, %v7144
        %v7146 = vpop.f32.mrb[0].mxu0
        %v7147 = vpop.f32.mrb[0].mxu0
        %v7148 = vadd.f32 0.0, %v7147
        %v7149 = vpop.f32.mrb[0].mxu0
        %7150 = vdwg.mxu0
        %v7151 = vadd.f32 %v6925, %v7137
        %v7152 = vadd.f32 %v6928, %v7140
        %v7153 = vadd.f32 %v6933, %v7145
        %v7154 = vadd.f32 %v6936, %v7148
        %v7155 = vld [vmem:[#allocation4 + $0x300] sm:$0xff]
        %v7156 = vld [vmem:[#allocation4 + $0x308] sm:$0xff]
        %v7157 = vld [vmem:[#allocation4 + $0x320] sm:$0xff]
        %v7158 = vld [vmem:[#allocation4 + $0x328] sm:$0xff]
        %v7159 = vld [vmem:[#allocation4 + $0x340] sm:$0xff]
        %v7160 = vld [vmem:[#allocation4 + $0x348] sm:$0xff]
        %v7161 = vld [vmem:[#allocation4 + $0x360] sm:$0xff]
        %v7162 = vld [vmem:[#allocation4 + $0x368] sm:$0xff]
        %v7163 = vld [vmem:[#allocation4 + $0x310] sm:$0xff]
        %v7164 = vld [vmem:[#allocation4 + $0x318] sm:$0xff]
        %v7165 = vld [vmem:[#allocation4 + $0x330] sm:$0xff]
        %v7166 = vld [vmem:[#allocation4 + $0x338] sm:$0xff]
        %v7167 = vld [vmem:[#allocation4 + $0x350] sm:$0xff]
        %v7168 = vld [vmem:[#allocation4 + $0x358] sm:$0xff]
        %v7169 = vld [vmem:[#allocation4 + $0x370] sm:$0xff]
        %v7170 = vld [vmem:[#allocation4 + $0x378] sm:$0xff]
        %v7171 = vmax.f32 %v7155, %v7163
        %v7172 = vmax.f32 %v7156, %v7164
        %v7173 = vmax.f32 %v7157, %v7165
        %v7174 = vmax.f32 %v7158, %v7166
        %v7175 = vmax.f32 %v7159, %v7167
        %v7176 = vmax.f32 %v7160, %v7168
        %v7177 = vmax.f32 %v7161, %v7169
        %v7178 = vmax.f32 %v7162, %v7170
        %v7179 = vld [vmem:[#allocation4 + $0x380] sm:$0xff]
        %v7180 = vld [vmem:[#allocation4 + $0x388] sm:$0xff]
        %v7181 = vld [vmem:[#allocation4 + $0x3a0] sm:$0xff]
        %v7182 = vld [vmem:[#allocation4 + $0x3a8] sm:$0xff]
        %v7183 = vld [vmem:[#allocation4 + $0x3c0] sm:$0xff]
        %v7184 = vld [vmem:[#allocation4 + $0x3c8] sm:$0xff]
        %v7185 = vld [vmem:[#allocation4 + $0x3e0] sm:$0xff]
        %v7186 = vld [vmem:[#allocation4 + $0x3e8] sm:$0xff]
        %v7187 = vld [vmem:[#allocation4 + $0x390] sm:$0xff]
        %v7188 = vld [vmem:[#allocation4 + $0x398] sm:$0xff]
        %v7189 = vld [vmem:[#allocation4 + $0x3b0] sm:$0xff]
        %v7190 = vld [vmem:[#allocation4 + $0x3b8] sm:$0xff]
        %v7191 = vld [vmem:[#allocation4 + $0x3d0] sm:$0xff]
        %v7192 = vld [vmem:[#allocation4 + $0x3d8] sm:$0xff]
        %v7193 = vld [vmem:[#allocation4 + $0x3f0] sm:$0xff]
        %v7194 = vld [vmem:[#allocation4 + $0x3f8] sm:$0xff]
        %v7195 = vmax.f32 %v7179, %v7187
        %v7196 = vmax.f32 %v7180, %v7188
        %v7197 = vmax.f32 %v7181, %v7189
        %v7198 = vmax.f32 %v7182, %v7190
        %v7199 = vmax.f32 %v7183, %v7191
        %v7200 = vmax.f32 %v7184, %v7192
        %v7201 = vmax.f32 %v7185, %v7193
        %v7202 = vmax.f32 %v7186, %v7194
        %v7203 = vmax.f32 %v7171, %v7195
        %v7204 = vmax.f32 %v7172, %v7196
        %v7205 = vmax.f32 %v7173, %v7197
        %v7206 = vmax.f32 %v7174, %v7198
        %v7207 = vmax.f32 %v7175, %v7199
        %v7208 = vmax.f32 %v7176, %v7200
        %v7209 = vmax.f32 %v7177, %v7201
        %v7210 = vmax.f32 %v7178, %v7202
        %v7211 = vadd.f32 %v7203, %v6509
        %v7212 = vadd.f32 %v7204, %v6513
        %v7213 = vadd.f32 %v7205, %v6509
        %v7214 = vadd.f32 %v7206, %v6513
        %v7215 = vadd.f32 %v7207, %v6509
        %v7216 = vadd.f32 %v7208, %v6513
        %v7217 = vadd.f32 %v7209, %v6509
        %v7218 = vadd.f32 %v7210, %v6513
        %v7219 = vmax.f32 %v7211, 0.0
        %v7220 = vmax.f32 %v7212, 0.0
        %v7221 = vmax.f32 %v7213, 0.0
        %v7222 = vmax.f32 %v7214, 0.0
        %v7223 = vmax.f32 %v7215, 0.0
        %v7224 = vmax.f32 %v7216, 0.0
        %v7225 = vmax.f32 %v7217, 0.0
        %v7226 = vmax.f32 %v7218, 0.0
        %v7227 = vpack.c.bf16 %v7221, %v7219
        %v7228 = vpack.c.bf16 %v7222, %v7220
        %v7229 = vpack.c.bf16 %v7225, %v7223
        %v7230 = vpack.c.bf16 %v7226, %v7224
        %s7231 = scalar_lea.vmem %s5, 240
        %v7232 = vld [vmem:[%s7231] sm:$0xf]
        %v7233 = vld [vmem:[%s7231 + $0x4] sm:$0xf]
        %v7234 = vld [vmem:[%s7231 + $0x8] sm:$0xf]
        %v7235 = vld [vmem:[%s7231 + $0xc] sm:$0xf]
        %v7236 = vld [vmem:[%s7231 + $0x10] sm:$0xf]
        %v7237 = vld [vmem:[%s7231 + $0x14] sm:$0xf]
        %v7238 = vld [vmem:[%s7231 + $0x18] sm:$0xf]
        %v7239 = vld [vmem:[%s7231 + $0x1c] sm:$0xf]
        %v7240 = vld [vmem:[%s7231 + $0x20] sm:$0xf]
        %v7241 = vld [vmem:[%s7231 + $0x24] sm:$0xf]
        %v7242 = vld [vmem:[%s7231 + $0x28] sm:$0xf]
        %v7243 = vld [vmem:[%s7231 + $0x2c] sm:$0xf]
        %v7244 = vld [vmem:[%s7231 + $0x30] sm:$0xf]
        %v7245 = vld [vmem:[%s7231 + $0x34] sm:$0xf]
        %v7246 = vld [vmem:[%s7231 + $0x38] sm:$0xf]
        %v7247 = vld [vmem:[%s7231 + $0x3c] sm:$0xf]
        %v7248 = vld [vmem:[%s7231 + $0x40] sm:$0xf]
        %v7249 = vld [vmem:[%s7231 + $0x44] sm:$0xf]
        %v7250 = vld [vmem:[%s7231 + $0x48] sm:$0xf]
        %v7251 = vld [vmem:[%s7231 + $0x4c] sm:$0xf]
        %v7272 = vunpack.c.l.b16 %v7232
        %v7273 = vunpack.c.l.b16 %v7233
        %v7274 = vunpack.c.l.b16 %v7234
        %v7275 = vunpack.c.l.b16 %v7235
        %v7276 = vunpack.c.l.b16 %v7236
        %v7277 = vunpack.c.l.b16 %v7237
        %v7278 = vunpack.c.l.b16 %v7238
        %v7279 = vunpack.c.l.b16 %v7239
        %v7280 = vunpack.c.l.b16 %v7240
        %v7281 = vunpack.c.l.b16 %v7241
        %v7282 = vunpack.c.l.b16 %v7242
        %v7283 = vunpack.c.l.b16 %v7243
        %v7284 = vunpack.c.l.b16 %v7244
        %v7285 = vunpack.c.l.b16 %v7245
        %v7286 = vunpack.c.l.b16 %v7246
        %v7287 = vunpack.c.l.b16 %v7247
        %v7288 = vunpack.c.l.b16 %v7248
        %v7289 = vunpack.c.l.b16 %v7249
        %v7290 = vunpack.c.l.b16 %v7250
        %v7291 = vunpack.c.l.b16 %v7251
        %v7292 = vpack.c.b16 %v7273, %v7272
        %v7293 = vpack.c.b16 %v7275, %v7274
        %v7294 = vpack.c.b16 %v7277, %v7276
        %v7295 = vpack.c.b16 %v7279, %v7278
        %v7296 = vpack.c.b16 %v7281, %v7280
        %v7297 = vpack.c.b16 %v7283, %v7282
        %v7298 = vpack.c.b16 %v7285, %v7284
        %v7299 = vpack.c.b16 %v7287, %v7286
        %v7300 = vpack.c.b16 %v7289, %v7288
        %v7301 = vpack.c.b16 %v7291, %v7290
        %v7313 = vsel %vm6346, %v7228, 0
        %v7316 = vsel %vm6346, %v7230, 0
        %7318 = vmatprep.subr.bf16.mxu0 0
        %7319 = vmatpush1.bf16.msra.mxu0 %v7292
        %7320 = vmatprep.subr.bf16.mxu0 0
        %7321 = vmatpush1.bf16.msra.mxu0 %v7293
        %7322 = vmatprep.subr.bf16.mxu0 0
        %7323 = vmatpush1.bf16.msra.mxu0 %v7294
        %7324 = vmatprep.subr.bf16.mxu0 0
        %7325 = vmatpush1.bf16.msra.mxu0 %v7295
        %7326 = vmatprep.subr.bf16.mxu0 0
        %7327 = vmatpush1.bf16.msra.mxu0 %v7296
        %7328 = vmatprep.subr.bf16.mxu0 0
        %7329 = vmatpush1.bf16.msra.mxu0 %v7297
        %7330 = vmatprep.subr.bf16.mxu0 0
        %7331 = vmatpush1.bf16.msra.mxu0 %v7298
        %7332 = vmatprep.subr.bf16.mxu0 0
        %7333 = vmatpush1.bf16.msra.mxu0 %v7299
        %7334 = vmatprep.subr.bf16.mxu0 0
        %7335 = vmatpush1.bf16.msra.mxu0 %v7300
        %7336 = vmatprep.subr.bf16.mxu0 0
        %7337 = vmatpush1.bf16.msra.mxu0 %v7301
        %7338 = vmatprep.subr.bf16.mxu0 0
        %7339 = vmatpush1.bf16.msra.mxu0 0
        %7340 = vmatprep.subr.bf16.mxu0 0
        %7341 = vmatpush1.bf16.msra.mxu0 0
        %7342 = vmatprep.subr.bf16.mxu0 0
        %7343 = vmatpush1.bf16.msra.mxu0 0
        %7344 = vmatprep.subr.bf16.mxu0 0
        %7345 = vmatpush1.bf16.msra.mxu0 0
        %7346 = vmatprep.subr.bf16.mxu0 0
        %7347 = vmatpush1.bf16.msra.mxu0 0
        %7348 = vmatprep.subr.bf16.mxu0 0
        %7349 = vmatpush1.bf16.msra.mxu0 0
        %7350 = vmatprep.mubr.bf16.mxu0 %v7313
        %7351 = vmatmul.mubr.bf16.gmra.mrb[0].mxu0 %v7227
        %v7352 = vpop.f32.mrb[0].mxu0
        %v7353 = vadd.f32 0.0, %v7352
        %v7354 = vpop.f32.mrb[0].mxu0
        %v7355 = vpop.f32.mrb[0].mxu0
        %v7356 = vadd.f32 0.0, %v7355
        %v7357 = vpop.f32.mrb[0].mxu0
        %7358 = vmatprep.mubr.bf16.mxu0 %v7316
        %7359 = vmatmul.mubr.bf16.gmra.mrb[0].mxu0 %v7229
        %v7360 = vpop.f32.mrb[0].mxu0
        %v7361 = vadd.f32 0.0, %v7360
        %v7362 = vpop.f32.mrb[0].mxu0
        %v7363 = vpop.f32.mrb[0].mxu0
        %v7364 = vadd.f32 0.0, %v7363
        %v7365 = vpop.f32.mrb[0].mxu0
        %7366 = vdwg.mxu0
        %v7367 = vadd.f32 %v7151, %v7353
        %v7368 = vadd.f32 %v7152, %v7356
        %v7369 = vadd.f32 %v7153, %v7361
        %v7370 = vadd.f32 %v7154, %v7364
        %v7371 = vld [vmem:[#allocation4 + $0x400] sm:$0xff]
        %v7372 = vld [vmem:[#allocation4 + $0x408] sm:$0xff]
        %v7373 = vld [vmem:[#allocation4 + $0x420] sm:$0xff]
        %v7374 = vld [vmem:[#allocation4 + $0x428] sm:$0xff]
        %v7375 = vld [vmem:[#allocation4 + $0x440] sm:$0xff]
        %v7376 = vld [vmem:[#allocation4 + $0x448] sm:$0xff]
        %v7377 = vld [vmem:[#allocation4 + $0x460] sm:$0xff]
        %v7378 = vld [vmem:[#allocation4 + $0x468] sm:$0xff]
        %v7379 = vld [vmem:[#allocation4 + $0x410] sm:$0xff]
        %v7380 = vld [vmem:[#allocation4 + $0x418] sm:$0xff]
        %v7381 = vld [vmem:[#allocation4 + $0x430] sm:$0xff]
        %v7382 = vld [vmem:[#allocation4 + $0x438] sm:$0xff]
        %v7383 = vld [vmem:[#allocation4 + $0x450] sm:$0xff]
        %v7384 = vld [vmem:[#allocation4 + $0x458] sm:$0xff]
        %v7385 = vld [vmem:[#allocation4 + $0x470] sm:$0xff]
        %v7386 = vld [vmem:[#allocation4 + $0x478] sm:$0xff]
        %v7387 = vmax.f32 %v7371, %v7379
        %v7388 = vmax.f32 %v7372, %v7380
        %v7389 = vmax.f32 %v7373, %v7381
        %v7390 = vmax.f32 %v7374, %v7382
        %v7391 = vmax.f32 %v7375, %v7383
        %v7392 = vmax.f32 %v7376, %v7384
        %v7393 = vmax.f32 %v7377, %v7385
        %v7394 = vmax.f32 %v7378, %v7386
        %v7395 = vld [vmem:[#allocation4 + $0x480] sm:$0xff]
        %v7396 = vld [vmem:[#allocation4 + $0x488] sm:$0xff]
        %v7397 = vld [vmem:[#allocation4 + $0x4a0] sm:$0xff]
        %v7398 = vld [vmem:[#allocation4 + $0x4a8] sm:$0xff]
        %v7399 = vld [vmem:[#allocation4 + $0x4c0] sm:$0xff]
        %v7400 = vld [vmem:[#allocation4 + $0x4c8] sm:$0xff]
        %v7401 = vld [vmem:[#allocation4 + $0x4e0] sm:$0xff]
        %v7402 = vld [vmem:[#allocation4 + $0x4e8] sm:$0xff]
        %v7403 = vld [vmem:[#allocation4 + $0x490] sm:$0xff]
        %v7404 = vld [vmem:[#allocation4 + $0x498] sm:$0xff]
        %v7405 = vld [vmem:[#allocation4 + $0x4b0] sm:$0xff]
        %v7406 = vld [vmem:[#allocation4 + $0x4b8] sm:$0xff]
        %v7407 = vld [vmem:[#allocation4 + $0x4d0] sm:$0xff]
        %v7408 = vld [vmem:[#allocation4 + $0x4d8] sm:$0xff]
        %v7409 = vld [vmem:[#allocation4 + $0x4f0] sm:$0xff]
        %v7410 = vld [vmem:[#allocation4 + $0x4f8] sm:$0xff]
        %v7411 = vmax.f32 %v7395, %v7403
        %v7412 = vmax.f32 %v7396, %v7404
        %v7413 = vmax.f32 %v7397, %v7405
        %v7414 = vmax.f32 %v7398, %v7406
        %v7415 = vmax.f32 %v7399, %v7407
        %v7416 = vmax.f32 %v7400, %v7408
        %v7417 = vmax.f32 %v7401, %v7409
        %v7418 = vmax.f32 %v7402, %v7410
        %v7419 = vmax.f32 %v7387, %v7411
        %v7420 = vmax.f32 %v7388, %v7412
        %v7421 = vmax.f32 %v7389, %v7413
        %v7422 = vmax.f32 %v7390, %v7414
        %v7423 = vmax.f32 %v7391, %v7415
        %v7424 = vmax.f32 %v7392, %v7416
        %v7425 = vmax.f32 %v7393, %v7417
        %v7426 = vmax.f32 %v7394, %v7418
        %v7427 = vadd.f32 %v7419, %v6509
        %v7428 = vadd.f32 %v7420, %v6513
        %v7429 = vadd.f32 %v7421, %v6509
        %v7430 = vadd.f32 %v7422, %v6513
        %v7431 = vadd.f32 %v7423, %v6509
        %v7432 = vadd.f32 %v7424, %v6513
        %v7433 = vadd.f32 %v7425, %v6509
        %v7434 = vadd.f32 %v7426, %v6513
        %v7435 = vmax.f32 %v7427, 0.0
        %v7436 = vmax.f32 %v7428, 0.0
        %v7437 = vmax.f32 %v7429, 0.0
        %v7438 = vmax.f32 %v7430, 0.0
        %v7439 = vmax.f32 %v7431, 0.0
        %v7440 = vmax.f32 %v7432, 0.0
        %v7441 = vmax.f32 %v7433, 0.0
        %v7442 = vmax.f32 %v7434, 0.0
        %v7443 = vpack.c.bf16 %v7437, %v7435
        %v7444 = vpack.c.bf16 %v7438, %v7436
        %v7445 = vpack.c.bf16 %v7441, %v7439
        %v7446 = vpack.c.bf16 %v7442, %v7440
        %s7447 = scalar_lea.vmem %s5, 320
        %v7448 = vld [vmem:[%s7447] sm:$0xf]
        %v7449 = vld [vmem:[%s7447 + $0x4] sm:$0xf]
        %v7450 = vld [vmem:[%s7447 + $0x8] sm:$0xf]
        %v7451 = vld [vmem:[%s7447 + $0xc] sm:$0xf]
        %v7452 = vld [vmem:[%s7447 + $0x10] sm:$0xf]
        %v7453 = vld [vmem:[%s7447 + $0x14] sm:$0xf]
        %v7454 = vld [vmem:[%s7447 + $0x18] sm:$0xf]
        %v7455 = vld [vmem:[%s7447 + $0x1c] sm:$0xf]
        %v7456 = vld [vmem:[%s7447 + $0x20] sm:$0xf]
        %v7457 = vld [vmem:[%s7447 + $0x24] sm:$0xf]
        %v7458 = vld [vmem:[%s7447 + $0x28] sm:$0xf]
        %v7459 = vld [vmem:[%s7447 + $0x2c] sm:$0xf]
        %v7460 = vld [vmem:[%s7447 + $0x30] sm:$0xf]
        %v7461 = vld [vmem:[%s7447 + $0x34] sm:$0xf]
        %v7462 = vld [vmem:[%s7447 + $0x38] sm:$0xf]
        %v7463 = vld [vmem:[%s7447 + $0x3c] sm:$0xf]
        %v7464 = vld [vmem:[%s7447 + $0x40] sm:$0xf]
        %v7465 = vld [vmem:[%s7447 + $0x44] sm:$0xf]
        %v7466 = vld [vmem:[%s7447 + $0x48] sm:$0xf]
        %v7467 = vld [vmem:[%s7447 + $0x4c] sm:$0xf]
        %v7488 = vunpack.c.l.b16 %v7448
        %v7489 = vunpack.c.l.b16 %v7449
        %v7490 = vunpack.c.l.b16 %v7450
        %v7491 = vunpack.c.l.b16 %v7451
        %v7492 = vunpack.c.l.b16 %v7452
        %v7493 = vunpack.c.l.b16 %v7453
        %v7494 = vunpack.c.l.b16 %v7454
        %v7495 = vunpack.c.l.b16 %v7455
        %v7496 = vunpack.c.l.b16 %v7456
        %v7497 = vunpack.c.l.b16 %v7457
        %v7498 = vunpack.c.l.b16 %v7458
        %v7499 = vunpack.c.l.b16 %v7459
        %v7500 = vunpack.c.l.b16 %v7460
        %v7501 = vunpack.c.l.b16 %v7461
        %v7502 = vunpack.c.l.b16 %v7462
        %v7503 = vunpack.c.l.b16 %v7463
        %v7504 = vunpack.c.l.b16 %v7464
        %v7505 = vunpack.c.l.b16 %v7465
        %v7506 = vunpack.c.l.b16 %v7466
        %v7507 = vunpack.c.l.b16 %v7467
        %v7508 = vpack.c.b16 %v7489, %v7488
        %v7509 = vpack.c.b16 %v7491, %v7490
        %v7510 = vpack.c.b16 %v7493, %v7492
        %v7511 = vpack.c.b16 %v7495, %v7494
        %v7512 = vpack.c.b16 %v7497, %v7496
        %v7513 = vpack.c.b16 %v7499, %v7498
        %v7514 = vpack.c.b16 %v7501, %v7500
        %v7515 = vpack.c.b16 %v7503, %v7502
        %v7516 = vpack.c.b16 %v7505, %v7504
        %v7517 = vpack.c.b16 %v7507, %v7506
        %v7529 = vsel %vm6346, %v7444, 0
        %v7532 = vsel %vm6346, %v7446, 0
        %7534 = vmatprep.subr.bf16.mxu0 0
        %7535 = vmatpush1.bf16.msra.mxu0 %v7508
        %7536 = vmatprep.subr.bf16.mxu0 0
        %7537 = vmatpush1.bf16.msra.mxu0 %v7509
        %7538 = vmatprep.subr.bf16.mxu0 0
        %7539 = vmatpush1.bf16.msra.mxu0 %v7510
        %7540 = vmatprep.subr.bf16.mxu0 0
        %7541 = vmatpush1.bf16.msra.mxu0 %v7511
        %7542 = vmatprep.subr.bf16.mxu0 0
        %7543 = vmatpush1.bf16.msra.mxu0 %v7512
        %7544 = vmatprep.subr.bf16.mxu0 0
        %7545 = vmatpush1.bf16.msra.mxu0 %v7513
        %7546 = vmatprep.subr.bf16.mxu0 0
        %7547 = vmatpush1.bf16.msra.mxu0 %v7514
        %7548 = vmatprep.subr.bf16.mxu0 0
        %7549 = vmatpush1.bf16.msra.mxu0 %v7515
        %7550 = vmatprep.subr.bf16.mxu0 0
        %7551 = vmatpush1.bf16.msra.mxu0 %v7516
        %7552 = vmatprep.subr.bf16.mxu0 0
        %7553 = vmatpush1.bf16.msra.mxu0 %v7517
        %7554 = vmatprep.subr.bf16.mxu0 0
        %7555 = vmatpush1.bf16.msra.mxu0 0
        %7556 = vmatprep.subr.bf16.mxu0 0
        %7557 = vmatpush1.bf16.msra.mxu0 0
        %7558 = vmatprep.subr.bf16.mxu0 0
        %7559 = vmatpush1.bf16.msra.mxu0 0
        %7560 = vmatprep.subr.bf16.mxu0 0
        %7561 = vmatpush1.bf16.msra.mxu0 0
        %7562 = vmatprep.subr.bf16.mxu0 0
        %7563 = vmatpush1.bf16.msra.mxu0 0
        %7564 = vmatprep.subr.bf16.mxu0 0
        %7565 = vmatpush1.bf16.msra.mxu0 0
        %7566 = vmatprep.mubr.bf16.mxu0 %v7529
        %7567 = vmatmul.mubr.bf16.gmra.mrb[0].mxu0 %v7443
        %v7568 = vpop.f32.mrb[0].mxu0
        %v7569 = vadd.f32 0.0, %v7568
        %v7570 = vpop.f32.mrb[0].mxu0
        %v7571 = vpop.f32.mrb[0].mxu0
        %v7572 = vadd.f32 0.0, %v7571
        %v7573 = vpop.f32.mrb[0].mxu0
        %7574 = vmatprep.mubr.bf16.mxu0 %v7532
        %7575 = vmatmul.mubr.bf16.gmra.mrb[0].mxu0 %v7445
        %v7576 = vpop.f32.mrb[0].mxu0
        %v7577 = vadd.f32 0.0, %v7576
        %v7578 = vpop.f32.mrb[0].mxu0
        %v7579 = vpop.f32.mrb[0].mxu0
        %v7580 = vadd.f32 0.0, %v7579
        %v7581 = vpop.f32.mrb[0].mxu0
        %7582 = vdwg.mxu0
        %v7583 = vadd.f32 %v7367, %v7569
        %v7584 = vadd.f32 %v7368, %v7572
        %v7585 = vadd.f32 %v7369, %v7577
        %v7586 = vadd.f32 %v7370, %v7580
        %v7587 = vld [vmem:[%s6] sm:$0x1]
        %v7589 = vlaneseq
        %v7590 = vshrl.u32 %v7589, 7
        %v7591 = vsub.s32 0, %v7590
        %v7592 = vrot.slane %v7587, %v7591
        %v7594 = vadd.f32 %v7583, %v7592
        %v7595 = vadd.f32 %v7584, %v7592
        %v7596 = vadd.f32 %v7585, %v7592
        %v7597 = vadd.f32 %v7586, %v7592
        %7598 = vst [vmem:[%s271] sm:$0xff] %v7594
        %7599 = vst [vmem:[%s271 + $0x8] sm:$0xff] %v7595
        %7600 = vst [vmem:[%s271 + $0x10] sm:$0xff] %v7596
        %7601 = vst [vmem:[%s271 + $0x18] sm:$0xff] %v7597
        %s7602 = sand.u32 %s181, 1
        %s7603 = scalar_lea.sflag [#allocation6], %s7602
        %s7604 = sand.u32 %s181, 1
        %s7605 = smul.addr %s7604, 32
        %s7606 = scalar_lea.vmem [#allocation5], %s7605
        // Predicated region
        $region49: #{tpu_custom_call.1} parent=47 // pred_check
          %p7607 = pneg %p191
        $region50: #{tpu_custom_call.1} parent=47 // pred_check_branch
          %7609 = sbr.rel (%p7607) target = $region52
        $region51: #{tpu_custom_call.1} parent=47 // pred_region
          %s7610 = smul.u32 4, %s21
          %s7612 = ssub.s32 512, 512
          %7613 = vsyncadd %s7603, %s7612
          %s7614 = smul.addr %s7610, 128
          %s7615 = scalar_lea.hbm %s7, %s7614
          %s7616 = sshll.u32 %s7606, 4
          %s7617 = int_to_ptr.vmem [resolvable:$true] %s7616
          %7622 = dma.vmem_to_hbm [thread:$0]  %s7617, 512, %s7615, %s7603, 128, 128, 8
        $region52: #{tpu_custom_call.1} parent=47 // pred_fallthru
          _
      $region48: #{tpu_custom_call.1} parent=5 // pred_fallthru
        _
      %p7623 = scmp.le.s32.totalorder 2, %s16
      // Predicated region
      $region53: #{tpu_custom_call.1} parent=5 // pred_check
        %p7624 = pneg %p7623
      $region54: #{tpu_custom_call.1} parent=5 // pred_check_branch
        %7626 = sbr.rel (%p7624) target = $region56
      $region55: #{tpu_custom_call.1} parent=5 // pred_region
        %s7627 = ssub.s32 %s16, 2
        // Predicated region
        $region57: #{tpu_custom_call.1} parent=55 // pred_check
          %p7628 = pneg %p197
        $region58: #{tpu_custom_call.1} parent=55 // pred_check_branch
          %7630 = sbr.rel (%p7628) target = $region60
        $region59: #{tpu_custom_call.1} parent=55 // pred_region
          %s7631 = sand.u32 %s182, 1
          %s7632 = scalar_lea.sflag [#allocation6], %s7631
          %s7633 = sand.u32 %s182, 1
          %s7634 = smul.addr %s7633, 32
          %s7635 = scalar_lea.vmem [#allocation5], %s7634
          %7636 = dma.done %s7632, 512
        $region60: #{tpu_custom_call.1} parent=55 // pred_fallthru
          _
      $region56: #{tpu_custom_call.1} parent=5 // pred_fallthru
        _
    $region6: #{tpu_custom_call.1} parent=1 // loop_footer
      %s20 = sadd.s32 1, %s16
    $region7: #{tpu_custom_call.1} parent=1 // loop_footer_branch
      %15 = sbr.rel target = $region3
    $region8: #{tpu_custom_call.1} parent=1 // loop_exit
      _
    %7637 = vsyncpa [#allocation6], 1
    %s7638 = scalar_lea.sflag [#allocation6], 1
    %7639 = vsyncpa %s7638, 1

</llo_original>
